<compile_context>
chip_gen: v6e
topology: v6e:2x2x1
jax: 0.10.0
libtpu: 0.0.40
codegen_flags: <defaults>
</compile_context>

<pallas_src>
import functools
import math

import jax
import jax.numpy as jnp
from jax.experimental import pallas as pl
from jax.experimental.pallas import tpu as pltpu


# ------------------------------ kernel ---------------------------------------

def _decoder_kernel(
    x_ref, mem_ref,
    wqkv_ref, bqkv_ref, wo1_ref, bo1_ref, ln1g_ref, ln1b_ref,
    wq2_ref, bq2_ref, wkv2_ref, bkv2_ref, wo2_ref, bo2_ref, ln2g_ref, ln2b_ref,
    w1_ref, b1_ref, w2_ref, b2_ref, ln3g_ref, ln3b_ref,
    lnfg_ref, lnfb_ref,
    out_ref,
    act_ref,                       # VMEM scratch (G, Tq, D) f32, layer-resident
    *, num_heads: int,
):
    layer = pl.program_id(1)
    n_layers = pl.num_programs(1)

    # Load the input tile only on the first layer step; afterwards the
    # activation stays resident in VMEM across the "arbitrary" layer axis.
    @pl.when(layer == 0)
    def _():
        act_ref[...] = x_ref[...].astype(jnp.float32)

    tgt = act_ref[...]                                   # (G, Tq, D) f32
    mem = mem_ref[...]                                   # (G, Tkv, D) bf16
    G, Tq, D = tgt.shape
    Tkv = mem.shape[1]
    H = num_heads
    dk = D // H
    scale = 1.0 / math.sqrt(dk)

    def linear(v2d, w_ref, b_ref):
        # bf16 MXU operands, f32 accumulation, f32 bias add.
        return (jnp.dot(v2d.astype(jnp.bfloat16),
                        w_ref[...].astype(jnp.bfloat16),
                        preferred_element_type=jnp.float32)
                + b_ref[...])

    def layernorm(val, g_ref, b_ref):
        mu = val.mean(axis=-1, keepdims=True)
        var = ((val - mu) ** 2).mean(axis=-1, keepdims=True)
        return (val - mu) * jax.lax.rsqrt(var + 1e-5) * g_ref[...] + b_ref[...]

    def mha(q3, k3, v3):
        # Per-head attention; softmax stats in f32; scale folded into q.
        # TODO(synk): head-batched dot_general would remove the dk-wide lane
        #   slices / lane-axis concat but needs a (g,t,h,d)->(g,h,t,d)
        #   relayout with uncertain Mosaic support; keep the proven form.
        heads = []
        for h in range(H):
            qh = (q3[:, :, h * dk:(h + 1) * dk] * scale).astype(jnp.bfloat16)
            kh = k3[:, :, h * dk:(h + 1) * dk].astype(jnp.bfloat16)
            vh = v3[:, :, h * dk:(h + 1) * dk].astype(jnp.bfloat16)
            s = jnp.einsum('gtd,gsd->gts', qh, kh,
                           preferred_element_type=jnp.float32)
            m = s.max(axis=-1, keepdims=True)
            p = jnp.exp(s - m)
            inv = pl.reciprocal(p.sum(axis=-1, keepdims=True), approx=True)
            probs = (p * inv).astype(jnp.bfloat16)
            heads.append(jnp.einsum('gts,gsd->gtd', probs, vh,
                                    preferred_element_type=jnp.float32))
        return jnp.concatenate(heads, axis=-1)           # (G, Tq, D) f32

    # ---------------- self attention (fused QKV) ----------------
    x2d = tgt.reshape(G * Tq, D)
    qkv = linear(x2d, wqkv_ref, bqkv_ref)                # (G*Tq, 3D)
    q = qkv[:, 0:D].reshape(G, Tq, D)
    k = qkv[:, D:2 * D].reshape(G, Tq, D)
    v = qkv[:, 2 * D:3 * D].reshape(G, Tq, D)
    ctx = mha(q, k, v)
    attn1 = linear(ctx.reshape(G * Tq, D), wo1_ref, bo1_ref).reshape(G, Tq, D)
    tgt = layernorm(tgt + attn1, ln1g_ref, ln1b_ref)

    # ---------------- cross attention (fused KV on memory) ----------------
    q2 = linear(tgt.reshape(G * Tq, D), wq2_ref, bq2_ref).reshape(G, Tq, D)
    kv2 = linear(mem.reshape(G * Tkv, D), wkv2_ref, bkv2_ref)     # (G*Tkv, 2D)
    k2 = kv2[:, 0:D].reshape(G, Tkv, D)
    v2 = kv2[:, D:2 * D].reshape(G, Tkv, D)
    ctx2 = mha(q2, k2, v2)
    attn2 = linear(ctx2.reshape(G * Tq, D), wo2_ref, bo2_ref).reshape(G, Tq, D)
    tgt = layernorm(tgt + attn2, ln2g_ref, ln2b_ref)

    # ---------------- position-wise FFN ----------------
    # Cast the (G*Tq, F) hidden to bf16 immediately after ReLU: halves the
    # largest live temporary (F is typically 4*D) without extra rounding
    # (the second matmul consumes bf16 operands anyway).
    h1 = jnp.maximum(linear(tgt.reshape(G * Tq, D), w1_ref, b1_ref),
                     0.0).astype(jnp.bfloat16)
    ffn = linear(h1, w2_ref, b2_ref).reshape(G, Tq, D)
    tgt = layernorm(tgt + ffn, ln3g_ref, ln3b_ref)

    # carry to next layer
    act_ref[...] = tgt

    # final decoder LayerNorm + writeback only on the last layer step
    @pl.when(layer == n_layers - 1)
    def _():
        out_ref[...] = layernorm(tgt, lnfg_ref, lnfb_ref).astype(out_ref.dtype)


# ------------------------------ wrapper ---------------------------------------

_WEIGHT_KEYS = [
    "wqkv", "bqkv", "wo1", "bo1", "ln1g", "ln1b",
    "wq2", "bq2", "wkv2", "bkv2", "wo2", "bo2", "ln2g", "ln2b",
    "w1", "b1", "w2", "b2", "ln3g", "ln3b",
]


def _tpu_defaults():
    """(m_target_rows, vmem_capacity_bytes) for the current TPU generation."""
    kind = ""
    try:
        kind = jax.devices()[0].device_kind.lower()
    except Exception:
        pass
    vmem_cap = 0
    try:
        info = pltpu.get_tpu_info()
        vmem_cap = int(getattr(info, "vmem_capacity_bytes", 0) or 0)
    except Exception:
        vmem_cap = 0
    if vmem_cap <= 0:
        # 128 MiB on v3..v6 parts; assume 64 MiB for unknown / newer (v7x).
        vmem_cap = (128 << 20) if any(t in kind for t in
                                      ("v3", "v4", "v5", "v6")) else (64 << 20)
    # Weights are re-streamed for every (group, layer) step, so arithmetic
    # intensity ~ G*Tq flops per weight byte.  ~512 rows suffice on v5e/v4
    # (low HBM BW); ~1024 needed to go MXU-bound on v6e/v7x.
    m_target = 512 if any(t in kind for t in ("v2", "v3", "v4", "v5")) else 1024
    return m_target, vmem_cap


def _vmem_estimate(G, Tq, Tkv, D, F, H, per_layer_w, final_w, x_bytes):
    """Rough per-step VMEM footprint (bytes) including in-kernel temporaries."""
    f32, bf16 = 4, 2
    M, Mk = G * Tq, G * Tkv
    act = M * D * f32                                        # resident activation
    io = 2 * (M * D * x_bytes) * 2 + 2 * (Mk * D * bf16)     # x/out + memory blocks
    weights = 2 * per_layer_w + final_w                      # double-buffered stream
    tmp = (3 * M * D + 2 * Mk * D + M * F + 5 * M * D) * f32  # qkv/kv2/h1/residuals
    tmp += 2 * G * Tq * Tkv * f32                            # live score matrices
    tmp += 3 * M * D * bf16                                  # bf16 operand copies
    return act + io + weights + tmp + (4 << 20)              # compiler headroom


def transformer_decoder_4d(tgt, memory, packed, *, num_heads, group_block=None):
    """tgt: (B, N, Tq, D); memory: (B, N, Tkv, D); packed: stacked layer params.

    NOTE: D % 128 == 0 keeps the fused-QKV / per-head lane slices free views.
    """
    B, N, Tq, D = tgt.shape
    Bm, Nm, Tkv, Dm = memory.shape
    assert (B, N, D) == (Bm, Nm, Dm)
    assert D % num_heads == 0
    L = int(packed["wqkv"].shape[0])
    F = int(packed["w1"].shape[2])
    BN = B * N
    x_bytes = int(jnp.dtype(tgt.dtype).itemsize)

    m_target, vmem_cap = _tpu_defaults()
    vmem_budget = int(0.8 * vmem_cap)

    per_layer_w = sum(int(packed[k].nbytes) // L for k in _WEIGHT_KEYS)
    final_w = int(packed["lnf_g"].nbytes) + int(packed["lnf_b"].nbytes)

    # --- tile sizing: flattened matmul M-dim (G*Tq) ~ generation M-target ---
    if group_block is None:
        group_block = max(8, (m_target // max(Tq, 1)) // 8 * 8)
    group_block = int(group_block)
    # Never larger than the (8-padded) problem, but do NOT shrink just to
    # manufacture a second grid group: on a 2-TC chip an idle core is cheaper
    # than dropping below the weight-streaming roofline target.
    group_block = min(group_block, max(8, ((BN + 7) // 8) * 8))
    # Shrink G (not weight double-buffering) until the estimate fits VMEM.
    while group_block > 8 and _vmem_estimate(
            group_block, Tq, Tkv, D, F, num_heads,
            per_layer_w, final_w, x_bytes) > vmem_budget:
        group_block = max(8, group_block // 2)

    num_groups = pl.cdiv(BN, group_block)
    BN_pad = num_groups * group_block
    G = group_block

    x = tgt.reshape(BN, Tq, D)
    # memory only feeds the MXU -> stream it in bf16 (halves its DMA bytes).
    m = memory.reshape(BN, Tkv, D).astype(jnp.bfloat16)
    if BN_pad != BN:
        pad = BN_pad - BN
        x = jnp.pad(x, ((0, pad), (0, 0), (0, 0)))
        m = jnp.pad(m, ((0, pad), (0, 0), (0, 0)))

    # --- BlockSpecs ---
    x_spec = pl.BlockSpec((G, Tq, D), lambda i, l: (i, 0, 0))
    m_spec = pl.BlockSpec((G, Tkv, D), lambda i, l: (i, 0, 0))

    def layer_spec(arr):
        tail = arr.shape[1:]
        nd = len(tail)
        return pl.BlockSpec((None,) + tail,
                            lambda i, l, _nd=nd: (l,) + (0,) * _nd)

    def const_spec(arr):
        nd = arr.ndim
        return pl.BlockSpec(arr.shape, lambda i, l, _nd=nd: (0,) * _nd)

    in_specs = [x_spec, m_spec]
    in_specs += [layer_spec(packed[k]) for k in _WEIGHT_KEYS]
    in_specs += [const_spec(packed["lnf_g"]), const_spec(packed["lnf_b"])]

    out_spec = pl.BlockSpec((G, Tq, D), lambda i, l: (i, 0, 0))

    est = _vmem_estimate(G, Tq, Tkv, D, F, num_heads,
                         per_layer_w, final_w, x_bytes)
    vmem_limit = int(min(max(est, 32 << 20), vmem_budget))

    kernel = functools.partial(_decoder_kernel, num_heads=num_heads)
    args = [x, m] + [packed[k] for k in _WEIGHT_KEYS] \
        + [packed["lnf_g"], packed["lnf_b"]]

    out = pl.pallas_call(
        kernel,
        out_shape=jax.ShapeDtypeStruct((BN_pad, Tq, D), x.dtype),
        grid_spec=pltpu.PrefetchScalarGridSpec(
            num_scalar_prefetch=0,
            grid=(num_groups, L),
            in_specs=in_specs,
            out_specs=out_spec,
            scratch_shapes=[pltpu.VMEM((G, Tq, D), jnp.float32)],
        ),
        compiler_params=pltpu.CompilerParams(
            dimension_semantics=("parallel", "arbitrary"),
            vmem_limit_bytes=vmem_limit,
        ),
        # x is only read at layer 0 per group; out reuses its HBM pages.
        input_output_aliases={0: 0},
    )(*args)

    return out[:BN].reshape(B, N, Tq, D).astype(tgt.dtype)


# --------------------- parameter construction / packing ----------------------

def make_layer_params(key, d_model, d_ff):
    D, F = d_model, d_ff
    ks = jax.random.split(key, 20)

    def w(k, shape, s=0.06):
        return s * jax.random.normal(k, shape, jnp.float32)

    return {
        "sa_wq": w(ks[0], (D, D)), "sa_bq": w(ks[1], (D,), 0.02),
        "sa_wk": w(ks[2], (D, D)), "sa_bk": w(ks[3], (D,), 0.02),
        "sa_wv": w(ks[4], (D, D)), "sa_bv": w(ks[5], (D,), 0.02),
        "sa_wo": w(ks[6], (D, D)), "sa_bo": w(ks[7], (D,), 0.02),
        "ln1_g": jnp.ones((D,), jnp.float32), "ln1_b": jnp.zeros((D,), jnp.float32),
        "ca_wq": w(ks[8], (D, D)), "ca_bq": w(ks[9], (D,), 0.02),
        "ca_wk": w(ks[10], (D, D)), "ca_bk": w(ks[11], (D,), 0.02),
        "ca_wv": w(ks[12], (D, D)), "ca_bv": w(ks[13], (D,), 0.02),
        "ca_wo": w(ks[14], (D, D)), "ca_bo": w(ks[15], (D,), 0.02),
        "ln2_g": jnp.ones((D,), jnp.float32), "ln2_b": jnp.zeros((D,), jnp.float32),
        "ffn_w1": w(ks[16], (D, F)), "ffn_b1": w(ks[17], (F,), 0.02),
        "ffn_w2": w(ks[18], (F, D)), "ffn_b2": w(ks[19], (D,), 0.02),
        "ln3_g": jnp.ones((D,), jnp.float32), "ln3_b": jnp.zeros((D,), jnp.float32),
    }


def pack_params(layer_params, final_g, final_b):
    """Stack per-layer params on a leading axis; fuse QKV / KV; bf16 matrices."""
    def stackw(fn):
        return jnp.stack([fn(p) for p in layer_params]).astype(jnp.bfloat16)

    def stackv(fn):
        return jnp.stack([fn(p).reshape(1, -1) for p in layer_params]
                         ).astype(jnp.float32)

    return {
        "wqkv": stackw(lambda p: jnp.concatenate(
            [p["sa_wq"], p["sa_wk"], p["sa_wv"]], axis=1)),
        "bqkv": stackv(lambda p: jnp.concatenate(
            [p["sa_bq"], p["sa_bk"], p["sa_bv"]])),
        "wo1": stackw(lambda p: p["sa_wo"]), "bo1": stackv(lambda p: p["sa_bo"]),
        "ln1g": stackv(lambda p: p["ln1_g"]), "ln1b": stackv(lambda p: p["ln1_b"]),
        "wq2": stackw(lambda p: p["ca_wq"]), "bq2": stackv(lambda p: p["ca_bq"]),
        "wkv2": stackw(lambda p: jnp.concatenate(
            [p["ca_wk"], p["ca_wv"]], axis=1)),
        "bkv2": stackv(lambda p: jnp.concatenate(
            [p["ca_bk"], p["ca_bv"]])),
        "wo2": stackw(lambda p: p["ca_wo"]), "bo2": stackv(lambda p: p["ca_bo"]),
        "ln2g": stackv(lambda p: p["ln2_g"]), "ln2b": stackv(lambda p: p["ln2_b"]),
        "w1": stackw(lambda p: p["ffn_w1"]), "b1": stackv(lambda p: p["ffn_b1"]),
        "w2": stackw(lambda p: p["ffn_w2"]), "b2": stackv(lambda p: p["ffn_b2"]),
        "ln3g": stackv(lambda p: p["ln3_g"]), "ln3b": stackv(lambda p: p["ln3_b"]),
        "lnf_g": final_g.reshape(1, -1).astype(jnp.float32),
        "lnf_b": final_b.reshape(1, -1).astype(jnp.float32),
    }


# ----------------------- pure-JAX f32 reference -------------------------------

def _ref_ln(x, g, b, eps=1e-5):
    mu = x.mean(-1, keepdims=True)
    var = ((x - mu) ** 2).mean(-1, keepdims=True)
    return (x - mu) * jax.lax.rsqrt(var + eps) * g + b


def _ref_mha(q_x, kv_x, wq, bq, wk, bk, wv, bv, wo, bo, H):
    B, N, Tq, D = q_x.shape
    Tkv = kv_x.shape[2]
    dk = D // H
    q = (q_x @ wq + bq).reshape(B, N, Tq, H, dk).transpose(0, 1, 3, 2, 4)
    k = (kv_x @ wk + bk).reshape(B, N, Tkv, H, dk).transpose(0, 1, 3, 2, 4)
    v = (kv_x @ wv + bv).reshape(B, N, Tkv, H, dk).transpose(0, 1, 3, 2, 4)
    s = jnp.einsum('bnhtd,bnhsd->bnhts', q, k) / math.sqrt(dk)
    pr = jax.nn.softmax(s, axis=-1)
    ctx = jnp.einsum('bnhts,bnhsd->bnhtd', pr, v)
    ctx = ctx.transpose(0, 1, 3, 2, 4).reshape(B, N, Tq, D)
    return ctx @ wo + bo


def _reference_decoder(tgt, memory, layer_params, final_g, final_b, H):
    out = tgt
    for p in layer_params:
        sa = _ref_mha(out, out, p["sa_wq"], p["sa_bq"], p["sa_wk"], p["sa_bk"],
                      p["sa_wv"], p["sa_bv"], p["sa_wo"], p["sa_bo"], H)
        out = _ref_ln(out + sa, p["ln1_g"], p["ln1_b"])
        ca = _ref_mha(out, memory, p["ca_wq"], p["ca_bq"], p["ca_wk"], p["ca_bk"],
                      p["ca_wv"], p["ca_bv"], p["ca_wo"], p["ca_bo"], H)
        out = _ref_ln(out + ca, p["ln2_g"], p["ln2_b"])
        h = jnp.maximum(out @ p["ffn_w1"] + p["ffn_b1"], 0.0)
        ffn = h @ p["ffn_w2"] + p["ffn_b2"]
        out = _ref_ln(out + ffn, p["ln3_g"], p["ln3_b"])
    return _ref_ln(out, final_g, final_b)


# ------------------------------ smoke test ------------------------------------

if __name__ == "__main__":
    # tgt: (batch, num_nodes, T_q, d_model); memory: (batch, num_nodes, T_kv, d_model)
    B, N_nodes, T_q, T_kv, d_model = 2, 4, 8, 16, 32
    num_heads, d_ff, num_layers = 4, 64, 2

    key = jax.random.PRNGKey(0)
    k_tgt, k_mem, *k_layers = jax.random.split(key, 2 + num_layers)
    tgt = jax.random.normal(k_tgt, (B, N_nodes, T_q, d_model), jnp.float32)
    memory = jax.random.normal(k_mem, (B, N_nodes, T_kv, d_model), jnp.float32)

    layer_params = [make_layer_params(k, d_model, d_ff) for k in k_layers]
    final_g = jnp.ones((d_model,), jnp.float32)
    final_b = jnp.zeros((d_model,), jnp.float32)
    packed = pack_params(layer_params, final_g, final_b)

    run = jax.jit(functools.partial(transformer_decoder_4d, num_heads=num_heads))
    out = jax.block_until_ready(run(tgt, memory, packed))

    ref = _reference_decoder(tgt, memory, layer_params, final_g, final_b,
                             num_heads)
    assert out.shape == (B, N_nodes, T_q, d_model)
    err = float(jnp.max(jnp.abs(out - ref)))
    # bf16 MXU operands / bf16-stored weights vs. pure-f32 reference: a few
    # 1e-2 of slack; structural bugs would produce O(1) errors.
    assert err < 5e-2, err

    print("KERNEL_OK")
</pallas_src>

<mosaic_0001>
module attributes {stable_mosaic.version = 11 : i64} {
  func.func @_decoder_kernel(%arg0: i32, %arg1: i32, %arg2: memref<8x8x32xf32, #tpu.memory_space<vmem>>, %arg3: memref<8x16x32xbf16, #tpu.memory_space<vmem>>, %arg4: memref<1x32x96xbf16, #tpu.memory_space<vmem>>, %arg5: memref<1x1x96xf32, #tpu.memory_space<vmem>>, %arg6: memref<1x32x32xbf16, #tpu.memory_space<vmem>>, %arg7: memref<1x1x32xf32, #tpu.memory_space<vmem>>, %arg8: memref<1x1x32xf32, #tpu.memory_space<vmem>>, %arg9: memref<1x1x32xf32, #tpu.memory_space<vmem>>, %arg10: memref<1x32x32xbf16, #tpu.memory_space<vmem>>, %arg11: memref<1x1x32xf32, #tpu.memory_space<vmem>>, %arg12: memref<1x32x64xbf16, #tpu.memory_space<vmem>>, %arg13: memref<1x1x64xf32, #tpu.memory_space<vmem>>, %arg14: memref<1x32x32xbf16, #tpu.memory_space<vmem>>, %arg15: memref<1x1x32xf32, #tpu.memory_space<vmem>>, %arg16: memref<1x1x32xf32, #tpu.memory_space<vmem>>, %arg17: memref<1x1x32xf32, #tpu.memory_space<vmem>>, %arg18: memref<1x32x64xbf16, #tpu.memory_space<vmem>>, %arg19: memref<1x1x64xf32, #tpu.memory_space<vmem>>, %arg20: memref<1x64x32xbf16, #tpu.memory_space<vmem>>, %arg21: memref<1x1x32xf32, #tpu.memory_space<vmem>>, %arg22: memref<1x1x32xf32, #tpu.memory_space<vmem>>, %arg23: memref<1x1x32xf32, #tpu.memory_space<vmem>>, %arg24: memref<1x32xf32, #tpu.memory_space<vmem>>, %arg25: memref<1x32xf32, #tpu.memory_space<vmem>>, %arg26: memref<8x8x32xf32, #tpu.memory_space<vmem>>, %arg27: memref<8x8x32xf32, #tpu.memory_space<vmem>>) attributes {dimension_semantics = [#tpu.dimension_semantics<parallel>, #tpu.dimension_semantics<arbitrary>], iteration_bounds = array<i64: 1, 2>, scalar_prefetch = 0 : i64, scratch_operands = 1 : i64, tpu.core_type = #tpu.core_type<tc>, window_params = [{transform_indices = @transform_0, window_bounds = array<i64: 8, 8, 32>}, {transform_indices = @transform_1, window_bounds = array<i64: 8, 16, 32>}, {transform_indices = @transform_2, window_bounds = array<i64: 1, 32, 96>}, {transform_indices = @transform_3, window_bounds = array<i64: 1, 1, 96>}, {transform_indices = @transform_4, window_bounds = array<i64: 1, 32, 32>}, {transform_indices = @transform_5, window_bounds = array<i64: 1, 1, 32>}, {transform_indices = @transform_6, window_bounds = array<i64: 1, 1, 32>}, {transform_indices = @transform_7, window_bounds = array<i64: 1, 1, 32>}, {transform_indices = @transform_8, window_bounds = array<i64: 1, 32, 32>}, {transform_indices = @transform_9, window_bounds = array<i64: 1, 1, 32>}, {transform_indices = @transform_10, window_bounds = array<i64: 1, 32, 64>}, {transform_indices = @transform_11, window_bounds = array<i64: 1, 1, 64>}, {transform_indices = @transform_12, window_bounds = array<i64: 1, 32, 32>}, {transform_indices = @transform_13, window_bounds = array<i64: 1, 1, 32>}, {transform_indices = @transform_14, window_bounds = array<i64: 1, 1, 32>}, {transform_indices = @transform_15, window_bounds = array<i64: 1, 1, 32>}, {transform_indices = @transform_16, window_bounds = array<i64: 1, 32, 64>}, {transform_indices = @transform_17, window_bounds = array<i64: 1, 1, 64>}, {transform_indices = @transform_18, window_bounds = array<i64: 1, 64, 32>}, {transform_indices = @transform_19, window_bounds = array<i64: 1, 1, 32>}, {transform_indices = @transform_20, window_bounds = array<i64: 1, 1, 32>}, {transform_indices = @transform_21, window_bounds = array<i64: 1, 1, 32>}, {pipeline_mode = #tpu.pipeline_mode<synchronous>, transform_indices = @transform_22, window_bounds = array<i64: 1, 32>}, {pipeline_mode = #tpu.pipeline_mode<synchronous>, transform_indices = @transform_23, window_bounds = array<i64: 1, 32>}, {transform_indices = @transform_24, window_bounds = array<i64: 8, 8, 32>}]} {
    %c0_i32 = arith.constant 0 : i32
    %0 = arith.cmpi eq, %arg1, %c0_i32 : i32
    %1 = arith.extui %0 : i1 to i32
    %c0_i32_0 = arith.constant 0 : i32
    %2 = arith.cmpi ne, %1, %c0_i32_0 : i32
    scf.if %2 {
      %c0_132 = arith.constant 0 : index
      %c0_133 = arith.constant 0 : index
      %c0_134 = arith.constant 0 : index
      %343 = vector.load %arg2[%c0_132, %c0_133, %c0_134] : memref<8x8x32xf32, #tpu.memory_space<vmem>>, vector<8x8x32xf32>
      %c0_135 = arith.constant 0 : index
      %c0_136 = arith.constant 0 : index
      %c0_137 = arith.constant 0 : index
      %344 = vector.load %arg27[%c0_135, %c0_136, %c0_137] : memref<8x8x32xf32, #tpu.memory_space<vmem>>, vector<8x8x32xf32>
      tpu.vector_store %arg27[%c0_135, %c0_136, %c0_137], %343 {strides = array<i32>} : memref<8x8x32xf32, #tpu.memory_space<vmem>>, vector<8x8x32xf32>,
    } else {
    }
    %c0 = arith.constant 0 : index
    %c0_1 = arith.constant 0 : index
    %c0_2 = arith.constant 0 : index
    %3 = vector.load %arg27[%c0, %c0_1, %c0_2] : memref<8x8x32xf32, #tpu.memory_space<vmem>>, vector<8x8x32xf32>
    %c0_3 = arith.constant 0 : index
    %c0_4 = arith.constant 0 : index
    %c0_5 = arith.constant 0 : index
    %4 = vector.load %arg3[%c0_3, %c0_4, %c0_5] : memref<8x16x32xbf16, #tpu.memory_space<vmem>>, vector<8x16x32xbf16>
    %5 = vector.shape_cast %3 : vector<8x8x32xf32> to vector<64x32xf32>
    %6 = arith.truncf %5 : vector<64x32xf32> to vector<64x32xbf16>
    %c0_6 = arith.constant 0 : index
    %c0_7 = arith.constant 0 : index
    %c0_8 = arith.constant 0 : index
    %7 = vector.load %arg4[%c0_6, %c0_7, %c0_8] : memref<1x32x96xbf16, #tpu.memory_space<vmem>>, vector<1x32x96xbf16>
    %8 = vector.shape_cast %7 : vector<1x32x96xbf16> to vector<32x96xbf16>
    %cst = arith.constant dense<0.000000e+00> : vector<64x96xf32>
    %9 = tpu.matmul %6, %8, %cst {dimension_numbers = #tpu.dot_dimension_numbers<[1], [0], [0], [1], [0, 0, 1, 1], [], []>} : vector<64x32xbf16>, vector<32x96xbf16>, vector<64x96xf32> -> vector<64x96xf32>
    %c0_9 = arith.constant 0 : index
    %c0_10 = arith.constant 0 : index
    %c0_11 = arith.constant 0 : index
    %10 = vector.load %arg5[%c0_9, %c0_10, %c0_11] : memref<1x1x96xf32, #tpu.memory_space<vmem>>, vector<1x1x96xf32>
    %11 = vector.shape_cast %10 : vector<1x1x96xf32> to vector<1x96xf32>
    %12 = vector.broadcast %11 : vector<1x96xf32> to vector<64x96xf32>
    %13 = arith.addf %9, %12 : vector<64x96xf32>
    %14 = vector.extract_strided_slice %13 {offsets = [0, 0], sizes = [64, 32], strides = [1, 1]} : vector<64x96xf32> to vector<64x32xf32>
    %15 = vector.shape_cast %14 : vector<64x32xf32> to vector<8x8x32xf32>
    %16 = vector.extract_strided_slice %13 {offsets = [0, 32], sizes = [64, 32], strides = [1, 1]} : vector<64x96xf32> to vector<64x32xf32>
    %17 = vector.shape_cast %16 : vector<64x32xf32> to vector<8x8x32xf32>
    %18 = vector.extract_strided_slice %13 {offsets = [0, 64], sizes = [64, 32], strides = [1, 1]} : vector<64x96xf32> to vector<64x32xf32>
    %19 = vector.shape_cast %18 : vector<64x32xf32> to vector<8x8x32xf32>
    %20 = vector.extract_strided_slice %15 {offsets = [0, 0, 0], sizes = [8, 8, 8], strides = [1, 1, 1]} : vector<8x8x32xf32> to vector<8x8x8xf32>
    %cst_12 = arith.constant 0.353553385 : f32
    %21 = vector.broadcast %cst_12 : f32 to vector<8x8x8xf32>
    %22 = arith.mulf %20, %21 : vector<8x8x8xf32>
    %23 = arith.truncf %22 : vector<8x8x8xf32> to vector<8x8x8xbf16>
    %24 = vector.extract_strided_slice %17 {offsets = [0, 0, 0], sizes = [8, 8, 8], strides = [1, 1, 1]} : vector<8x8x32xf32> to vector<8x8x8xf32>
    %25 = arith.truncf %24 : vector<8x8x8xf32> to vector<8x8x8xbf16>
    %26 = vector.extract_strided_slice %19 {offsets = [0, 0, 0], sizes = [8, 8, 8], strides = [1, 1, 1]} : vector<8x8x32xf32> to vector<8x8x8xf32>
    %27 = arith.truncf %26 : vector<8x8x8xf32> to vector<8x8x8xbf16>
    "tpu.trace_start"() <{level = 10 : i32, message = "gtd,gsd->gts"}> : () -> ()
    %cst_13 = arith.constant dense<0.000000e+00> : vector<8x8x8xf32>
    %28 = tpu.matmul %23, %25, %cst_13 {dimension_numbers = #tpu.dot_dimension_numbers<[2], [2], [1], [1], [0, 0, 0, 1, 1, 1], [0], [0]>} : vector<8x8x8xbf16>, vector<8x8x8xbf16>, vector<8x8x8xf32> -> vector<8x8x8xf32>
    "tpu.trace_stop"() : () -> ()
    %cst_14 = arith.constant dense<0xFF800000> : vector<8x8xf32>
    %29 = vector.multi_reduction <maximumf>, %28, %cst_14 [2] : vector<8x8x8xf32> to vector<8x8xf32>
    %30 = vector.shape_cast %29 : vector<8x8xf32> to vector<8x8x1xf32>
    %31 = vector.broadcast %30 : vector<8x8x1xf32> to vector<8x8x8xf32>
    %32 = arith.subf %28, %31 : vector<8x8x8xf32>
    %33 = math.exp %32 : vector<8x8x8xf32>
    %cst_15 = arith.constant dense<0.000000e+00> : vector<8x8xf32>
    %34 = vector.multi_reduction <add>, %33, %cst_15 [2] : vector<8x8x8xf32> to vector<8x8xf32>
    %35 = vector.shape_cast %34 : vector<8x8xf32> to vector<8x8x1xf32>
    %36 = tpu.reciprocal %35 {approx = true} : vector<8x8x1xf32> -> vector<8x8x1xf32>
    %37 = vector.broadcast %36 : vector<8x8x1xf32> to vector<8x8x8xf32>
    %38 = arith.mulf %33, %37 : vector<8x8x8xf32>
    %39 = arith.truncf %38 : vector<8x8x8xf32> to vector<8x8x8xbf16>
    "tpu.trace_start"() <{level = 10 : i32, message = "gts,gsd->gtd"}> : () -> ()
    %cst_16 = arith.constant dense<0.000000e+00> : vector<8x8x8xf32>
    %40 = tpu.matmul %39, %27, %cst_16 {dimension_numbers = #tpu.dot_dimension_numbers<[2], [1], [1], [2], [0, 0, 0, 1, 1, 2], [0], [0]>} : vector<8x8x8xbf16>, vector<8x8x8xbf16>, vector<8x8x8xf32> -> vector<8x8x8xf32>
    "tpu.trace_stop"() : () -> ()
    %41 = vector.extract_strided_slice %15 {offsets = [0, 0, 8], sizes = [8, 8, 8], strides = [1, 1, 1]} : vector<8x8x32xf32> to vector<8x8x8xf32>
    %cst_17 = arith.constant 0.353553385 : f32
    %42 = vector.broadcast %cst_17 : f32 to vector<8x8x8xf32>
    %43 = arith.mulf %41, %42 : vector<8x8x8xf32>
    %44 = arith.truncf %43 : vector<8x8x8xf32> to vector<8x8x8xbf16>
    %45 = vector.extract_strided_slice %17 {offsets = [0, 0, 8], sizes = [8, 8, 8], strides = [1, 1, 1]} : vector<8x8x32xf32> to vector<8x8x8xf32>
    %46 = arith.truncf %45 : vector<8x8x8xf32> to vector<8x8x8xbf16>
    %47 = vector.extract_strided_slice %19 {offsets = [0, 0, 8], sizes = [8, 8, 8], strides = [1, 1, 1]} : vector<8x8x32xf32> to vector<8x8x8xf32>
    %48 = arith.truncf %47 : vector<8x8x8xf32> to vector<8x8x8xbf16>
    "tpu.trace_start"() <{level = 10 : i32, message = "gtd,gsd->gts"}> : () -> ()
    %cst_18 = arith.constant dense<0.000000e+00> : vector<8x8x8xf32>
    %49 = tpu.matmul %44, %46, %cst_18 {dimension_numbers = #tpu.dot_dimension_numbers<[2], [2], [1], [1], [0, 0, 0, 1, 1, 1], [0], [0]>} : vector<8x8x8xbf16>, vector<8x8x8xbf16>, vector<8x8x8xf32> -> vector<8x8x8xf32>
    "tpu.trace_stop"() : () -> ()
    %cst_19 = arith.constant dense<0xFF800000> : vector<8x8xf32>
    %50 = vector.multi_reduction <maximumf>, %49, %cst_19 [2] : vector<8x8x8xf32> to vector<8x8xf32>
    %51 = vector.shape_cast %50 : vector<8x8xf32> to vector<8x8x1xf32>
    %52 = vector.broadcast %51 : vector<8x8x1xf32> to vector<8x8x8xf32>
    %53 = arith.subf %49, %52 : vector<8x8x8xf32>
    %54 = math.exp %53 : vector<8x8x8xf32>
    %cst_20 = arith.constant dense<0.000000e+00> : vector<8x8xf32>
    %55 = vector.multi_reduction <add>, %54, %cst_20 [2] : vector<8x8x8xf32> to vector<8x8xf32>
    %56 = vector.shape_cast %55 : vector<8x8xf32> to vector<8x8x1xf32>
    %57 = tpu.reciprocal %56 {approx = true} : vector<8x8x1xf32> -> vector<8x8x1xf32>
    %58 = vector.broadcast %57 : vector<8x8x1xf32> to vector<8x8x8xf32>
    %59 = arith.mulf %54, %58 : vector<8x8x8xf32>
    %60 = arith.truncf %59 : vector<8x8x8xf32> to vector<8x8x8xbf16>
    "tpu.trace_start"() <{level = 10 : i32, message = "gts,gsd->gtd"}> : () -> ()
    %cst_21 = arith.constant dense<0.000000e+00> : vector<8x8x8xf32>
    %61 = tpu.matmul %60, %48, %cst_21 {dimension_numbers = #tpu.dot_dimension_numbers<[2], [1], [1], [2], [0, 0, 0, 1, 1, 2], [0], [0]>} : vector<8x8x8xbf16>, vector<8x8x8xbf16>, vector<8x8x8xf32> -> vector<8x8x8xf32>
    "tpu.trace_stop"() : () -> ()
    %62 = vector.extract_strided_slice %15 {offsets = [0, 0, 16], sizes = [8, 8, 8], strides = [1, 1, 1]} : vector<8x8x32xf32> to vector<8x8x8xf32>
    %cst_22 = arith.constant 0.353553385 : f32
    %63 = vector.broadcast %cst_22 : f32 to vector<8x8x8xf32>
    %64 = arith.mulf %62, %63 : vector<8x8x8xf32>
    %65 = arith.truncf %64 : vector<8x8x8xf32> to vector<8x8x8xbf16>
    %66 = vector.extract_strided_slice %17 {offsets = [0, 0, 16], sizes = [8, 8, 8], strides = [1, 1, 1]} : vector<8x8x32xf32> to vector<8x8x8xf32>
    %67 = arith.truncf %66 : vector<8x8x8xf32> to vector<8x8x8xbf16>
    %68 = vector.extract_strided_slice %19 {offsets = [0, 0, 16], sizes = [8, 8, 8], strides = [1, 1, 1]} : vector<8x8x32xf32> to vector<8x8x8xf32>
    %69 = arith.truncf %68 : vector<8x8x8xf32> to vector<8x8x8xbf16>
    "tpu.trace_start"() <{level = 10 : i32, message = "gtd,gsd->gts"}> : () -> ()
    %cst_23 = arith.constant dense<0.000000e+00> : vector<8x8x8xf32>
    %70 = tpu.matmul %65, %67, %cst_23 {dimension_numbers = #tpu.dot_dimension_numbers<[2], [2], [1], [1], [0, 0, 0, 1, 1, 1], [0], [0]>} : vector<8x8x8xbf16>, vector<8x8x8xbf16>, vector<8x8x8xf32> -> vector<8x8x8xf32>
    "tpu.trace_stop"() : () -> ()
    %cst_24 = arith.constant dense<0xFF800000> : vector<8x8xf32>
    %71 = vector.multi_reduction <maximumf>, %70, %cst_24 [2] : vector<8x8x8xf32> to vector<8x8xf32>
    %72 = vector.shape_cast %71 : vector<8x8xf32> to vector<8x8x1xf32>
    %73 = vector.broadcast %72 : vector<8x8x1xf32> to vector<8x8x8xf32>
    %74 = arith.subf %70, %73 : vector<8x8x8xf32>
    %75 = math.exp %74 : vector<8x8x8xf32>
    %cst_25 = arith.constant dense<0.000000e+00> : vector<8x8xf32>
    %76 = vector.multi_reduction <add>, %75, %cst_25 [2] : vector<8x8x8xf32> to vector<8x8xf32>
    %77 = vector.shape_cast %76 : vector<8x8xf32> to vector<8x8x1xf32>
    %78 = tpu.reciprocal %77 {approx = true} : vector<8x8x1xf32> -> vector<8x8x1xf32>
    %79 = vector.broadcast %78 : vector<8x8x1xf32> to vector<8x8x8xf32>
    %80 = arith.mulf %75, %79 : vector<8x8x8xf32>
    %81 = arith.truncf %80 : vector<8x8x8xf32> to vector<8x8x8xbf16>
    "tpu.trace_start"() <{level = 10 : i32, message = "gts,gsd->gtd"}> : () -> ()
    %cst_26 = arith.constant dense<0.000000e+00> : vector<8x8x8xf32>
    %82 = tpu.matmul %81, %69, %cst_26 {dimension_numbers = #tpu.dot_dimension_numbers<[2], [1], [1], [2], [0, 0, 0, 1, 1, 2], [0], [0]>} : vector<8x8x8xbf16>, vector<8x8x8xbf16>, vector<8x8x8xf32> -> vector<8x8x8xf32>
    "tpu.trace_stop"() : () -> ()
    %83 = vector.extract_strided_slice %15 {offsets = [0, 0, 24], sizes = [8, 8, 8], strides = [1, 1, 1]} : vector<8x8x32xf32> to vector<8x8x8xf32>
    %cst_27 = arith.constant 0.353553385 : f32
    %84 = vector.broadcast %cst_27 : f32 to vector<8x8x8xf32>
    %85 = arith.mulf %83, %84 : vector<8x8x8xf32>
    %86 = arith.truncf %85 : vector<8x8x8xf32> to vector<8x8x8xbf16>
    %87 = vector.extract_strided_slice %17 {offsets = [0, 0, 24], sizes = [8, 8, 8], strides = [1, 1, 1]} : vector<8x8x32xf32> to vector<8x8x8xf32>
    %88 = arith.truncf %87 : vector<8x8x8xf32> to vector<8x8x8xbf16>
    %89 = vector.extract_strided_slice %19 {offsets = [0, 0, 24], sizes = [8, 8, 8], strides = [1, 1, 1]} : vector<8x8x32xf32> to vector<8x8x8xf32>
    %90 = arith.truncf %89 : vector<8x8x8xf32> to vector<8x8x8xbf16>
    "tpu.trace_start"() <{level = 10 : i32, message = "gtd,gsd->gts"}> : () -> ()
    %cst_28 = arith.constant dense<0.000000e+00> : vector<8x8x8xf32>
    %91 = tpu.matmul %86, %88, %cst_28 {dimension_numbers = #tpu.dot_dimension_numbers<[2], [2], [1], [1], [0, 0, 0, 1, 1, 1], [0], [0]>} : vector<8x8x8xbf16>, vector<8x8x8xbf16>, vector<8x8x8xf32> -> vector<8x8x8xf32>
    "tpu.trace_stop"() : () -> ()
    %cst_29 = arith.constant dense<0xFF800000> : vector<8x8xf32>
    %92 = vector.multi_reduction <maximumf>, %91, %cst_29 [2] : vector<8x8x8xf32> to vector<8x8xf32>
    %93 = vector.shape_cast %92 : vector<8x8xf32> to vector<8x8x1xf32>
    %94 = vector.broadcast %93 : vector<8x8x1xf32> to vector<8x8x8xf32>
    %95 = arith.subf %91, %94 : vector<8x8x8xf32>
    %96 = math.exp %95 : vector<8x8x8xf32>
    %cst_30 = arith.constant dense<0.000000e+00> : vector<8x8xf32>
    %97 = vector.multi_reduction <add>, %96, %cst_30 [2] : vector<8x8x8xf32> to vector<8x8xf32>
    %98 = vector.shape_cast %97 : vector<8x8xf32> to vector<8x8x1xf32>
    %99 = tpu.reciprocal %98 {approx = true} : vector<8x8x1xf32> -> vector<8x8x1xf32>
    %100 = vector.broadcast %99 : vector<8x8x1xf32> to vector<8x8x8xf32>
    %101 = arith.mulf %96, %100 : vector<8x8x8xf32>
    %102 = arith.truncf %101 : vector<8x8x8xf32> to vector<8x8x8xbf16>
    "tpu.trace_start"() <{level = 10 : i32, message = "gts,gsd->gtd"}> : () -> ()
    %cst_31 = arith.constant dense<0.000000e+00> : vector<8x8x8xf32>
    %103 = tpu.matmul %102, %90, %cst_31 {dimension_numbers = #tpu.dot_dimension_numbers<[2], [1], [1], [2], [0, 0, 0, 1, 1, 2], [0], [0]>} : vector<8x8x8xbf16>, vector<8x8x8xbf16>, vector<8x8x8xf32> -> vector<8x8x8xf32>
    "tpu.trace_stop"() : () -> ()
    %104 = tpu.concatenate %40, %61, %82, %103 in 2 : vector<8x8x8xf32>, vector<8x8x8xf32>, vector<8x8x8xf32>, vector<8x8x8xf32> -> vector<8x8x32xf32>
    %105 = vector.shape_cast %104 : vector<8x8x32xf32> to vector<64x32xf32>
    %106 = arith.truncf %105 : vector<64x32xf32> to vector<64x32xbf16>
    %c0_32 = arith.constant 0 : index
    %c0_33 = arith.constant 0 : index
    %c0_34 = arith.constant 0 : index
    %107 = vector.load %arg6[%c0_32, %c0_33, %c0_34] : memref<1x32x32xbf16, #tpu.memory_space<vmem>>, vector<1x32x32xbf16>
    %108 = vector.shape_cast %107 : vector<1x32x32xbf16> to vector<32x32xbf16>
    %cst_35 = arith.constant dense<0.000000e+00> : vector<64x32xf32>
    %109 = tpu.matmul %106, %108, %cst_35 {dimension_numbers = #tpu.dot_dimension_numbers<[1], [0], [0], [1], [0, 0, 1, 1], [], []>} : vector<64x32xbf16>, vector<32x32xbf16>, vector<64x32xf32> -> vector<64x32xf32>
    %c0_36 = arith.constant 0 : index
    %c0_37 = arith.constant 0 : index
    %c0_38 = arith.constant 0 : index
    %110 = vector.load %arg7[%c0_36, %c0_37, %c0_38] : memref<1x1x32xf32, #tpu.memory_space<vmem>>, vector<1x1x32xf32>
    %111 = vector.shape_cast %110 : vector<1x1x32xf32> to vector<1x32xf32>
    %112 = vector.broadcast %111 : vector<1x32xf32> to vector<64x32xf32>
    %113 = arith.addf %109, %112 : vector<64x32xf32>
    %114 = vector.shape_cast %113 : vector<64x32xf32> to vector<8x8x32xf32>
    %115 = arith.addf %3, %114 : vector<8x8x32xf32>
    %cst_39 = arith.constant dense<0.000000e+00> : vector<8x8xf32>
    %116 = vector.multi_reduction <add>, %115, %cst_39 [2] : vector<8x8x32xf32> to vector<8x8xf32>
    %117 = vector.shape_cast %116 : vector<8x8xf32> to vector<8x8x1xf32>
    %cst_40 = arith.constant 3.200000e+01 : f32
    %118 = vector.broadcast %cst_40 : f32 to vector<8x8x1xf32>
    %119 = arith.divf %117, %118 : vector<8x8x1xf32>
    %120 = vector.broadcast %119 : vector<8x8x1xf32> to vector<8x8x32xf32>
    %121 = arith.subf %115, %120 : vector<8x8x32xf32>
    %122 = arith.mulf %121, %121 : vector<8x8x32xf32>
    %cst_41 = arith.constant dense<0.000000e+00> : vector<8x8xf32>
    %123 = vector.multi_reduction <add>, %122, %cst_41 [2] : vector<8x8x32xf32> to vector<8x8xf32>
    %124 = vector.shape_cast %123 : vector<8x8xf32> to vector<8x8x1xf32>
    %cst_42 = arith.constant 3.200000e+01 : f32
    %125 = vector.broadcast %cst_42 : f32 to vector<8x8x1xf32>
    %126 = arith.divf %124, %125 : vector<8x8x1xf32>
    %127 = vector.broadcast %119 : vector<8x8x1xf32> to vector<8x8x32xf32>
    %128 = arith.subf %115, %127 : vector<8x8x32xf32>
    %cst_43 = arith.constant 9.99999974E-6 : f32
    %129 = vector.broadcast %cst_43 : f32 to vector<8x8x1xf32>
    %130 = arith.addf %126, %129 : vector<8x8x1xf32>
    %131 = math.rsqrt %130 : vector<8x8x1xf32>
    %132 = vector.broadcast %131 : vector<8x8x1xf32> to vector<8x8x32xf32>
    %133 = arith.mulf %128, %132 : vector<8x8x32xf32>
    %c0_44 = arith.constant 0 : index
    %c0_45 = arith.constant 0 : index
    %c0_46 = arith.constant 0 : index
    %134 = vector.load %arg8[%c0_44, %c0_45, %c0_46] : memref<1x1x32xf32, #tpu.memory_space<vmem>>, vector<1x1x32xf32>
    %135 = vector.shape_cast %134 : vector<1x1x32xf32> to vector<1x32xf32>
    %136 = vector.shape_cast %135 : vector<1x32xf32> to vector<1x1x32xf32>
    %137 = vector.broadcast %136 : vector<1x1x32xf32> to vector<8x8x32xf32>
    %138 = arith.mulf %133, %137 : vector<8x8x32xf32>
    %c0_47 = arith.constant 0 : index
    %c0_48 = arith.constant 0 : index
    %c0_49 = arith.constant 0 : index
    %139 = vector.load %arg9[%c0_47, %c0_48, %c0_49] : memref<1x1x32xf32, #tpu.memory_space<vmem>>, vector<1x1x32xf32>
    %140 = vector.shape_cast %139 : vector<1x1x32xf32> to vector<1x32xf32>
    %141 = vector.shape_cast %140 : vector<1x32xf32> to vector<1x1x32xf32>
    %142 = vector.broadcast %141 : vector<1x1x32xf32> to vector<8x8x32xf32>
    %143 = arith.addf %138, %142 : vector<8x8x32xf32>
    %144 = vector.shape_cast %143 : vector<8x8x32xf32> to vector<64x32xf32>
    %145 = arith.truncf %144 : vector<64x32xf32> to vector<64x32xbf16>
    %c0_50 = arith.constant 0 : index
    %c0_51 = arith.constant 0 : index
    %c0_52 = arith.constant 0 : index
    %146 = vector.load %arg10[%c0_50, %c0_51, %c0_52] : memref<1x32x32xbf16, #tpu.memory_space<vmem>>, vector<1x32x32xbf16>
    %147 = vector.shape_cast %146 : vector<1x32x32xbf16> to vector<32x32xbf16>
    %cst_53 = arith.constant dense<0.000000e+00> : vector<64x32xf32>
    %148 = tpu.matmul %145, %147, %cst_53 {dimension_numbers = #tpu.dot_dimension_numbers<[1], [0], [0], [1], [0, 0, 1, 1], [], []>} : vector<64x32xbf16>, vector<32x32xbf16>, vector<64x32xf32> -> vector<64x32xf32>
    %c0_54 = arith.constant 0 : index
    %c0_55 = arith.constant 0 : index
    %c0_56 = arith.constant 0 : index
    %149 = vector.load %arg11[%c0_54, %c0_55, %c0_56] : memref<1x1x32xf32, #tpu.memory_space<vmem>>, vector<1x1x32xf32>
    %150 = vector.shape_cast %149 : vector<1x1x32xf32> to vector<1x32xf32>
    %151 = vector.broadcast %150 : vector<1x32xf32> to vector<64x32xf32>
    %152 = arith.addf %148, %151 : vector<64x32xf32>
    %153 = vector.shape_cast %152 : vector<64x32xf32> to vector<8x8x32xf32>
    %154 = vector.shape_cast %4 : vector<8x16x32xbf16> to vector<128x32xbf16>
    %c0_57 = arith.constant 0 : index
    %c0_58 = arith.constant 0 : index
    %c0_59 = arith.constant 0 : index
    %155 = vector.load %arg12[%c0_57, %c0_58, %c0_59] : memref<1x32x64xbf16, #tpu.memory_space<vmem>>, vector<1x32x64xbf16>
    %156 = vector.shape_cast %155 : vector<1x32x64xbf16> to vector<32x64xbf16>
    %cst_60 = arith.constant dense<0.000000e+00> : vector<128x64xf32>
    %157 = tpu.matmul %154, %156, %cst_60 {dimension_numbers = #tpu.dot_dimension_numbers<[1], [0], [0], [1], [0, 0, 1, 1], [], []>} : vector<128x32xbf16>, vector<32x64xbf16>, vector<128x64xf32> -> vector<128x64xf32>
    %c0_61 = arith.constant 0 : index
    %c0_62 = arith.constant 0 : index
    %c0_63 = arith.constant 0 : index
    %158 = vector.load %arg13[%c0_61, %c0_62, %c0_63] : memref<1x1x64xf32, #tpu.memory_space<vmem>>, vector<1x1x64xf32>
    %159 = vector.shape_cast %158 : vector<1x1x64xf32> to vector<1x64xf32>
    %160 = vector.broadcast %159 : vector<1x64xf32> to vector<128x64xf32>
    %161 = arith.addf %157, %160 : vector<128x64xf32>
    %162 = vector.extract_strided_slice %161 {offsets = [0, 0], sizes = [128, 32], strides = [1, 1]} : vector<128x64xf32> to vector<128x32xf32>
    %163 = vector.shape_cast %162 : vector<128x32xf32> to vector<8x16x32xf32>
    %164 = vector.extract_strided_slice %161 {offsets = [0, 32], sizes = [128, 32], strides = [1, 1]} : vector<128x64xf32> to vector<128x32xf32>
    %165 = vector.shape_cast %164 : vector<128x32xf32> to vector<8x16x32xf32>
    %166 = vector.extract_strided_slice %153 {offsets = [0, 0, 0], sizes = [8, 8, 8], strides = [1, 1, 1]} : vector<8x8x32xf32> to vector<8x8x8xf32>
    %cst_64 = arith.constant 0.353553385 : f32
    %167 = vector.broadcast %cst_64 : f32 to vector<8x8x8xf32>
    %168 = arith.mulf %166, %167 : vector<8x8x8xf32>
    %169 = arith.truncf %168 : vector<8x8x8xf32> to vector<8x8x8xbf16>
    %170 = vector.extract_strided_slice %163 {offsets = [0, 0, 0], sizes = [8, 16, 8], strides = [1, 1, 1]} : vector<8x16x32xf32> to vector<8x16x8xf32>
    %171 = arith.truncf %170 : vector<8x16x8xf32> to vector<8x16x8xbf16>
    %172 = vector.extract_strided_slice %165 {offsets = [0, 0, 0], sizes = [8, 16, 8], strides = [1, 1, 1]} : vector<8x16x32xf32> to vector<8x16x8xf32>
    %173 = arith.truncf %172 : vector<8x16x8xf32> to vector<8x16x8xbf16>
    "tpu.trace_start"() <{level = 10 : i32, message = "gtd,gsd->gts"}> : () -> ()
    %cst_65 = arith.constant dense<0.000000e+00> : vector<8x8x16xf32>
    %174 = tpu.matmul %169, %171, %cst_65 {dimension_numbers = #tpu.dot_dimension_numbers<[2], [2], [1], [1], [0, 0, 0, 1, 1, 1], [0], [0]>} : vector<8x8x8xbf16>, vector<8x16x8xbf16>, vector<8x8x16xf32> -> vector<8x8x16xf32>
    "tpu.trace_stop"() : () -> ()
    %cst_66 = arith.constant dense<0xFF800000> : vector<8x8xf32>
    %175 = vector.multi_reduction <maximumf>, %174, %cst_66 [2] : vector<8x8x16xf32> to vector<8x8xf32>
    %176 = vector.shape_cast %175 : vector<8x8xf32> to vector<8x8x1xf32>
    %177 = vector.broadcast %176 : vector<8x8x1xf32> to vector<8x8x16xf32>
    %178 = arith.subf %174, %177 : vector<8x8x16xf32>
    %179 = math.exp %178 : vector<8x8x16xf32>
    %cst_67 = arith.constant dense<0.000000e+00> : vector<8x8xf32>
    %180 = vector.multi_reduction <add>, %179, %cst_67 [2] : vector<8x8x16xf32> to vector<8x8xf32>
    %181 = vector.shape_cast %180 : vector<8x8xf32> to vector<8x8x1xf32>
    %182 = tpu.reciprocal %181 {approx = true} : vector<8x8x1xf32> -> vector<8x8x1xf32>
    %183 = vector.broadcast %182 : vector<8x8x1xf32> to vector<8x8x16xf32>
    %184 = arith.mulf %179, %183 : vector<8x8x16xf32>
    %185 = arith.truncf %184 : vector<8x8x16xf32> to vector<8x8x16xbf16>
    "tpu.trace_start"() <{level = 10 : i32, message = "gts,gsd->gtd"}> : () -> ()
    %cst_68 = arith.constant dense<0.000000e+00> : vector<8x8x8xf32>
    %186 = tpu.matmul %185, %173, %cst_68 {dimension_numbers = #tpu.dot_dimension_numbers<[2], [1], [1], [2], [0, 0, 0, 1, 1, 2], [0], [0]>} : vector<8x8x16xbf16>, vector<8x16x8xbf16>, vector<8x8x8xf32> -> vector<8x8x8xf32>
    "tpu.trace_stop"() : () -> ()
    %187 = vector.extract_strided_slice %153 {offsets = [0, 0, 8], sizes = [8, 8, 8], strides = [1, 1, 1]} : vector<8x8x32xf32> to vector<8x8x8xf32>
    %cst_69 = arith.constant 0.353553385 : f32
    %188 = vector.broadcast %cst_69 : f32 to vector<8x8x8xf32>
    %189 = arith.mulf %187, %188 : vector<8x8x8xf32>
    %190 = arith.truncf %189 : vector<8x8x8xf32> to vector<8x8x8xbf16>
    %191 = vector.extract_strided_slice %163 {offsets = [0, 0, 8], sizes = [8, 16, 8], strides = [1, 1, 1]} : vector<8x16x32xf32> to vector<8x16x8xf32>
    %192 = arith.truncf %191 : vector<8x16x8xf32> to vector<8x16x8xbf16>
    %193 = vector.extract_strided_slice %165 {offsets = [0, 0, 8], sizes = [8, 16, 8], strides = [1, 1, 1]} : vector<8x16x32xf32> to vector<8x16x8xf32>
    %194 = arith.truncf %193 : vector<8x16x8xf32> to vector<8x16x8xbf16>
    "tpu.trace_start"() <{level = 10 : i32, message = "gtd,gsd->gts"}> : () -> ()
    %cst_70 = arith.constant dense<0.000000e+00> : vector<8x8x16xf32>
    %195 = tpu.matmul %190, %192, %cst_70 {dimension_numbers = #tpu.dot_dimension_numbers<[2], [2], [1], [1], [0, 0, 0, 1, 1, 1], [0], [0]>} : vector<8x8x8xbf16>, vector<8x16x8xbf16>, vector<8x8x16xf32> -> vector<8x8x16xf32>
    "tpu.trace_stop"() : () -> ()
    %cst_71 = arith.constant dense<0xFF800000> : vector<8x8xf32>
    %196 = vector.multi_reduction <maximumf>, %195, %cst_71 [2] : vector<8x8x16xf32> to vector<8x8xf32>
    %197 = vector.shape_cast %196 : vector<8x8xf32> to vector<8x8x1xf32>
    %198 = vector.broadcast %197 : vector<8x8x1xf32> to vector<8x8x16xf32>
    %199 = arith.subf %195, %198 : vector<8x8x16xf32>
    %200 = math.exp %199 : vector<8x8x16xf32>
    %cst_72 = arith.constant dense<0.000000e+00> : vector<8x8xf32>
    %201 = vector.multi_reduction <add>, %200, %cst_72 [2] : vector<8x8x16xf32> to vector<8x8xf32>
    %202 = vector.shape_cast %201 : vector<8x8xf32> to vector<8x8x1xf32>
    %203 = tpu.reciprocal %202 {approx = true} : vector<8x8x1xf32> -> vector<8x8x1xf32>
    %204 = vector.broadcast %203 : vector<8x8x1xf32> to vector<8x8x16xf32>
    %205 = arith.mulf %200, %204 : vector<8x8x16xf32>
    %206 = arith.truncf %205 : vector<8x8x16xf32> to vector<8x8x16xbf16>
    "tpu.trace_start"() <{level = 10 : i32, message = "gts,gsd->gtd"}> : () -> ()
    %cst_73 = arith.constant dense<0.000000e+00> : vector<8x8x8xf32>
    %207 = tpu.matmul %206, %194, %cst_73 {dimension_numbers = #tpu.dot_dimension_numbers<[2], [1], [1], [2], [0, 0, 0, 1, 1, 2], [0], [0]>} : vector<8x8x16xbf16>, vector<8x16x8xbf16>, vector<8x8x8xf32> -> vector<8x8x8xf32>
    "tpu.trace_stop"() : () -> ()
    %208 = vector.extract_strided_slice %153 {offsets = [0, 0, 16], sizes = [8, 8, 8], strides = [1, 1, 1]} : vector<8x8x32xf32> to vector<8x8x8xf32>
    %cst_74 = arith.constant 0.353553385 : f32
    %209 = vector.broadcast %cst_74 : f32 to vector<8x8x8xf32>
    %210 = arith.mulf %208, %209 : vector<8x8x8xf32>
    %211 = arith.truncf %210 : vector<8x8x8xf32> to vector<8x8x8xbf16>
    %212 = vector.extract_strided_slice %163 {offsets = [0, 0, 16], sizes = [8, 16, 8], strides = [1, 1, 1]} : vector<8x16x32xf32> to vector<8x16x8xf32>
    %213 = arith.truncf %212 : vector<8x16x8xf32> to vector<8x16x8xbf16>
    %214 = vector.extract_strided_slice %165 {offsets = [0, 0, 16], sizes = [8, 16, 8], strides = [1, 1, 1]} : vector<8x16x32xf32> to vector<8x16x8xf32>
    %215 = arith.truncf %214 : vector<8x16x8xf32> to vector<8x16x8xbf16>
    "tpu.trace_start"() <{level = 10 : i32, message = "gtd,gsd->gts"}> : () -> ()
    %cst_75 = arith.constant dense<0.000000e+00> : vector<8x8x16xf32>
    %216 = tpu.matmul %211, %213, %cst_75 {dimension_numbers = #tpu.dot_dimension_numbers<[2], [2], [1], [1], [0, 0, 0, 1, 1, 1], [0], [0]>} : vector<8x8x8xbf16>, vector<8x16x8xbf16>, vector<8x8x16xf32> -> vector<8x8x16xf32>
    "tpu.trace_stop"() : () -> ()
    %cst_76 = arith.constant dense<0xFF800000> : vector<8x8xf32>
    %217 = vector.multi_reduction <maximumf>, %216, %cst_76 [2] : vector<8x8x16xf32> to vector<8x8xf32>
    %218 = vector.shape_cast %217 : vector<8x8xf32> to vector<8x8x1xf32>
    %219 = vector.broadcast %218 : vector<8x8x1xf32> to vector<8x8x16xf32>
    %220 = arith.subf %216, %219 : vector<8x8x16xf32>
    %221 = math.exp %220 : vector<8x8x16xf32>
    %cst_77 = arith.constant dense<0.000000e+00> : vector<8x8xf32>
    %222 = vector.multi_reduction <add>, %221, %cst_77 [2] : vector<8x8x16xf32> to vector<8x8xf32>
    %223 = vector.shape_cast %222 : vector<8x8xf32> to vector<8x8x1xf32>
    %224 = tpu.reciprocal %223 {approx = true} : vector<8x8x1xf32> -> vector<8x8x1xf32>
    %225 = vector.broadcast %224 : vector<8x8x1xf32> to vector<8x8x16xf32>
    %226 = arith.mulf %221, %225 : vector<8x8x16xf32>
    %227 = arith.truncf %226 : vector<8x8x16xf32> to vector<8x8x16xbf16>
    "tpu.trace_start"() <{level = 10 : i32, message = "gts,gsd->gtd"}> : () -> ()
    %cst_78 = arith.constant dense<0.000000e+00> : vector<8x8x8xf32>
    %228 = tpu.matmul %227, %215, %cst_78 {dimension_numbers = #tpu.dot_dimension_numbers<[2], [1], [1], [2], [0, 0, 0, 1, 1, 2], [0], [0]>} : vector<8x8x16xbf16>, vector<8x16x8xbf16>, vector<8x8x8xf32> -> vector<8x8x8xf32>
    "tpu.trace_stop"() : () -> ()
    %229 = vector.extract_strided_slice %153 {offsets = [0, 0, 24], sizes = [8, 8, 8], strides = [1, 1, 1]} : vector<8x8x32xf32> to vector<8x8x8xf32>
    %cst_79 = arith.constant 0.353553385 : f32
    %230 = vector.broadcast %cst_79 : f32 to vector<8x8x8xf32>
    %231 = arith.mulf %229, %230 : vector<8x8x8xf32>
    %232 = arith.truncf %231 : vector<8x8x8xf32> to vector<8x8x8xbf16>
    %233 = vector.extract_strided_slice %163 {offsets = [0, 0, 24], sizes = [8, 16, 8], strides = [1, 1, 1]} : vector<8x16x32xf32> to vector<8x16x8xf32>
    %234 = arith.truncf %233 : vector<8x16x8xf32> to vector<8x16x8xbf16>
    %235 = vector.extract_strided_slice %165 {offsets = [0, 0, 24], sizes = [8, 16, 8], strides = [1, 1, 1]} : vector<8x16x32xf32> to vector<8x16x8xf32>
    %236 = arith.truncf %235 : vector<8x16x8xf32> to vector<8x16x8xbf16>
    "tpu.trace_start"() <{level = 10 : i32, message = "gtd,gsd->gts"}> : () -> ()
    %cst_80 = arith.constant dense<0.000000e+00> : vector<8x8x16xf32>
    %237 = tpu.matmul %232, %234, %cst_80 {dimension_numbers = #tpu.dot_dimension_numbers<[2], [2], [1], [1], [0, 0, 0, 1, 1, 1], [0], [0]>} : vector<8x8x8xbf16>, vector<8x16x8xbf16>, vector<8x8x16xf32> -> vector<8x8x16xf32>
    "tpu.trace_stop"() : () -> ()
    %cst_81 = arith.constant dense<0xFF800000> : vector<8x8xf32>
    %238 = vector.multi_reduction <maximumf>, %237, %cst_81 [2] : vector<8x8x16xf32> to vector<8x8xf32>
    %239 = vector.shape_cast %238 : vector<8x8xf32> to vector<8x8x1xf32>
    %240 = vector.broadcast %239 : vector<8x8x1xf32> to vector<8x8x16xf32>
    %241 = arith.subf %237, %240 : vector<8x8x16xf32>
    %242 = math.exp %241 : vector<8x8x16xf32>
    %cst_82 = arith.constant dense<0.000000e+00> : vector<8x8xf32>
    %243 = vector.multi_reduction <add>, %242, %cst_82 [2] : vector<8x8x16xf32> to vector<8x8xf32>
    %244 = vector.shape_cast %243 : vector<8x8xf32> to vector<8x8x1xf32>
    %245 = tpu.reciprocal %244 {approx = true} : vector<8x8x1xf32> -> vector<8x8x1xf32>
    %246 = vector.broadcast %245 : vector<8x8x1xf32> to vector<8x8x16xf32>
    %247 = arith.mulf %242, %246 : vector<8x8x16xf32>
    %248 = arith.truncf %247 : vector<8x8x16xf32> to vector<8x8x16xbf16>
    "tpu.trace_start"() <{level = 10 : i32, message = "gts,gsd->gtd"}> : () -> ()
    %cst_83 = arith.constant dense<0.000000e+00> : vector<8x8x8xf32>
    %249 = tpu.matmul %248, %236, %cst_83 {dimension_numbers = #tpu.dot_dimension_numbers<[2], [1], [1], [2], [0, 0, 0, 1, 1, 2], [0], [0]>} : vector<8x8x16xbf16>, vector<8x16x8xbf16>, vector<8x8x8xf32> -> vector<8x8x8xf32>
    "tpu.trace_stop"() : () -> ()
    %250 = tpu.concatenate %186, %207, %228, %249 in 2 : vector<8x8x8xf32>, vector<8x8x8xf32>, vector<8x8x8xf32>, vector<8x8x8xf32> -> vector<8x8x32xf32>
    %251 = vector.shape_cast %250 : vector<8x8x32xf32> to vector<64x32xf32>
    %252 = arith.truncf %251 : vector<64x32xf32> to vector<64x32xbf16>
    %c0_84 = arith.constant 0 : index
    %c0_85 = arith.constant 0 : index
    %c0_86 = arith.constant 0 : index
    %253 = vector.load %arg14[%c0_84, %c0_85, %c0_86] : memref<1x32x32xbf16, #tpu.memory_space<vmem>>, vector<1x32x32xbf16>
    %254 = vector.shape_cast %253 : vector<1x32x32xbf16> to vector<32x32xbf16>
    %cst_87 = arith.constant dense<0.000000e+00> : vector<64x32xf32>
    %255 = tpu.matmul %252, %254, %cst_87 {dimension_numbers = #tpu.dot_dimension_numbers<[1], [0], [0], [1], [0, 0, 1, 1], [], []>} : vector<64x32xbf16>, vector<32x32xbf16>, vector<64x32xf32> -> vector<64x32xf32>
    %c0_88 = arith.constant 0 : index
    %c0_89 = arith.constant 0 : index
    %c0_90 = arith.constant 0 : index
    %256 = vector.load %arg15[%c0_88, %c0_89, %c0_90] : memref<1x1x32xf32, #tpu.memory_space<vmem>>, vector<1x1x32xf32>
    %257 = vector.shape_cast %256 : vector<1x1x32xf32> to vector<1x32xf32>
    %258 = vector.broadcast %257 : vector<1x32xf32> to vector<64x32xf32>
    %259 = arith.addf %255, %258 : vector<64x32xf32>
    %260 = vector.shape_cast %259 : vector<64x32xf32> to vector<8x8x32xf32>
    %261 = arith.addf %143, %260 : vector<8x8x32xf32>
    %cst_91 = arith.constant dense<0.000000e+00> : vector<8x8xf32>
    %262 = vector.multi_reduction <add>, %261, %cst_91 [2] : vector<8x8x32xf32> to vector<8x8xf32>
    %263 = vector.shape_cast %262 : vector<8x8xf32> to vector<8x8x1xf32>
    %cst_92 = arith.constant 3.200000e+01 : f32
    %264 = vector.broadcast %cst_92 : f32 to vector<8x8x1xf32>
    %265 = arith.divf %263, %264 : vector<8x8x1xf32>
    %266 = vector.broadcast %265 : vector<8x8x1xf32> to vector<8x8x32xf32>
    %267 = arith.subf %261, %266 : vector<8x8x32xf32>
    %268 = arith.mulf %267, %267 : vector<8x8x32xf32>
    %cst_93 = arith.constant dense<0.000000e+00> : vector<8x8xf32>
    %269 = vector.multi_reduction <add>, %268, %cst_93 [2] : vector<8x8x32xf32> to vector<8x8xf32>
    %270 = vector.shape_cast %269 : vector<8x8xf32> to vector<8x8x1xf32>
    %cst_94 = arith.constant 3.200000e+01 : f32
    %271 = vector.broadcast %cst_94 : f32 to vector<8x8x1xf32>
    %272 = arith.divf %270, %271 : vector<8x8x1xf32>
    %273 = vector.broadcast %265 : vector<8x8x1xf32> to vector<8x8x32xf32>
    %274 = arith.subf %261, %273 : vector<8x8x32xf32>
    %cst_95 = arith.constant 9.99999974E-6 : f32
    %275 = vector.broadcast %cst_95 : f32 to vector<8x8x1xf32>
    %276 = arith.addf %272, %275 : vector<8x8x1xf32>
    %277 = math.rsqrt %276 : vector<8x8x1xf32>
    %278 = vector.broadcast %277 : vector<8x8x1xf32> to vector<8x8x32xf32>
    %279 = arith.mulf %274, %278 : vector<8x8x32xf32>
    %c0_96 = arith.constant 0 : index
    %c0_97 = arith.constant 0 : index
    %c0_98 = arith.constant 0 : index
    %280 = vector.load %arg16[%c0_96, %c0_97, %c0_98] : memref<1x1x32xf32, #tpu.memory_space<vmem>>, vector<1x1x32xf32>
    %281 = vector.shape_cast %280 : vector<1x1x32xf32> to vector<1x32xf32>
    %282 = vector.shape_cast %281 : vector<1x32xf32> to vector<1x1x32xf32>
    %283 = vector.broadcast %282 : vector<1x1x32xf32> to vector<8x8x32xf32>
    %284 = arith.mulf %279, %283 : vector<8x8x32xf32>
    %c0_99 = arith.constant 0 : index
    %c0_100 = arith.constant 0 : index
    %c0_101 = arith.constant 0 : index
    %285 = vector.load %arg17[%c0_99, %c0_100, %c0_101] : memref<1x1x32xf32, #tpu.memory_space<vmem>>, vector<1x1x32xf32>
    %286 = vector.shape_cast %285 : vector<1x1x32xf32> to vector<1x32xf32>
    %287 = vector.shape_cast %286 : vector<1x32xf32> to vector<1x1x32xf32>
    %288 = vector.broadcast %287 : vector<1x1x32xf32> to vector<8x8x32xf32>
    %289 = arith.addf %284, %288 : vector<8x8x32xf32>
    %290 = vector.shape_cast %289 : vector<8x8x32xf32> to vector<64x32xf32>
    %291 = arith.truncf %290 : vector<64x32xf32> to vector<64x32xbf16>
    %c0_102 = arith.constant 0 : index
    %c0_103 = arith.constant 0 : index
    %c0_104 = arith.constant 0 : index
    %292 = vector.load %arg18[%c0_102, %c0_103, %c0_104] : memref<1x32x64xbf16, #tpu.memory_space<vmem>>, vector<1x32x64xbf16>
    %293 = vector.shape_cast %292 : vector<1x32x64xbf16> to vector<32x64xbf16>
    %cst_105 = arith.constant dense<0.000000e+00> : vector<64x64xf32>
    %294 = tpu.matmul %291, %293, %cst_105 {dimension_numbers = #tpu.dot_dimension_numbers<[1], [0], [0], [1], [0, 0, 1, 1], [], []>} : vector<64x32xbf16>, vector<32x64xbf16>, vector<64x64xf32> -> vector<64x64xf32>
    %c0_106 = arith.constant 0 : index
    %c0_107 = arith.constant 0 : index
    %c0_108 = arith.constant 0 : index
    %295 = vector.load %arg19[%c0_106, %c0_107, %c0_108] : memref<1x1x64xf32, #tpu.memory_space<vmem>>, vector<1x1x64xf32>
    %296 = vector.shape_cast %295 : vector<1x1x64xf32> to vector<1x64xf32>
    %297 = vector.broadcast %296 : vector<1x64xf32> to vector<64x64xf32>
    %298 = arith.addf %294, %297 : vector<64x64xf32>
    %cst_109 = arith.constant 0.000000e+00 : f32
    %299 = vector.broadcast %cst_109 : f32 to vector<64x64xf32>
    %300 = arith.maximumf %298, %299 : vector<64x64xf32>
    %301 = arith.truncf %300 : vector<64x64xf32> to vector<64x64xbf16>
    %c0_110 = arith.constant 0 : index
    %c0_111 = arith.constant 0 : index
    %c0_112 = arith.constant 0 : index
    %302 = vector.load %arg20[%c0_110, %c0_111, %c0_112] : memref<1x64x32xbf16, #tpu.memory_space<vmem>>, vector<1x64x32xbf16>
    %303 = vector.shape_cast %302 : vector<1x64x32xbf16> to vector<64x32xbf16>
    %cst_113 = arith.constant dense<0.000000e+00> : vector<64x32xf32>
    %304 = tpu.matmul %301, %303, %cst_113 {dimension_numbers = #tpu.dot_dimension_numbers<[1], [0], [0], [1], [0, 0, 1, 1], [], []>} : vector<64x64xbf16>, vector<64x32xbf16>, vector<64x32xf32> -> vector<64x32xf32>
    %c0_114 = arith.constant 0 : index
    %c0_115 = arith.constant 0 : index
    %c0_116 = arith.constant 0 : index
    %305 = vector.load %arg21[%c0_114, %c0_115, %c0_116] : memref<1x1x32xf32, #tpu.memory_space<vmem>>, vector<1x1x32xf32>
    %306 = vector.shape_cast %305 : vector<1x1x32xf32> to vector<1x32xf32>
    %307 = vector.broadcast %306 : vector<1x32xf32> to vector<64x32xf32>
    %308 = arith.addf %304, %307 : vector<64x32xf32>
    %309 = vector.shape_cast %308 : vector<64x32xf32> to vector<8x8x32xf32>
    %310 = arith.addf %289, %309 : vector<8x8x32xf32>
    %cst_117 = arith.constant dense<0.000000e+00> : vector<8x8xf32>
    %311 = vector.multi_reduction <add>, %310, %cst_117 [2] : vector<8x8x32xf32> to vector<8x8xf32>
    %312 = vector.shape_cast %311 : vector<8x8xf32> to vector<8x8x1xf32>
    %cst_118 = arith.constant 3.200000e+01 : f32
    %313 = vector.broadcast %cst_118 : f32 to vector<8x8x1xf32>
    %314 = arith.divf %312, %313 : vector<8x8x1xf32>
    %315 = vector.broadcast %314 : vector<8x8x1xf32> to vector<8x8x32xf32>
    %316 = arith.subf %310, %315 : vector<8x8x32xf32>
    %317 = arith.mulf %316, %316 : vector<8x8x32xf32>
    %cst_119 = arith.constant dense<0.000000e+00> : vector<8x8xf32>
    %318 = vector.multi_reduction <add>, %317, %cst_119 [2] : vector<8x8x32xf32> to vector<8x8xf32>
    %319 = vector.shape_cast %318 : vector<8x8xf32> to vector<8x8x1xf32>
    %cst_120 = arith.constant 3.200000e+01 : f32
    %320 = vector.broadcast %cst_120 : f32 to vector<8x8x1xf32>
    %321 = arith.divf %319, %320 : vector<8x8x1xf32>
    %322 = vector.broadcast %314 : vector<8x8x1xf32> to vector<8x8x32xf32>
    %323 = arith.subf %310, %322 : vector<8x8x32xf32>
    %cst_121 = arith.constant 9.99999974E-6 : f32
    %324 = vector.broadcast %cst_121 : f32 to vector<8x8x1xf32>
    %325 = arith.addf %321, %324 : vector<8x8x1xf32>
    %326 = math.rsqrt %325 : vector<8x8x1xf32>
    %327 = vector.broadcast %326 : vector<8x8x1xf32> to vector<8x8x32xf32>
    %328 = arith.mulf %323, %327 : vector<8x8x32xf32>
    %c0_122 = arith.constant 0 : index
    %c0_123 = arith.constant 0 : index
    %c0_124 = arith.constant 0 : index
    %329 = vector.load %arg22[%c0_122, %c0_123, %c0_124] : memref<1x1x32xf32, #tpu.memory_space<vmem>>, vector<1x1x32xf32>
    %330 = vector.shape_cast %329 : vector<1x1x32xf32> to vector<1x32xf32>
    %331 = vector.shape_cast %330 : vector<1x32xf32> to vector<1x1x32xf32>
    %332 = vector.broadcast %331 : vector<1x1x32xf32> to vector<8x8x32xf32>
    %333 = arith.mulf %328, %332 : vector<8x8x32xf32>
    %c0_125 = arith.constant 0 : index
    %c0_126 = arith.constant 0 : index
    %c0_127 = arith.constant 0 : index
    %334 = vector.load %arg23[%c0_125, %c0_126, %c0_127] : memref<1x1x32xf32, #tpu.memory_space<vmem>>, vector<1x1x32xf32>
    %335 = vector.shape_cast %334 : vector<1x1x32xf32> to vector<1x32xf32>
    %336 = vector.shape_cast %335 : vector<1x32xf32> to vector<1x1x32xf32>
    %337 = vector.broadcast %336 : vector<1x1x32xf32> to vector<8x8x32xf32>
    %338 = arith.addf %333, %337 : vector<8x8x32xf32>
    %c0_128 = arith.constant 0 : index
    %c0_129 = arith.constant 0 : index
    %c0_130 = arith.constant 0 : index
    %339 = vector.load %arg27[%c0_128, %c0_129, %c0_130] : memref<8x8x32xf32, #tpu.memory_space<vmem>>, vector<8x8x32xf32>
    tpu.vector_store %arg27[%c0_128, %c0_129, %c0_130], %338 {strides = array<i32>} : memref<8x8x32xf32, #tpu.memory_space<vmem>>, vector<8x8x32xf32>,
    %c1_i32 = arith.constant 1 : i32
    %340 = arith.cmpi eq, %arg1, %c1_i32 : i32
    %341 = arith.extui %340 : i1 to i32
    %c0_i32_131 = arith.constant 0 : i32
    %342 = arith.cmpi ne, %341, %c0_i32_131 : i32
    scf.if %342 {
      %cst_132 = arith.constant dense<0.000000e+00> : vector<8x8xf32>
      %343 = vector.multi_reduction <add>, %338, %cst_132 [2] : vector<8x8x32xf32> to vector<8x8xf32>
      %344 = vector.shape_cast %343 : vector<8x8xf32> to vector<8x8x1xf32>
      %cst_133 = arith.constant 3.200000e+01 : f32
      %345 = vector.broadcast %cst_133 : f32 to vector<8x8x1xf32>
      %346 = arith.divf %344, %345 : vector<8x8x1xf32>
      %347 = vector.broadcast %346 : vector<8x8x1xf32> to vector<8x8x32xf32>
      %348 = arith.subf %338, %347 : vector<8x8x32xf32>
      %349 = arith.mulf %348, %348 : vector<8x8x32xf32>
      %cst_134 = arith.constant dense<0.000000e+00> : vector<8x8xf32>
      %350 = vector.multi_reduction <add>, %349, %cst_134 [2] : vector<8x8x32xf32> to vector<8x8xf32>
      %351 = vector.shape_cast %350 : vector<8x8xf32> to vector<8x8x1xf32>
      %cst_135 = arith.constant 3.200000e+01 : f32
      %352 = vector.broadcast %cst_135 : f32 to vector<8x8x1xf32>
      %353 = arith.divf %351, %352 : vector<8x8x1xf32>
      %354 = vector.broadcast %346 : vector<8x8x1xf32> to vector<8x8x32xf32>
      %355 = arith.subf %338, %354 : vector<8x8x32xf32>
      %cst_136 = arith.constant 9.99999974E-6 : f32
      %356 = vector.broadcast %cst_136 : f32 to vector<8x8x1xf32>
      %357 = arith.addf %353, %356 : vector<8x8x1xf32>
      %358 = math.rsqrt %357 : vector<8x8x1xf32>
      %359 = vector.broadcast %358 : vector<8x8x1xf32> to vector<8x8x32xf32>
      %360 = arith.mulf %355, %359 : vector<8x8x32xf32>
      %c0_137 = arith.constant 0 : index
      %c0_138 = arith.constant 0 : index
      %361 = vector.load %arg24[%c0_137, %c0_138] : memref<1x32xf32, #tpu.memory_space<vmem>>, vector<1x32xf32>
      %362 = vector.shape_cast %361 : vector<1x32xf32> to vector<1x1x32xf32>
      %363 = vector.broadcast %362 : vector<1x1x32xf32> to vector<8x8x32xf32>
      %364 = arith.mulf %360, %363 : vector<8x8x32xf32>
      %c0_139 = arith.constant 0 : index
      %c0_140 = arith.constant 0 : index
      %365 = vector.load %arg25[%c0_139, %c0_140] : memref<1x32xf32, #tpu.memory_space<vmem>>, vector<1x32xf32>
      %366 = vector.shape_cast %365 : vector<1x32xf32> to vector<1x1x32xf32>
      %367 = vector.broadcast %366 : vector<1x1x32xf32> to vector<8x8x32xf32>
      %368 = arith.addf %364, %367 : vector<8x8x32xf32>
      %c0_141 = arith.constant 0 : index
      %c0_142 = arith.constant 0 : index
      %c0_143 = arith.constant 0 : index
      %369 = vector.load %arg26[%c0_141, %c0_142, %c0_143] : memref<8x8x32xf32, #tpu.memory_space<vmem>>, vector<8x8x32xf32>
      tpu.vector_store %arg26[%c0_141, %c0_142, %c0_143], %368 {strides = array<i32>} : memref<8x8x32xf32, #tpu.memory_space<vmem>>, vector<8x8x32xf32>,
    } else {
    }
    return
  }
  func.func @transform_0(%arg0: i32, %arg1: i32) -> (i32, i32, i32) {
    %c0_i32 = arith.constant 0 : i32
    %c0_i32_0 = arith.constant 0 : i32
    %c0_i32_1 = arith.constant 0 : i32
    return %arg0, %c0_i32, %c0_i32_0 : i32, i32, i32
  }
  func.func @transform_1(%arg0: i32, %arg1: i32) -> (i32, i32, i32) {
    %c0_i32 = arith.constant 0 : i32
    %c0_i32_0 = arith.constant 0 : i32
    %c0_i32_1 = arith.constant 0 : i32
    return %arg0, %c0_i32, %c0_i32_0 : i32, i32, i32
  }
  func.func @transform_2(%arg0: i32, %arg1: i32) -> (i32, i32, i32) {
    %c0_i32 = arith.constant 0 : i32
    %c0_i32_0 = arith.constant 0 : i32
    %c0_i32_1 = arith.constant 0 : i32
    return %arg1, %c0_i32, %c0_i32_0 : i32, i32, i32
  }
  func.func @transform_3(%arg0: i32, %arg1: i32) -> (i32, i32, i32) {
    %c0_i32 = arith.constant 0 : i32
    %c0_i32_0 = arith.constant 0 : i32
    %c0_i32_1 = arith.constant 0 : i32
    return %arg1, %c0_i32, %c0_i32_0 : i32, i32, i32
  }
  func.func @transform_4(%arg0: i32, %arg1: i32) -> (i32, i32, i32) {
    %c0_i32 = arith.constant 0 : i32
    %c0_i32_0 = arith.constant 0 : i32
    %c0_i32_1 = arith.constant 0 : i32
    return %arg1, %c0_i32, %c0_i32_0 : i32, i32, i32
  }
  func.func @transform_5(%arg0: i32, %arg1: i32) -> (i32, i32, i32) {
    %c0_i32 = arith.constant 0 : i32
    %c0_i32_0 = arith.constant 0 : i32
    %c0_i32_1 = arith.constant 0 : i32
    return %arg1, %c0_i32, %c0_i32_0 : i32, i32, i32
  }
  func.func @transform_6(%arg0: i32, %arg1: i32) -> (i32, i32, i32) {
    %c0_i32 = arith.constant 0 : i32
    %c0_i32_0 = arith.constant 0 : i32
    %c0_i32_1 = arith.constant 0 : i32
    return %arg1, %c0_i32, %c0_i32_0 : i32, i32, i32
  }
  func.func @transform_7(%arg0: i32, %arg1: i32) -> (i32, i32, i32) {
    %c0_i32 = arith.constant 0 : i32
    %c0_i32_0 = arith.constant 0 : i32
    %c0_i32_1 = arith.constant 0 : i32
    return %arg1, %c0_i32, %c0_i32_0 : i32, i32, i32
  }
  func.func @transform_8(%arg0: i32, %arg1: i32) -> (i32, i32, i32) {
    %c0_i32 = arith.constant 0 : i32
    %c0_i32_0 = arith.constant 0 : i32
    %c0_i32_1 = arith.constant 0 : i32
    return %arg1, %c0_i32, %c0_i32_0 : i32, i32, i32
  }
  func.func @transform_9(%arg0: i32, %arg1: i32) -> (i32, i32, i32) {
    %c0_i32 = arith.constant 0 : i32
    %c0_i32_0 = arith.constant 0 : i32
    %c0_i32_1 = arith.constant 0 : i32
    return %arg1, %c0_i32, %c0_i32_0 : i32, i32, i32
  }
  func.func @transform_10(%arg0: i32, %arg1: i32) -> (i32, i32, i32) {
    %c0_i32 = arith.constant 0 : i32
    %c0_i32_0 = arith.constant 0 : i32
    %c0_i32_1 = arith.constant 0 : i32
    return %arg1, %c0_i32, %c0_i32_0 : i32, i32, i32
  }
  func.func @transform_11(%arg0: i32, %arg1: i32) -> (i32, i32, i32) {
    %c0_i32 = arith.constant 0 : i32
    %c0_i32_0 = arith.constant 0 : i32
    %c0_i32_1 = arith.constant 0 : i32
    return %arg1, %c0_i32, %c0_i32_0 : i32, i32, i32
  }
  func.func @transform_12(%arg0: i32, %arg1: i32) -> (i32, i32, i32) {
    %c0_i32 = arith.constant 0 : i32
    %c0_i32_0 = arith.constant 0 : i32
    %c0_i32_1 = arith.constant 0 : i32
    return %arg1, %c0_i32, %c0_i32_0 : i32, i32, i32
  }
  func.func @transform_13(%arg0: i32, %arg1: i32) -> (i32, i32, i32) {
    %c0_i32 = arith.constant 0 : i32
    %c0_i32_0 = arith.constant 0 : i32
    %c0_i32_1 = arith.constant 0 : i32
    return %arg1, %c0_i32, %c0_i32_0 : i32, i32, i32
  }
  func.func @transform_14(%arg0: i32, %arg1: i32) -> (i32, i32, i32) {
    %c0_i32 = arith.constant 0 : i32
    %c0_i32_0 = arith.constant 0 : i32
    %c0_i32_1 = arith.constant 0 : i32
    return %arg1, %c0_i32, %c0_i32_0 : i32, i32, i32
  }
  func.func @transform_15(%arg0: i32, %arg1: i32) -> (i32, i32, i32) {
    %c0_i32 = arith.constant 0 : i32
    %c0_i32_0 = arith.constant 0 : i32
    %c0_i32_1 = arith.constant 0 : i32
    return %arg1, %c0_i32, %c0_i32_0 : i32, i32, i32
  }
  func.func @transform_16(%arg0: i32, %arg1: i32) -> (i32, i32, i32) {
    %c0_i32 = arith.constant 0 : i32
    %c0_i32_0 = arith.constant 0 : i32
    %c0_i32_1 = arith.constant 0 : i32
    return %arg1, %c0_i32, %c0_i32_0 : i32, i32, i32
  }
  func.func @transform_17(%arg0: i32, %arg1: i32) -> (i32, i32, i32) {
    %c0_i32 = arith.constant 0 : i32
    %c0_i32_0 = arith.constant 0 : i32
    %c0_i32_1 = arith.constant 0 : i32
    return %arg1, %c0_i32, %c0_i32_0 : i32, i32, i32
  }
  func.func @transform_18(%arg0: i32, %arg1: i32) -> (i32, i32, i32) {
    %c0_i32 = arith.constant 0 : i32
    %c0_i32_0 = arith.constant 0 : i32
    %c0_i32_1 = arith.constant 0 : i32
    return %arg1, %c0_i32, %c0_i32_0 : i32, i32, i32
  }
  func.func @transform_19(%arg0: i32, %arg1: i32) -> (i32, i32, i32) {
    %c0_i32 = arith.constant 0 : i32
    %c0_i32_0 = arith.constant 0 : i32
    %c0_i32_1 = arith.constant 0 : i32
    return %arg1, %c0_i32, %c0_i32_0 : i32, i32, i32
  }
  func.func @transform_20(%arg0: i32, %arg1: i32) -> (i32, i32, i32) {
    %c0_i32 = arith.constant 0 : i32
    %c0_i32_0 = arith.constant 0 : i32
    %c0_i32_1 = arith.constant 0 : i32
    return %arg1, %c0_i32, %c0_i32_0 : i32, i32, i32
  }
  func.func @transform_21(%arg0: i32, %arg1: i32) -> (i32, i32, i32) {
    %c0_i32 = arith.constant 0 : i32
    %c0_i32_0 = arith.constant 0 : i32
    %c0_i32_1 = arith.constant 0 : i32
    return %arg1, %c0_i32, %c0_i32_0 : i32, i32, i32
  }
  func.func @transform_22(%arg0: i32, %arg1: i32) -> (i32, i32) {
    %c0_i32 = arith.constant 0 : i32
    %c0_i32_0 = arith.constant 0 : i32
    %c0_i32_1 = arith.constant 0 : i32
    return %c0_i32, %c0_i32_0 : i32, i32
  }
  func.func @transform_23(%arg0: i32, %arg1: i32) -> (i32, i32) {
    %c0_i32 = arith.constant 0 : i32
    %c0_i32_0 = arith.constant 0 : i32
    %c0_i32_1 = arith.constant 0 : i32
    return %c0_i32, %c0_i32_0 : i32, i32
  }
  func.func @transform_24(%arg0: i32, %arg1: i32) -> (i32, i32, i32) {
    %c0_i32 = arith.constant 0 : i32
    %c0_i32_0 = arith.constant 0 : i32
    %c0_i32_1 = arith.constant 0 : i32
    return %arg0, %c0_i32, %c0_i32_0 : i32, i32, i32
  }
}

</mosaic_0001>

<llo_original>
// kernel: transformer_decoder_4d.1
$region0: #{transformer_decoder_4d.1}
  #allocation0 [shape = 'u32[]', space=smem, size = 0x4, offset = 0x4, fixed_abs, tag = 'smem constant byte address 0x4 - core index']
  #allocation1 [shape = 'u32[144,128]{1,0:T(1,128)}', space=vmem, size = 0x12000, scoped, tag = 'internal scratch']
  #allocation2 [shape = 'f32[8,8,32]{2,1,0:T(8,128)}', space=vmem, size = 0x8000, scoped, tag = 'scratch operand']
  %s0 = inlined_call_operand.vmem [shape: f32[8,8,32], index: 0, kind: input, shape index: {}, may-alias: {0,24}]
  %s1 = inlined_call_operand.vmem [shape: bf16[8,16,32], index: 1, kind: input, shape index: {}]
  %s2 = inlined_call_operand.vmem [shape: bf16[2,32,96], index: 2, kind: input, shape index: {}]
  %s3 = inlined_call_operand.vmem [shape: f32[2,1,96], index: 3, kind: input, shape index: {}]
  %s4 = inlined_call_operand.vmem [shape: bf16[2,32,32], index: 4, kind: input, shape index: {}]
  %s5 = inlined_call_operand.vmem [shape: f32[2,1,32], index: 5, kind: input, shape index: {}]
  %s6 = inlined_call_operand.vmem [shape: f32[2,1,32], index: 6, kind: input, shape index: {}]
  %s7 = inlined_call_operand.vmem [shape: f32[2,1,32], index: 7, kind: input, shape index: {}]
  %s8 = inlined_call_operand.vmem [shape: bf16[2,32,32], index: 8, kind: input, shape index: {}]
  %s9 = inlined_call_operand.vmem [shape: f32[2,1,32], index: 9, kind: input, shape index: {}]
  %s10 = inlined_call_operand.vmem [shape: bf16[2,32,64], index: 10, kind: input, shape index: {}]
  %s11 = inlined_call_operand.hbm [shape: f32[2,1,64], index: 11, kind: input, shape index: {}]
  %s12 = inlined_call_operand.vmem [shape: bf16[2,32,32], index: 12, kind: input, shape index: {}]
  %s13 = inlined_call_operand.vmem [shape: f32[2,1,32], index: 13, kind: input, shape index: {}]
  %s14 = inlined_call_operand.vmem [shape: f32[2,1,32], index: 14, kind: input, shape index: {}]
  %s15 = inlined_call_operand.vmem [shape: f32[2,1,32], index: 15, kind: input, shape index: {}]
  %s16 = inlined_call_operand.vmem [shape: bf16[2,32,64], index: 16, kind: input, shape index: {}]
  %s17 = inlined_call_operand.hbm [shape: f32[2,1,64], index: 17, kind: input, shape index: {}]
  %s18 = inlined_call_operand.vmem [shape: bf16[2,64,32], index: 18, kind: input, shape index: {}]
  %s19 = inlined_call_operand.hbm [shape: f32[2,1,32], index: 19, kind: input, shape index: {}]
  %s20 = inlined_call_operand.vmem [shape: f32[2,1,32], index: 20, kind: input, shape index: {}]
  %s21 = inlined_call_operand.vmem [shape: f32[2,1,32], index: 21, kind: input, shape index: {}]
  %s22 = inlined_call_operand.vmem [shape: f32[1,32], index: 22, kind: input, shape index: {}]
  %s23 = inlined_call_operand.vmem [shape: f32[1,32], index: 23, kind: input, shape index: {}]
  %s24 = inlined_call_operand.vmem [shape: f32[8,8,32], index: 24, kind: output, shape index: {}, may-alias: {0,24}]
  %s25 = sld [smem:[#allocation0]]
  $region149: #{transformer_decoder_4d.1} parent=0
    _
  %s27 = ssub.s32 1, %s25
  %s28 = scalar_select 0, %s27, %s25
  $region1: #{transformer_decoder_4d.1} parent=0
    #allocation3 [shape = 'u8[1024]{0}', space=vmem, size = 0x400, scoped, tag = 'input window, operand 11']
    #allocation4 [shape = 's32[2]{0}', space=sflag, size = 0x8, scoped, tag = 'scoped memory for transformer_decoder_4d.1']
    #allocation5 [shape = 'u8[1024]{0}', space=vmem, size = 0x400, scoped, tag = 'input window, operand 17']
    #allocation6 [shape = 's32[2]{0}', space=sflag, size = 0x8, scoped, tag = 'scoped memory for transformer_decoder_4d.1']
    #allocation7 [shape = 'u8[1024]{0}', space=vmem, size = 0x400, scoped, tag = 'input window, operand 19']
    %29 = vsyncpa [#allocation4], 0
    %s30 = scalar_lea.sflag [#allocation4], 1
    %31 = vsyncpa %s30, 0
    %32 = vsyncpa [#allocation6], 0
    %s33 = scalar_lea.sflag [#allocation6], 1
    %34 = vsyncpa %s33, 0
    loop: start=0, step=1, limit=4
    $region2: #{transformer_decoder_4d.1} parent=1 // loop_pre_header
      _
    $region3: #{transformer_decoder_4d.1} parent=1 // loop_header
      %s36 = sphi 0, %s40
      %p37 = scmp.ge.s32.totalorder %s36, 4
      %s43 = sphi 0, %s55
      %s44 = sphi 0, %s51
      %s45 = sphi 0, %s43
      %s46 = sphi 0, %s44
      %s47 = sphi 0, %s45
      %s48 = sphi 0, %s46
      %s58 = sphi 0, %s60
      %s61 = sphi 0, %s58
      %s62 = sphi 0, %s61
      %s78 = sphi 0, %s62
      %s84 = sphi 0, %s86
      %s87 = sphi 0, %s84
      %s88 = sphi 0, %s87
      %s104 = sphi 0, %s88
      %s110 = sphi 0, %s112
      %s113 = sphi 0, %s110
      %s114 = sphi 0, %s113
      %s130 = sphi 0, %s114
      %s136 = sphi 0, %s138
      %s139 = sphi 0, %s136
      %s140 = sphi 0, %s139
      %s156 = sphi 0, %s140
      %s162 = sphi 0, %s164
      %s165 = sphi 0, %s162
      %s166 = sphi 0, %s165
      %s182 = sphi 0, %s166
      %s188 = sphi 0, %s190
      %s191 = sphi 0, %s188
      %s192 = sphi 0, %s191
      %s208 = sphi 0, %s192
      %s214 = sphi 0, %s216
      %s217 = sphi 0, %s214
      %s218 = sphi 0, %s217
      %s234 = sphi 0, %s218
      %s240 = sphi 0, %s242
      %s243 = sphi 0, %s240
      %s244 = sphi 0, %s243
      %s260 = sphi 0, %s244
      %s266 = sphi 0, %s268
      %s269 = sphi 0, %s266
      %s270 = sphi 0, %s269
      %s286 = sphi 0, %s270
      %s292 = sphi 0, %s294
      %s295 = sphi 0, %s292
      %s296 = sphi 0, %s295
      %s312 = sphi 0, %s296
      %s318 = sphi 0, %s320
      %s321 = sphi 0, %s318
      %s322 = sphi 0, %s321
      %s338 = sphi 0, %s322
      %s344 = sphi 0, %s346
      %s347 = sphi 0, %s344
      %s348 = sphi 0, %s347
      %s364 = sphi 0, %s348
      %s370 = sphi 0, %s372
      %s373 = sphi 0, %s370
      %s374 = sphi 0, %s373
      %s390 = sphi 0, %s374
      %s396 = sphi 0, %s398
      %s399 = sphi 0, %s396
      %s400 = sphi 0, %s399
      %s416 = sphi 0, %s400
      %s422 = sphi 0, %s424
      %s425 = sphi 0, %s422
      %s426 = sphi 0, %s425
      %s442 = sphi 0, %s426
      %s448 = sphi 0, %s450
      %s451 = sphi 0, %s448
      %s452 = sphi 0, %s451
      %s468 = sphi 0, %s452
      %s474 = sphi 0, %s476
      %s477 = sphi 0, %s474
      %s478 = sphi 0, %s477
      %s494 = sphi 0, %s478
      %s500 = sphi 0, %s502
      %s503 = sphi 0, %s500
      %s504 = sphi 0, %s503
      %s520 = sphi 0, %s504
      %s526 = sphi 0, %s528
      %s529 = sphi 0, %s526
      %s530 = sphi 0, %s529
      %s546 = sphi 0, %s530
      %s552 = sphi 0, %s554
      %s555 = sphi 0, %s552
      %s556 = sphi 0, %s555
      %s572 = sphi 0, %s556
      %s578 = sphi 0, %s580
      %s581 = sphi 0, %s578
      %s582 = sphi 0, %s581
      %s598 = sphi 0, %s582
      %s604 = sphi 0, %s606
      %s607 = sphi 0, %s604
      %s608 = sphi 0, %s607
      %s624 = sphi 0, %s608
      %s628 = sphi 0, %s628
      %s630 = sphi 0, %s628
      %s631 = sphi 0, %s630
      %s645 = sphi 0, %s631
      %s649 = sphi 0, %s649
      %s651 = sphi 0, %s649
      %s652 = sphi 0, %s651
      %s666 = sphi 0, %s652
      %s672 = sphi 0, %s674
      %s675 = sphi 0, %s672
      %s676 = sphi 0, %s675
      %s692 = sphi 0, %s676
    $region4: #{transformer_decoder_4d.1} parent=1 // loop_header_branch
      %39 = sbr.rel (%p37) target = $region8
    $region5: #{transformer_decoder_4d.1} parent=1 // loop_body
      %s41 = ssub.s32 %s36, 1
      %s42 = ssub.s32 %s36, 2
      %s49 = sadd.s32 1, %s44
      %p50 = scmp.ge.s32.totalorder %s49, 2
      %s51 = scalar_select %p50, 0, %s49
      %s52 = sadd.s32 1, %s43
      %s53 = scalar_select %p50, %s52, %s43
      %p54 = scmp.ge.s32.totalorder %s53, 1
      %s55 = scalar_select %p54, 0, %s53
      %s56 = ssub.s32 %s43, %s55
      %p57 = scmp.eq.s32.totalorder %s56, 0
      %s59 = sadd.s32 %s58, 1
      %s60 = scalar_select %p57, %s58, %s59
      %p63 = pneg %p57
      %p64 = scmp.eq.s32.totalorder %s36, 1
      %p65 = por %p63, %p64
      %p66 = scmp.ne.s32.totalorder %s58, %s61
      %p67 = scmp.eq.s32.totalorder %s36, 0
      %p68 = por %p66, %p67
      %p69 = scmp.ne.s32.totalorder %s58, %s61
      %p70 = scmp.eq.s32.totalorder %s41, 1
      %p71 = por %p69, %p70
      %p72 = scmp.ne.s32.totalorder %s61, %s62
      %p73 = scmp.eq.s32.totalorder %s41, 0
      %p74 = por %p72, %p73
      %p75 = scmp.ne.s32.totalorder %s61, %s62
      %p76 = scmp.eq.s32.totalorder %s42, 1
      %p77 = por %p75, %p76
      %p79 = scmp.ne.s32.totalorder %s62, %s78
      %p80 = scmp.eq.s32.totalorder %s42, 0
      %p81 = por %p79, %p80
      %s82 = ssub.s32 %s43, %s55
      %p83 = scmp.eq.s32.totalorder %s82, 0
      %s85 = sadd.s32 %s84, 1
      %s86 = scalar_select %p83, %s84, %s85
      %p89 = pneg %p83
      %p90 = scmp.eq.s32.totalorder %s36, 1
      %p91 = por %p89, %p90
      %p92 = scmp.ne.s32.totalorder %s84, %s87
      %p93 = scmp.eq.s32.totalorder %s36, 0
      %p94 = por %p92, %p93
      %p95 = scmp.ne.s32.totalorder %s84, %s87
      %p96 = scmp.eq.s32.totalorder %s41, 1
      %p97 = por %p95, %p96
      %p98 = scmp.ne.s32.totalorder %s87, %s88
      %p99 = scmp.eq.s32.totalorder %s41, 0
      %p100 = por %p98, %p99
      %p101 = scmp.ne.s32.totalorder %s87, %s88
      %p102 = scmp.eq.s32.totalorder %s42, 1
      %p103 = por %p101, %p102
      %p105 = scmp.ne.s32.totalorder %s88, %s104
      %p106 = scmp.eq.s32.totalorder %s42, 0
      %p107 = por %p105, %p106
      %s108 = ssub.s32 %s44, %s51
      %p109 = scmp.eq.s32.totalorder %s108, 0
      %s111 = sadd.s32 %s110, 1
      %s112 = scalar_select %p109, %s110, %s111
      %p115 = pneg %p109
      %p116 = scmp.eq.s32.totalorder %s36, 1
      %p117 = por %p115, %p116
      %p118 = scmp.ne.s32.totalorder %s110, %s113
      %p119 = scmp.eq.s32.totalorder %s36, 0
      %p120 = por %p118, %p119
      %p121 = scmp.ne.s32.totalorder %s110, %s113
      %p122 = scmp.eq.s32.totalorder %s41, 1
      %p123 = por %p121, %p122
      %p124 = scmp.ne.s32.totalorder %s113, %s114
      %p125 = scmp.eq.s32.totalorder %s41, 0
      %p126 = por %p124, %p125
      %p127 = scmp.ne.s32.totalorder %s113, %s114
      %p128 = scmp.eq.s32.totalorder %s42, 1
      %p129 = por %p127, %p128
      %p131 = scmp.ne.s32.totalorder %s114, %s130
      %p132 = scmp.eq.s32.totalorder %s42, 0
      %p133 = por %p131, %p132
      %s134 = ssub.s32 %s44, %s51
      %p135 = scmp.eq.s32.totalorder %s134, 0
      %s137 = sadd.s32 %s136, 1
      %s138 = scalar_select %p135, %s136, %s137
      %p141 = pneg %p135
      %p142 = scmp.eq.s32.totalorder %s36, 1
      %p143 = por %p141, %p142
      %p144 = scmp.ne.s32.totalorder %s136, %s139
      %p145 = scmp.eq.s32.totalorder %s36, 0
      %p146 = por %p144, %p145
      %p147 = scmp.ne.s32.totalorder %s136, %s139
      %p148 = scmp.eq.s32.totalorder %s41, 1
      %p149 = por %p147, %p148
      %p150 = scmp.ne.s32.totalorder %s139, %s140
      %p151 = scmp.eq.s32.totalorder %s41, 0
      %p152 = por %p150, %p151
      %p153 = scmp.ne.s32.totalorder %s139, %s140
      %p154 = scmp.eq.s32.totalorder %s42, 1
      %p155 = por %p153, %p154
      %p157 = scmp.ne.s32.totalorder %s140, %s156
      %p158 = scmp.eq.s32.totalorder %s42, 0
      %p159 = por %p157, %p158
      %s160 = ssub.s32 %s44, %s51
      %p161 = scmp.eq.s32.totalorder %s160, 0
      %s163 = sadd.s32 %s162, 1
      %s164 = scalar_select %p161, %s162, %s163
      %p167 = pneg %p161
      %p168 = scmp.eq.s32.totalorder %s36, 1
      %p169 = por %p167, %p168
      %p170 = scmp.ne.s32.totalorder %s162, %s165
      %p171 = scmp.eq.s32.totalorder %s36, 0
      %p172 = por %p170, %p171
      %p173 = scmp.ne.s32.totalorder %s162, %s165
      %p174 = scmp.eq.s32.totalorder %s41, 1
      %p175 = por %p173, %p174
      %p176 = scmp.ne.s32.totalorder %s165, %s166
      %p177 = scmp.eq.s32.totalorder %s41, 0
      %p178 = por %p176, %p177
      %p179 = scmp.ne.s32.totalorder %s165, %s166
      %p180 = scmp.eq.s32.totalorder %s42, 1
      %p181 = por %p179, %p180
      %p183 = scmp.ne.s32.totalorder %s166, %s182
      %p184 = scmp.eq.s32.totalorder %s42, 0
      %p185 = por %p183, %p184
      %s186 = ssub.s32 %s44, %s51
      %p187 = scmp.eq.s32.totalorder %s186, 0
      %s189 = sadd.s32 %s188, 1
      %s190 = scalar_select %p187, %s188, %s189
      %p193 = pneg %p187
      %p194 = scmp.eq.s32.totalorder %s36, 1
      %p195 = por %p193, %p194
      %p196 = scmp.ne.s32.totalorder %s188, %s191
      %p197 = scmp.eq.s32.totalorder %s36, 0
      %p198 = por %p196, %p197
      %p199 = scmp.ne.s32.totalorder %s188, %s191
      %p200 = scmp.eq.s32.totalorder %s41, 1
      %p201 = por %p199, %p200
      %p202 = scmp.ne.s32.totalorder %s191, %s192
      %p203 = scmp.eq.s32.totalorder %s41, 0
      %p204 = por %p202, %p203
      %p205 = scmp.ne.s32.totalorder %s191, %s192
      %p206 = scmp.eq.s32.totalorder %s42, 1
      %p207 = por %p205, %p206
      %p209 = scmp.ne.s32.totalorder %s192, %s208
      %p210 = scmp.eq.s32.totalorder %s42, 0
      %p211 = por %p209, %p210
      %s212 = ssub.s32 %s44, %s51
      %p213 = scmp.eq.s32.totalorder %s212, 0
      %s215 = sadd.s32 %s214, 1
      %s216 = scalar_select %p213, %s214, %s215
      %p219 = pneg %p213
      %p220 = scmp.eq.s32.totalorder %s36, 1
      %p221 = por %p219, %p220
      %p222 = scmp.ne.s32.totalorder %s214, %s217
      %p223 = scmp.eq.s32.totalorder %s36, 0
      %p224 = por %p222, %p223
      %p225 = scmp.ne.s32.totalorder %s214, %s217
      %p226 = scmp.eq.s32.totalorder %s41, 1
      %p227 = por %p225, %p226
      %p228 = scmp.ne.s32.totalorder %s217, %s218
      %p229 = scmp.eq.s32.totalorder %s41, 0
      %p230 = por %p228, %p229
      %p231 = scmp.ne.s32.totalorder %s217, %s218
      %p232 = scmp.eq.s32.totalorder %s42, 1
      %p233 = por %p231, %p232
      %p235 = scmp.ne.s32.totalorder %s218, %s234
      %p236 = scmp.eq.s32.totalorder %s42, 0
      %p237 = por %p235, %p236
      %s238 = ssub.s32 %s44, %s51
      %p239 = scmp.eq.s32.totalorder %s238, 0
      %s241 = sadd.s32 %s240, 1
      %s242 = scalar_select %p239, %s240, %s241
      %p245 = pneg %p239
      %p246 = scmp.eq.s32.totalorder %s36, 1
      %p247 = por %p245, %p246
      %p248 = scmp.ne.s32.totalorder %s240, %s243
      %p249 = scmp.eq.s32.totalorder %s36, 0
      %p250 = por %p248, %p249
      %p251 = scmp.ne.s32.totalorder %s240, %s243
      %p252 = scmp.eq.s32.totalorder %s41, 1
      %p253 = por %p251, %p252
      %p254 = scmp.ne.s32.totalorder %s243, %s244
      %p255 = scmp.eq.s32.totalorder %s41, 0
      %p256 = por %p254, %p255
      %p257 = scmp.ne.s32.totalorder %s243, %s244
      %p258 = scmp.eq.s32.totalorder %s42, 1
      %p259 = por %p257, %p258
      %p261 = scmp.ne.s32.totalorder %s244, %s260
      %p262 = scmp.eq.s32.totalorder %s42, 0
      %p263 = por %p261, %p262
      %s264 = ssub.s32 %s44, %s51
      %p265 = scmp.eq.s32.totalorder %s264, 0
      %s267 = sadd.s32 %s266, 1
      %s268 = scalar_select %p265, %s266, %s267
      %p271 = pneg %p265
      %p272 = scmp.eq.s32.totalorder %s36, 1
      %p273 = por %p271, %p272
      %p274 = scmp.ne.s32.totalorder %s266, %s269
      %p275 = scmp.eq.s32.totalorder %s36, 0
      %p276 = por %p274, %p275
      %p277 = scmp.ne.s32.totalorder %s266, %s269
      %p278 = scmp.eq.s32.totalorder %s41, 1
      %p279 = por %p277, %p278
      %p280 = scmp.ne.s32.totalorder %s269, %s270
      %p281 = scmp.eq.s32.totalorder %s41, 0
      %p282 = por %p280, %p281
      %p283 = scmp.ne.s32.totalorder %s269, %s270
      %p284 = scmp.eq.s32.totalorder %s42, 1
      %p285 = por %p283, %p284
      %p287 = scmp.ne.s32.totalorder %s270, %s286
      %p288 = scmp.eq.s32.totalorder %s42, 0
      %p289 = por %p287, %p288
      %s290 = ssub.s32 %s44, %s51
      %p291 = scmp.eq.s32.totalorder %s290, 0
      %s293 = sadd.s32 %s292, 1
      %s294 = scalar_select %p291, %s292, %s293
      %p297 = pneg %p291
      %p298 = scmp.eq.s32.totalorder %s36, 1
      %p299 = por %p297, %p298
      %p300 = scmp.ne.s32.totalorder %s292, %s295
      %p301 = scmp.eq.s32.totalorder %s36, 0
      %p302 = por %p300, %p301
      %p303 = scmp.ne.s32.totalorder %s292, %s295
      %p304 = scmp.eq.s32.totalorder %s41, 1
      %p305 = por %p303, %p304
      %p306 = scmp.ne.s32.totalorder %s295, %s296
      %p307 = scmp.eq.s32.totalorder %s41, 0
      %p308 = por %p306, %p307
      %p309 = scmp.ne.s32.totalorder %s295, %s296
      %p310 = scmp.eq.s32.totalorder %s42, 1
      %p311 = por %p309, %p310
      %p313 = scmp.ne.s32.totalorder %s296, %s312
      %p314 = scmp.eq.s32.totalorder %s42, 0
      %p315 = por %p313, %p314
      %s316 = ssub.s32 %s44, %s51
      %p317 = scmp.eq.s32.totalorder %s316, 0
      %s319 = sadd.s32 %s318, 1
      %s320 = scalar_select %p317, %s318, %s319
      %p323 = pneg %p317
      %p324 = scmp.eq.s32.totalorder %s36, 1
      %p325 = por %p323, %p324
      %p326 = scmp.ne.s32.totalorder %s318, %s321
      %p327 = scmp.eq.s32.totalorder %s36, 0
      %p328 = por %p326, %p327
      %p329 = scmp.ne.s32.totalorder %s318, %s321
      %p330 = scmp.eq.s32.totalorder %s41, 1
      %p331 = por %p329, %p330
      %p332 = scmp.ne.s32.totalorder %s321, %s322
      %p333 = scmp.eq.s32.totalorder %s41, 0
      %p334 = por %p332, %p333
      %p335 = scmp.ne.s32.totalorder %s321, %s322
      %p336 = scmp.eq.s32.totalorder %s42, 1
      %p337 = por %p335, %p336
      %p339 = scmp.ne.s32.totalorder %s322, %s338
      %p340 = scmp.eq.s32.totalorder %s42, 0
      %p341 = por %p339, %p340
      %s342 = ssub.s32 %s44, %s51
      %p343 = scmp.eq.s32.totalorder %s342, 0
      %s345 = sadd.s32 %s344, 1
      %s346 = scalar_select %p343, %s344, %s345
      %p349 = pneg %p343
      %p350 = scmp.eq.s32.totalorder %s36, 1
      %p351 = por %p349, %p350
      %p352 = scmp.ne.s32.totalorder %s344, %s347
      %p353 = scmp.eq.s32.totalorder %s36, 0
      %p354 = por %p352, %p353
      %p355 = scmp.ne.s32.totalorder %s344, %s347
      %p356 = scmp.eq.s32.totalorder %s41, 1
      %p357 = por %p355, %p356
      %p358 = scmp.ne.s32.totalorder %s347, %s348
      %p359 = scmp.eq.s32.totalorder %s41, 0
      %p360 = por %p358, %p359
      %p361 = scmp.ne.s32.totalorder %s347, %s348
      %p362 = scmp.eq.s32.totalorder %s42, 1
      %p363 = por %p361, %p362
      %p365 = scmp.ne.s32.totalorder %s348, %s364
      %p366 = scmp.eq.s32.totalorder %s42, 0
      %p367 = por %p365, %p366
      %s368 = ssub.s32 %s44, %s51
      %p369 = scmp.eq.s32.totalorder %s368, 0
      %s371 = sadd.s32 %s370, 1
      %s372 = scalar_select %p369, %s370, %s371
      %p375 = pneg %p369
      %p376 = scmp.eq.s32.totalorder %s36, 1
      %p377 = por %p375, %p376
      %p378 = scmp.ne.s32.totalorder %s370, %s373
      %p379 = scmp.eq.s32.totalorder %s36, 0
      %p380 = por %p378, %p379
      %p381 = scmp.ne.s32.totalorder %s370, %s373
      %p382 = scmp.eq.s32.totalorder %s41, 1
      %p383 = por %p381, %p382
      %p384 = scmp.ne.s32.totalorder %s373, %s374
      %p385 = scmp.eq.s32.totalorder %s41, 0
      %p386 = por %p384, %p385
      %p387 = scmp.ne.s32.totalorder %s373, %s374
      %p388 = scmp.eq.s32.totalorder %s42, 1
      %p389 = por %p387, %p388
      %p391 = scmp.ne.s32.totalorder %s374, %s390
      %p392 = scmp.eq.s32.totalorder %s42, 0
      %p393 = por %p391, %p392
      %s394 = ssub.s32 %s44, %s51
      %p395 = scmp.eq.s32.totalorder %s394, 0
      %s397 = sadd.s32 %s396, 1
      %s398 = scalar_select %p395, %s396, %s397
      %p401 = pneg %p395
      %p402 = scmp.eq.s32.totalorder %s36, 1
      %p403 = por %p401, %p402
      %p404 = scmp.ne.s32.totalorder %s396, %s399
      %p405 = scmp.eq.s32.totalorder %s36, 0
      %p406 = por %p404, %p405
      %p407 = scmp.ne.s32.totalorder %s396, %s399
      %p408 = scmp.eq.s32.totalorder %s41, 1
      %p409 = por %p407, %p408
      %p410 = scmp.ne.s32.totalorder %s399, %s400
      %p411 = scmp.eq.s32.totalorder %s41, 0
      %p412 = por %p410, %p411
      %p413 = scmp.ne.s32.totalorder %s399, %s400
      %p414 = scmp.eq.s32.totalorder %s42, 1
      %p415 = por %p413, %p414
      %p417 = scmp.ne.s32.totalorder %s400, %s416
      %p418 = scmp.eq.s32.totalorder %s42, 0
      %p419 = por %p417, %p418
      %s420 = ssub.s32 %s44, %s51
      %p421 = scmp.eq.s32.totalorder %s420, 0
      %s423 = sadd.s32 %s422, 1
      %s424 = scalar_select %p421, %s422, %s423
      %p427 = pneg %p421
      %p428 = scmp.eq.s32.totalorder %s36, 1
      %p429 = por %p427, %p428
      %p430 = scmp.ne.s32.totalorder %s422, %s425
      %p431 = scmp.eq.s32.totalorder %s36, 0
      %p432 = por %p430, %p431
      %p433 = scmp.ne.s32.totalorder %s422, %s425
      %p434 = scmp.eq.s32.totalorder %s41, 1
      %p435 = por %p433, %p434
      %p436 = scmp.ne.s32.totalorder %s425, %s426
      %p437 = scmp.eq.s32.totalorder %s41, 0
      %p438 = por %p436, %p437
      %p439 = scmp.ne.s32.totalorder %s425, %s426
      %p440 = scmp.eq.s32.totalorder %s42, 1
      %p441 = por %p439, %p440
      %p443 = scmp.ne.s32.totalorder %s426, %s442
      %p444 = scmp.eq.s32.totalorder %s42, 0
      %p445 = por %p443, %p444
      %s446 = ssub.s32 %s44, %s51
      %p447 = scmp.eq.s32.totalorder %s446, 0
      %s449 = sadd.s32 %s448, 1
      %s450 = scalar_select %p447, %s448, %s449
      %p453 = pneg %p447
      %p454 = scmp.eq.s32.totalorder %s36, 1
      %p455 = por %p453, %p454
      %p456 = scmp.ne.s32.totalorder %s448, %s451
      %p457 = scmp.eq.s32.totalorder %s36, 0
      %p458 = por %p456, %p457
      %p459 = scmp.ne.s32.totalorder %s448, %s451
      %p460 = scmp.eq.s32.totalorder %s41, 1
      %p461 = por %p459, %p460
      %p462 = scmp.ne.s32.totalorder %s451, %s452
      %p463 = scmp.eq.s32.totalorder %s41, 0
      %p464 = por %p462, %p463
      %p465 = scmp.ne.s32.totalorder %s451, %s452
      %p466 = scmp.eq.s32.totalorder %s42, 1
      %p467 = por %p465, %p466
      %p469 = scmp.ne.s32.totalorder %s452, %s468
      %p470 = scmp.eq.s32.totalorder %s42, 0
      %p471 = por %p469, %p470
      %s472 = ssub.s32 %s44, %s51
      %p473 = scmp.eq.s32.totalorder %s472, 0
      %s475 = sadd.s32 %s474, 1
      %s476 = scalar_select %p473, %s474, %s475
      %p479 = pneg %p473
      %p480 = scmp.eq.s32.totalorder %s36, 1
      %p481 = por %p479, %p480
      %p482 = scmp.ne.s32.totalorder %s474, %s477
      %p483 = scmp.eq.s32.totalorder %s36, 0
      %p484 = por %p482, %p483
      %p485 = scmp.ne.s32.totalorder %s474, %s477
      %p486 = scmp.eq.s32.totalorder %s41, 1
      %p487 = por %p485, %p486
      %p488 = scmp.ne.s32.totalorder %s477, %s478
      %p489 = scmp.eq.s32.totalorder %s41, 0
      %p490 = por %p488, %p489
      %p491 = scmp.ne.s32.totalorder %s477, %s478
      %p492 = scmp.eq.s32.totalorder %s42, 1
      %p493 = por %p491, %p492
      %p495 = scmp.ne.s32.totalorder %s478, %s494
      %p496 = scmp.eq.s32.totalorder %s42, 0
      %p497 = por %p495, %p496
      %s498 = ssub.s32 %s44, %s51
      %p499 = scmp.eq.s32.totalorder %s498, 0
      %s501 = sadd.s32 %s500, 1
      %s502 = scalar_select %p499, %s500, %s501
      %p505 = pneg %p499
      %p506 = scmp.eq.s32.totalorder %s36, 1
      %p507 = por %p505, %p506
      %p508 = scmp.ne.s32.totalorder %s500, %s503
      %p509 = scmp.eq.s32.totalorder %s36, 0
      %p510 = por %p508, %p509
      %p511 = scmp.ne.s32.totalorder %s500, %s503
      %p512 = scmp.eq.s32.totalorder %s41, 1
      %p513 = por %p511, %p512
      %p514 = scmp.ne.s32.totalorder %s503, %s504
      %p515 = scmp.eq.s32.totalorder %s41, 0
      %p516 = por %p514, %p515
      %p517 = scmp.ne.s32.totalorder %s503, %s504
      %p518 = scmp.eq.s32.totalorder %s42, 1
      %p519 = por %p517, %p518
      %p521 = scmp.ne.s32.totalorder %s504, %s520
      %p522 = scmp.eq.s32.totalorder %s42, 0
      %p523 = por %p521, %p522
      %s524 = ssub.s32 %s44, %s51
      %p525 = scmp.eq.s32.totalorder %s524, 0
      %s527 = sadd.s32 %s526, 1
      %s528 = scalar_select %p525, %s526, %s527
      %p531 = pneg %p525
      %p532 = scmp.eq.s32.totalorder %s36, 1
      %p533 = por %p531, %p532
      %p534 = scmp.ne.s32.totalorder %s526, %s529
      %p535 = scmp.eq.s32.totalorder %s36, 0
      %p536 = por %p534, %p535
      %p537 = scmp.ne.s32.totalorder %s526, %s529
      %p538 = scmp.eq.s32.totalorder %s41, 1
      %p539 = por %p537, %p538
      %p540 = scmp.ne.s32.totalorder %s529, %s530
      %p541 = scmp.eq.s32.totalorder %s41, 0
      %p542 = por %p540, %p541
      %p543 = scmp.ne.s32.totalorder %s529, %s530
      %p544 = scmp.eq.s32.totalorder %s42, 1
      %p545 = por %p543, %p544
      %p547 = scmp.ne.s32.totalorder %s530, %s546
      %p548 = scmp.eq.s32.totalorder %s42, 0
      %p549 = por %p547, %p548
      %s550 = ssub.s32 %s44, %s51
      %p551 = scmp.eq.s32.totalorder %s550, 0
      %s553 = sadd.s32 %s552, 1
      %s554 = scalar_select %p551, %s552, %s553
      %p557 = pneg %p551
      %p558 = scmp.eq.s32.totalorder %s36, 1
      %p559 = por %p557, %p558
      %p560 = scmp.ne.s32.totalorder %s552, %s555
      %p561 = scmp.eq.s32.totalorder %s36, 0
      %p562 = por %p560, %p561
      %p563 = scmp.ne.s32.totalorder %s552, %s555
      %p564 = scmp.eq.s32.totalorder %s41, 1
      %p565 = por %p563, %p564
      %p566 = scmp.ne.s32.totalorder %s555, %s556
      %p567 = scmp.eq.s32.totalorder %s41, 0
      %p568 = por %p566, %p567
      %p569 = scmp.ne.s32.totalorder %s555, %s556
      %p570 = scmp.eq.s32.totalorder %s42, 1
      %p571 = por %p569, %p570
      %p573 = scmp.ne.s32.totalorder %s556, %s572
      %p574 = scmp.eq.s32.totalorder %s42, 0
      %p575 = por %p573, %p574
      %s576 = ssub.s32 %s44, %s51
      %p577 = scmp.eq.s32.totalorder %s576, 0
      %s579 = sadd.s32 %s578, 1
      %s580 = scalar_select %p577, %s578, %s579
      %p583 = pneg %p577
      %p584 = scmp.eq.s32.totalorder %s36, 1
      %p585 = por %p583, %p584
      %p586 = scmp.ne.s32.totalorder %s578, %s581
      %p587 = scmp.eq.s32.totalorder %s36, 0
      %p588 = por %p586, %p587
      %p589 = scmp.ne.s32.totalorder %s578, %s581
      %p590 = scmp.eq.s32.totalorder %s41, 1
      %p591 = por %p589, %p590
      %p592 = scmp.ne.s32.totalorder %s581, %s582
      %p593 = scmp.eq.s32.totalorder %s41, 0
      %p594 = por %p592, %p593
      %p595 = scmp.ne.s32.totalorder %s581, %s582
      %p596 = scmp.eq.s32.totalorder %s42, 1
      %p597 = por %p595, %p596
      %p599 = scmp.ne.s32.totalorder %s582, %s598
      %p600 = scmp.eq.s32.totalorder %s42, 0
      %p601 = por %p599, %p600
      %s602 = ssub.s32 %s44, %s51
      %p603 = scmp.eq.s32.totalorder %s602, 0
      %s605 = sadd.s32 %s604, 1
      %s606 = scalar_select %p603, %s604, %s605
      %p609 = pneg %p603
      %p610 = scmp.eq.s32.totalorder %s36, 1
      %p611 = por %p609, %p610
      %p612 = scmp.ne.s32.totalorder %s604, %s607
      %p613 = scmp.eq.s32.totalorder %s36, 0
      %p614 = por %p612, %p613
      %p615 = scmp.ne.s32.totalorder %s604, %s607
      %p616 = scmp.eq.s32.totalorder %s41, 1
      %p617 = por %p615, %p616
      %p618 = scmp.ne.s32.totalorder %s607, %s608
      %p619 = scmp.eq.s32.totalorder %s41, 0
      %p620 = por %p618, %p619
      %p621 = scmp.ne.s32.totalorder %s607, %s608
      %p622 = scmp.eq.s32.totalorder %s42, 1
      %p623 = por %p621, %p622
      %p625 = scmp.ne.s32.totalorder %s608, %s624
      %p626 = scmp.eq.s32.totalorder %s42, 0
      %p627 = por %p625, %p626
      %s629 = sadd.s32 %s628, 1
      %p632 = scmp.eq.s32.totalorder %s36, 1
      %p633 = scmp.ne.s32.totalorder %s628, %s630
      %p634 = scmp.eq.s32.totalorder %s36, 0
      %p635 = por %p633, %p634
      %p636 = scmp.ne.s32.totalorder %s628, %s630
      %p637 = scmp.eq.s32.totalorder %s41, 1
      %p638 = por %p636, %p637
      %p639 = scmp.ne.s32.totalorder %s630, %s631
      %p640 = scmp.eq.s32.totalorder %s41, 0
      %p641 = por %p639, %p640
      %p642 = scmp.ne.s32.totalorder %s630, %s631
      %p643 = scmp.eq.s32.totalorder %s42, 1
      %p644 = por %p642, %p643
      %p646 = scmp.ne.s32.totalorder %s631, %s645
      %p647 = scmp.eq.s32.totalorder %s42, 0
      %p648 = por %p646, %p647
      %s650 = sadd.s32 %s649, 1
      %p653 = scmp.eq.s32.totalorder %s36, 1
      %p654 = scmp.ne.s32.totalorder %s649, %s651
      %p655 = scmp.eq.s32.totalorder %s36, 0
      %p656 = por %p654, %p655
      %p657 = scmp.ne.s32.totalorder %s649, %s651
      %p658 = scmp.eq.s32.totalorder %s41, 1
      %p659 = por %p657, %p658
      %p660 = scmp.ne.s32.totalorder %s651, %s652
      %p661 = scmp.eq.s32.totalorder %s41, 0
      %p662 = por %p660, %p661
      %p663 = scmp.ne.s32.totalorder %s651, %s652
      %p664 = scmp.eq.s32.totalorder %s42, 1
      %p665 = por %p663, %p664
      %p667 = scmp.ne.s32.totalorder %s652, %s666
      %p668 = scmp.eq.s32.totalorder %s42, 0
      %p669 = por %p667, %p668
      %s670 = ssub.s32 %s43, %s55
      %p671 = scmp.eq.s32.totalorder %s670, 0
      %s673 = sadd.s32 %s672, 1
      %s674 = scalar_select %p671, %s672, %s673
      %p677 = pneg %p671
      %p678 = scmp.eq.s32.totalorder %s36, 1
      %p679 = por %p677, %p678
      %p680 = scmp.ne.s32.totalorder %s672, %s675
      %p681 = scmp.eq.s32.totalorder %s36, 0
      %p682 = por %p680, %p681
      %p683 = scmp.ne.s32.totalorder %s672, %s675
      %p684 = scmp.eq.s32.totalorder %s41, 1
      %p685 = por %p683, %p684
      %p686 = scmp.ne.s32.totalorder %s675, %s676
      %p687 = scmp.eq.s32.totalorder %s41, 0
      %p688 = por %p686, %p687
      %p689 = scmp.ne.s32.totalorder %s675, %s676
      %p690 = scmp.eq.s32.totalorder %s42, 1
      %p691 = por %p689, %p690
      %p693 = scmp.ne.s32.totalorder %s676, %s692
      %p694 = scmp.eq.s32.totalorder %s42, 0
      %p695 = por %p693, %p694
      %p696 = scmp.le.s32.totalorder 1, %s36
      %p697 = scmp.lt.s32.totalorder %s36, 3
      %p698 = pnand %p696, %p697
      %p699 = pneg %p698
      // Predicated region
      $region9: #{transformer_decoder_4d.1} parent=5 // pred_check
        _
      $region10: #{transformer_decoder_4d.1} parent=5 // pred_check_branch
        %701 = sbr.rel (%p698) target = $region12
      $region11: #{transformer_decoder_4d.1} parent=5 // pred_region
        %s702 = ssub.s32 %s36, 1
        // Predicated region
        $region13: #{transformer_decoder_4d.1} parent=11 // pred_check
          %p703 = pneg %p74
        $region14: #{transformer_decoder_4d.1} parent=11 // pred_check_branch
          %705 = sbr.rel (%p703) target = $region16
        $region15: #{transformer_decoder_4d.1} parent=11 // pred_region
          %s706 = smul.u32 8, %s45
          %p707 = scmp.lt.s32.totalorder %s706, 7
          %s708 = scalar_select %p707, %s706, 7
          %s709 = smul.addr %s708, 8
          %s710 = scalar_lea.vmem %s0, %s709
          %s711 = smul.u32 8, %s45
        $region16: #{transformer_decoder_4d.1} parent=11 // pred_fallthru
          _
        // Predicated region
        $region17: #{transformer_decoder_4d.1} parent=11 // pred_check
          %p712 = pneg %p100
        $region18: #{transformer_decoder_4d.1} parent=11 // pred_check_branch
          %714 = sbr.rel (%p712) target = $region20
        $region19: #{transformer_decoder_4d.1} parent=11 // pred_region
          %s715 = smul.u32 8, %s45
          %p716 = scmp.lt.s32.totalorder %s715, 7
          %s717 = scalar_select %p716, %s715, 7
          %s718 = smul.addr %s717, 2
          %s719 = smul.addr %s718, 4
          %s720 = scalar_lea.vmem %s1, %s719
          %s721 = smul.u32 8, %s45
        $region20: #{transformer_decoder_4d.1} parent=11 // pred_fallthru
          _
        // Predicated region
        $region21: #{transformer_decoder_4d.1} parent=11 // pred_check
          %p722 = pneg %p641
        $region22: #{transformer_decoder_4d.1} parent=11 // pred_check_branch
          %724 = sbr.rel (%p722) target = $region24
        $region23: #{transformer_decoder_4d.1} parent=11 // pred_region
          _
        $region24: #{transformer_decoder_4d.1} parent=11 // pred_fallthru
          _
        // Predicated region
        $region25: #{transformer_decoder_4d.1} parent=11 // pred_check
          %p725 = pneg %p662
        $region26: #{transformer_decoder_4d.1} parent=11 // pred_check_branch
          %727 = sbr.rel (%p725) target = $region28
        $region27: #{transformer_decoder_4d.1} parent=11 // pred_region
          _
        $region28: #{transformer_decoder_4d.1} parent=11 // pred_fallthru
          _
      $region12: #{transformer_decoder_4d.1} parent=5 // pred_fallthru
        _
      %p728 = scmp.lt.s32.totalorder %s36, 2
      // Predicated region
      $region29: #{transformer_decoder_4d.1} parent=5 // pred_check
        %p729 = pneg %p728
      $region30: #{transformer_decoder_4d.1} parent=5 // pred_check_branch
        %731 = sbr.rel (%p729) target = $region32
      $region31: #{transformer_decoder_4d.1} parent=5 // pred_region
        // Predicated region
        $region33: #{transformer_decoder_4d.1} parent=31 // pred_check
          %p732 = pneg %p120
        $region34: #{transformer_decoder_4d.1} parent=31 // pred_check_branch
          %734 = sbr.rel (%p732) target = $region36
        $region35: #{transformer_decoder_4d.1} parent=31 // pred_region
          %p735 = scmp.lt.s32.totalorder %s44, 1
          %s736 = scalar_select %p735, %s44, 1
          %s737 = smul.addr %s736, 4
          %s738 = smul.addr %s737, 4
          %s739 = scalar_lea.vmem %s2, %s738
        $region36: #{transformer_decoder_4d.1} parent=31 // pred_fallthru
          _
        // Predicated region
        $region37: #{transformer_decoder_4d.1} parent=31 // pred_check
          %p740 = pneg %p146
        $region38: #{transformer_decoder_4d.1} parent=31 // pred_check_branch
          %742 = sbr.rel (%p740) target = $region40
        $region39: #{transformer_decoder_4d.1} parent=31 // pred_region
          %p743 = scmp.lt.s32.totalorder %s44, 1
          %s744 = scalar_select %p743, %s44, 1
          %s745 = scalar_lea.vmem %s3, %s744
        $region40: #{transformer_decoder_4d.1} parent=31 // pred_fallthru
          _
        // Predicated region
        $region41: #{transformer_decoder_4d.1} parent=31 // pred_check
          %p746 = pneg %p172
        $region42: #{transformer_decoder_4d.1} parent=31 // pred_check_branch
          %748 = sbr.rel (%p746) target = $region44
        $region43: #{transformer_decoder_4d.1} parent=31 // pred_region
          %p749 = scmp.lt.s32.totalorder %s44, 1
          %s750 = scalar_select %p749, %s44, 1
          %s751 = smul.addr %s750, 4
          %s752 = smul.addr %s751, 4
          %s753 = scalar_lea.vmem %s4, %s752
        $region44: #{transformer_decoder_4d.1} parent=31 // pred_fallthru
          _
        // Predicated region
        $region45: #{transformer_decoder_4d.1} parent=31 // pred_check
          %p754 = pneg %p198
        $region46: #{transformer_decoder_4d.1} parent=31 // pred_check_branch
          %756 = sbr.rel (%p754) target = $region48
        $region47: #{transformer_decoder_4d.1} parent=31 // pred_region
          %p757 = scmp.lt.s32.totalorder %s44, 1
          %s758 = scalar_select %p757, %s44, 1
          %s759 = scalar_lea.vmem %s5, %s758
        $region48: #{transformer_decoder_4d.1} parent=31 // pred_fallthru
          _
        // Predicated region
        $region49: #{transformer_decoder_4d.1} parent=31 // pred_check
          %p760 = pneg %p224
        $region50: #{transformer_decoder_4d.1} parent=31 // pred_check_branch
          %762 = sbr.rel (%p760) target = $region52
        $region51: #{transformer_decoder_4d.1} parent=31 // pred_region
          %p763 = scmp.lt.s32.totalorder %s44, 1
          %s764 = scalar_select %p763, %s44, 1
          %s765 = scalar_lea.vmem %s6, %s764
        $region52: #{transformer_decoder_4d.1} parent=31 // pred_fallthru
          _
        // Predicated region
        $region53: #{transformer_decoder_4d.1} parent=31 // pred_check
          %p766 = pneg %p250
        $region54: #{transformer_decoder_4d.1} parent=31 // pred_check_branch
          %768 = sbr.rel (%p766) target = $region56
        $region55: #{transformer_decoder_4d.1} parent=31 // pred_region
          %p769 = scmp.lt.s32.totalorder %s44, 1
          %s770 = scalar_select %p769, %s44, 1
          %s771 = scalar_lea.vmem %s7, %s770
        $region56: #{transformer_decoder_4d.1} parent=31 // pred_fallthru
          _
        // Predicated region
        $region57: #{transformer_decoder_4d.1} parent=31 // pred_check
          %p772 = pneg %p276
        $region58: #{transformer_decoder_4d.1} parent=31 // pred_check_branch
          %774 = sbr.rel (%p772) target = $region60
        $region59: #{transformer_decoder_4d.1} parent=31 // pred_region
          %p775 = scmp.lt.s32.totalorder %s44, 1
          %s776 = scalar_select %p775, %s44, 1
          %s777 = smul.addr %s776, 4
          %s778 = smul.addr %s777, 4
          %s779 = scalar_lea.vmem %s8, %s778
        $region60: #{transformer_decoder_4d.1} parent=31 // pred_fallthru
          _
        // Predicated region
        $region61: #{transformer_decoder_4d.1} parent=31 // pred_check
          %p780 = pneg %p302
        $region62: #{transformer_decoder_4d.1} parent=31 // pred_check_branch
          %782 = sbr.rel (%p780) target = $region64
        $region63: #{transformer_decoder_4d.1} parent=31 // pred_region
          %p783 = scmp.lt.s32.totalorder %s44, 1
          %s784 = scalar_select %p783, %s44, 1
          %s785 = scalar_lea.vmem %s9, %s784
        $region64: #{transformer_decoder_4d.1} parent=31 // pred_fallthru
          _
        // Predicated region
        $region65: #{transformer_decoder_4d.1} parent=31 // pred_check
          %p786 = pneg %p328
        $region66: #{transformer_decoder_4d.1} parent=31 // pred_check_branch
          %788 = sbr.rel (%p786) target = $region68
        $region67: #{transformer_decoder_4d.1} parent=31 // pred_region
          %p789 = scmp.lt.s32.totalorder %s44, 1
          %s790 = scalar_select %p789, %s44, 1
          %s791 = smul.addr %s790, 4
          %s792 = smul.addr %s791, 4
          %s793 = scalar_lea.vmem %s10, %s792
        $region68: #{transformer_decoder_4d.1} parent=31 // pred_fallthru
          _
        // Predicated region
        $region69: #{transformer_decoder_4d.1} parent=31 // pred_check
          %p794 = pneg %p354
        $region70: #{transformer_decoder_4d.1} parent=31 // pred_check_branch
          %796 = sbr.rel (%p794) target = $region72
        $region71: #{transformer_decoder_4d.1} parent=31 // pred_region
          %s797 = sand.u32 %s344, 1
          %s798 = scalar_lea.sflag [#allocation4], %s797
          %s799 = sand.u32 %s344, 1
          %s800 = scalar_lea.vmem [#allocation3], %s799
          %s802 = ssub.s32 16, 16
          %803 = vsyncadd %s798, %s802
          %s804 = smul.addr %s44, 16
          %s805 = scalar_lea.hbm %s11, %s804
          %s807 = sshll.u32 %s800, 4
          %s808 = int_to_ptr.vmem [resolvable:$true] %s807
          %810 = dma.hbm_to_vmem [thread:$0]  %s805, 16, %s808, %s798
        $region72: #{transformer_decoder_4d.1} parent=31 // pred_fallthru
          _
        // Predicated region
        $region73: #{transformer_decoder_4d.1} parent=31 // pred_check
          %p811 = pneg %p380
        $region74: #{transformer_decoder_4d.1} parent=31 // pred_check_branch
          %813 = sbr.rel (%p811) target = $region76
        $region75: #{transformer_decoder_4d.1} parent=31 // pred_region
          %p814 = scmp.lt.s32.totalorder %s44, 1
          %s815 = scalar_select %p814, %s44, 1
          %s816 = smul.addr %s815, 4
          %s817 = smul.addr %s816, 4
          %s818 = scalar_lea.vmem %s12, %s817
        $region76: #{transformer_decoder_4d.1} parent=31 // pred_fallthru
          _
        // Predicated region
        $region77: #{transformer_decoder_4d.1} parent=31 // pred_check
          %p819 = pneg %p406
        $region78: #{transformer_decoder_4d.1} parent=31 // pred_check_branch
          %821 = sbr.rel (%p819) target = $region80
        $region79: #{transformer_decoder_4d.1} parent=31 // pred_region
          %p822 = scmp.lt.s32.totalorder %s44, 1
          %s823 = scalar_select %p822, %s44, 1
          %s824 = scalar_lea.vmem %s13, %s823
        $region80: #{transformer_decoder_4d.1} parent=31 // pred_fallthru
          _
        // Predicated region
        $region81: #{transformer_decoder_4d.1} parent=31 // pred_check
          %p825 = pneg %p432
        $region82: #{transformer_decoder_4d.1} parent=31 // pred_check_branch
          %827 = sbr.rel (%p825) target = $region84
        $region83: #{transformer_decoder_4d.1} parent=31 // pred_region
          %p828 = scmp.lt.s32.totalorder %s44, 1
          %s829 = scalar_select %p828, %s44, 1
          %s830 = scalar_lea.vmem %s14, %s829
        $region84: #{transformer_decoder_4d.1} parent=31 // pred_fallthru
          _
        // Predicated region
        $region85: #{transformer_decoder_4d.1} parent=31 // pred_check
          %p831 = pneg %p458
        $region86: #{transformer_decoder_4d.1} parent=31 // pred_check_branch
          %833 = sbr.rel (%p831) target = $region88
        $region87: #{transformer_decoder_4d.1} parent=31 // pred_region
          %p834 = scmp.lt.s32.totalorder %s44, 1
          %s835 = scalar_select %p834, %s44, 1
          %s836 = scalar_lea.vmem %s15, %s835
        $region88: #{transformer_decoder_4d.1} parent=31 // pred_fallthru
          _
        // Predicated region
        $region89: #{transformer_decoder_4d.1} parent=31 // pred_check
          %p837 = pneg %p484
        $region90: #{transformer_decoder_4d.1} parent=31 // pred_check_branch
          %839 = sbr.rel (%p837) target = $region92
        $region91: #{transformer_decoder_4d.1} parent=31 // pred_region
          %p840 = scmp.lt.s32.totalorder %s44, 1
          %s841 = scalar_select %p840, %s44, 1
          %s842 = smul.addr %s841, 4
          %s843 = smul.addr %s842, 4
          %s844 = scalar_lea.vmem %s16, %s843
        $region92: #{transformer_decoder_4d.1} parent=31 // pred_fallthru
          _
        // Predicated region
        $region93: #{transformer_decoder_4d.1} parent=31 // pred_check
          %p845 = pneg %p510
        $region94: #{transformer_decoder_4d.1} parent=31 // pred_check_branch
          %847 = sbr.rel (%p845) target = $region96
        $region95: #{transformer_decoder_4d.1} parent=31 // pred_region
          %s848 = sand.u32 %s36, 1
          %s849 = scalar_lea.sflag [#allocation6], %s848
          %s850 = sand.u32 %s500, 1
          %s851 = scalar_lea.vmem [#allocation5], %s850
          %s853 = ssub.s32 16, 16
          %854 = vsyncadd %s849, %s853
          %s855 = smul.addr %s44, 16
          %s856 = scalar_lea.hbm %s17, %s855
          %s858 = sshll.u32 %s851, 4
          %s859 = int_to_ptr.vmem [resolvable:$true] %s858
          %861 = dma.hbm_to_vmem [thread:$0]  %s856, 16, %s859, %s849
        $region96: #{transformer_decoder_4d.1} parent=31 // pred_fallthru
          _
        // Predicated region
        $region97: #{transformer_decoder_4d.1} parent=31 // pred_check
          %p862 = pneg %p536
        $region98: #{transformer_decoder_4d.1} parent=31 // pred_check_branch
          %864 = sbr.rel (%p862) target = $region100
        $region99: #{transformer_decoder_4d.1} parent=31 // pred_region
          %p865 = scmp.lt.s32.totalorder %s44, 1
          %s866 = scalar_select %p865, %s44, 1
          %s867 = smul.addr %s866, 8
          %s868 = smul.addr %s867, 4
          %s869 = scalar_lea.vmem %s18, %s868
        $region100: #{transformer_decoder_4d.1} parent=31 // pred_fallthru
          _
        // Predicated region
        $region101: #{transformer_decoder_4d.1} parent=31 // pred_check
          %p870 = pneg %p562
        $region102: #{transformer_decoder_4d.1} parent=31 // pred_check_branch
          %872 = sbr.rel (%p870) target = $region104
        $region103: #{transformer_decoder_4d.1} parent=31 // pred_region
          %s873 = sand.u32 %s36, 1
          %s874 = scalar_lea.sflag [#allocation6], %s873
          %s875 = sand.u32 %s552, 1
          %s876 = scalar_lea.vmem [#allocation7], %s875
          %s878 = ssub.s32 16, 16
          %879 = vsyncadd %s874, %s878
          %s880 = smul.addr %s44, 16
          %s881 = scalar_lea.hbm %s19, %s880
          %s883 = sshll.u32 %s876, 4
          %s884 = int_to_ptr.vmem [resolvable:$true] %s883
          %886 = dma.hbm_to_vmem [thread:$0]  %s881, 16, %s884, %s874
        $region104: #{transformer_decoder_4d.1} parent=31 // pred_fallthru
          _
        // Predicated region
        $region105: #{transformer_decoder_4d.1} parent=31 // pred_check
          %p887 = pneg %p588
        $region106: #{transformer_decoder_4d.1} parent=31 // pred_check_branch
          %889 = sbr.rel (%p887) target = $region108
        $region107: #{transformer_decoder_4d.1} parent=31 // pred_region
          %p890 = scmp.lt.s32.totalorder %s44, 1
          %s891 = scalar_select %p890, %s44, 1
          %s892 = scalar_lea.vmem %s20, %s891
        $region108: #{transformer_decoder_4d.1} parent=31 // pred_fallthru
          _
        // Predicated region
        $region109: #{transformer_decoder_4d.1} parent=31 // pred_check
          %p893 = pneg %p614
        $region110: #{transformer_decoder_4d.1} parent=31 // pred_check_branch
          %895 = sbr.rel (%p893) target = $region112
        $region111: #{transformer_decoder_4d.1} parent=31 // pred_region
          %p896 = scmp.lt.s32.totalorder %s44, 1
          %s897 = scalar_select %p896, %s44, 1
          %s898 = scalar_lea.vmem %s21, %s897
        $region112: #{transformer_decoder_4d.1} parent=31 // pred_fallthru
          _
      $region32: #{transformer_decoder_4d.1} parent=5 // pred_fallthru
        _
      %p899 = scmp.le.s32.totalorder 1, %s36
      %p900 = scmp.lt.s32.totalorder %s36, 3
      %p901 = pnand %p899, %p900
      %p902 = pneg %p901
      // Predicated region
      $region113: #{transformer_decoder_4d.1} parent=5 // pred_check
        _
      $region114: #{transformer_decoder_4d.1} parent=5 // pred_check_branch
        %904 = sbr.rel (%p901) target = $region116
      $region115: #{transformer_decoder_4d.1} parent=5 // pred_region
        %s905 = ssub.s32 %s36, 1
        %s906 = sand.u32 %s347, 1
        %s907 = scalar_lea.sflag [#allocation4], %s906
        %s908 = sand.u32 %s347, 1
        %s909 = scalar_lea.vmem [#allocation3], %s908
        // Predicated region
        $region117: #{transformer_decoder_4d.1} parent=115 // pred_check
          %p910 = pneg %p360
        $region118: #{transformer_decoder_4d.1} parent=115 // pred_check_branch
          %912 = sbr.rel (%p910) target = $region120
        $region119: #{transformer_decoder_4d.1} parent=115 // pred_region
          %913 = dma.done %s907, 16
        $region120: #{transformer_decoder_4d.1} parent=115 // pred_fallthru
          _
        %s914 = sand.u32 %s41, 1
        %s915 = scalar_lea.sflag [#allocation6], %s914
        %s916 = sand.u32 %s503, 1
        %s917 = scalar_lea.vmem [#allocation5], %s916
        // Predicated region
        $region121: #{transformer_decoder_4d.1} parent=115 // pred_check
          %p918 = pneg %p516
        $region122: #{transformer_decoder_4d.1} parent=115 // pred_check_branch
          %920 = sbr.rel (%p918) target = $region124
        $region123: #{transformer_decoder_4d.1} parent=115 // pred_region
          %921 = dma.done %s915, 16
        $region124: #{transformer_decoder_4d.1} parent=115 // pred_fallthru
          _
        %s922 = sand.u32 %s41, 1
        %s923 = scalar_lea.sflag [#allocation6], %s922
        %s924 = sand.u32 %s555, 1
        %s925 = scalar_lea.vmem [#allocation7], %s924
        // Predicated region
        $region125: #{transformer_decoder_4d.1} parent=115 // pred_check
          %p926 = pneg %p568
        $region126: #{transformer_decoder_4d.1} parent=115 // pred_check_branch
          %928 = sbr.rel (%p926) target = $region128
        $region127: #{transformer_decoder_4d.1} parent=115 // pred_region
          %929 = dma.done %s923, 16
        $region128: #{transformer_decoder_4d.1} parent=115 // pred_fallthru
          _
        %s930 = smul.u32 8, %s45
        %p931 = scmp.lt.s32.totalorder %s930, 7
        %s932 = scalar_select %p931, %s930, 7
        %s933 = smul.addr %s932, 8
        %s934 = scalar_lea.vmem %s0, %s933
        %p935 = pneg %p74
        %p936 = pneg %p71
        %s937 = smul.u32 8, %s45
        %p938 = scmp.lt.s32.totalorder %s937, 7
        %s939 = scalar_select %p938, %s937, 7
        %s940 = smul.addr %s939, 2
        %s941 = smul.addr %s940, 4
        %s942 = scalar_lea.vmem %s1, %s941
        %p943 = pneg %p100
        %p944 = pneg %p97
        %p945 = scmp.lt.s32.totalorder %s46, 1
        %s946 = scalar_select %p945, %s46, 1
        %s947 = smul.addr %s946, 4
        %s948 = smul.addr %s947, 4
        %s949 = scalar_lea.vmem %s2, %s948
        %p950 = pneg %p126
        %p951 = pneg %p123
        %p952 = scmp.lt.s32.totalorder %s46, 1
        %s953 = scalar_select %p952, %s46, 1
        %s954 = scalar_lea.vmem %s3, %s953
        %p955 = pneg %p152
        %p956 = pneg %p149
        %p957 = scmp.lt.s32.totalorder %s46, 1
        %s958 = scalar_select %p957, %s46, 1
        %s959 = smul.addr %s958, 4
        %s960 = smul.addr %s959, 4
        %s961 = scalar_lea.vmem %s4, %s960
        %p962 = pneg %p178
        %p963 = pneg %p175
        %p964 = scmp.lt.s32.totalorder %s46, 1
        %s965 = scalar_select %p964, %s46, 1
        %s966 = scalar_lea.vmem %s5, %s965
        %p967 = pneg %p204
        %p968 = pneg %p201
        %p969 = scmp.lt.s32.totalorder %s46, 1
        %s970 = scalar_select %p969, %s46, 1
        %s971 = scalar_lea.vmem %s6, %s970
        %p972 = pneg %p230
        %p973 = pneg %p227
        %p974 = scmp.lt.s32.totalorder %s46, 1
        %s975 = scalar_select %p974, %s46, 1
        %s976 = scalar_lea.vmem %s7, %s975
        %p977 = pneg %p256
        %p978 = pneg %p253
        %p979 = scmp.lt.s32.totalorder %s46, 1
        %s980 = scalar_select %p979, %s46, 1
        %s981 = smul.addr %s980, 4
        %s982 = smul.addr %s981, 4
        %s983 = scalar_lea.vmem %s8, %s982
        %p984 = pneg %p282
        %p985 = pneg %p279
        %p986 = scmp.lt.s32.totalorder %s46, 1
        %s987 = scalar_select %p986, %s46, 1
        %s988 = scalar_lea.vmem %s9, %s987
        %p989 = pneg %p308
        %p990 = pneg %p305
        %p991 = scmp.lt.s32.totalorder %s46, 1
        %s992 = scalar_select %p991, %s46, 1
        %s993 = smul.addr %s992, 4
        %s994 = smul.addr %s993, 4
        %s995 = scalar_lea.vmem %s10, %s994
        %p996 = pneg %p334
        %p997 = pneg %p331
        %s998 = sand.u32 %s347, 1
        %s999 = scalar_lea.sflag [#allocation4], %s998
        %s1000 = sand.u32 %s347, 1
        %s1001 = scalar_lea.vmem [#allocation3], %s1000
        %p1002 = pneg %p360
        %p1003 = pneg %p357
        %p1004 = scmp.lt.s32.totalorder %s46, 1
        %s1005 = scalar_select %p1004, %s46, 1
        %s1006 = smul.addr %s1005, 4
        %s1007 = smul.addr %s1006, 4
        %s1008 = scalar_lea.vmem %s12, %s1007
        %p1009 = pneg %p386
        %p1010 = pneg %p383
        %p1011 = scmp.lt.s32.totalorder %s46, 1
        %s1012 = scalar_select %p1011, %s46, 1
        %s1013 = scalar_lea.vmem %s13, %s1012
        %p1014 = pneg %p412
        %p1015 = pneg %p409
        %p1016 = scmp.lt.s32.totalorder %s46, 1
        %s1017 = scalar_select %p1016, %s46, 1
        %s1018 = scalar_lea.vmem %s14, %s1017
        %p1019 = pneg %p438
        %p1020 = pneg %p435
        %p1021 = scmp.lt.s32.totalorder %s46, 1
        %s1022 = scalar_select %p1021, %s46, 1
        %s1023 = scalar_lea.vmem %s15, %s1022
        %p1024 = pneg %p464
        %p1025 = pneg %p461
        %p1026 = scmp.lt.s32.totalorder %s46, 1
        %s1027 = scalar_select %p1026, %s46, 1
        %s1028 = smul.addr %s1027, 4
        %s1029 = smul.addr %s1028, 4
        %s1030 = scalar_lea.vmem %s16, %s1029
        %p1031 = pneg %p490
        %p1032 = pneg %p487
        %s1033 = sand.u32 %s41, 1
        %s1034 = scalar_lea.sflag [#allocation6], %s1033
        %s1035 = sand.u32 %s503, 1
        %s1036 = scalar_lea.vmem [#allocation5], %s1035
        %p1037 = pneg %p516
        %p1038 = pneg %p513
        %p1039 = scmp.lt.s32.totalorder %s46, 1
        %s1040 = scalar_select %p1039, %s46, 1
        %s1041 = smul.addr %s1040, 8
        %s1042 = smul.addr %s1041, 4
        %s1043 = scalar_lea.vmem %s18, %s1042
        %p1044 = pneg %p542
        %p1045 = pneg %p539
        %s1046 = sand.u32 %s41, 1
        %s1047 = scalar_lea.sflag [#allocation6], %s1046
        %s1048 = sand.u32 %s555, 1
        %s1049 = scalar_lea.vmem [#allocation7], %s1048
        %p1050 = pneg %p568
        %p1051 = pneg %p565
        %p1052 = scmp.lt.s32.totalorder %s46, 1
        %s1053 = scalar_select %p1052, %s46, 1
        %s1054 = scalar_lea.vmem %s20, %s1053
        %p1055 = pneg %p594
        %p1056 = pneg %p591
        %p1057 = scmp.lt.s32.totalorder %s46, 1
        %s1058 = scalar_select %p1057, %s46, 1
        %s1059 = scalar_lea.vmem %s21, %s1058
        %p1060 = pneg %p620
        %p1061 = pneg %p617
        %p1062 = pneg %p641
        %p1063 = pneg %p638
        %p1064 = pneg %p662
        %p1065 = pneg %p659
        %p1066 = pneg %p688
        %p1067 = pneg %p685
        %s1068 = smul.u32 8, %s45
        %p1069 = scmp.lt.s32.totalorder %s1068, 7
        %s1070 = scalar_select %p1069, %s1068, 7
        %s1071 = smul.addr %s1070, 8
        %s1072 = scalar_lea.vmem %s24, %s1071
        %s1073 = smul.u32 8, %s45
        %p1074 = scmp.lt.s32.totalorder %s1073, 7
        %s1075 = scalar_select %p1074, %s1073, 7
        %s1076 = smul.addr %s1075, 8
        %s1077 = scalar_lea.vmem %s0, %s1076
        %s1078 = smul.u32 8, %s45
        %s1079 = smul.u32 8, %s45
        %p1080 = scmp.lt.s32.totalorder %s1079, 7
        %s1081 = scalar_select %p1080, %s1079, 7
        %s1082 = smul.addr %s1081, 2
        %s1083 = smul.addr %s1082, 4
        %s1084 = scalar_lea.vmem %s1, %s1083
        %s1085 = smul.u32 8, %s45
        %p1086 = scmp.lt.s32.totalorder %s46, 1
        %s1087 = scalar_select %p1086, %s46, 1
        %s1088 = smul.addr %s1087, 4
        %s1089 = smul.addr %s1088, 4
        %s1090 = scalar_lea.vmem %s2, %s1089
        %p1091 = scmp.lt.s32.totalorder %s46, 1
        %s1092 = scalar_select %p1091, %s46, 1
        %s1093 = scalar_lea.vmem %s3, %s1092
        %p1094 = scmp.lt.s32.totalorder %s46, 1
        %s1095 = scalar_select %p1094, %s46, 1
        %s1096 = smul.addr %s1095, 4
        %s1097 = smul.addr %s1096, 4
        %s1098 = scalar_lea.vmem %s4, %s1097
        %p1099 = scmp.lt.s32.totalorder %s46, 1
        %s1100 = scalar_select %p1099, %s46, 1
        %s1101 = scalar_lea.vmem %s5, %s1100
        %p1102 = scmp.lt.s32.totalorder %s46, 1
        %s1103 = scalar_select %p1102, %s46, 1
        %s1104 = scalar_lea.vmem %s6, %s1103
        %p1105 = scmp.lt.s32.totalorder %s46, 1
        %s1106 = scalar_select %p1105, %s46, 1
        %s1107 = scalar_lea.vmem %s7, %s1106
        %p1108 = scmp.lt.s32.totalorder %s46, 1
        %s1109 = scalar_select %p1108, %s46, 1
        %s1110 = smul.addr %s1109, 4
        %s1111 = smul.addr %s1110, 4
        %s1112 = scalar_lea.vmem %s8, %s1111
        %p1113 = scmp.lt.s32.totalorder %s46, 1
        %s1114 = scalar_select %p1113, %s46, 1
        %s1115 = scalar_lea.vmem %s9, %s1114
        %p1116 = scmp.lt.s32.totalorder %s46, 1
        %s1117 = scalar_select %p1116, %s46, 1
        %s1118 = smul.addr %s1117, 4
        %s1119 = smul.addr %s1118, 4
        %s1120 = scalar_lea.vmem %s10, %s1119
        %p1121 = scmp.lt.s32.totalorder %s46, 1
        %s1122 = scalar_select %p1121, %s46, 1
        %s1123 = smul.addr %s1122, 4
        %s1124 = smul.addr %s1123, 4
        %s1125 = scalar_lea.vmem %s12, %s1124
        %p1126 = scmp.lt.s32.totalorder %s46, 1
        %s1127 = scalar_select %p1126, %s46, 1
        %s1128 = scalar_lea.vmem %s13, %s1127
        %p1129 = scmp.lt.s32.totalorder %s46, 1
        %s1130 = scalar_select %p1129, %s46, 1
        %s1131 = scalar_lea.vmem %s14, %s1130
        %p1132 = scmp.lt.s32.totalorder %s46, 1
        %s1133 = scalar_select %p1132, %s46, 1
        %s1134 = scalar_lea.vmem %s15, %s1133
        %p1135 = scmp.lt.s32.totalorder %s46, 1
        %s1136 = scalar_select %p1135, %s46, 1
        %s1137 = smul.addr %s1136, 4
        %s1138 = smul.addr %s1137, 4
        %s1139 = scalar_lea.vmem %s16, %s1138
        %p1140 = scmp.lt.s32.totalorder %s46, 1
        %s1141 = scalar_select %p1140, %s46, 1
        %s1142 = smul.addr %s1141, 8
        %s1143 = smul.addr %s1142, 4
        %s1144 = scalar_lea.vmem %s18, %s1143
        %p1145 = scmp.lt.s32.totalorder %s46, 1
        %s1146 = scalar_select %p1145, %s46, 1
        %s1147 = scalar_lea.vmem %s20, %s1146
        %p1148 = scmp.lt.s32.totalorder %s46, 1
        %s1149 = scalar_select %p1148, %s46, 1
        %s1150 = scalar_lea.vmem %s21, %s1149
        %s1151 = smul.u32 8, %s45
        %p1152 = scmp.lt.s32.totalorder %s1151, 7
        %s1153 = scalar_select %p1152, %s1151, 7
        %s1154 = smul.addr %s1153, 8
        %s1155 = scalar_lea.vmem %s24, %s1154
        %s1156 = smul.u32 8, %s45
        %p1158 = scmp.eq.s32.totalorder %s46, 0
        // Predicated region
        $region129: #{transformer_decoder_4d.1} parent=115 // pred_check
          %p1159 = pneg %p1158
        $region130: #{transformer_decoder_4d.1} parent=115 // pred_check_branch
          %1161 = sbr.rel (%p1159) target = $region132
        $region131: #{transformer_decoder_4d.1} parent=115 // pred_region
          %v1162 = vld [vmem:[%s1077] sm:$0xff]
          %v1163 = vld [vmem:[%s1077 + $0x8] sm:$0xff]
          %v1164 = vld [vmem:[%s1077 + $0x10] sm:$0xff]
          %v1165 = vld [vmem:[%s1077 + $0x18] sm:$0xff]
          %v1166 = vld [vmem:[%s1077 + $0x20] sm:$0xff]
          %v1167 = vld [vmem:[%s1077 + $0x28] sm:$0xff]
          %v1168 = vld [vmem:[%s1077 + $0x30] sm:$0xff]
          %v1169 = vld [vmem:[%s1077 + $0x38] sm:$0xff]
          %vm1170 = vcmask 261120
          %1171 = vst.msk [vmem:[#allocation2] sm:$0xff] %vm1170, %v1162
          %1172 = vst.msk [vmem:[#allocation2 + $0x8] sm:$0xff] %vm1170, %v1163
          %1173 = vst.msk [vmem:[#allocation2 + $0x10] sm:$0xff] %vm1170, %v1164
          %1174 = vst.msk [vmem:[#allocation2 + $0x18] sm:$0xff] %vm1170, %v1165
          %1175 = vst.msk [vmem:[#allocation2 + $0x20] sm:$0xff] %vm1170, %v1166
          %1176 = vst.msk [vmem:[#allocation2 + $0x28] sm:$0xff] %vm1170, %v1167
          %1177 = vst.msk [vmem:[#allocation2 + $0x30] sm:$0xff] %vm1170, %v1168
          %1178 = vst.msk [vmem:[#allocation2 + $0x38] sm:$0xff] %vm1170, %v1169
        $region132: #{transformer_decoder_4d.1} parent=115 // pred_fallthru
          _
        %v1179 = vld [vmem:[#allocation2] sm:$0xff]
        %v1180 = vld [vmem:[#allocation2 + $0x8] sm:$0xff]
        %v1181 = vld [vmem:[#allocation2 + $0x10] sm:$0xff]
        %v1182 = vld [vmem:[#allocation2 + $0x18] sm:$0xff]
        %v1183 = vld [vmem:[#allocation2 + $0x20] sm:$0xff]
        %v1184 = vld [vmem:[#allocation2 + $0x28] sm:$0xff]
        %v1185 = vld [vmem:[#allocation2 + $0x30] sm:$0xff]
        %v1186 = vld [vmem:[#allocation2 + $0x38] sm:$0xff]
        %v1187 = vld [vmem:[%s1084] sm:$0xf]
        %v1188 = vld [vmem:[%s1084 + $0x4] sm:$0xf]
        %v1189 = vld [vmem:[%s1084 + $0x8] sm:$0xf]
        %v1190 = vld [vmem:[%s1084 + $0xc] sm:$0xf]
        %v1191 = vld [vmem:[%s1084 + $0x10] sm:$0xf]
        %v1192 = vld [vmem:[%s1084 + $0x14] sm:$0xf]
        %v1193 = vld [vmem:[%s1084 + $0x18] sm:$0xf]
        %v1194 = vld [vmem:[%s1084 + $0x1c] sm:$0xf]
        %v1195 = vld [vmem:[%s1084 + $0x20] sm:$0xf]
        %v1196 = vld [vmem:[%s1084 + $0x24] sm:$0xf]
        %v1197 = vld [vmem:[%s1084 + $0x28] sm:$0xf]
        %v1198 = vld [vmem:[%s1084 + $0x2c] sm:$0xf]
        %v1199 = vld [vmem:[%s1084 + $0x30] sm:$0xf]
        %v1200 = vld [vmem:[%s1084 + $0x34] sm:$0xf]
        %v1201 = vld [vmem:[%s1084 + $0x38] sm:$0xf]
        %v1202 = vld [vmem:[%s1084 + $0x3c] sm:$0xf]
        %v1203 = vpack.c.bf16 %v1180, %v1179
        %v1204 = vpack.c.bf16 %v1182, %v1181
        %v1205 = vpack.c.bf16 %v1184, %v1183
        %v1206 = vpack.c.bf16 %v1186, %v1185
        %v1207 = vld [vmem:[%s1090] sm:$0xf]
        %v1208 = vld [vmem:[%s1090 + $0x4] sm:$0xf]
        %v1209 = vld [vmem:[%s1090 + $0x8] sm:$0xf]
        %v1210 = vld [vmem:[%s1090 + $0xc] sm:$0xf]
        %v1211 = vld [vmem:[%s1093] sm:$0x1]
        %v1213 = vlaneseq
        %v1214 = vshrl.u32 %v1213, 7
        %v1215 = vsub.s32 0, %v1214
        %v1216 = vrot.slane %v1211, %v1215
        %v1222 = vunpack.c.l.b16 %v1207
        %v1223 = vunpack.c.l.b16 %v1208
        %v1224 = vunpack.c.l.b16 %v1209
        %v1225 = vunpack.c.l.b16 %v1210
        %v1226 = vpack.c.b16 %v1223, %v1222
        %v1227 = vpack.c.b16 %v1225, %v1224
        %vm1230 = vcmask 261120
        %v1232 = vsel %vm1230, %v1203, 0
        %v1235 = vsel %vm1230, %v1204, 0
        %v1238 = vsel %vm1230, %v1205, 0
        %v1241 = vsel %vm1230, %v1206, 0
        %1243 = vmatprep.subr.bf16.mxu0 0
        %1244 = vmatpush1.bf16.msra.mxu0 0
        %1245 = vmatprep.subr.bf16.mxu0 0
        %1246 = vmatpush1.bf16.msra.mxu0 0
        %1247 = vmatprep.subr.bf16.mxu0 0
        %1248 = vmatpush1.bf16.msra.mxu0 0
        %1249 = vmatprep.subr.bf16.mxu0 0
        %1250 = vmatpush1.bf16.msra.mxu0 0
        %1251 = vmatprep.subr.bf16.mxu0 0
        %1252 = vmatpush1.bf16.msra.mxu0 0
        %1253 = vmatprep.subr.bf16.mxu0 0
        %1254 = vmatpush1.bf16.msra.mxu0 0
        %1255 = vmatprep.subr.bf16.mxu0 0
        %1256 = vmatpush1.bf16.msra.mxu0 %v1227
        %1257 = vmatprep.subr.bf16.mxu0 0
        %1258 = vmatpush1.bf16.msra.mxu0 %v1226
        %1259 = vmatprep.subr.bf16.mxu0 0
        %1260 = vmatpush2.bf16.msra.mxu0 0
        %1261 = vmatprep.subr.bf16.mxu0 0
        %1262 = vmatpush2.bf16.msra.mxu0 0
        %1263 = vmatprep.subr.bf16.mxu0 0
        %1264 = vmatpush2.bf16.msra.mxu0 0
        %1265 = vmatprep.subr.bf16.mxu0 0
        %1266 = vmatpush2.bf16.msra.mxu0 0
        %1267 = vmatprep.subr.bf16.mxu0 0
        %1268 = vmatpush2.bf16.msra.mxu0 0
        %1269 = vmatprep.subr.bf16.mxu0 0
        %1270 = vmatpush2.bf16.msra.mxu0 0
        %1271 = vmatprep.subr.bf16.mxu0 0
        %1272 = vmatpush2.bf16.msra.mxu0 0
        %1273 = vmatprep.subr.bf16.mxu0 0
        %1274 = vmatpush2.bf16.msra.mxu0 0
        %1275 = vmatprep.mubr.bf16.mxu0 0
        %1276 = vmatmul.mubr.bf16.gmra.mxu0 %v1232
        %v1277 = vpop.f32.mrf.mxu0
        %v1278 = vadd.f32 %v1216, %v1277
        %v1279 = vpop.f32.mrf.mxu0
        %v1280 = vpop.f32.mrf.mxu0
        %v1281 = vadd.f32 %v1216, %v1280
        %v1282 = vpop.f32.mrf.mxu0
        %1283 = vmatprep.mubr.bf16.mxu0 0
        %1284 = vmatmul.mubr.bf16.gmra.mxu0 %v1235
        %v1285 = vpop.f32.mrf.mxu0
        %v1286 = vadd.f32 %v1216, %v1285
        %v1287 = vpop.f32.mrf.mxu0
        %v1288 = vpop.f32.mrf.mxu0
        %v1289 = vadd.f32 %v1216, %v1288
        %v1290 = vpop.f32.mrf.mxu0
        %1291 = vmatprep.mubr.bf16.mxu0 0
        %1292 = vmatmul.mubr.bf16.gmra.mxu0 %v1238
        %v1293 = vpop.f32.mrf.mxu0
        %v1294 = vadd.f32 %v1216, %v1293
        %v1295 = vpop.f32.mrf.mxu0
        %v1296 = vpop.f32.mrf.mxu0
        %v1297 = vadd.f32 %v1216, %v1296
        %v1298 = vpop.f32.mrf.mxu0
        %1299 = vmatprep.mubr.bf16.mxu0 0
        %1300 = vmatmul.mubr.bf16.gmra.mxu0 %v1241
        %v1301 = vpop.f32.mrf.mxu0
        %v1302 = vadd.f32 %v1216, %v1301
        %v1303 = vpop.f32.mrf.mxu0
        %v1304 = vpop.f32.mrf.mxu0
        %v1305 = vadd.f32 %v1216, %v1304
        %v1306 = vpop.f32.mrf.mxu0
        %1307 = vdwg.mxu0
        %v1308 = vmul.f32 %v1278, 0.35355338
        %v1309 = vmul.f32 %v1281, 0.35355338
        %v1310 = vmul.f32 %v1286, 0.35355338
        %v1311 = vmul.f32 %v1289, 0.35355338
        %v1312 = vmul.f32 %v1294, 0.35355338
        %v1313 = vmul.f32 %v1297, 0.35355338
        %v1314 = vmul.f32 %v1302, 0.35355338
        %v1315 = vmul.f32 %v1305, 0.35355338
        %v1316 = vpack.c.bf16 %v1308, %v1308
        %v1317 = vpack.c.bf16 %v1309, %v1309
        %v1318 = vpack.c.bf16 %v1310, %v1310
        %v1319 = vpack.c.bf16 %v1311, %v1311
        %v1320 = vpack.c.bf16 %v1312, %v1312
        %v1321 = vpack.c.bf16 %v1313, %v1313
        %v1322 = vpack.c.bf16 %v1314, %v1314
        %v1323 = vpack.c.bf16 %v1315, %v1315
        %v1324 = vpack.c.bf16 %v1278, %v1278
        %v1325 = vpack.c.bf16 %v1281, %v1281
        %v1326 = vpack.c.bf16 %v1286, %v1286
        %v1327 = vpack.c.bf16 %v1289, %v1289
        %v1328 = vpack.c.bf16 %v1294, %v1294
        %v1329 = vpack.c.bf16 %v1297, %v1297
        %v1330 = vpack.c.bf16 %v1302, %v1302
        %v1331 = vpack.c.bf16 %v1305, %v1305
        %1333 = vrot.lane.b32.xlu0 %v1324, 96
        %v1334 = vpop.permute.xlu0 %1333
        %vm1335 = vcmask 64512
        %v1337 = vsel %vm1335, %v1316, 0
        %v1340 = vsel %vm1335, %v1334, 0
        %1342 = vmatprep.subr.bf16.mxu0 0
        %1343 = vmatpush1.bf16.xpose.msra.mxu0 0
        %1344 = vmatprep.subr.bf16.mxu0 0
        %1345 = vmatpush1.bf16.xpose.msra.mxu0 0
        %1346 = vmatprep.subr.bf16.mxu0 0
        %1347 = vmatpush1.bf16.xpose.msra.mxu0 0
        %1348 = vmatprep.subr.bf16.mxu0 0
        %1349 = vmatpush1.bf16.xpose.msra.mxu0 0
        %1350 = vmatprep.subr.bf16.mxu0 0
        %1351 = vmatpush1.bf16.xpose.msra.mxu0 0
        %1352 = vmatprep.subr.bf16.mxu0 0
        %1353 = vmatpush1.bf16.xpose.msra.mxu0 0
        %1354 = vmatprep.subr.bf16.mxu0 0
        %1355 = vmatpush1.bf16.xpose.msra.mxu0 0
        %1356 = vmatprep.subr.bf16.mxu0 0
        %1357 = vmatpush1.bf16.xpose.msra.mxu0 %v1340
        %1358 = vmatprep.subr.bf16.mxu0 0
        %1359 = vmatpush2.bf16.xpose.msra.mxu0 0
        %1360 = vmatprep.subr.bf16.mxu0 0
        %1361 = vmatpush2.bf16.xpose.msra.mxu0 0
        %1362 = vmatprep.subr.bf16.mxu0 0
        %1363 = vmatpush2.bf16.xpose.msra.mxu0 0
        %1364 = vmatprep.subr.bf16.mxu0 0
        %1365 = vmatpush2.bf16.xpose.msra.mxu0 0
        %1366 = vmatprep.subr.bf16.mxu0 0
        %1367 = vmatpush2.bf16.xpose.msra.mxu0 0
        %1368 = vmatprep.subr.bf16.mxu0 0
        %1369 = vmatpush2.bf16.xpose.msra.mxu0 0
        %1370 = vmatprep.subr.bf16.mxu0 0
        %1371 = vmatpush2.bf16.xpose.msra.mxu0 0
        %1372 = vmatprep.subr.bf16.mxu0 0
        %1373 = vmatpush2.bf16.xpose.msra.mxu0 0
        %1374 = vmatprep.mubr.bf16.mxu0 0
        %1375 = vmatmul.mubr.bf16.gmra.mxu0 %v1337
        %v1376 = vpop.f32.mrf.mxu0
        %v1377 = vadd.f32 0.0, %v1376
        %v1378 = vpop.f32.mrf.mxu0
        %v1379 = vpop.f32.mrf.mxu0
        %v1380 = vpop.f32.mrf.mxu0
        %1381 = vdwg.mxu0
        %1383 = vrot.lane.b32.xlu0 %v1325, 96
        %v1384 = vpop.permute.xlu0 %1383
        %v1386 = vsel %vm1335, %v1317, 0
        %v1389 = vsel %vm1335, %v1384, 0
        %1391 = vmatprep.subr.bf16.mxu0 0
        %1392 = vmatpush1.bf16.xpose.msra.mxu0 0
        %1393 = vmatprep.subr.bf16.mxu0 0
        %1394 = vmatpush1.bf16.xpose.msra.mxu0 0
        %1395 = vmatprep.subr.bf16.mxu0 0
        %1396 = vmatpush1.bf16.xpose.msra.mxu0 0
        %1397 = vmatprep.subr.bf16.mxu0 0
        %1398 = vmatpush1.bf16.xpose.msra.mxu0 0
        %1399 = vmatprep.subr.bf16.mxu0 0
        %1400 = vmatpush1.bf16.xpose.msra.mxu0 0
        %1401 = vmatprep.subr.bf16.mxu0 0
        %1402 = vmatpush1.bf16.xpose.msra.mxu0 0
        %1403 = vmatprep.subr.bf16.mxu0 0
        %1404 = vmatpush1.bf16.xpose.msra.mxu0 0
        %1405 = vmatprep.subr.bf16.mxu0 0
        %1406 = vmatpush1.bf16.xpose.msra.mxu0 %v1389
        %1407 = vmatprep.subr.bf16.mxu0 0
        %1408 = vmatpush2.bf16.xpose.msra.mxu0 0
        %1409 = vmatprep.subr.bf16.mxu0 0
        %1410 = vmatpush2.bf16.xpose.msra.mxu0 0
        %1411 = vmatprep.subr.bf16.mxu0 0
        %1412 = vmatpush2.bf16.xpose.msra.mxu0 0
        %1413 = vmatprep.subr.bf16.mxu0 0
        %1414 = vmatpush2.bf16.xpose.msra.mxu0 0
        %1415 = vmatprep.subr.bf16.mxu0 0
        %1416 = vmatpush2.bf16.xpose.msra.mxu0 0
        %1417 = vmatprep.subr.bf16.mxu0 0
        %1418 = vmatpush2.bf16.xpose.msra.mxu0 0
        %1419 = vmatprep.subr.bf16.mxu0 0
        %1420 = vmatpush2.bf16.xpose.msra.mxu0 0
        %1421 = vmatprep.subr.bf16.mxu0 0
        %1422 = vmatpush2.bf16.xpose.msra.mxu0 0
        %1423 = vmatprep.mubr.bf16.mxu0 0
        %1424 = vmatmul.mubr.bf16.gmra.mxu0 %v1386
        %v1425 = vpop.f32.mrf.mxu0
        %v1426 = vadd.f32 0.0, %v1425
        %v1427 = vpop.f32.mrf.mxu0
        %v1428 = vpop.f32.mrf.mxu0
        %v1429 = vpop.f32.mrf.mxu0
        %1430 = vdwg.mxu0
        %1432 = vrot.lane.b32.xlu0 %v1326, 96
        %v1433 = vpop.permute.xlu0 %1432
        %v1435 = vsel %vm1335, %v1318, 0
        %v1438 = vsel %vm1335, %v1433, 0
        %1440 = vmatprep.subr.bf16.mxu0 0
        %1441 = vmatpush1.bf16.xpose.msra.mxu0 0
        %1442 = vmatprep.subr.bf16.mxu0 0
        %1443 = vmatpush1.bf16.xpose.msra.mxu0 0
        %1444 = vmatprep.subr.bf16.mxu0 0
        %1445 = vmatpush1.bf16.xpose.msra.mxu0 0
        %1446 = vmatprep.subr.bf16.mxu0 0
        %1447 = vmatpush1.bf16.xpose.msra.mxu0 0
        %1448 = vmatprep.subr.bf16.mxu0 0
        %1449 = vmatpush1.bf16.xpose.msra.mxu0 0
        %1450 = vmatprep.subr.bf16.mxu0 0
        %1451 = vmatpush1.bf16.xpose.msra.mxu0 0
        %1452 = vmatprep.subr.bf16.mxu0 0
        %1453 = vmatpush1.bf16.xpose.msra.mxu0 0
        %1454 = vmatprep.subr.bf16.mxu0 0
        %1455 = vmatpush1.bf16.xpose.msra.mxu0 %v1438
        %1456 = vmatprep.subr.bf16.mxu0 0
        %1457 = vmatpush2.bf16.xpose.msra.mxu0 0
        %1458 = vmatprep.subr.bf16.mxu0 0
        %1459 = vmatpush2.bf16.xpose.msra.mxu0 0
        %1460 = vmatprep.subr.bf16.mxu0 0
        %1461 = vmatpush2.bf16.xpose.msra.mxu0 0
        %1462 = vmatprep.subr.bf16.mxu0 0
        %1463 = vmatpush2.bf16.xpose.msra.mxu0 0
        %1464 = vmatprep.subr.bf16.mxu0 0
        %1465 = vmatpush2.bf16.xpose.msra.mxu0 0
        %1466 = vmatprep.subr.bf16.mxu0 0
        %1467 = vmatpush2.bf16.xpose.msra.mxu0 0
        %1468 = vmatprep.subr.bf16.mxu0 0
        %1469 = vmatpush2.bf16.xpose.msra.mxu0 0
        %1470 = vmatprep.subr.bf16.mxu0 0
        %1471 = vmatpush2.bf16.xpose.msra.mxu0 0
        %1472 = vmatprep.mubr.bf16.mxu0 0
        %1473 = vmatmul.mubr.bf16.gmra.mxu0 %v1435
        %v1474 = vpop.f32.mrf.mxu0
        %v1475 = vadd.f32 0.0, %v1474
        %v1476 = vpop.f32.mrf.mxu0
        %v1477 = vpop.f32.mrf.mxu0
        %v1478 = vpop.f32.mrf.mxu0
        %1479 = vdwg.mxu0
        %1481 = vrot.lane.b32.xlu0 %v1327, 96
        %v1482 = vpop.permute.xlu0 %1481
        %v1484 = vsel %vm1335, %v1319, 0
        %v1487 = vsel %vm1335, %v1482, 0
        %1489 = vmatprep.subr.bf16.mxu0 0
        %1490 = vmatpush1.bf16.xpose.msra.mxu0 0
        %1491 = vmatprep.subr.bf16.mxu0 0
        %1492 = vmatpush1.bf16.xpose.msra.mxu0 0
        %1493 = vmatprep.subr.bf16.mxu0 0
        %1494 = vmatpush1.bf16.xpose.msra.mxu0 0
        %1495 = vmatprep.subr.bf16.mxu0 0
        %1496 = vmatpush1.bf16.xpose.msra.mxu0 0
        %1497 = vmatprep.subr.bf16.mxu0 0
        %1498 = vmatpush1.bf16.xpose.msra.mxu0 0
        %1499 = vmatprep.subr.bf16.mxu0 0
        %1500 = vmatpush1.bf16.xpose.msra.mxu0 0
        %1501 = vmatprep.subr.bf16.mxu0 0
        %1502 = vmatpush1.bf16.xpose.msra.mxu0 0
        %1503 = vmatprep.subr.bf16.mxu0 0
        %1504 = vmatpush1.bf16.xpose.msra.mxu0 %v1487
        %1505 = vmatprep.subr.bf16.mxu0 0
        %1506 = vmatpush2.bf16.xpose.msra.mxu0 0
        %1507 = vmatprep.subr.bf16.mxu0 0
        %1508 = vmatpush2.bf16.xpose.msra.mxu0 0
        %1509 = vmatprep.subr.bf16.mxu0 0
        %1510 = vmatpush2.bf16.xpose.msra.mxu0 0
        %1511 = vmatprep.subr.bf16.mxu0 0
        %1512 = vmatpush2.bf16.xpose.msra.mxu0 0
        %1513 = vmatprep.subr.bf16.mxu0 0
        %1514 = vmatpush2.bf16.xpose.msra.mxu0 0
        %1515 = vmatprep.subr.bf16.mxu0 0
        %1516 = vmatpush2.bf16.xpose.msra.mxu0 0
        %1517 = vmatprep.subr.bf16.mxu0 0
        %1518 = vmatpush2.bf16.xpose.msra.mxu0 0
        %1519 = vmatprep.subr.bf16.mxu0 0
        %1520 = vmatpush2.bf16.xpose.msra.mxu0 0
        %1521 = vmatprep.mubr.bf16.mxu0 0
        %1522 = vmatmul.mubr.bf16.gmra.mxu0 %v1484
        %v1523 = vpop.f32.mrf.mxu0
        %v1524 = vadd.f32 0.0, %v1523
        %v1525 = vpop.f32.mrf.mxu0
        %v1526 = vpop.f32.mrf.mxu0
        %v1527 = vpop.f32.mrf.mxu0
        %1528 = vdwg.mxu0
        %1530 = vrot.lane.b32.xlu0 %v1328, 96
        %v1531 = vpop.permute.xlu0 %1530
        %v1533 = vsel %vm1335, %v1320, 0
        %v1536 = vsel %vm1335, %v1531, 0
        %1538 = vmatprep.subr.bf16.mxu0 0
        %1539 = vmatpush1.bf16.xpose.msra.mxu0 0
        %1540 = vmatprep.subr.bf16.mxu0 0
        %1541 = vmatpush1.bf16.xpose.msra.mxu0 0
        %1542 = vmatprep.subr.bf16.mxu0 0
        %1543 = vmatpush1.bf16.xpose.msra.mxu0 0
        %1544 = vmatprep.subr.bf16.mxu0 0
        %1545 = vmatpush1.bf16.xpose.msra.mxu0 0
        %1546 = vmatprep.subr.bf16.mxu0 0
        %1547 = vmatpush1.bf16.xpose.msra.mxu0 0
        %1548 = vmatprep.subr.bf16.mxu0 0
        %1549 = vmatpush1.bf16.xpose.msra.mxu0 0
        %1550 = vmatprep.subr.bf16.mxu0 0
        %1551 = vmatpush1.bf16.xpose.msra.mxu0 0
        %1552 = vmatprep.subr.bf16.mxu0 0
        %1553 = vmatpush1.bf16.xpose.msra.mxu0 %v1536
        %1554 = vmatprep.subr.bf16.mxu0 0
        %1555 = vmatpush2.bf16.xpose.msra.mxu0 0
        %1556 = vmatprep.subr.bf16.mxu0 0
        %1557 = vmatpush2.bf16.xpose.msra.mxu0 0
        %1558 = vmatprep.subr.bf16.mxu0 0
        %1559 = vmatpush2.bf16.xpose.msra.mxu0 0
        %1560 = vmatprep.subr.bf16.mxu0 0
        %1561 = vmatpush2.bf16.xpose.msra.mxu0 0
        %1562 = vmatprep.subr.bf16.mxu0 0
        %1563 = vmatpush2.bf16.xpose.msra.mxu0 0
        %1564 = vmatprep.subr.bf16.mxu0 0
        %1565 = vmatpush2.bf16.xpose.msra.mxu0 0
        %1566 = vmatprep.subr.bf16.mxu0 0
        %1567 = vmatpush2.bf16.xpose.msra.mxu0 0
        %1568 = vmatprep.subr.bf16.mxu0 0
        %1569 = vmatpush2.bf16.xpose.msra.mxu0 0
        %1570 = vmatprep.mubr.bf16.mxu0 0
        %1571 = vmatmul.mubr.bf16.gmra.mxu0 %v1533
        %v1572 = vpop.f32.mrf.mxu0
        %v1573 = vadd.f32 0.0, %v1572
        %v1574 = vpop.f32.mrf.mxu0
        %v1575 = vpop.f32.mrf.mxu0
        %v1576 = vpop.f32.mrf.mxu0
        %1577 = vdwg.mxu0
        %1579 = vrot.lane.b32.xlu0 %v1329, 96
        %v1580 = vpop.permute.xlu0 %1579
        %v1582 = vsel %vm1335, %v1321, 0
        %v1585 = vsel %vm1335, %v1580, 0
        %1587 = vmatprep.subr.bf16.mxu0 0
        %1588 = vmatpush1.bf16.xpose.msra.mxu0 0
        %1589 = vmatprep.subr.bf16.mxu0 0
        %1590 = vmatpush1.bf16.xpose.msra.mxu0 0
        %1591 = vmatprep.subr.bf16.mxu0 0
        %1592 = vmatpush1.bf16.xpose.msra.mxu0 0
        %1593 = vmatprep.subr.bf16.mxu0 0
        %1594 = vmatpush1.bf16.xpose.msra.mxu0 0
        %1595 = vmatprep.subr.bf16.mxu0 0
        %1596 = vmatpush1.bf16.xpose.msra.mxu0 0
        %1597 = vmatprep.subr.bf16.mxu0 0
        %1598 = vmatpush1.bf16.xpose.msra.mxu0 0
        %1599 = vmatprep.subr.bf16.mxu0 0
        %1600 = vmatpush1.bf16.xpose.msra.mxu0 0
        %1601 = vmatprep.subr.bf16.mxu0 0
        %1602 = vmatpush1.bf16.xpose.msra.mxu0 %v1585
        %1603 = vmatprep.subr.bf16.mxu0 0
        %1604 = vmatpush2.bf16.xpose.msra.mxu0 0
        %1605 = vmatprep.subr.bf16.mxu0 0
        %1606 = vmatpush2.bf16.xpose.msra.mxu0 0
        %1607 = vmatprep.subr.bf16.mxu0 0
        %1608 = vmatpush2.bf16.xpose.msra.mxu0 0
        %1609 = vmatprep.subr.bf16.mxu0 0
        %1610 = vmatpush2.bf16.xpose.msra.mxu0 0
        %1611 = vmatprep.subr.bf16.mxu0 0
        %1612 = vmatpush2.bf16.xpose.msra.mxu0 0
        %1613 = vmatprep.subr.bf16.mxu0 0
        %1614 = vmatpush2.bf16.xpose.msra.mxu0 0
        %1615 = vmatprep.subr.bf16.mxu0 0
        %1616 = vmatpush2.bf16.xpose.msra.mxu0 0
        %1617 = vmatprep.subr.bf16.mxu0 0
        %1618 = vmatpush2.bf16.xpose.msra.mxu0 0
        %1619 = vmatprep.mubr.bf16.mxu0 0
        %1620 = vmatmul.mubr.bf16.gmra.mxu0 %v1582
        %v1621 = vpop.f32.mrf.mxu0
        %v1622 = vadd.f32 0.0, %v1621
        %v1623 = vpop.f32.mrf.mxu0
        %v1624 = vpop.f32.mrf.mxu0
        %v1625 = vpop.f32.mrf.mxu0
        %1626 = vdwg.mxu0
        %1628 = vrot.lane.b32.xlu0 %v1330, 96
        %v1629 = vpop.permute.xlu0 %1628
        %v1631 = vsel %vm1335, %v1322, 0
        %v1634 = vsel %vm1335, %v1629, 0
        %1636 = vmatprep.subr.bf16.mxu0 0
        %1637 = vmatpush1.bf16.xpose.msra.mxu0 0
        %1638 = vmatprep.subr.bf16.mxu0 0
        %1639 = vmatpush1.bf16.xpose.msra.mxu0 0
        %1640 = vmatprep.subr.bf16.mxu0 0
        %1641 = vmatpush1.bf16.xpose.msra.mxu0 0
        %1642 = vmatprep.subr.bf16.mxu0 0
        %1643 = vmatpush1.bf16.xpose.msra.mxu0 0
        %1644 = vmatprep.subr.bf16.mxu0 0
        %1645 = vmatpush1.bf16.xpose.msra.mxu0 0
        %1646 = vmatprep.subr.bf16.mxu0 0
        %1647 = vmatpush1.bf16.xpose.msra.mxu0 0
        %1648 = vmatprep.subr.bf16.mxu0 0
        %1649 = vmatpush1.bf16.xpose.msra.mxu0 0
        %1650 = vmatprep.subr.bf16.mxu0 0
        %1651 = vmatpush1.bf16.xpose.msra.mxu0 %v1634
        %1652 = vmatprep.subr.bf16.mxu0 0
        %1653 = vmatpush2.bf16.xpose.msra.mxu0 0
        %1654 = vmatprep.subr.bf16.mxu0 0
        %1655 = vmatpush2.bf16.xpose.msra.mxu0 0
        %1656 = vmatprep.subr.bf16.mxu0 0
        %1657 = vmatpush2.bf16.xpose.msra.mxu0 0
        %1658 = vmatprep.subr.bf16.mxu0 0
        %1659 = vmatpush2.bf16.xpose.msra.mxu0 0
        %1660 = vmatprep.subr.bf16.mxu0 0
        %1661 = vmatpush2.bf16.xpose.msra.mxu0 0
        %1662 = vmatprep.subr.bf16.mxu0 0
        %1663 = vmatpush2.bf16.xpose.msra.mxu0 0
        %1664 = vmatprep.subr.bf16.mxu0 0
        %1665 = vmatpush2.bf16.xpose.msra.mxu0 0
        %1666 = vmatprep.subr.bf16.mxu0 0
        %1667 = vmatpush2.bf16.xpose.msra.mxu0 0
        %1668 = vmatprep.mubr.bf16.mxu0 0
        %1669 = vmatmul.mubr.bf16.gmra.mxu0 %v1631
        %v1670 = vpop.f32.mrf.mxu0
        %v1671 = vadd.f32 0.0, %v1670
        %v1672 = vpop.f32.mrf.mxu0
        %v1673 = vpop.f32.mrf.mxu0
        %v1674 = vpop.f32.mrf.mxu0
        %1675 = vdwg.mxu0
        %1677 = vrot.lane.b32.xlu0 %v1331, 96
        %v1678 = vpop.permute.xlu0 %1677
        %v1680 = vsel %vm1335, %v1323, 0
        %v1683 = vsel %vm1335, %v1678, 0
        %1685 = vmatprep.subr.bf16.mxu0 0
        %1686 = vmatpush1.bf16.xpose.msra.mxu0 0
        %1687 = vmatprep.subr.bf16.mxu0 0
        %1688 = vmatpush1.bf16.xpose.msra.mxu0 0
        %1689 = vmatprep.subr.bf16.mxu0 0
        %1690 = vmatpush1.bf16.xpose.msra.mxu0 0
        %1691 = vmatprep.subr.bf16.mxu0 0
        %1692 = vmatpush1.bf16.xpose.msra.mxu0 0
        %1693 = vmatprep.subr.bf16.mxu0 0
        %1694 = vmatpush1.bf16.xpose.msra.mxu0 0
        %1695 = vmatprep.subr.bf16.mxu0 0
        %1696 = vmatpush1.bf16.xpose.msra.mxu0 0
        %1697 = vmatprep.subr.bf16.mxu0 0
        %1698 = vmatpush1.bf16.xpose.msra.mxu0 0
        %1699 = vmatprep.subr.bf16.mxu0 0
        %1700 = vmatpush1.bf16.xpose.msra.mxu0 %v1683
        %1701 = vmatprep.subr.bf16.mxu0 0
        %1702 = vmatpush2.bf16.xpose.msra.mxu0 0
        %1703 = vmatprep.subr.bf16.mxu0 0
        %1704 = vmatpush2.bf16.xpose.msra.mxu0 0
        %1705 = vmatprep.subr.bf16.mxu0 0
        %1706 = vmatpush2.bf16.xpose.msra.mxu0 0
        %1707 = vmatprep.subr.bf16.mxu0 0
        %1708 = vmatpush2.bf16.xpose.msra.mxu0 0
        %1709 = vmatprep.subr.bf16.mxu0 0
        %1710 = vmatpush2.bf16.xpose.msra.mxu0 0
        %1711 = vmatprep.subr.bf16.mxu0 0
        %1712 = vmatpush2.bf16.xpose.msra.mxu0 0
        %1713 = vmatprep.subr.bf16.mxu0 0
        %1714 = vmatpush2.bf16.xpose.msra.mxu0 0
        %1715 = vmatprep.subr.bf16.mxu0 0
        %1716 = vmatpush2.bf16.xpose.msra.mxu0 0
        %1717 = vmatprep.mubr.bf16.mxu0 0
        %1718 = vmatmul.mubr.bf16.gmra.mxu0 %v1680
        %v1719 = vpop.f32.mrf.mxu0
        %v1720 = vadd.f32 0.0, %v1719
        %v1721 = vpop.f32.mrf.mxu0
        %v1722 = vpop.f32.mrf.mxu0
        %v1723 = vpop.f32.mrf.mxu0
        %1724 = vdwg.mxu0
        %v1725 = vsel %vm1335, %v1377, -inf
        %1726 = vmax.xlane.f32.xlu0 %v1725
        %v1727 = vpop.xlane.xlu0 %1726
        %v1728 = vsel %vm1335, %v1426, -inf
        %1729 = vmax.xlane.f32.xlu0 %v1728
        %v1730 = vpop.xlane.xlu0 %1729
        %v1731 = vsel %vm1335, %v1475, -inf
        %1732 = vmax.xlane.f32.xlu0 %v1731
        %v1733 = vpop.xlane.xlu0 %1732
        %v1734 = vsel %vm1335, %v1524, -inf
        %1735 = vmax.xlane.f32.xlu0 %v1734
        %v1736 = vpop.xlane.xlu0 %1735
        %v1737 = vsel %vm1335, %v1573, -inf
        %1738 = vmax.xlane.f32.xlu0 %v1737
        %v1739 = vpop.xlane.xlu0 %1738
        %v1740 = vsel %vm1335, %v1622, -inf
        %1741 = vmax.xlane.f32.xlu0 %v1740
        %v1742 = vpop.xlane.xlu0 %1741
        %v1743 = vsel %vm1335, %v1671, -inf
        %1744 = vmax.xlane.f32.xlu0 %v1743
        %v1745 = vpop.xlane.xlu0 %1744
        %v1746 = vsel %vm1335, %v1720, -inf
        %1747 = vmax.xlane.f32.xlu0 %v1746
        %v1748 = vpop.xlane.xlu0 %1747
        %v1749 = vsub.f32 %v1377, %v1727
        %v1750 = vsub.f32 %v1426, %v1730
        %v1751 = vsub.f32 %v1475, %v1733
        %v1752 = vsub.f32 %v1524, %v1736
        %v1753 = vsub.f32 %v1573, %v1739
        %v1754 = vsub.f32 %v1622, %v1742
        %v1755 = vsub.f32 %v1671, %v1745
        %v1756 = vsub.f32 %v1720, %v1748
        %v1757 = vmul.f32 %v1749, 1.442695
        %v1758 = vpow.pop %v1757
        %v1759 = vmul.f32 %v1750, 1.442695
        %v1760 = vpow.pop %v1759
        %v1761 = vmul.f32 %v1751, 1.442695
        %v1762 = vpow.pop %v1761
        %v1763 = vmul.f32 %v1752, 1.442695
        %v1764 = vpow.pop %v1763
        %v1765 = vmul.f32 %v1753, 1.442695
        %v1766 = vpow.pop %v1765
        %v1767 = vmul.f32 %v1754, 1.442695
        %v1768 = vpow.pop %v1767
        %v1769 = vmul.f32 %v1755, 1.442695
        %v1770 = vpow.pop %v1769
        %v1771 = vmul.f32 %v1756, 1.442695
        %v1772 = vpow.pop %v1771
        %v1773 = vsel %vm1335, %v1758, 0.0
        %1774 = vadd.xlane.f32.xlu0 %v1773
        %v1775 = vpop.xlane.xlu0 %1774
        %v1776 = vsel %vm1335, %v1760, 0.0
        %1777 = vadd.xlane.f32.xlu0 %v1776
        %v1778 = vpop.xlane.xlu0 %1777
        %v1779 = vsel %vm1335, %v1762, 0.0
        %1780 = vadd.xlane.f32.xlu0 %v1779
        %v1781 = vpop.xlane.xlu0 %1780
        %v1782 = vsel %vm1335, %v1764, 0.0
        %1783 = vadd.xlane.f32.xlu0 %v1782
        %v1784 = vpop.xlane.xlu0 %1783
        %v1785 = vsel %vm1335, %v1766, 0.0
        %1786 = vadd.xlane.f32.xlu0 %v1785
        %v1787 = vpop.xlane.xlu0 %1786
        %v1788 = vsel %vm1335, %v1768, 0.0
        %1789 = vadd.xlane.f32.xlu0 %v1788
        %v1790 = vpop.xlane.xlu0 %1789
        %v1791 = vsel %vm1335, %v1770, 0.0
        %1792 = vadd.xlane.f32.xlu0 %v1791
        %v1793 = vpop.xlane.xlu0 %1792
        %v1794 = vsel %vm1335, %v1772, 0.0
        %1795 = vadd.xlane.f32.xlu0 %v1794
        %v1796 = vpop.xlane.xlu0 %1795
        %v1797 = vrcp.pop %v1775
        %v1798 = vrcp.pop %v1778
        %v1799 = vrcp.pop %v1781
        %v1800 = vrcp.pop %v1784
        %v1801 = vrcp.pop %v1787
        %v1802 = vrcp.pop %v1790
        %v1803 = vrcp.pop %v1793
        %v1804 = vrcp.pop %v1796
        %v1805 = vmul.f32 %v1758, %v1797
        %v1806 = vmul.f32 %v1760, %v1798
        %v1807 = vmul.f32 %v1762, %v1799
        %v1808 = vmul.f32 %v1764, %v1800
        %v1809 = vmul.f32 %v1766, %v1801
        %v1810 = vmul.f32 %v1768, %v1802
        %v1811 = vmul.f32 %v1770, %v1803
        %v1812 = vmul.f32 %v1772, %v1804
        %v1813 = vpack.c.bf16 %v1805, %v1805
        %v1814 = vpack.c.bf16 %v1806, %v1806
        %v1815 = vpack.c.bf16 %v1807, %v1807
        %v1816 = vpack.c.bf16 %v1808, %v1808
        %v1817 = vpack.c.bf16 %v1809, %v1809
        %v1818 = vpack.c.bf16 %v1810, %v1810
        %v1819 = vpack.c.bf16 %v1811, %v1811
        %v1820 = vpack.c.bf16 %v1812, %v1812
        %1821 = vrot.lane.b32.xlu0 %v1324, 64
        %v1822 = vpop.permute.xlu0 %1821
        %v1824 = vsel %vm1335, %v1813, 0
        %vm1826 = vcmask 1043456
        %v1828 = vsel %vm1826, %v1822, 0
        %1830 = vmatprep.subr.bf16.mxu0 0
        %1831 = vmatpush1.bf16.msra.mxu0 0
        %1832 = vmatprep.subr.bf16.mxu0 0
        %1833 = vmatpush1.bf16.msra.mxu0 0
        %1834 = vmatprep.subr.bf16.mxu0 0
        %1835 = vmatpush1.bf16.msra.mxu0 0
        %1836 = vmatprep.subr.bf16.mxu0 0
        %1837 = vmatpush1.bf16.msra.mxu0 0
        %1838 = vmatprep.subr.bf16.mxu0 0
        %1839 = vmatpush1.bf16.msra.mxu0 0
        %1840 = vmatprep.subr.bf16.mxu0 0
        %1841 = vmatpush1.bf16.msra.mxu0 0
        %1842 = vmatprep.subr.bf16.mxu0 0
        %1843 = vmatpush1.bf16.msra.mxu0 0
        %1844 = vmatprep.subr.bf16.mxu0 0
        %1845 = vmatpush1.bf16.msra.mxu0 %v1828
        %1846 = vmatprep.subr.bf16.mxu0 0
        %1847 = vmatpush2.bf16.msra.mxu0 0
        %1848 = vmatprep.subr.bf16.mxu0 0
        %1849 = vmatpush2.bf16.msra.mxu0 0
        %1850 = vmatprep.subr.bf16.mxu0 0
        %1851 = vmatpush2.bf16.msra.mxu0 0
        %1852 = vmatprep.subr.bf16.mxu0 0
        %1853 = vmatpush2.bf16.msra.mxu0 0
        %1854 = vmatprep.subr.bf16.mxu0 0
        %1855 = vmatpush2.bf16.msra.mxu0 0
        %1856 = vmatprep.subr.bf16.mxu0 0
        %1857 = vmatpush2.bf16.msra.mxu0 0
        %1858 = vmatprep.subr.bf16.mxu0 0
        %1859 = vmatpush2.bf16.msra.mxu0 0
        %1860 = vmatprep.subr.bf16.mxu0 0
        %1861 = vmatpush2.bf16.msra.mxu0 0
        %1862 = vmatprep.mubr.bf16.mxu0 0
        %1863 = vmatmul.mubr.bf16.gmra.mxu0 %v1824
        %v1864 = vpop.f32.mrf.mxu0
        %v1865 = vadd.f32 0.0, %v1864
        %v1866 = vpop.f32.mrf.mxu0
        %v1867 = vpop.f32.mrf.mxu0
        %v1868 = vpop.f32.mrf.mxu0
        %1869 = vdwg.mxu0
        %1870 = vrot.lane.b32.xlu0 %v1325, 64
        %v1871 = vpop.permute.xlu0 %1870
        %v1873 = vsel %vm1335, %v1814, 0
        %v1876 = vsel %vm1826, %v1871, 0
        %1878 = vmatprep.subr.bf16.mxu0 0
        %1879 = vmatpush1.bf16.msra.mxu0 0
        %1880 = vmatprep.subr.bf16.mxu0 0
        %1881 = vmatpush1.bf16.msra.mxu0 0
        %1882 = vmatprep.subr.bf16.mxu0 0
        %1883 = vmatpush1.bf16.msra.mxu0 0
        %1884 = vmatprep.subr.bf16.mxu0 0
        %1885 = vmatpush1.bf16.msra.mxu0 0
        %1886 = vmatprep.subr.bf16.mxu0 0
        %1887 = vmatpush1.bf16.msra.mxu0 0
        %1888 = vmatprep.subr.bf16.mxu0 0
        %1889 = vmatpush1.bf16.msra.mxu0 0
        %1890 = vmatprep.subr.bf16.mxu0 0
        %1891 = vmatpush1.bf16.msra.mxu0 0
        %1892 = vmatprep.subr.bf16.mxu0 0
        %1893 = vmatpush1.bf16.msra.mxu0 %v1876
        %1894 = vmatprep.subr.bf16.mxu0 0
        %1895 = vmatpush2.bf16.msra.mxu0 0
        %1896 = vmatprep.subr.bf16.mxu0 0
        %1897 = vmatpush2.bf16.msra.mxu0 0
        %1898 = vmatprep.subr.bf16.mxu0 0
        %1899 = vmatpush2.bf16.msra.mxu0 0
        %1900 = vmatprep.subr.bf16.mxu0 0
        %1901 = vmatpush2.bf16.msra.mxu0 0
        %1902 = vmatprep.subr.bf16.mxu0 0
        %1903 = vmatpush2.bf16.msra.mxu0 0
        %1904 = vmatprep.subr.bf16.mxu0 0
        %1905 = vmatpush2.bf16.msra.mxu0 0
        %1906 = vmatprep.subr.bf16.mxu0 0
        %1907 = vmatpush2.bf16.msra.mxu0 0
        %1908 = vmatprep.subr.bf16.mxu0 0
        %1909 = vmatpush2.bf16.msra.mxu0 0
        %1910 = vmatprep.mubr.bf16.mxu0 0
        %1911 = vmatmul.mubr.bf16.gmra.mxu0 %v1873
        %v1912 = vpop.f32.mrf.mxu0
        %v1913 = vadd.f32 0.0, %v1912
        %v1914 = vpop.f32.mrf.mxu0
        %v1915 = vpop.f32.mrf.mxu0
        %v1916 = vpop.f32.mrf.mxu0
        %1917 = vdwg.mxu0
        %1918 = vrot.lane.b32.xlu0 %v1326, 64
        %v1919 = vpop.permute.xlu0 %1918
        %v1921 = vsel %vm1335, %v1815, 0
        %v1924 = vsel %vm1826, %v1919, 0
        %1926 = vmatprep.subr.bf16.mxu0 0
        %1927 = vmatpush1.bf16.msra.mxu0 0
        %1928 = vmatprep.subr.bf16.mxu0 0
        %1929 = vmatpush1.bf16.msra.mxu0 0
        %1930 = vmatprep.subr.bf16.mxu0 0
        %1931 = vmatpush1.bf16.msra.mxu0 0
        %1932 = vmatprep.subr.bf16.mxu0 0
        %1933 = vmatpush1.bf16.msra.mxu0 0
        %1934 = vmatprep.subr.bf16.mxu0 0
        %1935 = vmatpush1.bf16.msra.mxu0 0
        %1936 = vmatprep.subr.bf16.mxu0 0
        %1937 = vmatpush1.bf16.msra.mxu0 0
        %1938 = vmatprep.subr.bf16.mxu0 0
        %1939 = vmatpush1.bf16.msra.mxu0 0
        %1940 = vmatprep.subr.bf16.mxu0 0
        %1941 = vmatpush1.bf16.msra.mxu0 %v1924
        %1942 = vmatprep.subr.bf16.mxu0 0
        %1943 = vmatpush2.bf16.msra.mxu0 0
        %1944 = vmatprep.subr.bf16.mxu0 0
        %1945 = vmatpush2.bf16.msra.mxu0 0
        %1946 = vmatprep.subr.bf16.mxu0 0
        %1947 = vmatpush2.bf16.msra.mxu0 0
        %1948 = vmatprep.subr.bf16.mxu0 0
        %1949 = vmatpush2.bf16.msra.mxu0 0
        %1950 = vmatprep.subr.bf16.mxu0 0
        %1951 = vmatpush2.bf16.msra.mxu0 0
        %1952 = vmatprep.subr.bf16.mxu0 0
        %1953 = vmatpush2.bf16.msra.mxu0 0
        %1954 = vmatprep.subr.bf16.mxu0 0
        %1955 = vmatpush2.bf16.msra.mxu0 0
        %1956 = vmatprep.subr.bf16.mxu0 0
        %1957 = vmatpush2.bf16.msra.mxu0 0
        %1958 = vmatprep.mubr.bf16.mxu0 0
        %1959 = vmatmul.mubr.bf16.gmra.mxu0 %v1921
        %v1960 = vpop.f32.mrf.mxu0
        %v1961 = vadd.f32 0.0, %v1960
        %v1962 = vpop.f32.mrf.mxu0
        %v1963 = vpop.f32.mrf.mxu0
        %v1964 = vpop.f32.mrf.mxu0
        %1965 = vdwg.mxu0
        %1966 = vrot.lane.b32.xlu0 %v1327, 64
        %v1967 = vpop.permute.xlu0 %1966
        %v1969 = vsel %vm1335, %v1816, 0
        %v1972 = vsel %vm1826, %v1967, 0
        %1974 = vmatprep.subr.bf16.mxu0 0
        %1975 = vmatpush1.bf16.msra.mxu0 0
        %1976 = vmatprep.subr.bf16.mxu0 0
        %1977 = vmatpush1.bf16.msra.mxu0 0
        %1978 = vmatprep.subr.bf16.mxu0 0
        %1979 = vmatpush1.bf16.msra.mxu0 0
        %1980 = vmatprep.subr.bf16.mxu0 0
        %1981 = vmatpush1.bf16.msra.mxu0 0
        %1982 = vmatprep.subr.bf16.mxu0 0
        %1983 = vmatpush1.bf16.msra.mxu0 0
        %1984 = vmatprep.subr.bf16.mxu0 0
        %1985 = vmatpush1.bf16.msra.mxu0 0
        %1986 = vmatprep.subr.bf16.mxu0 0
        %1987 = vmatpush1.bf16.msra.mxu0 0
        %1988 = vmatprep.subr.bf16.mxu0 0
        %1989 = vmatpush1.bf16.msra.mxu0 %v1972
        %1990 = vmatprep.subr.bf16.mxu0 0
        %1991 = vmatpush2.bf16.msra.mxu0 0
        %1992 = vmatprep.subr.bf16.mxu0 0
        %1993 = vmatpush2.bf16.msra.mxu0 0
        %1994 = vmatprep.subr.bf16.mxu0 0
        %1995 = vmatpush2.bf16.msra.mxu0 0
        %1996 = vmatprep.subr.bf16.mxu0 0
        %1997 = vmatpush2.bf16.msra.mxu0 0
        %1998 = vmatprep.subr.bf16.mxu0 0
        %1999 = vmatpush2.bf16.msra.mxu0 0
        %2000 = vmatprep.subr.bf16.mxu0 0
        %2001 = vmatpush2.bf16.msra.mxu0 0
        %2002 = vmatprep.subr.bf16.mxu0 0
        %2003 = vmatpush2.bf16.msra.mxu0 0
        %2004 = vmatprep.subr.bf16.mxu0 0
        %2005 = vmatpush2.bf16.msra.mxu0 0
        %2006 = vmatprep.mubr.bf16.mxu0 0
        %2007 = vmatmul.mubr.bf16.gmra.mxu0 %v1969
        %v2008 = vpop.f32.mrf.mxu0
        %v2009 = vadd.f32 0.0, %v2008
        %v2010 = vpop.f32.mrf.mxu0
        %v2011 = vpop.f32.mrf.mxu0
        %v2012 = vpop.f32.mrf.mxu0
        %2013 = vdwg.mxu0
        %2014 = vrot.lane.b32.xlu0 %v1328, 64
        %v2015 = vpop.permute.xlu0 %2014
        %v2017 = vsel %vm1335, %v1817, 0
        %v2020 = vsel %vm1826, %v2015, 0
        %2022 = vmatprep.subr.bf16.mxu0 0
        %2023 = vmatpush1.bf16.msra.mxu0 0
        %2024 = vmatprep.subr.bf16.mxu0 0
        %2025 = vmatpush1.bf16.msra.mxu0 0
        %2026 = vmatprep.subr.bf16.mxu0 0
        %2027 = vmatpush1.bf16.msra.mxu0 0
        %2028 = vmatprep.subr.bf16.mxu0 0
        %2029 = vmatpush1.bf16.msra.mxu0 0
        %2030 = vmatprep.subr.bf16.mxu0 0
        %2031 = vmatpush1.bf16.msra.mxu0 0
        %2032 = vmatprep.subr.bf16.mxu0 0
        %2033 = vmatpush1.bf16.msra.mxu0 0
        %2034 = vmatprep.subr.bf16.mxu0 0
        %2035 = vmatpush1.bf16.msra.mxu0 0
        %2036 = vmatprep.subr.bf16.mxu0 0
        %2037 = vmatpush1.bf16.msra.mxu0 %v2020
        %2038 = vmatprep.subr.bf16.mxu0 0
        %2039 = vmatpush2.bf16.msra.mxu0 0
        %2040 = vmatprep.subr.bf16.mxu0 0
        %2041 = vmatpush2.bf16.msra.mxu0 0
        %2042 = vmatprep.subr.bf16.mxu0 0
        %2043 = vmatpush2.bf16.msra.mxu0 0
        %2044 = vmatprep.subr.bf16.mxu0 0
        %2045 = vmatpush2.bf16.msra.mxu0 0
        %2046 = vmatprep.subr.bf16.mxu0 0
        %2047 = vmatpush2.bf16.msra.mxu0 0
        %2048 = vmatprep.subr.bf16.mxu0 0
        %2049 = vmatpush2.bf16.msra.mxu0 0
        %2050 = vmatprep.subr.bf16.mxu0 0
        %2051 = vmatpush2.bf16.msra.mxu0 0
        %2052 = vmatprep.subr.bf16.mxu0 0
        %2053 = vmatpush2.bf16.msra.mxu0 0
        %2054 = vmatprep.mubr.bf16.mxu0 0
        %2055 = vmatmul.mubr.bf16.gmra.mxu0 %v2017
        %v2056 = vpop.f32.mrf.mxu0
        %v2057 = vadd.f32 0.0, %v2056
        %v2058 = vpop.f32.mrf.mxu0
        %v2059 = vpop.f32.mrf.mxu0
        %v2060 = vpop.f32.mrf.mxu0
        %2061 = vdwg.mxu0
        %2062 = vrot.lane.b32.xlu0 %v1329, 64
        %v2063 = vpop.permute.xlu0 %2062
        %v2065 = vsel %vm1335, %v1818, 0
        %v2068 = vsel %vm1826, %v2063, 0
        %2070 = vmatprep.subr.bf16.mxu0 0
        %2071 = vmatpush1.bf16.msra.mxu0 0
        %2072 = vmatprep.subr.bf16.mxu0 0
        %2073 = vmatpush1.bf16.msra.mxu0 0
        %2074 = vmatprep.subr.bf16.mxu0 0
        %2075 = vmatpush1.bf16.msra.mxu0 0
        %2076 = vmatprep.subr.bf16.mxu0 0
        %2077 = vmatpush1.bf16.msra.mxu0 0
        %2078 = vmatprep.subr.bf16.mxu0 0
        %2079 = vmatpush1.bf16.msra.mxu0 0
        %2080 = vmatprep.subr.bf16.mxu0 0
        %2081 = vmatpush1.bf16.msra.mxu0 0
        %2082 = vmatprep.subr.bf16.mxu0 0
        %2083 = vmatpush1.bf16.msra.mxu0 0
        %2084 = vmatprep.subr.bf16.mxu0 0
        %2085 = vmatpush1.bf16.msra.mxu0 %v2068
        %2086 = vmatprep.subr.bf16.mxu0 0
        %2087 = vmatpush2.bf16.msra.mxu0 0
        %2088 = vmatprep.subr.bf16.mxu0 0
        %2089 = vmatpush2.bf16.msra.mxu0 0
        %2090 = vmatprep.subr.bf16.mxu0 0
        %2091 = vmatpush2.bf16.msra.mxu0 0
        %2092 = vmatprep.subr.bf16.mxu0 0
        %2093 = vmatpush2.bf16.msra.mxu0 0
        %2094 = vmatprep.subr.bf16.mxu0 0
        %2095 = vmatpush2.bf16.msra.mxu0 0
        %2096 = vmatprep.subr.bf16.mxu0 0
        %2097 = vmatpush2.bf16.msra.mxu0 0
        %2098 = vmatprep.subr.bf16.mxu0 0
        %2099 = vmatpush2.bf16.msra.mxu0 0
        %2100 = vmatprep.subr.bf16.mxu0 0
        %2101 = vmatpush2.bf16.msra.mxu0 0
        %2102 = vmatprep.mubr.bf16.mxu0 0
        %2103 = vmatmul.mubr.bf16.gmra.mxu0 %v2065
        %v2104 = vpop.f32.mrf.mxu0
        %v2105 = vadd.f32 0.0, %v2104
        %v2106 = vpop.f32.mrf.mxu0
        %v2107 = vpop.f32.mrf.mxu0
        %v2108 = vpop.f32.mrf.mxu0
        %2109 = vdwg.mxu0
        %2110 = vrot.lane.b32.xlu0 %v1330, 64
        %v2111 = vpop.permute.xlu0 %2110
        %v2113 = vsel %vm1335, %v1819, 0
        %v2116 = vsel %vm1826, %v2111, 0
        %2118 = vmatprep.subr.bf16.mxu0 0
        %2119 = vmatpush1.bf16.msra.mxu0 0
        %2120 = vmatprep.subr.bf16.mxu0 0
        %2121 = vmatpush1.bf16.msra.mxu0 0
        %2122 = vmatprep.subr.bf16.mxu0 0
        %2123 = vmatpush1.bf16.msra.mxu0 0
        %2124 = vmatprep.subr.bf16.mxu0 0
        %2125 = vmatpush1.bf16.msra.mxu0 0
        %2126 = vmatprep.subr.bf16.mxu0 0
        %2127 = vmatpush1.bf16.msra.mxu0 0
        %2128 = vmatprep.subr.bf16.mxu0 0
        %2129 = vmatpush1.bf16.msra.mxu0 0
        %2130 = vmatprep.subr.bf16.mxu0 0
        %2131 = vmatpush1.bf16.msra.mxu0 0
        %2132 = vmatprep.subr.bf16.mxu0 0
        %2133 = vmatpush1.bf16.msra.mxu0 %v2116
        %2134 = vmatprep.subr.bf16.mxu0 0
        %2135 = vmatpush2.bf16.msra.mxu0 0
        %2136 = vmatprep.subr.bf16.mxu0 0
        %2137 = vmatpush2.bf16.msra.mxu0 0
        %2138 = vmatprep.subr.bf16.mxu0 0
        %2139 = vmatpush2.bf16.msra.mxu0 0
        %2140 = vmatprep.subr.bf16.mxu0 0
        %2141 = vmatpush2.bf16.msra.mxu0 0
        %2142 = vmatprep.subr.bf16.mxu0 0
        %2143 = vmatpush2.bf16.msra.mxu0 0
        %2144 = vmatprep.subr.bf16.mxu0 0
        %2145 = vmatpush2.bf16.msra.mxu0 0
        %2146 = vmatprep.subr.bf16.mxu0 0
        %2147 = vmatpush2.bf16.msra.mxu0 0
        %2148 = vmatprep.subr.bf16.mxu0 0
        %2149 = vmatpush2.bf16.msra.mxu0 0
        %2150 = vmatprep.mubr.bf16.mxu0 0
        %2151 = vmatmul.mubr.bf16.gmra.mxu0 %v2113
        %v2152 = vpop.f32.mrf.mxu0
        %v2153 = vadd.f32 0.0, %v2152
        %v2154 = vpop.f32.mrf.mxu0
        %v2155 = vpop.f32.mrf.mxu0
        %v2156 = vpop.f32.mrf.mxu0
        %2157 = vdwg.mxu0
        %2158 = vrot.lane.b32.xlu0 %v1331, 64
        %v2159 = vpop.permute.xlu0 %2158
        %v2161 = vsel %vm1335, %v1820, 0
        %v2164 = vsel %vm1826, %v2159, 0
        %2166 = vmatprep.subr.bf16.mxu0 0
        %2167 = vmatpush1.bf16.msra.mxu0 0
        %2168 = vmatprep.subr.bf16.mxu0 0
        %2169 = vmatpush1.bf16.msra.mxu0 0
        %2170 = vmatprep.subr.bf16.mxu0 0
        %2171 = vmatpush1.bf16.msra.mxu0 0
        %2172 = vmatprep.subr.bf16.mxu0 0
        %2173 = vmatpush1.bf16.msra.mxu0 0
        %2174 = vmatprep.subr.bf16.mxu0 0
        %2175 = vmatpush1.bf16.msra.mxu0 0
        %2176 = vmatprep.subr.bf16.mxu0 0
        %2177 = vmatpush1.bf16.msra.mxu0 0
        %2178 = vmatprep.subr.bf16.mxu0 0
        %2179 = vmatpush1.bf16.msra.mxu0 0
        %2180 = vmatprep.subr.bf16.mxu0 0
        %2181 = vmatpush1.bf16.msra.mxu0 %v2164
        %2182 = vmatprep.subr.bf16.mxu0 0
        %2183 = vmatpush2.bf16.msra.mxu0 0
        %2184 = vmatprep.subr.bf16.mxu0 0
        %2185 = vmatpush2.bf16.msra.mxu0 0
        %2186 = vmatprep.subr.bf16.mxu0 0
        %2187 = vmatpush2.bf16.msra.mxu0 0
        %2188 = vmatprep.subr.bf16.mxu0 0
        %2189 = vmatpush2.bf16.msra.mxu0 0
        %2190 = vmatprep.subr.bf16.mxu0 0
        %2191 = vmatpush2.bf16.msra.mxu0 0
        %2192 = vmatprep.subr.bf16.mxu0 0
        %2193 = vmatpush2.bf16.msra.mxu0 0
        %2194 = vmatprep.subr.bf16.mxu0 0
        %2195 = vmatpush2.bf16.msra.mxu0 0
        %2196 = vmatprep.subr.bf16.mxu0 0
        %2197 = vmatpush2.bf16.msra.mxu0 0
        %2198 = vmatprep.mubr.bf16.mxu0 0
        %2199 = vmatmul.mubr.bf16.gmra.mxu0 %v2161
        %v2200 = vpop.f32.mrf.mxu0
        %v2201 = vadd.f32 0.0, %v2200
        %v2202 = vpop.f32.mrf.mxu0
        %v2203 = vpop.f32.mrf.mxu0
        %v2204 = vpop.f32.mrf.mxu0
        %2205 = vdwg.mxu0
        %2207 = vrot.lane.b32.xlu0 %v1316, 120
        %v2208 = vpop.permute.xlu0 %2207
        %2209 = vrot.lane.b32.xlu0 %v1324, 88
        %v2210 = vpop.permute.xlu0 %2209
        %v2212 = vsel %vm1335, %v2208, 0
        %v2215 = vsel %vm1335, %v2210, 0
        %2217 = vmatprep.subr.bf16.mxu0 0
        %2218 = vmatpush1.bf16.xpose.msra.mxu0 0
        %2219 = vmatprep.subr.bf16.mxu0 0
        %2220 = vmatpush1.bf16.xpose.msra.mxu0 0
        %2221 = vmatprep.subr.bf16.mxu0 0
        %2222 = vmatpush1.bf16.xpose.msra.mxu0 0
        %2223 = vmatprep.subr.bf16.mxu0 0
        %2224 = vmatpush1.bf16.xpose.msra.mxu0 0
        %2225 = vmatprep.subr.bf16.mxu0 0
        %2226 = vmatpush1.bf16.xpose.msra.mxu0 0
        %2227 = vmatprep.subr.bf16.mxu0 0
        %2228 = vmatpush1.bf16.xpose.msra.mxu0 0
        %2229 = vmatprep.subr.bf16.mxu0 0
        %2230 = vmatpush1.bf16.xpose.msra.mxu0 0
        %2231 = vmatprep.subr.bf16.mxu0 0
        %2232 = vmatpush1.bf16.xpose.msra.mxu0 %v2215
        %2233 = vmatprep.subr.bf16.mxu0 0
        %2234 = vmatpush2.bf16.xpose.msra.mxu0 0
        %2235 = vmatprep.subr.bf16.mxu0 0
        %2236 = vmatpush2.bf16.xpose.msra.mxu0 0
        %2237 = vmatprep.subr.bf16.mxu0 0
        %2238 = vmatpush2.bf16.xpose.msra.mxu0 0
        %2239 = vmatprep.subr.bf16.mxu0 0
        %2240 = vmatpush2.bf16.xpose.msra.mxu0 0
        %2241 = vmatprep.subr.bf16.mxu0 0
        %2242 = vmatpush2.bf16.xpose.msra.mxu0 0
        %2243 = vmatprep.subr.bf16.mxu0 0
        %2244 = vmatpush2.bf16.xpose.msra.mxu0 0
        %2245 = vmatprep.subr.bf16.mxu0 0
        %2246 = vmatpush2.bf16.xpose.msra.mxu0 0
        %2247 = vmatprep.subr.bf16.mxu0 0
        %2248 = vmatpush2.bf16.xpose.msra.mxu0 0
        %2249 = vmatprep.mubr.bf16.mxu0 0
        %2250 = vmatmul.mubr.bf16.gmra.mxu0 %v2212
        %v2251 = vpop.f32.mrf.mxu0
        %v2252 = vadd.f32 0.0, %v2251
        %v2253 = vpop.f32.mrf.mxu0
        %v2254 = vpop.f32.mrf.mxu0
        %v2255 = vpop.f32.mrf.mxu0
        %2256 = vdwg.mxu0
        %2258 = vrot.lane.b32.xlu0 %v1317, 120
        %v2259 = vpop.permute.xlu0 %2258
        %2260 = vrot.lane.b32.xlu0 %v1325, 88
        %v2261 = vpop.permute.xlu0 %2260
        %v2263 = vsel %vm1335, %v2259, 0
        %v2266 = vsel %vm1335, %v2261, 0
        %2268 = vmatprep.subr.bf16.mxu0 0
        %2269 = vmatpush1.bf16.xpose.msra.mxu0 0
        %2270 = vmatprep.subr.bf16.mxu0 0
        %2271 = vmatpush1.bf16.xpose.msra.mxu0 0
        %2272 = vmatprep.subr.bf16.mxu0 0
        %2273 = vmatpush1.bf16.xpose.msra.mxu0 0
        %2274 = vmatprep.subr.bf16.mxu0 0
        %2275 = vmatpush1.bf16.xpose.msra.mxu0 0
        %2276 = vmatprep.subr.bf16.mxu0 0
        %2277 = vmatpush1.bf16.xpose.msra.mxu0 0
        %2278 = vmatprep.subr.bf16.mxu0 0
        %2279 = vmatpush1.bf16.xpose.msra.mxu0 0
        %2280 = vmatprep.subr.bf16.mxu0 0
        %2281 = vmatpush1.bf16.xpose.msra.mxu0 0
        %2282 = vmatprep.subr.bf16.mxu0 0
        %2283 = vmatpush1.bf16.xpose.msra.mxu0 %v2266
        %2284 = vmatprep.subr.bf16.mxu0 0
        %2285 = vmatpush2.bf16.xpose.msra.mxu0 0
        %2286 = vmatprep.subr.bf16.mxu0 0
        %2287 = vmatpush2.bf16.xpose.msra.mxu0 0
        %2288 = vmatprep.subr.bf16.mxu0 0
        %2289 = vmatpush2.bf16.xpose.msra.mxu0 0
        %2290 = vmatprep.subr.bf16.mxu0 0
        %2291 = vmatpush2.bf16.xpose.msra.mxu0 0
        %2292 = vmatprep.subr.bf16.mxu0 0
        %2293 = vmatpush2.bf16.xpose.msra.mxu0 0
        %2294 = vmatprep.subr.bf16.mxu0 0
        %2295 = vmatpush2.bf16.xpose.msra.mxu0 0
        %2296 = vmatprep.subr.bf16.mxu0 0
        %2297 = vmatpush2.bf16.xpose.msra.mxu0 0
        %2298 = vmatprep.subr.bf16.mxu0 0
        %2299 = vmatpush2.bf16.xpose.msra.mxu0 0
        %2300 = vmatprep.mubr.bf16.mxu0 0
        %2301 = vmatmul.mubr.bf16.gmra.mxu0 %v2263
        %v2302 = vpop.f32.mrf.mxu0
        %v2303 = vadd.f32 0.0, %v2302
        %v2304 = vpop.f32.mrf.mxu0
        %v2305 = vpop.f32.mrf.mxu0
        %v2306 = vpop.f32.mrf.mxu0
        %2307 = vdwg.mxu0
        %2309 = vrot.lane.b32.xlu0 %v1318, 120
        %v2310 = vpop.permute.xlu0 %2309
        %2311 = vrot.lane.b32.xlu0 %v1326, 88
        %v2312 = vpop.permute.xlu0 %2311
        %v2314 = vsel %vm1335, %v2310, 0
        %v2317 = vsel %vm1335, %v2312, 0
        %2319 = vmatprep.subr.bf16.mxu0 0
        %2320 = vmatpush1.bf16.xpose.msra.mxu0 0
        %2321 = vmatprep.subr.bf16.mxu0 0
        %2322 = vmatpush1.bf16.xpose.msra.mxu0 0
        %2323 = vmatprep.subr.bf16.mxu0 0
        %2324 = vmatpush1.bf16.xpose.msra.mxu0 0
        %2325 = vmatprep.subr.bf16.mxu0 0
        %2326 = vmatpush1.bf16.xpose.msra.mxu0 0
        %2327 = vmatprep.subr.bf16.mxu0 0
        %2328 = vmatpush1.bf16.xpose.msra.mxu0 0
        %2329 = vmatprep.subr.bf16.mxu0 0
        %2330 = vmatpush1.bf16.xpose.msra.mxu0 0
        %2331 = vmatprep.subr.bf16.mxu0 0
        %2332 = vmatpush1.bf16.xpose.msra.mxu0 0
        %2333 = vmatprep.subr.bf16.mxu0 0
        %2334 = vmatpush1.bf16.xpose.msra.mxu0 %v2317
        %2335 = vmatprep.subr.bf16.mxu0 0
        %2336 = vmatpush2.bf16.xpose.msra.mxu0 0
        %2337 = vmatprep.subr.bf16.mxu0 0
        %2338 = vmatpush2.bf16.xpose.msra.mxu0 0
        %2339 = vmatprep.subr.bf16.mxu0 0
        %2340 = vmatpush2.bf16.xpose.msra.mxu0 0
        %2341 = vmatprep.subr.bf16.mxu0 0
        %2342 = vmatpush2.bf16.xpose.msra.mxu0 0
        %2343 = vmatprep.subr.bf16.mxu0 0
        %2344 = vmatpush2.bf16.xpose.msra.mxu0 0
        %2345 = vmatprep.subr.bf16.mxu0 0
        %2346 = vmatpush2.bf16.xpose.msra.mxu0 0
        %2347 = vmatprep.subr.bf16.mxu0 0
        %2348 = vmatpush2.bf16.xpose.msra.mxu0 0
        %2349 = vmatprep.subr.bf16.mxu0 0
        %2350 = vmatpush2.bf16.xpose.msra.mxu0 0
        %2351 = vmatprep.mubr.bf16.mxu0 0
        %2352 = vmatmul.mubr.bf16.gmra.mxu0 %v2314
        %v2353 = vpop.f32.mrf.mxu0
        %v2354 = vadd.f32 0.0, %v2353
        %v2355 = vpop.f32.mrf.mxu0
        %v2356 = vpop.f32.mrf.mxu0
        %v2357 = vpop.f32.mrf.mxu0
        %2358 = vdwg.mxu0
        %2360 = vrot.lane.b32.xlu0 %v1319, 120
        %v2361 = vpop.permute.xlu0 %2360
        %2362 = vrot.lane.b32.xlu0 %v1327, 88
        %v2363 = vpop.permute.xlu0 %2362
        %v2365 = vsel %vm1335, %v2361, 0
        %v2368 = vsel %vm1335, %v2363, 0
        %2370 = vmatprep.subr.bf16.mxu0 0
        %2371 = vmatpush1.bf16.xpose.msra.mxu0 0
        %2372 = vmatprep.subr.bf16.mxu0 0
        %2373 = vmatpush1.bf16.xpose.msra.mxu0 0
        %2374 = vmatprep.subr.bf16.mxu0 0
        %2375 = vmatpush1.bf16.xpose.msra.mxu0 0
        %2376 = vmatprep.subr.bf16.mxu0 0
        %2377 = vmatpush1.bf16.xpose.msra.mxu0 0
        %2378 = vmatprep.subr.bf16.mxu0 0
        %2379 = vmatpush1.bf16.xpose.msra.mxu0 0
        %2380 = vmatprep.subr.bf16.mxu0 0
        %2381 = vmatpush1.bf16.xpose.msra.mxu0 0
        %2382 = vmatprep.subr.bf16.mxu0 0
        %2383 = vmatpush1.bf16.xpose.msra.mxu0 0
        %2384 = vmatprep.subr.bf16.mxu0 0
        %2385 = vmatpush1.bf16.xpose.msra.mxu0 %v2368
        %2386 = vmatprep.subr.bf16.mxu0 0
        %2387 = vmatpush2.bf16.xpose.msra.mxu0 0
        %2388 = vmatprep.subr.bf16.mxu0 0
        %2389 = vmatpush2.bf16.xpose.msra.mxu0 0
        %2390 = vmatprep.subr.bf16.mxu0 0
        %2391 = vmatpush2.bf16.xpose.msra.mxu0 0
        %2392 = vmatprep.subr.bf16.mxu0 0
        %2393 = vmatpush2.bf16.xpose.msra.mxu0 0
        %2394 = vmatprep.subr.bf16.mxu0 0
        %2395 = vmatpush2.bf16.xpose.msra.mxu0 0
        %2396 = vmatprep.subr.bf16.mxu0 0
        %2397 = vmatpush2.bf16.xpose.msra.mxu0 0
        %2398 = vmatprep.subr.bf16.mxu0 0
        %2399 = vmatpush2.bf16.xpose.msra.mxu0 0
        %2400 = vmatprep.subr.bf16.mxu0 0
        %2401 = vmatpush2.bf16.xpose.msra.mxu0 0
        %2402 = vmatprep.mubr.bf16.mxu0 0
        %2403 = vmatmul.mubr.bf16.gmra.mxu0 %v2365
        %v2404 = vpop.f32.mrf.mxu0
        %v2405 = vadd.f32 0.0, %v2404
        %v2406 = vpop.f32.mrf.mxu0
        %v2407 = vpop.f32.mrf.mxu0
        %v2408 = vpop.f32.mrf.mxu0
        %2409 = vdwg.mxu0
        %2411 = vrot.lane.b32.xlu0 %v1320, 120
        %v2412 = vpop.permute.xlu0 %2411
        %2413 = vrot.lane.b32.xlu0 %v1328, 88
        %v2414 = vpop.permute.xlu0 %2413
        %v2416 = vsel %vm1335, %v2412, 0
        %v2419 = vsel %vm1335, %v2414, 0
        %2421 = vmatprep.subr.bf16.mxu0 0
        %2422 = vmatpush1.bf16.xpose.msra.mxu0 0
        %2423 = vmatprep.subr.bf16.mxu0 0
        %2424 = vmatpush1.bf16.xpose.msra.mxu0 0
        %2425 = vmatprep.subr.bf16.mxu0 0
        %2426 = vmatpush1.bf16.xpose.msra.mxu0 0
        %2427 = vmatprep.subr.bf16.mxu0 0
        %2428 = vmatpush1.bf16.xpose.msra.mxu0 0
        %2429 = vmatprep.subr.bf16.mxu0 0
        %2430 = vmatpush1.bf16.xpose.msra.mxu0 0
        %2431 = vmatprep.subr.bf16.mxu0 0
        %2432 = vmatpush1.bf16.xpose.msra.mxu0 0
        %2433 = vmatprep.subr.bf16.mxu0 0
        %2434 = vmatpush1.bf16.xpose.msra.mxu0 0
        %2435 = vmatprep.subr.bf16.mxu0 0
        %2436 = vmatpush1.bf16.xpose.msra.mxu0 %v2419
        %2437 = vmatprep.subr.bf16.mxu0 0
        %2438 = vmatpush2.bf16.xpose.msra.mxu0 0
        %2439 = vmatprep.subr.bf16.mxu0 0
        %2440 = vmatpush2.bf16.xpose.msra.mxu0 0
        %2441 = vmatprep.subr.bf16.mxu0 0
        %2442 = vmatpush2.bf16.xpose.msra.mxu0 0
        %2443 = vmatprep.subr.bf16.mxu0 0
        %2444 = vmatpush2.bf16.xpose.msra.mxu0 0
        %2445 = vmatprep.subr.bf16.mxu0 0
        %2446 = vmatpush2.bf16.xpose.msra.mxu0 0
        %2447 = vmatprep.subr.bf16.mxu0 0
        %2448 = vmatpush2.bf16.xpose.msra.mxu0 0
        %2449 = vmatprep.subr.bf16.mxu0 0
        %2450 = vmatpush2.bf16.xpose.msra.mxu0 0
        %2451 = vmatprep.subr.bf16.mxu0 0
        %2452 = vmatpush2.bf16.xpose.msra.mxu0 0
        %2453 = vmatprep.mubr.bf16.mxu0 0
        %2454 = vmatmul.mubr.bf16.gmra.mxu0 %v2416
        %v2455 = vpop.f32.mrf.mxu0
        %v2456 = vadd.f32 0.0, %v2455
        %v2457 = vpop.f32.mrf.mxu0
        %v2458 = vpop.f32.mrf.mxu0
        %v2459 = vpop.f32.mrf.mxu0
        %2460 = vdwg.mxu0
        %2462 = vrot.lane.b32.xlu0 %v1321, 120
        %v2463 = vpop.permute.xlu0 %2462
        %2464 = vrot.lane.b32.xlu0 %v1329, 88
        %v2465 = vpop.permute.xlu0 %2464
        %v2467 = vsel %vm1335, %v2463, 0
        %v2470 = vsel %vm1335, %v2465, 0
        %2472 = vmatprep.subr.bf16.mxu0 0
        %2473 = vmatpush1.bf16.xpose.msra.mxu0 0
        %2474 = vmatprep.subr.bf16.mxu0 0
        %2475 = vmatpush1.bf16.xpose.msra.mxu0 0
        %2476 = vmatprep.subr.bf16.mxu0 0
        %2477 = vmatpush1.bf16.xpose.msra.mxu0 0
        %2478 = vmatprep.subr.bf16.mxu0 0
        %2479 = vmatpush1.bf16.xpose.msra.mxu0 0
        %2480 = vmatprep.subr.bf16.mxu0 0
        %2481 = vmatpush1.bf16.xpose.msra.mxu0 0
        %2482 = vmatprep.subr.bf16.mxu0 0
        %2483 = vmatpush1.bf16.xpose.msra.mxu0 0
        %2484 = vmatprep.subr.bf16.mxu0 0
        %2485 = vmatpush1.bf16.xpose.msra.mxu0 0
        %2486 = vmatprep.subr.bf16.mxu0 0
        %2487 = vmatpush1.bf16.xpose.msra.mxu0 %v2470
        %2488 = vmatprep.subr.bf16.mxu0 0
        %2489 = vmatpush2.bf16.xpose.msra.mxu0 0
        %2490 = vmatprep.subr.bf16.mxu0 0
        %2491 = vmatpush2.bf16.xpose.msra.mxu0 0
        %2492 = vmatprep.subr.bf16.mxu0 0
        %2493 = vmatpush2.bf16.xpose.msra.mxu0 0
        %2494 = vmatprep.subr.bf16.mxu0 0
        %2495 = vmatpush2.bf16.xpose.msra.mxu0 0
        %2496 = vmatprep.subr.bf16.mxu0 0
        %2497 = vmatpush2.bf16.xpose.msra.mxu0 0
        %2498 = vmatprep.subr.bf16.mxu0 0
        %2499 = vmatpush2.bf16.xpose.msra.mxu0 0
        %2500 = vmatprep.subr.bf16.mxu0 0
        %2501 = vmatpush2.bf16.xpose.msra.mxu0 0
        %2502 = vmatprep.subr.bf16.mxu0 0
        %2503 = vmatpush2.bf16.xpose.msra.mxu0 0
        %2504 = vmatprep.mubr.bf16.mxu0 0
        %2505 = vmatmul.mubr.bf16.gmra.mxu0 %v2467
        %v2506 = vpop.f32.mrf.mxu0
        %v2507 = vadd.f32 0.0, %v2506
        %v2508 = vpop.f32.mrf.mxu0
        %v2509 = vpop.f32.mrf.mxu0
        %v2510 = vpop.f32.mrf.mxu0
        %2511 = vdwg.mxu0
        %2513 = vrot.lane.b32.xlu0 %v1322, 120
        %v2514 = vpop.permute.xlu0 %2513
        %2515 = vrot.lane.b32.xlu0 %v1330, 88
        %v2516 = vpop.permute.xlu0 %2515
        %v2518 = vsel %vm1335, %v2514, 0
        %v2521 = vsel %vm1335, %v2516, 0
        %2523 = vmatprep.subr.bf16.mxu0 0
        %2524 = vmatpush1.bf16.xpose.msra.mxu0 0
        %2525 = vmatprep.subr.bf16.mxu0 0
        %2526 = vmatpush1.bf16.xpose.msra.mxu0 0
        %2527 = vmatprep.subr.bf16.mxu0 0
        %2528 = vmatpush1.bf16.xpose.msra.mxu0 0
        %2529 = vmatprep.subr.bf16.mxu0 0
        %2530 = vmatpush1.bf16.xpose.msra.mxu0 0
        %2531 = vmatprep.subr.bf16.mxu0 0
        %2532 = vmatpush1.bf16.xpose.msra.mxu0 0
        %2533 = vmatprep.subr.bf16.mxu0 0
        %2534 = vmatpush1.bf16.xpose.msra.mxu0 0
        %2535 = vmatprep.subr.bf16.mxu0 0
        %2536 = vmatpush1.bf16.xpose.msra.mxu0 0
        %2537 = vmatprep.subr.bf16.mxu0 0
        %2538 = vmatpush1.bf16.xpose.msra.mxu0 %v2521
        %2539 = vmatprep.subr.bf16.mxu0 0
        %2540 = vmatpush2.bf16.xpose.msra.mxu0 0
        %2541 = vmatprep.subr.bf16.mxu0 0
        %2542 = vmatpush2.bf16.xpose.msra.mxu0 0
        %2543 = vmatprep.subr.bf16.mxu0 0
        %2544 = vmatpush2.bf16.xpose.msra.mxu0 0
        %2545 = vmatprep.subr.bf16.mxu0 0
        %2546 = vmatpush2.bf16.xpose.msra.mxu0 0
        %2547 = vmatprep.subr.bf16.mxu0 0
        %2548 = vmatpush2.bf16.xpose.msra.mxu0 0
        %2549 = vmatprep.subr.bf16.mxu0 0
        %2550 = vmatpush2.bf16.xpose.msra.mxu0 0
        %2551 = vmatprep.subr.bf16.mxu0 0
        %2552 = vmatpush2.bf16.xpose.msra.mxu0 0
        %2553 = vmatprep.subr.bf16.mxu0 0
        %2554 = vmatpush2.bf16.xpose.msra.mxu0 0
        %2555 = vmatprep.mubr.bf16.mxu0 0
        %2556 = vmatmul.mubr.bf16.gmra.mxu0 %v2518
        %v2557 = vpop.f32.mrf.mxu0
        %v2558 = vadd.f32 0.0, %v2557
        %v2559 = vpop.f32.mrf.mxu0
        %v2560 = vpop.f32.mrf.mxu0
        %v2561 = vpop.f32.mrf.mxu0
        %2562 = vdwg.mxu0
        %2564 = vrot.lane.b32.xlu0 %v1323, 120
        %v2565 = vpop.permute.xlu0 %2564
        %2566 = vrot.lane.b32.xlu0 %v1331, 88
        %v2567 = vpop.permute.xlu0 %2566
        %v2569 = vsel %vm1335, %v2565, 0
        %v2572 = vsel %vm1335, %v2567, 0
        %2574 = vmatprep.subr.bf16.mxu0 0
        %2575 = vmatpush1.bf16.xpose.msra.mxu0 0
        %2576 = vmatprep.subr.bf16.mxu0 0
        %2577 = vmatpush1.bf16.xpose.msra.mxu0 0
        %2578 = vmatprep.subr.bf16.mxu0 0
        %2579 = vmatpush1.bf16.xpose.msra.mxu0 0
        %2580 = vmatprep.subr.bf16.mxu0 0
        %2581 = vmatpush1.bf16.xpose.msra.mxu0 0
        %2582 = vmatprep.subr.bf16.mxu0 0
        %2583 = vmatpush1.bf16.xpose.msra.mxu0 0
        %2584 = vmatprep.subr.bf16.mxu0 0
        %2585 = vmatpush1.bf16.xpose.msra.mxu0 0
        %2586 = vmatprep.subr.bf16.mxu0 0
        %2587 = vmatpush1.bf16.xpose.msra.mxu0 0
        %2588 = vmatprep.subr.bf16.mxu0 0
        %2589 = vmatpush1.bf16.xpose.msra.mxu0 %v2572
        %2590 = vmatprep.subr.bf16.mxu0 0
        %2591 = vmatpush2.bf16.xpose.msra.mxu0 0
        %2592 = vmatprep.subr.bf16.mxu0 0
        %2593 = vmatpush2.bf16.xpose.msra.mxu0 0
        %2594 = vmatprep.subr.bf16.mxu0 0
        %2595 = vmatpush2.bf16.xpose.msra.mxu0 0
        %2596 = vmatprep.subr.bf16.mxu0 0
        %2597 = vmatpush2.bf16.xpose.msra.mxu0 0
        %2598 = vmatprep.subr.bf16.mxu0 0
        %2599 = vmatpush2.bf16.xpose.msra.mxu0 0
        %2600 = vmatprep.subr.bf16.mxu0 0
        %2601 = vmatpush2.bf16.xpose.msra.mxu0 0
        %2602 = vmatprep.subr.bf16.mxu0 0
        %2603 = vmatpush2.bf16.xpose.msra.mxu0 0
        %2604 = vmatprep.subr.bf16.mxu0 0
        %2605 = vmatpush2.bf16.xpose.msra.mxu0 0
        %2606 = vmatprep.mubr.bf16.mxu0 0
        %2607 = vmatmul.mubr.bf16.gmra.mxu0 %v2569
        %v2608 = vpop.f32.mrf.mxu0
        %v2609 = vadd.f32 0.0, %v2608
        %v2610 = vpop.f32.mrf.mxu0
        %v2611 = vpop.f32.mrf.mxu0
        %v2612 = vpop.f32.mrf.mxu0
        %2613 = vdwg.mxu0
        %v2614 = vsel %vm1335, %v2252, -inf
        %2615 = vmax.xlane.f32.xlu0 %v2614
        %v2616 = vpop.xlane.xlu0 %2615
        %v2617 = vsel %vm1335, %v2303, -inf
        %2618 = vmax.xlane.f32.xlu0 %v2617
        %v2619 = vpop.xlane.xlu0 %2618
        %v2620 = vsel %vm1335, %v2354, -inf
        %2621 = vmax.xlane.f32.xlu0 %v2620
        %v2622 = vpop.xlane.xlu0 %2621
        %v2623 = vsel %vm1335, %v2405, -inf
        %2624 = vmax.xlane.f32.xlu0 %v2623
        %v2625 = vpop.xlane.xlu0 %2624
        %v2626 = vsel %vm1335, %v2456, -inf
        %2627 = vmax.xlane.f32.xlu0 %v2626
        %v2628 = vpop.xlane.xlu0 %2627
        %v2629 = vsel %vm1335, %v2507, -inf
        %2630 = vmax.xlane.f32.xlu0 %v2629
        %v2631 = vpop.xlane.xlu0 %2630
        %v2632 = vsel %vm1335, %v2558, -inf
        %2633 = vmax.xlane.f32.xlu0 %v2632
        %v2634 = vpop.xlane.xlu0 %2633
        %v2635 = vsel %vm1335, %v2609, -inf
        %2636 = vmax.xlane.f32.xlu0 %v2635
        %v2637 = vpop.xlane.xlu0 %2636
        %v2638 = vsub.f32 %v2252, %v2616
        %v2639 = vsub.f32 %v2303, %v2619
        %v2640 = vsub.f32 %v2354, %v2622
        %v2641 = vsub.f32 %v2405, %v2625
        %v2642 = vsub.f32 %v2456, %v2628
        %v2643 = vsub.f32 %v2507, %v2631
        %v2644 = vsub.f32 %v2558, %v2634
        %v2645 = vsub.f32 %v2609, %v2637
        %v2646 = vmul.f32 %v2638, 1.442695
        %v2647 = vpow.pop %v2646
        %v2648 = vmul.f32 %v2639, 1.442695
        %v2649 = vpow.pop %v2648
        %v2650 = vmul.f32 %v2640, 1.442695
        %v2651 = vpow.pop %v2650
        %v2652 = vmul.f32 %v2641, 1.442695
        %v2653 = vpow.pop %v2652
        %v2654 = vmul.f32 %v2642, 1.442695
        %v2655 = vpow.pop %v2654
        %v2656 = vmul.f32 %v2643, 1.442695
        %v2657 = vpow.pop %v2656
        %v2658 = vmul.f32 %v2644, 1.442695
        %v2659 = vpow.pop %v2658
        %v2660 = vmul.f32 %v2645, 1.442695
        %v2661 = vpow.pop %v2660
        %v2662 = vsel %vm1335, %v2647, 0.0
        %2663 = vadd.xlane.f32.xlu0 %v2662
        %v2664 = vpop.xlane.xlu0 %2663
        %v2665 = vsel %vm1335, %v2649, 0.0
        %2666 = vadd.xlane.f32.xlu0 %v2665
        %v2667 = vpop.xlane.xlu0 %2666
        %v2668 = vsel %vm1335, %v2651, 0.0
        %2669 = vadd.xlane.f32.xlu0 %v2668
        %v2670 = vpop.xlane.xlu0 %2669
        %v2671 = vsel %vm1335, %v2653, 0.0
        %2672 = vadd.xlane.f32.xlu0 %v2671
        %v2673 = vpop.xlane.xlu0 %2672
        %v2674 = vsel %vm1335, %v2655, 0.0
        %2675 = vadd.xlane.f32.xlu0 %v2674
        %v2676 = vpop.xlane.xlu0 %2675
        %v2677 = vsel %vm1335, %v2657, 0.0
        %2678 = vadd.xlane.f32.xlu0 %v2677
        %v2679 = vpop.xlane.xlu0 %2678
        %v2680 = vsel %vm1335, %v2659, 0.0
        %2681 = vadd.xlane.f32.xlu0 %v2680
        %v2682 = vpop.xlane.xlu0 %2681
        %v2683 = vsel %vm1335, %v2661, 0.0
        %2684 = vadd.xlane.f32.xlu0 %v2683
        %v2685 = vpop.xlane.xlu0 %2684
        %v2686 = vrcp.pop %v2664
        %v2687 = vrcp.pop %v2667
        %v2688 = vrcp.pop %v2670
        %v2689 = vrcp.pop %v2673
        %v2690 = vrcp.pop %v2676
        %v2691 = vrcp.pop %v2679
        %v2692 = vrcp.pop %v2682
        %v2693 = vrcp.pop %v2685
        %v2694 = vmul.f32 %v2647, %v2686
        %v2695 = vmul.f32 %v2649, %v2687
        %v2696 = vmul.f32 %v2651, %v2688
        %v2697 = vmul.f32 %v2653, %v2689
        %v2698 = vmul.f32 %v2655, %v2690
        %v2699 = vmul.f32 %v2657, %v2691
        %v2700 = vmul.f32 %v2659, %v2692
        %v2701 = vmul.f32 %v2661, %v2693
        %v2702 = vpack.c.bf16 %v2694, %v2694
        %v2703 = vpack.c.bf16 %v2695, %v2695
        %v2704 = vpack.c.bf16 %v2696, %v2696
        %v2705 = vpack.c.bf16 %v2697, %v2697
        %v2706 = vpack.c.bf16 %v2698, %v2698
        %v2707 = vpack.c.bf16 %v2699, %v2699
        %v2708 = vpack.c.bf16 %v2700, %v2700
        %v2709 = vpack.c.bf16 %v2701, %v2701
        %2710 = vrot.lane.b32.xlu0 %v1324, 56
        %v2711 = vpop.permute.xlu0 %2710
        %v2713 = vsel %vm1335, %v2702, 0
        %v2716 = vsel %vm1826, %v2711, 0
        %2718 = vmatprep.subr.bf16.mxu0 0
        %2719 = vmatpush1.bf16.msra.mxu0 0
        %2720 = vmatprep.subr.bf16.mxu0 0
        %2721 = vmatpush1.bf16.msra.mxu0 0
        %2722 = vmatprep.subr.bf16.mxu0 0
        %2723 = vmatpush1.bf16.msra.mxu0 0
        %2724 = vmatprep.subr.bf16.mxu0 0
        %2725 = vmatpush1.bf16.msra.mxu0 0
        %2726 = vmatprep.subr.bf16.mxu0 0
        %2727 = vmatpush1.bf16.msra.mxu0 0
        %2728 = vmatprep.subr.bf16.mxu0 0
        %2729 = vmatpush1.bf16.msra.mxu0 0
        %2730 = vmatprep.subr.bf16.mxu0 0
        %2731 = vmatpush1.bf16.msra.mxu0 0
        %2732 = vmatprep.subr.bf16.mxu0 0
        %2733 = vmatpush1.bf16.msra.mxu0 %v2716
        %2734 = vmatprep.subr.bf16.mxu0 0
        %2735 = vmatpush2.bf16.msra.mxu0 0
        %2736 = vmatprep.subr.bf16.mxu0 0
        %2737 = vmatpush2.bf16.msra.mxu0 0
        %2738 = vmatprep.subr.bf16.mxu0 0
        %2739 = vmatpush2.bf16.msra.mxu0 0
        %2740 = vmatprep.subr.bf16.mxu0 0
        %2741 = vmatpush2.bf16.msra.mxu0 0
        %2742 = vmatprep.subr.bf16.mxu0 0
        %2743 = vmatpush2.bf16.msra.mxu0 0
        %2744 = vmatprep.subr.bf16.mxu0 0
        %2745 = vmatpush2.bf16.msra.mxu0 0
        %2746 = vmatprep.subr.bf16.mxu0 0
        %2747 = vmatpush2.bf16.msra.mxu0 0
        %2748 = vmatprep.subr.bf16.mxu0 0
        %2749 = vmatpush2.bf16.msra.mxu0 0
        %2750 = vmatprep.mubr.bf16.mxu0 0
        %2751 = vmatmul.mubr.bf16.gmra.mxu0 %v2713
        %v2752 = vpop.f32.mrf.mxu0
        %v2753 = vadd.f32 0.0, %v2752
        %v2754 = vpop.f32.mrf.mxu0
        %v2755 = vpop.f32.mrf.mxu0
        %v2756 = vpop.f32.mrf.mxu0
        %2757 = vdwg.mxu0
        %2758 = vrot.lane.b32.xlu0 %v1325, 56
        %v2759 = vpop.permute.xlu0 %2758
        %v2761 = vsel %vm1335, %v2703, 0
        %v2764 = vsel %vm1826, %v2759, 0
        %2766 = vmatprep.subr.bf16.mxu0 0
        %2767 = vmatpush1.bf16.msra.mxu0 0
        %2768 = vmatprep.subr.bf16.mxu0 0
        %2769 = vmatpush1.bf16.msra.mxu0 0
        %2770 = vmatprep.subr.bf16.mxu0 0
        %2771 = vmatpush1.bf16.msra.mxu0 0
        %2772 = vmatprep.subr.bf16.mxu0 0
        %2773 = vmatpush1.bf16.msra.mxu0 0
        %2774 = vmatprep.subr.bf16.mxu0 0
        %2775 = vmatpush1.bf16.msra.mxu0 0
        %2776 = vmatprep.subr.bf16.mxu0 0
        %2777 = vmatpush1.bf16.msra.mxu0 0
        %2778 = vmatprep.subr.bf16.mxu0 0
        %2779 = vmatpush1.bf16.msra.mxu0 0
        %2780 = vmatprep.subr.bf16.mxu0 0
        %2781 = vmatpush1.bf16.msra.mxu0 %v2764
        %2782 = vmatprep.subr.bf16.mxu0 0
        %2783 = vmatpush2.bf16.msra.mxu0 0
        %2784 = vmatprep.subr.bf16.mxu0 0
        %2785 = vmatpush2.bf16.msra.mxu0 0
        %2786 = vmatprep.subr.bf16.mxu0 0
        %2787 = vmatpush2.bf16.msra.mxu0 0
        %2788 = vmatprep.subr.bf16.mxu0 0
        %2789 = vmatpush2.bf16.msra.mxu0 0
        %2790 = vmatprep.subr.bf16.mxu0 0
        %2791 = vmatpush2.bf16.msra.mxu0 0
        %2792 = vmatprep.subr.bf16.mxu0 0
        %2793 = vmatpush2.bf16.msra.mxu0 0
        %2794 = vmatprep.subr.bf16.mxu0 0
        %2795 = vmatpush2.bf16.msra.mxu0 0
        %2796 = vmatprep.subr.bf16.mxu0 0
        %2797 = vmatpush2.bf16.msra.mxu0 0
        %2798 = vmatprep.mubr.bf16.mxu0 0
        %2799 = vmatmul.mubr.bf16.gmra.mxu0 %v2761
        %v2800 = vpop.f32.mrf.mxu0
        %v2801 = vadd.f32 0.0, %v2800
        %v2802 = vpop.f32.mrf.mxu0
        %v2803 = vpop.f32.mrf.mxu0
        %v2804 = vpop.f32.mrf.mxu0
        %2805 = vdwg.mxu0
        %2806 = vrot.lane.b32.xlu0 %v1326, 56
        %v2807 = vpop.permute.xlu0 %2806
        %v2809 = vsel %vm1335, %v2704, 0
        %v2812 = vsel %vm1826, %v2807, 0
        %2814 = vmatprep.subr.bf16.mxu0 0
        %2815 = vmatpush1.bf16.msra.mxu0 0
        %2816 = vmatprep.subr.bf16.mxu0 0
        %2817 = vmatpush1.bf16.msra.mxu0 0
        %2818 = vmatprep.subr.bf16.mxu0 0
        %2819 = vmatpush1.bf16.msra.mxu0 0
        %2820 = vmatprep.subr.bf16.mxu0 0
        %2821 = vmatpush1.bf16.msra.mxu0 0
        %2822 = vmatprep.subr.bf16.mxu0 0
        %2823 = vmatpush1.bf16.msra.mxu0 0
        %2824 = vmatprep.subr.bf16.mxu0 0
        %2825 = vmatpush1.bf16.msra.mxu0 0
        %2826 = vmatprep.subr.bf16.mxu0 0
        %2827 = vmatpush1.bf16.msra.mxu0 0
        %2828 = vmatprep.subr.bf16.mxu0 0
        %2829 = vmatpush1.bf16.msra.mxu0 %v2812
        %2830 = vmatprep.subr.bf16.mxu0 0
        %2831 = vmatpush2.bf16.msra.mxu0 0
        %2832 = vmatprep.subr.bf16.mxu0 0
        %2833 = vmatpush2.bf16.msra.mxu0 0
        %2834 = vmatprep.subr.bf16.mxu0 0
        %2835 = vmatpush2.bf16.msra.mxu0 0
        %2836 = vmatprep.subr.bf16.mxu0 0
        %2837 = vmatpush2.bf16.msra.mxu0 0
        %2838 = vmatprep.subr.bf16.mxu0 0
        %2839 = vmatpush2.bf16.msra.mxu0 0
        %2840 = vmatprep.subr.bf16.mxu0 0
        %2841 = vmatpush2.bf16.msra.mxu0 0
        %2842 = vmatprep.subr.bf16.mxu0 0
        %2843 = vmatpush2.bf16.msra.mxu0 0
        %2844 = vmatprep.subr.bf16.mxu0 0
        %2845 = vmatpush2.bf16.msra.mxu0 0
        %2846 = vmatprep.mubr.bf16.mxu0 0
        %2847 = vmatmul.mubr.bf16.gmra.mxu0 %v2809
        %v2848 = vpop.f32.mrf.mxu0
        %v2849 = vadd.f32 0.0, %v2848
        %v2850 = vpop.f32.mrf.mxu0
        %v2851 = vpop.f32.mrf.mxu0
        %v2852 = vpop.f32.mrf.mxu0
        %2853 = vdwg.mxu0
        %2854 = vrot.lane.b32.xlu0 %v1327, 56
        %v2855 = vpop.permute.xlu0 %2854
        %v2857 = vsel %vm1335, %v2705, 0
        %v2860 = vsel %vm1826, %v2855, 0
        %2862 = vmatprep.subr.bf16.mxu0 0
        %2863 = vmatpush1.bf16.msra.mxu0 0
        %2864 = vmatprep.subr.bf16.mxu0 0
        %2865 = vmatpush1.bf16.msra.mxu0 0
        %2866 = vmatprep.subr.bf16.mxu0 0
        %2867 = vmatpush1.bf16.msra.mxu0 0
        %2868 = vmatprep.subr.bf16.mxu0 0
        %2869 = vmatpush1.bf16.msra.mxu0 0
        %2870 = vmatprep.subr.bf16.mxu0 0
        %2871 = vmatpush1.bf16.msra.mxu0 0
        %2872 = vmatprep.subr.bf16.mxu0 0
        %2873 = vmatpush1.bf16.msra.mxu0 0
        %2874 = vmatprep.subr.bf16.mxu0 0
        %2875 = vmatpush1.bf16.msra.mxu0 0
        %2876 = vmatprep.subr.bf16.mxu0 0
        %2877 = vmatpush1.bf16.msra.mxu0 %v2860
        %2878 = vmatprep.subr.bf16.mxu0 0
        %2879 = vmatpush2.bf16.msra.mxu0 0
        %2880 = vmatprep.subr.bf16.mxu0 0
        %2881 = vmatpush2.bf16.msra.mxu0 0
        %2882 = vmatprep.subr.bf16.mxu0 0
        %2883 = vmatpush2.bf16.msra.mxu0 0
        %2884 = vmatprep.subr.bf16.mxu0 0
        %2885 = vmatpush2.bf16.msra.mxu0 0
        %2886 = vmatprep.subr.bf16.mxu0 0
        %2887 = vmatpush2.bf16.msra.mxu0 0
        %2888 = vmatprep.subr.bf16.mxu0 0
        %2889 = vmatpush2.bf16.msra.mxu0 0
        %2890 = vmatprep.subr.bf16.mxu0 0
        %2891 = vmatpush2.bf16.msra.mxu0 0
        %2892 = vmatprep.subr.bf16.mxu0 0
        %2893 = vmatpush2.bf16.msra.mxu0 0
        %2894 = vmatprep.mubr.bf16.mxu0 0
        %2895 = vmatmul.mubr.bf16.gmra.mxu0 %v2857
        %v2896 = vpop.f32.mrf.mxu0
        %v2897 = vadd.f32 0.0, %v2896
        %v2898 = vpop.f32.mrf.mxu0
        %v2899 = vpop.f32.mrf.mxu0
        %v2900 = vpop.f32.mrf.mxu0
        %2901 = vdwg.mxu0
        %2902 = vrot.lane.b32.xlu0 %v1328, 56
        %v2903 = vpop.permute.xlu0 %2902
        %v2905 = vsel %vm1335, %v2706, 0
        %v2908 = vsel %vm1826, %v2903, 0
        %2910 = vmatprep.subr.bf16.mxu0 0
        %2911 = vmatpush1.bf16.msra.mxu0 0
        %2912 = vmatprep.subr.bf16.mxu0 0
        %2913 = vmatpush1.bf16.msra.mxu0 0
        %2914 = vmatprep.subr.bf16.mxu0 0
        %2915 = vmatpush1.bf16.msra.mxu0 0
        %2916 = vmatprep.subr.bf16.mxu0 0
        %2917 = vmatpush1.bf16.msra.mxu0 0
        %2918 = vmatprep.subr.bf16.mxu0 0
        %2919 = vmatpush1.bf16.msra.mxu0 0
        %2920 = vmatprep.subr.bf16.mxu0 0
        %2921 = vmatpush1.bf16.msra.mxu0 0
        %2922 = vmatprep.subr.bf16.mxu0 0
        %2923 = vmatpush1.bf16.msra.mxu0 0
        %2924 = vmatprep.subr.bf16.mxu0 0
        %2925 = vmatpush1.bf16.msra.mxu0 %v2908
        %2926 = vmatprep.subr.bf16.mxu0 0
        %2927 = vmatpush2.bf16.msra.mxu0 0
        %2928 = vmatprep.subr.bf16.mxu0 0
        %2929 = vmatpush2.bf16.msra.mxu0 0
        %2930 = vmatprep.subr.bf16.mxu0 0
        %2931 = vmatpush2.bf16.msra.mxu0 0
        %2932 = vmatprep.subr.bf16.mxu0 0
        %2933 = vmatpush2.bf16.msra.mxu0 0
        %2934 = vmatprep.subr.bf16.mxu0 0
        %2935 = vmatpush2.bf16.msra.mxu0 0
        %2936 = vmatprep.subr.bf16.mxu0 0
        %2937 = vmatpush2.bf16.msra.mxu0 0
        %2938 = vmatprep.subr.bf16.mxu0 0
        %2939 = vmatpush2.bf16.msra.mxu0 0
        %2940 = vmatprep.subr.bf16.mxu0 0
        %2941 = vmatpush2.bf16.msra.mxu0 0
        %2942 = vmatprep.mubr.bf16.mxu0 0
        %2943 = vmatmul.mubr.bf16.gmra.mxu0 %v2905
        %v2944 = vpop.f32.mrf.mxu0
        %v2945 = vadd.f32 0.0, %v2944
        %v2946 = vpop.f32.mrf.mxu0
        %v2947 = vpop.f32.mrf.mxu0
        %v2948 = vpop.f32.mrf.mxu0
        %2949 = vdwg.mxu0
        %2950 = vrot.lane.b32.xlu0 %v1329, 56
        %v2951 = vpop.permute.xlu0 %2950
        %v2953 = vsel %vm1335, %v2707, 0
        %v2956 = vsel %vm1826, %v2951, 0
        %2958 = vmatprep.subr.bf16.mxu0 0
        %2959 = vmatpush1.bf16.msra.mxu0 0
        %2960 = vmatprep.subr.bf16.mxu0 0
        %2961 = vmatpush1.bf16.msra.mxu0 0
        %2962 = vmatprep.subr.bf16.mxu0 0
        %2963 = vmatpush1.bf16.msra.mxu0 0
        %2964 = vmatprep.subr.bf16.mxu0 0
        %2965 = vmatpush1.bf16.msra.mxu0 0
        %2966 = vmatprep.subr.bf16.mxu0 0
        %2967 = vmatpush1.bf16.msra.mxu0 0
        %2968 = vmatprep.subr.bf16.mxu0 0
        %2969 = vmatpush1.bf16.msra.mxu0 0
        %2970 = vmatprep.subr.bf16.mxu0 0
        %2971 = vmatpush1.bf16.msra.mxu0 0
        %2972 = vmatprep.subr.bf16.mxu0 0
        %2973 = vmatpush1.bf16.msra.mxu0 %v2956
        %2974 = vmatprep.subr.bf16.mxu0 0
        %2975 = vmatpush2.bf16.msra.mxu0 0
        %2976 = vmatprep.subr.bf16.mxu0 0
        %2977 = vmatpush2.bf16.msra.mxu0 0
        %2978 = vmatprep.subr.bf16.mxu0 0
        %2979 = vmatpush2.bf16.msra.mxu0 0
        %2980 = vmatprep.subr.bf16.mxu0 0
        %2981 = vmatpush2.bf16.msra.mxu0 0
        %2982 = vmatprep.subr.bf16.mxu0 0
        %2983 = vmatpush2.bf16.msra.mxu0 0
        %2984 = vmatprep.subr.bf16.mxu0 0
        %2985 = vmatpush2.bf16.msra.mxu0 0
        %2986 = vmatprep.subr.bf16.mxu0 0
        %2987 = vmatpush2.bf16.msra.mxu0 0
        %2988 = vmatprep.subr.bf16.mxu0 0
        %2989 = vmatpush2.bf16.msra.mxu0 0
        %2990 = vmatprep.mubr.bf16.mxu0 0
        %2991 = vmatmul.mubr.bf16.gmra.mxu0 %v2953
        %v2992 = vpop.f32.mrf.mxu0
        %v2993 = vadd.f32 0.0, %v2992
        %v2994 = vpop.f32.mrf.mxu0
        %v2995 = vpop.f32.mrf.mxu0
        %v2996 = vpop.f32.mrf.mxu0
        %2997 = vdwg.mxu0
        %2998 = vrot.lane.b32.xlu0 %v1330, 56
        %v2999 = vpop.permute.xlu0 %2998
        %v3001 = vsel %vm1335, %v2708, 0
        %v3004 = vsel %vm1826, %v2999, 0
        %3006 = vmatprep.subr.bf16.mxu0 0
        %3007 = vmatpush1.bf16.msra.mxu0 0
        %3008 = vmatprep.subr.bf16.mxu0 0
        %3009 = vmatpush1.bf16.msra.mxu0 0
        %3010 = vmatprep.subr.bf16.mxu0 0
        %3011 = vmatpush1.bf16.msra.mxu0 0
        %3012 = vmatprep.subr.bf16.mxu0 0
        %3013 = vmatpush1.bf16.msra.mxu0 0
        %3014 = vmatprep.subr.bf16.mxu0 0
        %3015 = vmatpush1.bf16.msra.mxu0 0
        %3016 = vmatprep.subr.bf16.mxu0 0
        %3017 = vmatpush1.bf16.msra.mxu0 0
        %3018 = vmatprep.subr.bf16.mxu0 0
        %3019 = vmatpush1.bf16.msra.mxu0 0
        %3020 = vmatprep.subr.bf16.mxu0 0
        %3021 = vmatpush1.bf16.msra.mxu0 %v3004
        %3022 = vmatprep.subr.bf16.mxu0 0
        %3023 = vmatpush2.bf16.msra.mxu0 0
        %3024 = vmatprep.subr.bf16.mxu0 0
        %3025 = vmatpush2.bf16.msra.mxu0 0
        %3026 = vmatprep.subr.bf16.mxu0 0
        %3027 = vmatpush2.bf16.msra.mxu0 0
        %3028 = vmatprep.subr.bf16.mxu0 0
        %3029 = vmatpush2.bf16.msra.mxu0 0
        %3030 = vmatprep.subr.bf16.mxu0 0
        %3031 = vmatpush2.bf16.msra.mxu0 0
        %3032 = vmatprep.subr.bf16.mxu0 0
        %3033 = vmatpush2.bf16.msra.mxu0 0
        %3034 = vmatprep.subr.bf16.mxu0 0
        %3035 = vmatpush2.bf16.msra.mxu0 0
        %3036 = vmatprep.subr.bf16.mxu0 0
        %3037 = vmatpush2.bf16.msra.mxu0 0
        %3038 = vmatprep.mubr.bf16.mxu0 0
        %3039 = vmatmul.mubr.bf16.gmra.mxu0 %v3001
        %v3040 = vpop.f32.mrf.mxu0
        %v3041 = vadd.f32 0.0, %v3040
        %v3042 = vpop.f32.mrf.mxu0
        %v3043 = vpop.f32.mrf.mxu0
        %v3044 = vpop.f32.mrf.mxu0
        %3045 = vdwg.mxu0
        %3046 = vrot.lane.b32.xlu0 %v1331, 56
        %v3047 = vpop.permute.xlu0 %3046
        %v3049 = vsel %vm1335, %v2709, 0
        %v3052 = vsel %vm1826, %v3047, 0
        %3054 = vmatprep.subr.bf16.mxu0 0
        %3055 = vmatpush1.bf16.msra.mxu0 0
        %3056 = vmatprep.subr.bf16.mxu0 0
        %3057 = vmatpush1.bf16.msra.mxu0 0
        %3058 = vmatprep.subr.bf16.mxu0 0
        %3059 = vmatpush1.bf16.msra.mxu0 0
        %3060 = vmatprep.subr.bf16.mxu0 0
        %3061 = vmatpush1.bf16.msra.mxu0 0
        %3062 = vmatprep.subr.bf16.mxu0 0
        %3063 = vmatpush1.bf16.msra.mxu0 0
        %3064 = vmatprep.subr.bf16.mxu0 0
        %3065 = vmatpush1.bf16.msra.mxu0 0
        %3066 = vmatprep.subr.bf16.mxu0 0
        %3067 = vmatpush1.bf16.msra.mxu0 0
        %3068 = vmatprep.subr.bf16.mxu0 0
        %3069 = vmatpush1.bf16.msra.mxu0 %v3052
        %3070 = vmatprep.subr.bf16.mxu0 0
        %3071 = vmatpush2.bf16.msra.mxu0 0
        %3072 = vmatprep.subr.bf16.mxu0 0
        %3073 = vmatpush2.bf16.msra.mxu0 0
        %3074 = vmatprep.subr.bf16.mxu0 0
        %3075 = vmatpush2.bf16.msra.mxu0 0
        %3076 = vmatprep.subr.bf16.mxu0 0
        %3077 = vmatpush2.bf16.msra.mxu0 0
        %3078 = vmatprep.subr.bf16.mxu0 0
        %3079 = vmatpush2.bf16.msra.mxu0 0
        %3080 = vmatprep.subr.bf16.mxu0 0
        %3081 = vmatpush2.bf16.msra.mxu0 0
        %3082 = vmatprep.subr.bf16.mxu0 0
        %3083 = vmatpush2.bf16.msra.mxu0 0
        %3084 = vmatprep.subr.bf16.mxu0 0
        %3085 = vmatpush2.bf16.msra.mxu0 0
        %3086 = vmatprep.mubr.bf16.mxu0 0
        %3087 = vmatmul.mubr.bf16.gmra.mxu0 %v3049
        %v3088 = vpop.f32.mrf.mxu0
        %v3089 = vadd.f32 0.0, %v3088
        %v3090 = vpop.f32.mrf.mxu0
        %v3091 = vpop.f32.mrf.mxu0
        %v3092 = vpop.f32.mrf.mxu0
        %3093 = vdwg.mxu0
        %3094 = vrot.lane.b32.xlu0 %v1316, 112
        %v3095 = vpop.permute.xlu0 %3094
        %3096 = vrot.lane.b32.xlu0 %v1324, 80
        %v3097 = vpop.permute.xlu0 %3096
        %v3099 = vsel %vm1335, %v3095, 0
        %v3102 = vsel %vm1335, %v3097, 0
        %3104 = vmatprep.subr.bf16.mxu0 0
        %3105 = vmatpush1.bf16.xpose.msra.mxu0 0
        %3106 = vmatprep.subr.bf16.mxu0 0
        %3107 = vmatpush1.bf16.xpose.msra.mxu0 0
        %3108 = vmatprep.subr.bf16.mxu0 0
        %3109 = vmatpush1.bf16.xpose.msra.mxu0 0
        %3110 = vmatprep.subr.bf16.mxu0 0
        %3111 = vmatpush1.bf16.xpose.msra.mxu0 0
        %3112 = vmatprep.subr.bf16.mxu0 0
        %3113 = vmatpush1.bf16.xpose.msra.mxu0 0
        %3114 = vmatprep.subr.bf16.mxu0 0
        %3115 = vmatpush1.bf16.xpose.msra.mxu0 0
        %3116 = vmatprep.subr.bf16.mxu0 0
        %3117 = vmatpush1.bf16.xpose.msra.mxu0 0
        %3118 = vmatprep.subr.bf16.mxu0 0
        %3119 = vmatpush1.bf16.xpose.msra.mxu0 %v3102
        %3120 = vmatprep.subr.bf16.mxu0 0
        %3121 = vmatpush2.bf16.xpose.msra.mxu0 0
        %3122 = vmatprep.subr.bf16.mxu0 0
        %3123 = vmatpush2.bf16.xpose.msra.mxu0 0
        %3124 = vmatprep.subr.bf16.mxu0 0
        %3125 = vmatpush2.bf16.xpose.msra.mxu0 0
        %3126 = vmatprep.subr.bf16.mxu0 0
        %3127 = vmatpush2.bf16.xpose.msra.mxu0 0
        %3128 = vmatprep.subr.bf16.mxu0 0
        %3129 = vmatpush2.bf16.xpose.msra.mxu0 0
        %3130 = vmatprep.subr.bf16.mxu0 0
        %3131 = vmatpush2.bf16.xpose.msra.mxu0 0
        %3132 = vmatprep.subr.bf16.mxu0 0
        %3133 = vmatpush2.bf16.xpose.msra.mxu0 0
        %3134 = vmatprep.subr.bf16.mxu0 0
        %3135 = vmatpush2.bf16.xpose.msra.mxu0 0
        %3136 = vmatprep.mubr.bf16.mxu0 0
        %3137 = vmatmul.mubr.bf16.gmra.mxu0 %v3099
        %v3138 = vpop.f32.mrf.mxu0
        %v3139 = vadd.f32 0.0, %v3138
        %v3140 = vpop.f32.mrf.mxu0
        %v3141 = vpop.f32.mrf.mxu0
        %v3142 = vpop.f32.mrf.mxu0
        %3143 = vdwg.mxu0
        %3144 = vrot.lane.b32.xlu0 %v1317, 112
        %v3145 = vpop.permute.xlu0 %3144
        %3146 = vrot.lane.b32.xlu0 %v1325, 80
        %v3147 = vpop.permute.xlu0 %3146
        %v3149 = vsel %vm1335, %v3145, 0
        %v3152 = vsel %vm1335, %v3147, 0
        %3154 = vmatprep.subr.bf16.mxu0 0
        %3155 = vmatpush1.bf16.xpose.msra.mxu0 0
        %3156 = vmatprep.subr.bf16.mxu0 0
        %3157 = vmatpush1.bf16.xpose.msra.mxu0 0
        %3158 = vmatprep.subr.bf16.mxu0 0
        %3159 = vmatpush1.bf16.xpose.msra.mxu0 0
        %3160 = vmatprep.subr.bf16.mxu0 0
        %3161 = vmatpush1.bf16.xpose.msra.mxu0 0
        %3162 = vmatprep.subr.bf16.mxu0 0
        %3163 = vmatpush1.bf16.xpose.msra.mxu0 0
        %3164 = vmatprep.subr.bf16.mxu0 0
        %3165 = vmatpush1.bf16.xpose.msra.mxu0 0
        %3166 = vmatprep.subr.bf16.mxu0 0
        %3167 = vmatpush1.bf16.xpose.msra.mxu0 0
        %3168 = vmatprep.subr.bf16.mxu0 0
        %3169 = vmatpush1.bf16.xpose.msra.mxu0 %v3152
        %3170 = vmatprep.subr.bf16.mxu0 0
        %3171 = vmatpush2.bf16.xpose.msra.mxu0 0
        %3172 = vmatprep.subr.bf16.mxu0 0
        %3173 = vmatpush2.bf16.xpose.msra.mxu0 0
        %3174 = vmatprep.subr.bf16.mxu0 0
        %3175 = vmatpush2.bf16.xpose.msra.mxu0 0
        %3176 = vmatprep.subr.bf16.mxu0 0
        %3177 = vmatpush2.bf16.xpose.msra.mxu0 0
        %3178 = vmatprep.subr.bf16.mxu0 0
        %3179 = vmatpush2.bf16.xpose.msra.mxu0 0
        %3180 = vmatprep.subr.bf16.mxu0 0
        %3181 = vmatpush2.bf16.xpose.msra.mxu0 0
        %3182 = vmatprep.subr.bf16.mxu0 0
        %3183 = vmatpush2.bf16.xpose.msra.mxu0 0
        %3184 = vmatprep.subr.bf16.mxu0 0
        %3185 = vmatpush2.bf16.xpose.msra.mxu0 0
        %3186 = vmatprep.mubr.bf16.mxu0 0
        %3187 = vmatmul.mubr.bf16.gmra.mxu0 %v3149
        %v3188 = vpop.f32.mrf.mxu0
        %v3189 = vadd.f32 0.0, %v3188
        %v3190 = vpop.f32.mrf.mxu0
        %v3191 = vpop.f32.mrf.mxu0
        %v3192 = vpop.f32.mrf.mxu0
        %3193 = vdwg.mxu0
        %3194 = vrot.lane.b32.xlu0 %v1318, 112
        %v3195 = vpop.permute.xlu0 %3194
        %3196 = vrot.lane.b32.xlu0 %v1326, 80
        %v3197 = vpop.permute.xlu0 %3196
        %v3199 = vsel %vm1335, %v3195, 0
        %v3202 = vsel %vm1335, %v3197, 0
        %3204 = vmatprep.subr.bf16.mxu0 0
        %3205 = vmatpush1.bf16.xpose.msra.mxu0 0
        %3206 = vmatprep.subr.bf16.mxu0 0
        %3207 = vmatpush1.bf16.xpose.msra.mxu0 0
        %3208 = vmatprep.subr.bf16.mxu0 0
        %3209 = vmatpush1.bf16.xpose.msra.mxu0 0
        %3210 = vmatprep.subr.bf16.mxu0 0
        %3211 = vmatpush1.bf16.xpose.msra.mxu0 0
        %3212 = vmatprep.subr.bf16.mxu0 0
        %3213 = vmatpush1.bf16.xpose.msra.mxu0 0
        %3214 = vmatprep.subr.bf16.mxu0 0
        %3215 = vmatpush1.bf16.xpose.msra.mxu0 0
        %3216 = vmatprep.subr.bf16.mxu0 0
        %3217 = vmatpush1.bf16.xpose.msra.mxu0 0
        %3218 = vmatprep.subr.bf16.mxu0 0
        %3219 = vmatpush1.bf16.xpose.msra.mxu0 %v3202
        %3220 = vmatprep.subr.bf16.mxu0 0
        %3221 = vmatpush2.bf16.xpose.msra.mxu0 0
        %3222 = vmatprep.subr.bf16.mxu0 0
        %3223 = vmatpush2.bf16.xpose.msra.mxu0 0
        %3224 = vmatprep.subr.bf16.mxu0 0
        %3225 = vmatpush2.bf16.xpose.msra.mxu0 0
        %3226 = vmatprep.subr.bf16.mxu0 0
        %3227 = vmatpush2.bf16.xpose.msra.mxu0 0
        %3228 = vmatprep.subr.bf16.mxu0 0
        %3229 = vmatpush2.bf16.xpose.msra.mxu0 0
        %3230 = vmatprep.subr.bf16.mxu0 0
        %3231 = vmatpush2.bf16.xpose.msra.mxu0 0
        %3232 = vmatprep.subr.bf16.mxu0 0
        %3233 = vmatpush2.bf16.xpose.msra.mxu0 0
        %3234 = vmatprep.subr.bf16.mxu0 0
        %3235 = vmatpush2.bf16.xpose.msra.mxu0 0
        %3236 = vmatprep.mubr.bf16.mxu0 0
        %3237 = vmatmul.mubr.bf16.gmra.mxu0 %v3199
        %v3238 = vpop.f32.mrf.mxu0
        %v3239 = vadd.f32 0.0, %v3238
        %v3240 = vpop.f32.mrf.mxu0
        %v3241 = vpop.f32.mrf.mxu0
        %v3242 = vpop.f32.mrf.mxu0
        %3243 = vdwg.mxu0
        %3244 = vrot.lane.b32.xlu0 %v1319, 112
        %v3245 = vpop.permute.xlu0 %3244
        %3246 = vrot.lane.b32.xlu0 %v1327, 80
        %v3247 = vpop.permute.xlu0 %3246
        %v3249 = vsel %vm1335, %v3245, 0
        %v3252 = vsel %vm1335, %v3247, 0
        %3254 = vmatprep.subr.bf16.mxu0 0
        %3255 = vmatpush1.bf16.xpose.msra.mxu0 0
        %3256 = vmatprep.subr.bf16.mxu0 0
        %3257 = vmatpush1.bf16.xpose.msra.mxu0 0
        %3258 = vmatprep.subr.bf16.mxu0 0
        %3259 = vmatpush1.bf16.xpose.msra.mxu0 0
        %3260 = vmatprep.subr.bf16.mxu0 0
        %3261 = vmatpush1.bf16.xpose.msra.mxu0 0
        %3262 = vmatprep.subr.bf16.mxu0 0
        %3263 = vmatpush1.bf16.xpose.msra.mxu0 0
        %3264 = vmatprep.subr.bf16.mxu0 0
        %3265 = vmatpush1.bf16.xpose.msra.mxu0 0
        %3266 = vmatprep.subr.bf16.mxu0 0
        %3267 = vmatpush1.bf16.xpose.msra.mxu0 0
        %3268 = vmatprep.subr.bf16.mxu0 0
        %3269 = vmatpush1.bf16.xpose.msra.mxu0 %v3252
        %3270 = vmatprep.subr.bf16.mxu0 0
        %3271 = vmatpush2.bf16.xpose.msra.mxu0 0
        %3272 = vmatprep.subr.bf16.mxu0 0
        %3273 = vmatpush2.bf16.xpose.msra.mxu0 0
        %3274 = vmatprep.subr.bf16.mxu0 0
        %3275 = vmatpush2.bf16.xpose.msra.mxu0 0
        %3276 = vmatprep.subr.bf16.mxu0 0
        %3277 = vmatpush2.bf16.xpose.msra.mxu0 0
        %3278 = vmatprep.subr.bf16.mxu0 0
        %3279 = vmatpush2.bf16.xpose.msra.mxu0 0
        %3280 = vmatprep.subr.bf16.mxu0 0
        %3281 = vmatpush2.bf16.xpose.msra.mxu0 0
        %3282 = vmatprep.subr.bf16.mxu0 0
        %3283 = vmatpush2.bf16.xpose.msra.mxu0 0
        %3284 = vmatprep.subr.bf16.mxu0 0
        %3285 = vmatpush2.bf16.xpose.msra.mxu0 0
        %3286 = vmatprep.mubr.bf16.mxu0 0
        %3287 = vmatmul.mubr.bf16.gmra.mxu0 %v3249
        %v3288 = vpop.f32.mrf.mxu0
        %v3289 = vadd.f32 0.0, %v3288
        %v3290 = vpop.f32.mrf.mxu0
        %v3291 = vpop.f32.mrf.mxu0
        %v3292 = vpop.f32.mrf.mxu0
        %3293 = vdwg.mxu0
        %3294 = vrot.lane.b32.xlu0 %v1320, 112
        %v3295 = vpop.permute.xlu0 %3294
        %3296 = vrot.lane.b32.xlu0 %v1328, 80
        %v3297 = vpop.permute.xlu0 %3296
        %v3299 = vsel %vm1335, %v3295, 0
        %v3302 = vsel %vm1335, %v3297, 0
        %3304 = vmatprep.subr.bf16.mxu0 0
        %3305 = vmatpush1.bf16.xpose.msra.mxu0 0
        %3306 = vmatprep.subr.bf16.mxu0 0
        %3307 = vmatpush1.bf16.xpose.msra.mxu0 0
        %3308 = vmatprep.subr.bf16.mxu0 0
        %3309 = vmatpush1.bf16.xpose.msra.mxu0 0
        %3310 = vmatprep.subr.bf16.mxu0 0
        %3311 = vmatpush1.bf16.xpose.msra.mxu0 0
        %3312 = vmatprep.subr.bf16.mxu0 0
        %3313 = vmatpush1.bf16.xpose.msra.mxu0 0
        %3314 = vmatprep.subr.bf16.mxu0 0
        %3315 = vmatpush1.bf16.xpose.msra.mxu0 0
        %3316 = vmatprep.subr.bf16.mxu0 0
        %3317 = vmatpush1.bf16.xpose.msra.mxu0 0
        %3318 = vmatprep.subr.bf16.mxu0 0
        %3319 = vmatpush1.bf16.xpose.msra.mxu0 %v3302
        %3320 = vmatprep.subr.bf16.mxu0 0
        %3321 = vmatpush2.bf16.xpose.msra.mxu0 0
        %3322 = vmatprep.subr.bf16.mxu0 0
        %3323 = vmatpush2.bf16.xpose.msra.mxu0 0
        %3324 = vmatprep.subr.bf16.mxu0 0
        %3325 = vmatpush2.bf16.xpose.msra.mxu0 0
        %3326 = vmatprep.subr.bf16.mxu0 0
        %3327 = vmatpush2.bf16.xpose.msra.mxu0 0
        %3328 = vmatprep.subr.bf16.mxu0 0
        %3329 = vmatpush2.bf16.xpose.msra.mxu0 0
        %3330 = vmatprep.subr.bf16.mxu0 0
        %3331 = vmatpush2.bf16.xpose.msra.mxu0 0
        %3332 = vmatprep.subr.bf16.mxu0 0
        %3333 = vmatpush2.bf16.xpose.msra.mxu0 0
        %3334 = vmatprep.subr.bf16.mxu0 0
        %3335 = vmatpush2.bf16.xpose.msra.mxu0 0
        %3336 = vmatprep.mubr.bf16.mxu0 0
        %3337 = vmatmul.mubr.bf16.gmra.mxu0 %v3299
        %v3338 = vpop.f32.mrf.mxu0
        %v3339 = vadd.f32 0.0, %v3338
        %v3340 = vpop.f32.mrf.mxu0
        %v3341 = vpop.f32.mrf.mxu0
        %v3342 = vpop.f32.mrf.mxu0
        %3343 = vdwg.mxu0
        %3344 = vrot.lane.b32.xlu0 %v1321, 112
        %v3345 = vpop.permute.xlu0 %3344
        %3346 = vrot.lane.b32.xlu0 %v1329, 80
        %v3347 = vpop.permute.xlu0 %3346
        %v3349 = vsel %vm1335, %v3345, 0
        %v3352 = vsel %vm1335, %v3347, 0
        %3354 = vmatprep.subr.bf16.mxu0 0
        %3355 = vmatpush1.bf16.xpose.msra.mxu0 0
        %3356 = vmatprep.subr.bf16.mxu0 0
        %3357 = vmatpush1.bf16.xpose.msra.mxu0 0
        %3358 = vmatprep.subr.bf16.mxu0 0
        %3359 = vmatpush1.bf16.xpose.msra.mxu0 0
        %3360 = vmatprep.subr.bf16.mxu0 0
        %3361 = vmatpush1.bf16.xpose.msra.mxu0 0
        %3362 = vmatprep.subr.bf16.mxu0 0
        %3363 = vmatpush1.bf16.xpose.msra.mxu0 0
        %3364 = vmatprep.subr.bf16.mxu0 0
        %3365 = vmatpush1.bf16.xpose.msra.mxu0 0
        %3366 = vmatprep.subr.bf16.mxu0 0
        %3367 = vmatpush1.bf16.xpose.msra.mxu0 0
        %3368 = vmatprep.subr.bf16.mxu0 0
        %3369 = vmatpush1.bf16.xpose.msra.mxu0 %v3352
        %3370 = vmatprep.subr.bf16.mxu0 0
        %3371 = vmatpush2.bf16.xpose.msra.mxu0 0
        %3372 = vmatprep.subr.bf16.mxu0 0
        %3373 = vmatpush2.bf16.xpose.msra.mxu0 0
        %3374 = vmatprep.subr.bf16.mxu0 0
        %3375 = vmatpush2.bf16.xpose.msra.mxu0 0
        %3376 = vmatprep.subr.bf16.mxu0 0
        %3377 = vmatpush2.bf16.xpose.msra.mxu0 0
        %3378 = vmatprep.subr.bf16.mxu0 0
        %3379 = vmatpush2.bf16.xpose.msra.mxu0 0
        %3380 = vmatprep.subr.bf16.mxu0 0
        %3381 = vmatpush2.bf16.xpose.msra.mxu0 0
        %3382 = vmatprep.subr.bf16.mxu0 0
        %3383 = vmatpush2.bf16.xpose.msra.mxu0 0
        %3384 = vmatprep.subr.bf16.mxu0 0
        %3385 = vmatpush2.bf16.xpose.msra.mxu0 0
        %3386 = vmatprep.mubr.bf16.mxu0 0
        %3387 = vmatmul.mubr.bf16.gmra.mxu0 %v3349
        %v3388 = vpop.f32.mrf.mxu0
        %v3389 = vadd.f32 0.0, %v3388
        %v3390 = vpop.f32.mrf.mxu0
        %v3391 = vpop.f32.mrf.mxu0
        %v3392 = vpop.f32.mrf.mxu0
        %3393 = vdwg.mxu0
        %3394 = vrot.lane.b32.xlu0 %v1322, 112
        %v3395 = vpop.permute.xlu0 %3394
        %3396 = vrot.lane.b32.xlu0 %v1330, 80
        %v3397 = vpop.permute.xlu0 %3396
        %v3399 = vsel %vm1335, %v3395, 0
        %v3402 = vsel %vm1335, %v3397, 0
        %3404 = vmatprep.subr.bf16.mxu0 0
        %3405 = vmatpush1.bf16.xpose.msra.mxu0 0
        %3406 = vmatprep.subr.bf16.mxu0 0
        %3407 = vmatpush1.bf16.xpose.msra.mxu0 0
        %3408 = vmatprep.subr.bf16.mxu0 0
        %3409 = vmatpush1.bf16.xpose.msra.mxu0 0
        %3410 = vmatprep.subr.bf16.mxu0 0
        %3411 = vmatpush1.bf16.xpose.msra.mxu0 0
        %3412 = vmatprep.subr.bf16.mxu0 0
        %3413 = vmatpush1.bf16.xpose.msra.mxu0 0
        %3414 = vmatprep.subr.bf16.mxu0 0
        %3415 = vmatpush1.bf16.xpose.msra.mxu0 0
        %3416 = vmatprep.subr.bf16.mxu0 0
        %3417 = vmatpush1.bf16.xpose.msra.mxu0 0
        %3418 = vmatprep.subr.bf16.mxu0 0
        %3419 = vmatpush1.bf16.xpose.msra.mxu0 %v3402
        %3420 = vmatprep.subr.bf16.mxu0 0
        %3421 = vmatpush2.bf16.xpose.msra.mxu0 0
        %3422 = vmatprep.subr.bf16.mxu0 0
        %3423 = vmatpush2.bf16.xpose.msra.mxu0 0
        %3424 = vmatprep.subr.bf16.mxu0 0
        %3425 = vmatpush2.bf16.xpose.msra.mxu0 0
        %3426 = vmatprep.subr.bf16.mxu0 0
        %3427 = vmatpush2.bf16.xpose.msra.mxu0 0
        %3428 = vmatprep.subr.bf16.mxu0 0
        %3429 = vmatpush2.bf16.xpose.msra.mxu0 0
        %3430 = vmatprep.subr.bf16.mxu0 0
        %3431 = vmatpush2.bf16.xpose.msra.mxu0 0
        %3432 = vmatprep.subr.bf16.mxu0 0
        %3433 = vmatpush2.bf16.xpose.msra.mxu0 0
        %3434 = vmatprep.subr.bf16.mxu0 0
        %3435 = vmatpush2.bf16.xpose.msra.mxu0 0
        %3436 = vmatprep.mubr.bf16.mxu0 0
        %3437 = vmatmul.mubr.bf16.gmra.mxu0 %v3399
        %v3438 = vpop.f32.mrf.mxu0
        %v3439 = vadd.f32 0.0, %v3438
        %v3440 = vpop.f32.mrf.mxu0
        %v3441 = vpop.f32.mrf.mxu0
        %v3442 = vpop.f32.mrf.mxu0
        %3443 = vdwg.mxu0
        %3444 = vrot.lane.b32.xlu0 %v1323, 112
        %v3445 = vpop.permute.xlu0 %3444
        %3446 = vrot.lane.b32.xlu0 %v1331, 80
        %v3447 = vpop.permute.xlu0 %3446
        %v3449 = vsel %vm1335, %v3445, 0
        %v3452 = vsel %vm1335, %v3447, 0
        %3454 = vmatprep.subr.bf16.mxu0 0
        %3455 = vmatpush1.bf16.xpose.msra.mxu0 0
        %3456 = vmatprep.subr.bf16.mxu0 0
        %3457 = vmatpush1.bf16.xpose.msra.mxu0 0
        %3458 = vmatprep.subr.bf16.mxu0 0
        %3459 = vmatpush1.bf16.xpose.msra.mxu0 0
        %3460 = vmatprep.subr.bf16.mxu0 0
        %3461 = vmatpush1.bf16.xpose.msra.mxu0 0
        %3462 = vmatprep.subr.bf16.mxu0 0
        %3463 = vmatpush1.bf16.xpose.msra.mxu0 0
        %3464 = vmatprep.subr.bf16.mxu0 0
        %3465 = vmatpush1.bf16.xpose.msra.mxu0 0
        %3466 = vmatprep.subr.bf16.mxu0 0
        %3467 = vmatpush1.bf16.xpose.msra.mxu0 0
        %3468 = vmatprep.subr.bf16.mxu0 0
        %3469 = vmatpush1.bf16.xpose.msra.mxu0 %v3452
        %3470 = vmatprep.subr.bf16.mxu0 0
        %3471 = vmatpush2.bf16.xpose.msra.mxu0 0
        %3472 = vmatprep.subr.bf16.mxu0 0
        %3473 = vmatpush2.bf16.xpose.msra.mxu0 0
        %3474 = vmatprep.subr.bf16.mxu0 0
        %3475 = vmatpush2.bf16.xpose.msra.mxu0 0
        %3476 = vmatprep.subr.bf16.mxu0 0
        %3477 = vmatpush2.bf16.xpose.msra.mxu0 0
        %3478 = vmatprep.subr.bf16.mxu0 0
        %3479 = vmatpush2.bf16.xpose.msra.mxu0 0
        %3480 = vmatprep.subr.bf16.mxu0 0
        %3481 = vmatpush2.bf16.xpose.msra.mxu0 0
        %3482 = vmatprep.subr.bf16.mxu0 0
        %3483 = vmatpush2.bf16.xpose.msra.mxu0 0
        %3484 = vmatprep.subr.bf16.mxu0 0
        %3485 = vmatpush2.bf16.xpose.msra.mxu0 0
        %3486 = vmatprep.mubr.bf16.mxu0 0
        %3487 = vmatmul.mubr.bf16.gmra.mxu0 %v3449
        %v3488 = vpop.f32.mrf.mxu0
        %v3489 = vadd.f32 0.0, %v3488
        %v3490 = vpop.f32.mrf.mxu0
        %v3491 = vpop.f32.mrf.mxu0
        %v3492 = vpop.f32.mrf.mxu0
        %3493 = vdwg.mxu0
        %v3494 = vsel %vm1335, %v3139, -inf
        %3495 = vmax.xlane.f32.xlu0 %v3494
        %v3496 = vpop.xlane.xlu0 %3495
        %v3497 = vsel %vm1335, %v3189, -inf
        %3498 = vmax.xlane.f32.xlu0 %v3497
        %v3499 = vpop.xlane.xlu0 %3498
        %v3500 = vsel %vm1335, %v3239, -inf
        %3501 = vmax.xlane.f32.xlu0 %v3500
        %v3502 = vpop.xlane.xlu0 %3501
        %v3503 = vsel %vm1335, %v3289, -inf
        %3504 = vmax.xlane.f32.xlu0 %v3503
        %v3505 = vpop.xlane.xlu0 %3504
        %v3506 = vsel %vm1335, %v3339, -inf
        %3507 = vmax.xlane.f32.xlu0 %v3506
        %v3508 = vpop.xlane.xlu0 %3507
        %v3509 = vsel %vm1335, %v3389, -inf
        %3510 = vmax.xlane.f32.xlu0 %v3509
        %v3511 = vpop.xlane.xlu0 %3510
        %v3512 = vsel %vm1335, %v3439, -inf
        %3513 = vmax.xlane.f32.xlu0 %v3512
        %v3514 = vpop.xlane.xlu0 %3513
        %v3515 = vsel %vm1335, %v3489, -inf
        %3516 = vmax.xlane.f32.xlu0 %v3515
        %v3517 = vpop.xlane.xlu0 %3516
        %v3518 = vsub.f32 %v3139, %v3496
        %v3519 = vsub.f32 %v3189, %v3499
        %v3520 = vsub.f32 %v3239, %v3502
        %v3521 = vsub.f32 %v3289, %v3505
        %v3522 = vsub.f32 %v3339, %v3508
        %v3523 = vsub.f32 %v3389, %v3511
        %v3524 = vsub.f32 %v3439, %v3514
        %v3525 = vsub.f32 %v3489, %v3517
        %v3526 = vmul.f32 %v3518, 1.442695
        %v3527 = vpow.pop %v3526
        %v3528 = vmul.f32 %v3519, 1.442695
        %v3529 = vpow.pop %v3528
        %v3530 = vmul.f32 %v3520, 1.442695
        %v3531 = vpow.pop %v3530
        %v3532 = vmul.f32 %v3521, 1.442695
        %v3533 = vpow.pop %v3532
        %v3534 = vmul.f32 %v3522, 1.442695
        %v3535 = vpow.pop %v3534
        %v3536 = vmul.f32 %v3523, 1.442695
        %v3537 = vpow.pop %v3536
        %v3538 = vmul.f32 %v3524, 1.442695
        %v3539 = vpow.pop %v3538
        %v3540 = vmul.f32 %v3525, 1.442695
        %v3541 = vpow.pop %v3540
        %v3542 = vsel %vm1335, %v3527, 0.0
        %3543 = vadd.xlane.f32.xlu0 %v3542
        %v3544 = vpop.xlane.xlu0 %3543
        %v3545 = vsel %vm1335, %v3529, 0.0
        %3546 = vadd.xlane.f32.xlu0 %v3545
        %v3547 = vpop.xlane.xlu0 %3546
        %v3548 = vsel %vm1335, %v3531, 0.0
        %3549 = vadd.xlane.f32.xlu0 %v3548
        %v3550 = vpop.xlane.xlu0 %3549
        %v3551 = vsel %vm1335, %v3533, 0.0
        %3552 = vadd.xlane.f32.xlu0 %v3551
        %v3553 = vpop.xlane.xlu0 %3552
        %v3554 = vsel %vm1335, %v3535, 0.0
        %3555 = vadd.xlane.f32.xlu0 %v3554
        %v3556 = vpop.xlane.xlu0 %3555
        %v3557 = vsel %vm1335, %v3537, 0.0
        %3558 = vadd.xlane.f32.xlu0 %v3557
        %v3559 = vpop.xlane.xlu0 %3558
        %v3560 = vsel %vm1335, %v3539, 0.0
        %3561 = vadd.xlane.f32.xlu0 %v3560
        %v3562 = vpop.xlane.xlu0 %3561
        %v3563 = vsel %vm1335, %v3541, 0.0
        %3564 = vadd.xlane.f32.xlu0 %v3563
        %v3565 = vpop.xlane.xlu0 %3564
        %v3566 = vrcp.pop %v3544
        %v3567 = vrcp.pop %v3547
        %v3568 = vrcp.pop %v3550
        %v3569 = vrcp.pop %v3553
        %v3570 = vrcp.pop %v3556
        %v3571 = vrcp.pop %v3559
        %v3572 = vrcp.pop %v3562
        %v3573 = vrcp.pop %v3565
        %v3574 = vmul.f32 %v3527, %v3566
        %v3575 = vmul.f32 %v3529, %v3567
        %v3576 = vmul.f32 %v3531, %v3568
        %v3577 = vmul.f32 %v3533, %v3569
        %v3578 = vmul.f32 %v3535, %v3570
        %v3579 = vmul.f32 %v3537, %v3571
        %v3580 = vmul.f32 %v3539, %v3572
        %v3581 = vmul.f32 %v3541, %v3573
        %v3582 = vpack.c.bf16 %v3574, %v3574
        %v3583 = vpack.c.bf16 %v3575, %v3575
        %v3584 = vpack.c.bf16 %v3576, %v3576
        %v3585 = vpack.c.bf16 %v3577, %v3577
        %v3586 = vpack.c.bf16 %v3578, %v3578
        %v3587 = vpack.c.bf16 %v3579, %v3579
        %v3588 = vpack.c.bf16 %v3580, %v3580
        %v3589 = vpack.c.bf16 %v3581, %v3581
        %3590 = vrot.lane.b32.xlu0 %v1324, 48
        %v3591 = vpop.permute.xlu0 %3590
        %v3593 = vsel %vm1335, %v3582, 0
        %v3596 = vsel %vm1826, %v3591, 0
        %3598 = vmatprep.subr.bf16.mxu0 0
        %3599 = vmatpush1.bf16.msra.mxu0 0
        %3600 = vmatprep.subr.bf16.mxu0 0
        %3601 = vmatpush1.bf16.msra.mxu0 0
        %3602 = vmatprep.subr.bf16.mxu0 0
        %3603 = vmatpush1.bf16.msra.mxu0 0
        %3604 = vmatprep.subr.bf16.mxu0 0
        %3605 = vmatpush1.bf16.msra.mxu0 0
        %3606 = vmatprep.subr.bf16.mxu0 0
        %3607 = vmatpush1.bf16.msra.mxu0 0
        %3608 = vmatprep.subr.bf16.mxu0 0
        %3609 = vmatpush1.bf16.msra.mxu0 0
        %3610 = vmatprep.subr.bf16.mxu0 0
        %3611 = vmatpush1.bf16.msra.mxu0 0
        %3612 = vmatprep.subr.bf16.mxu0 0
        %3613 = vmatpush1.bf16.msra.mxu0 %v3596
        %3614 = vmatprep.subr.bf16.mxu0 0
        %3615 = vmatpush2.bf16.msra.mxu0 0
        %3616 = vmatprep.subr.bf16.mxu0 0
        %3617 = vmatpush2.bf16.msra.mxu0 0
        %3618 = vmatprep.subr.bf16.mxu0 0
        %3619 = vmatpush2.bf16.msra.mxu0 0
        %3620 = vmatprep.subr.bf16.mxu0 0
        %3621 = vmatpush2.bf16.msra.mxu0 0
        %3622 = vmatprep.subr.bf16.mxu0 0
        %3623 = vmatpush2.bf16.msra.mxu0 0
        %3624 = vmatprep.subr.bf16.mxu0 0
        %3625 = vmatpush2.bf16.msra.mxu0 0
        %3626 = vmatprep.subr.bf16.mxu0 0
        %3627 = vmatpush2.bf16.msra.mxu0 0
        %3628 = vmatprep.subr.bf16.mxu0 0
        %3629 = vmatpush2.bf16.msra.mxu0 0
        %3630 = vmatprep.mubr.bf16.mxu0 0
        %3631 = vmatmul.mubr.bf16.gmra.mxu0 %v3593
        %v3632 = vpop.f32.mrf.mxu0
        %v3633 = vadd.f32 0.0, %v3632
        %v3634 = vpop.f32.mrf.mxu0
        %v3635 = vpop.f32.mrf.mxu0
        %v3636 = vpop.f32.mrf.mxu0
        %3637 = vdwg.mxu0
        %3638 = vrot.lane.b32.xlu0 %v1325, 48
        %v3639 = vpop.permute.xlu0 %3638
        %v3641 = vsel %vm1335, %v3583, 0
        %v3644 = vsel %vm1826, %v3639, 0
        %3646 = vmatprep.subr.bf16.mxu0 0
        %3647 = vmatpush1.bf16.msra.mxu0 0
        %3648 = vmatprep.subr.bf16.mxu0 0
        %3649 = vmatpush1.bf16.msra.mxu0 0
        %3650 = vmatprep.subr.bf16.mxu0 0
        %3651 = vmatpush1.bf16.msra.mxu0 0
        %3652 = vmatprep.subr.bf16.mxu0 0
        %3653 = vmatpush1.bf16.msra.mxu0 0
        %3654 = vmatprep.subr.bf16.mxu0 0
        %3655 = vmatpush1.bf16.msra.mxu0 0
        %3656 = vmatprep.subr.bf16.mxu0 0
        %3657 = vmatpush1.bf16.msra.mxu0 0
        %3658 = vmatprep.subr.bf16.mxu0 0
        %3659 = vmatpush1.bf16.msra.mxu0 0
        %3660 = vmatprep.subr.bf16.mxu0 0
        %3661 = vmatpush1.bf16.msra.mxu0 %v3644
        %3662 = vmatprep.subr.bf16.mxu0 0
        %3663 = vmatpush2.bf16.msra.mxu0 0
        %3664 = vmatprep.subr.bf16.mxu0 0
        %3665 = vmatpush2.bf16.msra.mxu0 0
        %3666 = vmatprep.subr.bf16.mxu0 0
        %3667 = vmatpush2.bf16.msra.mxu0 0
        %3668 = vmatprep.subr.bf16.mxu0 0
        %3669 = vmatpush2.bf16.msra.mxu0 0
        %3670 = vmatprep.subr.bf16.mxu0 0
        %3671 = vmatpush2.bf16.msra.mxu0 0
        %3672 = vmatprep.subr.bf16.mxu0 0
        %3673 = vmatpush2.bf16.msra.mxu0 0
        %3674 = vmatprep.subr.bf16.mxu0 0
        %3675 = vmatpush2.bf16.msra.mxu0 0
        %3676 = vmatprep.subr.bf16.mxu0 0
        %3677 = vmatpush2.bf16.msra.mxu0 0
        %3678 = vmatprep.mubr.bf16.mxu0 0
        %3679 = vmatmul.mubr.bf16.gmra.mxu0 %v3641
        %v3680 = vpop.f32.mrf.mxu0
        %v3681 = vadd.f32 0.0, %v3680
        %v3682 = vpop.f32.mrf.mxu0
        %v3683 = vpop.f32.mrf.mxu0
        %v3684 = vpop.f32.mrf.mxu0
        %3685 = vdwg.mxu0
        %3686 = vrot.lane.b32.xlu0 %v1326, 48
        %v3687 = vpop.permute.xlu0 %3686
        %v3689 = vsel %vm1335, %v3584, 0
        %v3692 = vsel %vm1826, %v3687, 0
        %3694 = vmatprep.subr.bf16.mxu0 0
        %3695 = vmatpush1.bf16.msra.mxu0 0
        %3696 = vmatprep.subr.bf16.mxu0 0
        %3697 = vmatpush1.bf16.msra.mxu0 0
        %3698 = vmatprep.subr.bf16.mxu0 0
        %3699 = vmatpush1.bf16.msra.mxu0 0
        %3700 = vmatprep.subr.bf16.mxu0 0
        %3701 = vmatpush1.bf16.msra.mxu0 0
        %3702 = vmatprep.subr.bf16.mxu0 0
        %3703 = vmatpush1.bf16.msra.mxu0 0
        %3704 = vmatprep.subr.bf16.mxu0 0
        %3705 = vmatpush1.bf16.msra.mxu0 0
        %3706 = vmatprep.subr.bf16.mxu0 0
        %3707 = vmatpush1.bf16.msra.mxu0 0
        %3708 = vmatprep.subr.bf16.mxu0 0
        %3709 = vmatpush1.bf16.msra.mxu0 %v3692
        %3710 = vmatprep.subr.bf16.mxu0 0
        %3711 = vmatpush2.bf16.msra.mxu0 0
        %3712 = vmatprep.subr.bf16.mxu0 0
        %3713 = vmatpush2.bf16.msra.mxu0 0
        %3714 = vmatprep.subr.bf16.mxu0 0
        %3715 = vmatpush2.bf16.msra.mxu0 0
        %3716 = vmatprep.subr.bf16.mxu0 0
        %3717 = vmatpush2.bf16.msra.mxu0 0
        %3718 = vmatprep.subr.bf16.mxu0 0
        %3719 = vmatpush2.bf16.msra.mxu0 0
        %3720 = vmatprep.subr.bf16.mxu0 0
        %3721 = vmatpush2.bf16.msra.mxu0 0
        %3722 = vmatprep.subr.bf16.mxu0 0
        %3723 = vmatpush2.bf16.msra.mxu0 0
        %3724 = vmatprep.subr.bf16.mxu0 0
        %3725 = vmatpush2.bf16.msra.mxu0 0
        %3726 = vmatprep.mubr.bf16.mxu0 0
        %3727 = vmatmul.mubr.bf16.gmra.mxu0 %v3689
        %v3728 = vpop.f32.mrf.mxu0
        %v3729 = vadd.f32 0.0, %v3728
        %v3730 = vpop.f32.mrf.mxu0
        %v3731 = vpop.f32.mrf.mxu0
        %v3732 = vpop.f32.mrf.mxu0
        %3733 = vdwg.mxu0
        %3734 = vrot.lane.b32.xlu0 %v1327, 48
        %v3735 = vpop.permute.xlu0 %3734
        %v3737 = vsel %vm1335, %v3585, 0
        %v3740 = vsel %vm1826, %v3735, 0
        %3742 = vmatprep.subr.bf16.mxu0 0
        %3743 = vmatpush1.bf16.msra.mxu0 0
        %3744 = vmatprep.subr.bf16.mxu0 0
        %3745 = vmatpush1.bf16.msra.mxu0 0
        %3746 = vmatprep.subr.bf16.mxu0 0
        %3747 = vmatpush1.bf16.msra.mxu0 0
        %3748 = vmatprep.subr.bf16.mxu0 0
        %3749 = vmatpush1.bf16.msra.mxu0 0
        %3750 = vmatprep.subr.bf16.mxu0 0
        %3751 = vmatpush1.bf16.msra.mxu0 0
        %3752 = vmatprep.subr.bf16.mxu0 0
        %3753 = vmatpush1.bf16.msra.mxu0 0
        %3754 = vmatprep.subr.bf16.mxu0 0
        %3755 = vmatpush1.bf16.msra.mxu0 0
        %3756 = vmatprep.subr.bf16.mxu0 0
        %3757 = vmatpush1.bf16.msra.mxu0 %v3740
        %3758 = vmatprep.subr.bf16.mxu0 0
        %3759 = vmatpush2.bf16.msra.mxu0 0
        %3760 = vmatprep.subr.bf16.mxu0 0
        %3761 = vmatpush2.bf16.msra.mxu0 0
        %3762 = vmatprep.subr.bf16.mxu0 0
        %3763 = vmatpush2.bf16.msra.mxu0 0
        %3764 = vmatprep.subr.bf16.mxu0 0
        %3765 = vmatpush2.bf16.msra.mxu0 0
        %3766 = vmatprep.subr.bf16.mxu0 0
        %3767 = vmatpush2.bf16.msra.mxu0 0
        %3768 = vmatprep.subr.bf16.mxu0 0
        %3769 = vmatpush2.bf16.msra.mxu0 0
        %3770 = vmatprep.subr.bf16.mxu0 0
        %3771 = vmatpush2.bf16.msra.mxu0 0
        %3772 = vmatprep.subr.bf16.mxu0 0
        %3773 = vmatpush2.bf16.msra.mxu0 0
        %3774 = vmatprep.mubr.bf16.mxu0 0
        %3775 = vmatmul.mubr.bf16.gmra.mxu0 %v3737
        %v3776 = vpop.f32.mrf.mxu0
        %v3777 = vadd.f32 0.0, %v3776
        %v3778 = vpop.f32.mrf.mxu0
        %v3779 = vpop.f32.mrf.mxu0
        %v3780 = vpop.f32.mrf.mxu0
        %3781 = vdwg.mxu0
        %3782 = vrot.lane.b32.xlu0 %v1328, 48
        %v3783 = vpop.permute.xlu0 %3782
        %v3785 = vsel %vm1335, %v3586, 0
        %v3788 = vsel %vm1826, %v3783, 0
        %3790 = vmatprep.subr.bf16.mxu0 0
        %3791 = vmatpush1.bf16.msra.mxu0 0
        %3792 = vmatprep.subr.bf16.mxu0 0
        %3793 = vmatpush1.bf16.msra.mxu0 0
        %3794 = vmatprep.subr.bf16.mxu0 0
        %3795 = vmatpush1.bf16.msra.mxu0 0
        %3796 = vmatprep.subr.bf16.mxu0 0
        %3797 = vmatpush1.bf16.msra.mxu0 0
        %3798 = vmatprep.subr.bf16.mxu0 0
        %3799 = vmatpush1.bf16.msra.mxu0 0
        %3800 = vmatprep.subr.bf16.mxu0 0
        %3801 = vmatpush1.bf16.msra.mxu0 0
        %3802 = vmatprep.subr.bf16.mxu0 0
        %3803 = vmatpush1.bf16.msra.mxu0 0
        %3804 = vmatprep.subr.bf16.mxu0 0
        %3805 = vmatpush1.bf16.msra.mxu0 %v3788
        %3806 = vmatprep.subr.bf16.mxu0 0
        %3807 = vmatpush2.bf16.msra.mxu0 0
        %3808 = vmatprep.subr.bf16.mxu0 0
        %3809 = vmatpush2.bf16.msra.mxu0 0
        %3810 = vmatprep.subr.bf16.mxu0 0
        %3811 = vmatpush2.bf16.msra.mxu0 0
        %3812 = vmatprep.subr.bf16.mxu0 0
        %3813 = vmatpush2.bf16.msra.mxu0 0
        %3814 = vmatprep.subr.bf16.mxu0 0
        %3815 = vmatpush2.bf16.msra.mxu0 0
        %3816 = vmatprep.subr.bf16.mxu0 0
        %3817 = vmatpush2.bf16.msra.mxu0 0
        %3818 = vmatprep.subr.bf16.mxu0 0
        %3819 = vmatpush2.bf16.msra.mxu0 0
        %3820 = vmatprep.subr.bf16.mxu0 0
        %3821 = vmatpush2.bf16.msra.mxu0 0
        %3822 = vmatprep.mubr.bf16.mxu0 0
        %3823 = vmatmul.mubr.bf16.gmra.mxu0 %v3785
        %v3824 = vpop.f32.mrf.mxu0
        %v3825 = vadd.f32 0.0, %v3824
        %v3826 = vpop.f32.mrf.mxu0
        %v3827 = vpop.f32.mrf.mxu0
        %v3828 = vpop.f32.mrf.mxu0
        %3829 = vdwg.mxu0
        %3830 = vrot.lane.b32.xlu0 %v1329, 48
        %v3831 = vpop.permute.xlu0 %3830
        %v3833 = vsel %vm1335, %v3587, 0
        %v3836 = vsel %vm1826, %v3831, 0
        %3838 = vmatprep.subr.bf16.mxu0 0
        %3839 = vmatpush1.bf16.msra.mxu0 0
        %3840 = vmatprep.subr.bf16.mxu0 0
        %3841 = vmatpush1.bf16.msra.mxu0 0
        %3842 = vmatprep.subr.bf16.mxu0 0
        %3843 = vmatpush1.bf16.msra.mxu0 0
        %3844 = vmatprep.subr.bf16.mxu0 0
        %3845 = vmatpush1.bf16.msra.mxu0 0
        %3846 = vmatprep.subr.bf16.mxu0 0
        %3847 = vmatpush1.bf16.msra.mxu0 0
        %3848 = vmatprep.subr.bf16.mxu0 0
        %3849 = vmatpush1.bf16.msra.mxu0 0
        %3850 = vmatprep.subr.bf16.mxu0 0
        %3851 = vmatpush1.bf16.msra.mxu0 0
        %3852 = vmatprep.subr.bf16.mxu0 0
        %3853 = vmatpush1.bf16.msra.mxu0 %v3836
        %3854 = vmatprep.subr.bf16.mxu0 0
        %3855 = vmatpush2.bf16.msra.mxu0 0
        %3856 = vmatprep.subr.bf16.mxu0 0
        %3857 = vmatpush2.bf16.msra.mxu0 0
        %3858 = vmatprep.subr.bf16.mxu0 0
        %3859 = vmatpush2.bf16.msra.mxu0 0
        %3860 = vmatprep.subr.bf16.mxu0 0
        %3861 = vmatpush2.bf16.msra.mxu0 0
        %3862 = vmatprep.subr.bf16.mxu0 0
        %3863 = vmatpush2.bf16.msra.mxu0 0
        %3864 = vmatprep.subr.bf16.mxu0 0
        %3865 = vmatpush2.bf16.msra.mxu0 0
        %3866 = vmatprep.subr.bf16.mxu0 0
        %3867 = vmatpush2.bf16.msra.mxu0 0
        %3868 = vmatprep.subr.bf16.mxu0 0
        %3869 = vmatpush2.bf16.msra.mxu0 0
        %3870 = vmatprep.mubr.bf16.mxu0 0
        %3871 = vmatmul.mubr.bf16.gmra.mxu0 %v3833
        %v3872 = vpop.f32.mrf.mxu0
        %v3873 = vadd.f32 0.0, %v3872
        %v3874 = vpop.f32.mrf.mxu0
        %v3875 = vpop.f32.mrf.mxu0
        %v3876 = vpop.f32.mrf.mxu0
        %3877 = vdwg.mxu0
        %3878 = vrot.lane.b32.xlu0 %v1330, 48
        %v3879 = vpop.permute.xlu0 %3878
        %v3881 = vsel %vm1335, %v3588, 0
        %v3884 = vsel %vm1826, %v3879, 0
        %3886 = vmatprep.subr.bf16.mxu0 0
        %3887 = vmatpush1.bf16.msra.mxu0 0
        %3888 = vmatprep.subr.bf16.mxu0 0
        %3889 = vmatpush1.bf16.msra.mxu0 0
        %3890 = vmatprep.subr.bf16.mxu0 0
        %3891 = vmatpush1.bf16.msra.mxu0 0
        %3892 = vmatprep.subr.bf16.mxu0 0
        %3893 = vmatpush1.bf16.msra.mxu0 0
        %3894 = vmatprep.subr.bf16.mxu0 0
        %3895 = vmatpush1.bf16.msra.mxu0 0
        %3896 = vmatprep.subr.bf16.mxu0 0
        %3897 = vmatpush1.bf16.msra.mxu0 0
        %3898 = vmatprep.subr.bf16.mxu0 0
        %3899 = vmatpush1.bf16.msra.mxu0 0
        %3900 = vmatprep.subr.bf16.mxu0 0
        %3901 = vmatpush1.bf16.msra.mxu0 %v3884
        %3902 = vmatprep.subr.bf16.mxu0 0
        %3903 = vmatpush2.bf16.msra.mxu0 0
        %3904 = vmatprep.subr.bf16.mxu0 0
        %3905 = vmatpush2.bf16.msra.mxu0 0
        %3906 = vmatprep.subr.bf16.mxu0 0
        %3907 = vmatpush2.bf16.msra.mxu0 0
        %3908 = vmatprep.subr.bf16.mxu0 0
        %3909 = vmatpush2.bf16.msra.mxu0 0
        %3910 = vmatprep.subr.bf16.mxu0 0
        %3911 = vmatpush2.bf16.msra.mxu0 0
        %3912 = vmatprep.subr.bf16.mxu0 0
        %3913 = vmatpush2.bf16.msra.mxu0 0
        %3914 = vmatprep.subr.bf16.mxu0 0
        %3915 = vmatpush2.bf16.msra.mxu0 0
        %3916 = vmatprep.subr.bf16.mxu0 0
        %3917 = vmatpush2.bf16.msra.mxu0 0
        %3918 = vmatprep.mubr.bf16.mxu0 0
        %3919 = vmatmul.mubr.bf16.gmra.mxu0 %v3881
        %v3920 = vpop.f32.mrf.mxu0
        %v3921 = vadd.f32 0.0, %v3920
        %v3922 = vpop.f32.mrf.mxu0
        %v3923 = vpop.f32.mrf.mxu0
        %v3924 = vpop.f32.mrf.mxu0
        %3925 = vdwg.mxu0
        %3926 = vrot.lane.b32.xlu0 %v1331, 48
        %v3927 = vpop.permute.xlu0 %3926
        %v3929 = vsel %vm1335, %v3589, 0
        %v3932 = vsel %vm1826, %v3927, 0
        %3934 = vmatprep.subr.bf16.mxu0 0
        %3935 = vmatpush1.bf16.msra.mxu0 0
        %3936 = vmatprep.subr.bf16.mxu0 0
        %3937 = vmatpush1.bf16.msra.mxu0 0
        %3938 = vmatprep.subr.bf16.mxu0 0
        %3939 = vmatpush1.bf16.msra.mxu0 0
        %3940 = vmatprep.subr.bf16.mxu0 0
        %3941 = vmatpush1.bf16.msra.mxu0 0
        %3942 = vmatprep.subr.bf16.mxu0 0
        %3943 = vmatpush1.bf16.msra.mxu0 0
        %3944 = vmatprep.subr.bf16.mxu0 0
        %3945 = vmatpush1.bf16.msra.mxu0 0
        %3946 = vmatprep.subr.bf16.mxu0 0
        %3947 = vmatpush1.bf16.msra.mxu0 0
        %3948 = vmatprep.subr.bf16.mxu0 0
        %3949 = vmatpush1.bf16.msra.mxu0 %v3932
        %3950 = vmatprep.subr.bf16.mxu0 0
        %3951 = vmatpush2.bf16.msra.mxu0 0
        %3952 = vmatprep.subr.bf16.mxu0 0
        %3953 = vmatpush2.bf16.msra.mxu0 0
        %3954 = vmatprep.subr.bf16.mxu0 0
        %3955 = vmatpush2.bf16.msra.mxu0 0
        %3956 = vmatprep.subr.bf16.mxu0 0
        %3957 = vmatpush2.bf16.msra.mxu0 0
        %3958 = vmatprep.subr.bf16.mxu0 0
        %3959 = vmatpush2.bf16.msra.mxu0 0
        %3960 = vmatprep.subr.bf16.mxu0 0
        %3961 = vmatpush2.bf16.msra.mxu0 0
        %3962 = vmatprep.subr.bf16.mxu0 0
        %3963 = vmatpush2.bf16.msra.mxu0 0
        %3964 = vmatprep.subr.bf16.mxu0 0
        %3965 = vmatpush2.bf16.msra.mxu0 0
        %3966 = vmatprep.mubr.bf16.mxu0 0
        %3967 = vmatmul.mubr.bf16.gmra.mxu0 %v3929
        %v3968 = vpop.f32.mrf.mxu0
        %v3969 = vadd.f32 0.0, %v3968
        %v3970 = vpop.f32.mrf.mxu0
        %v3971 = vpop.f32.mrf.mxu0
        %v3972 = vpop.f32.mrf.mxu0
        %3973 = vdwg.mxu0
        %3974 = vrot.lane.b32.xlu0 %v1316, 104
        %v3975 = vpop.permute.xlu0 %3974
        %3976 = vrot.lane.b32.xlu0 %v1324, 72
        %v3977 = vpop.permute.xlu0 %3976
        %v3979 = vsel %vm1335, %v3975, 0
        %v3982 = vsel %vm1335, %v3977, 0
        %3984 = vmatprep.subr.bf16.mxu0 0
        %3985 = vmatpush1.bf16.xpose.msra.mxu0 0
        %3986 = vmatprep.subr.bf16.mxu0 0
        %3987 = vmatpush1.bf16.xpose.msra.mxu0 0
        %3988 = vmatprep.subr.bf16.mxu0 0
        %3989 = vmatpush1.bf16.xpose.msra.mxu0 0
        %3990 = vmatprep.subr.bf16.mxu0 0
        %3991 = vmatpush1.bf16.xpose.msra.mxu0 0
        %3992 = vmatprep.subr.bf16.mxu0 0
        %3993 = vmatpush1.bf16.xpose.msra.mxu0 0
        %3994 = vmatprep.subr.bf16.mxu0 0
        %3995 = vmatpush1.bf16.xpose.msra.mxu0 0
        %3996 = vmatprep.subr.bf16.mxu0 0
        %3997 = vmatpush1.bf16.xpose.msra.mxu0 0
        %3998 = vmatprep.subr.bf16.mxu0 0
        %3999 = vmatpush1.bf16.xpose.msra.mxu0 %v3982
        %4000 = vmatprep.subr.bf16.mxu0 0
        %4001 = vmatpush2.bf16.xpose.msra.mxu0 0
        %4002 = vmatprep.subr.bf16.mxu0 0
        %4003 = vmatpush2.bf16.xpose.msra.mxu0 0
        %4004 = vmatprep.subr.bf16.mxu0 0
        %4005 = vmatpush2.bf16.xpose.msra.mxu0 0
        %4006 = vmatprep.subr.bf16.mxu0 0
        %4007 = vmatpush2.bf16.xpose.msra.mxu0 0
        %4008 = vmatprep.subr.bf16.mxu0 0
        %4009 = vmatpush2.bf16.xpose.msra.mxu0 0
        %4010 = vmatprep.subr.bf16.mxu0 0
        %4011 = vmatpush2.bf16.xpose.msra.mxu0 0
        %4012 = vmatprep.subr.bf16.mxu0 0
        %4013 = vmatpush2.bf16.xpose.msra.mxu0 0
        %4014 = vmatprep.subr.bf16.mxu0 0
        %4015 = vmatpush2.bf16.xpose.msra.mxu0 0
        %4016 = vmatprep.mubr.bf16.mxu0 0
        %4017 = vmatmul.mubr.bf16.gmra.mxu0 %v3979
        %v4018 = vpop.f32.mrf.mxu0
        %v4019 = vadd.f32 0.0, %v4018
        %v4020 = vpop.f32.mrf.mxu0
        %v4021 = vpop.f32.mrf.mxu0
        %v4022 = vpop.f32.mrf.mxu0
        %4023 = vdwg.mxu0
        %4024 = vrot.lane.b32.xlu0 %v1317, 104
        %v4025 = vpop.permute.xlu0 %4024
        %4026 = vrot.lane.b32.xlu0 %v1325, 72
        %v4027 = vpop.permute.xlu0 %4026
        %v4029 = vsel %vm1335, %v4025, 0
        %v4032 = vsel %vm1335, %v4027, 0
        %4034 = vmatprep.subr.bf16.mxu0 0
        %4035 = vmatpush1.bf16.xpose.msra.mxu0 0
        %4036 = vmatprep.subr.bf16.mxu0 0
        %4037 = vmatpush1.bf16.xpose.msra.mxu0 0
        %4038 = vmatprep.subr.bf16.mxu0 0
        %4039 = vmatpush1.bf16.xpose.msra.mxu0 0
        %4040 = vmatprep.subr.bf16.mxu0 0
        %4041 = vmatpush1.bf16.xpose.msra.mxu0 0
        %4042 = vmatprep.subr.bf16.mxu0 0
        %4043 = vmatpush1.bf16.xpose.msra.mxu0 0
        %4044 = vmatprep.subr.bf16.mxu0 0
        %4045 = vmatpush1.bf16.xpose.msra.mxu0 0
        %4046 = vmatprep.subr.bf16.mxu0 0
        %4047 = vmatpush1.bf16.xpose.msra.mxu0 0
        %4048 = vmatprep.subr.bf16.mxu0 0
        %4049 = vmatpush1.bf16.xpose.msra.mxu0 %v4032
        %4050 = vmatprep.subr.bf16.mxu0 0
        %4051 = vmatpush2.bf16.xpose.msra.mxu0 0
        %4052 = vmatprep.subr.bf16.mxu0 0
        %4053 = vmatpush2.bf16.xpose.msra.mxu0 0
        %4054 = vmatprep.subr.bf16.mxu0 0
        %4055 = vmatpush2.bf16.xpose.msra.mxu0 0
        %4056 = vmatprep.subr.bf16.mxu0 0
        %4057 = vmatpush2.bf16.xpose.msra.mxu0 0
        %4058 = vmatprep.subr.bf16.mxu0 0
        %4059 = vmatpush2.bf16.xpose.msra.mxu0 0
        %4060 = vmatprep.subr.bf16.mxu0 0
        %4061 = vmatpush2.bf16.xpose.msra.mxu0 0
        %4062 = vmatprep.subr.bf16.mxu0 0
        %4063 = vmatpush2.bf16.xpose.msra.mxu0 0
        %4064 = vmatprep.subr.bf16.mxu0 0
        %4065 = vmatpush2.bf16.xpose.msra.mxu0 0
        %4066 = vmatprep.mubr.bf16.mxu0 0
        %4067 = vmatmul.mubr.bf16.gmra.mxu0 %v4029
        %v4068 = vpop.f32.mrf.mxu0
        %v4069 = vadd.f32 0.0, %v4068
        %v4070 = vpop.f32.mrf.mxu0
        %v4071 = vpop.f32.mrf.mxu0
        %v4072 = vpop.f32.mrf.mxu0
        %4073 = vdwg.mxu0
        %4074 = vrot.lane.b32.xlu0 %v1318, 104
        %v4075 = vpop.permute.xlu0 %4074
        %4076 = vrot.lane.b32.xlu0 %v1326, 72
        %v4077 = vpop.permute.xlu0 %4076
        %v4079 = vsel %vm1335, %v4075, 0
        %v4082 = vsel %vm1335, %v4077, 0
        %4084 = vmatprep.subr.bf16.mxu0 0
        %4085 = vmatpush1.bf16.xpose.msra.mxu0 0
        %4086 = vmatprep.subr.bf16.mxu0 0
        %4087 = vmatpush1.bf16.xpose.msra.mxu0 0
        %4088 = vmatprep.subr.bf16.mxu0 0
        %4089 = vmatpush1.bf16.xpose.msra.mxu0 0
        %4090 = vmatprep.subr.bf16.mxu0 0
        %4091 = vmatpush1.bf16.xpose.msra.mxu0 0
        %4092 = vmatprep.subr.bf16.mxu0 0
        %4093 = vmatpush1.bf16.xpose.msra.mxu0 0
        %4094 = vmatprep.subr.bf16.mxu0 0
        %4095 = vmatpush1.bf16.xpose.msra.mxu0 0
        %4096 = vmatprep.subr.bf16.mxu0 0
        %4097 = vmatpush1.bf16.xpose.msra.mxu0 0
        %4098 = vmatprep.subr.bf16.mxu0 0
        %4099 = vmatpush1.bf16.xpose.msra.mxu0 %v4082
        %4100 = vmatprep.subr.bf16.mxu0 0
        %4101 = vmatpush2.bf16.xpose.msra.mxu0 0
        %4102 = vmatprep.subr.bf16.mxu0 0
        %4103 = vmatpush2.bf16.xpose.msra.mxu0 0
        %4104 = vmatprep.subr.bf16.mxu0 0
        %4105 = vmatpush2.bf16.xpose.msra.mxu0 0
        %4106 = vmatprep.subr.bf16.mxu0 0
        %4107 = vmatpush2.bf16.xpose.msra.mxu0 0
        %4108 = vmatprep.subr.bf16.mxu0 0
        %4109 = vmatpush2.bf16.xpose.msra.mxu0 0
        %4110 = vmatprep.subr.bf16.mxu0 0
        %4111 = vmatpush2.bf16.xpose.msra.mxu0 0
        %4112 = vmatprep.subr.bf16.mxu0 0
        %4113 = vmatpush2.bf16.xpose.msra.mxu0 0
        %4114 = vmatprep.subr.bf16.mxu0 0
        %4115 = vmatpush2.bf16.xpose.msra.mxu0 0
        %4116 = vmatprep.mubr.bf16.mxu0 0
        %4117 = vmatmul.mubr.bf16.gmra.mxu0 %v4079
        %v4118 = vpop.f32.mrf.mxu0
        %v4119 = vadd.f32 0.0, %v4118
        %v4120 = vpop.f32.mrf.mxu0
        %v4121 = vpop.f32.mrf.mxu0
        %v4122 = vpop.f32.mrf.mxu0
        %4123 = vdwg.mxu0
        %4124 = vrot.lane.b32.xlu0 %v1319, 104
        %v4125 = vpop.permute.xlu0 %4124
        %4126 = vrot.lane.b32.xlu0 %v1327, 72
        %v4127 = vpop.permute.xlu0 %4126
        %v4129 = vsel %vm1335, %v4125, 0
        %v4132 = vsel %vm1335, %v4127, 0
        %4134 = vmatprep.subr.bf16.mxu0 0
        %4135 = vmatpush1.bf16.xpose.msra.mxu0 0
        %4136 = vmatprep.subr.bf16.mxu0 0
        %4137 = vmatpush1.bf16.xpose.msra.mxu0 0
        %4138 = vmatprep.subr.bf16.mxu0 0
        %4139 = vmatpush1.bf16.xpose.msra.mxu0 0
        %4140 = vmatprep.subr.bf16.mxu0 0
        %4141 = vmatpush1.bf16.xpose.msra.mxu0 0
        %4142 = vmatprep.subr.bf16.mxu0 0
        %4143 = vmatpush1.bf16.xpose.msra.mxu0 0
        %4144 = vmatprep.subr.bf16.mxu0 0
        %4145 = vmatpush1.bf16.xpose.msra.mxu0 0
        %4146 = vmatprep.subr.bf16.mxu0 0
        %4147 = vmatpush1.bf16.xpose.msra.mxu0 0
        %4148 = vmatprep.subr.bf16.mxu0 0
        %4149 = vmatpush1.bf16.xpose.msra.mxu0 %v4132
        %4150 = vmatprep.subr.bf16.mxu0 0
        %4151 = vmatpush2.bf16.xpose.msra.mxu0 0
        %4152 = vmatprep.subr.bf16.mxu0 0
        %4153 = vmatpush2.bf16.xpose.msra.mxu0 0
        %4154 = vmatprep.subr.bf16.mxu0 0
        %4155 = vmatpush2.bf16.xpose.msra.mxu0 0
        %4156 = vmatprep.subr.bf16.mxu0 0
        %4157 = vmatpush2.bf16.xpose.msra.mxu0 0
        %4158 = vmatprep.subr.bf16.mxu0 0
        %4159 = vmatpush2.bf16.xpose.msra.mxu0 0
        %4160 = vmatprep.subr.bf16.mxu0 0
        %4161 = vmatpush2.bf16.xpose.msra.mxu0 0
        %4162 = vmatprep.subr.bf16.mxu0 0
        %4163 = vmatpush2.bf16.xpose.msra.mxu0 0
        %4164 = vmatprep.subr.bf16.mxu0 0
        %4165 = vmatpush2.bf16.xpose.msra.mxu0 0
        %4166 = vmatprep.mubr.bf16.mxu0 0
        %4167 = vmatmul.mubr.bf16.gmra.mxu0 %v4129
        %v4168 = vpop.f32.mrf.mxu0
        %v4169 = vadd.f32 0.0, %v4168
        %v4170 = vpop.f32.mrf.mxu0
        %v4171 = vpop.f32.mrf.mxu0
        %v4172 = vpop.f32.mrf.mxu0
        %4173 = vdwg.mxu0
        %4174 = vrot.lane.b32.xlu0 %v1320, 104
        %v4175 = vpop.permute.xlu0 %4174
        %4176 = vrot.lane.b32.xlu0 %v1328, 72
        %v4177 = vpop.permute.xlu0 %4176
        %v4179 = vsel %vm1335, %v4175, 0
        %v4182 = vsel %vm1335, %v4177, 0
        %4184 = vmatprep.subr.bf16.mxu0 0
        %4185 = vmatpush1.bf16.xpose.msra.mxu0 0
        %4186 = vmatprep.subr.bf16.mxu0 0
        %4187 = vmatpush1.bf16.xpose.msra.mxu0 0
        %4188 = vmatprep.subr.bf16.mxu0 0
        %4189 = vmatpush1.bf16.xpose.msra.mxu0 0
        %4190 = vmatprep.subr.bf16.mxu0 0
        %4191 = vmatpush1.bf16.xpose.msra.mxu0 0
        %4192 = vmatprep.subr.bf16.mxu0 0
        %4193 = vmatpush1.bf16.xpose.msra.mxu0 0
        %4194 = vmatprep.subr.bf16.mxu0 0
        %4195 = vmatpush1.bf16.xpose.msra.mxu0 0
        %4196 = vmatprep.subr.bf16.mxu0 0
        %4197 = vmatpush1.bf16.xpose.msra.mxu0 0
        %4198 = vmatprep.subr.bf16.mxu0 0
        %4199 = vmatpush1.bf16.xpose.msra.mxu0 %v4182
        %4200 = vmatprep.subr.bf16.mxu0 0
        %4201 = vmatpush2.bf16.xpose.msra.mxu0 0
        %4202 = vmatprep.subr.bf16.mxu0 0
        %4203 = vmatpush2.bf16.xpose.msra.mxu0 0
        %4204 = vmatprep.subr.bf16.mxu0 0
        %4205 = vmatpush2.bf16.xpose.msra.mxu0 0
        %4206 = vmatprep.subr.bf16.mxu0 0
        %4207 = vmatpush2.bf16.xpose.msra.mxu0 0
        %4208 = vmatprep.subr.bf16.mxu0 0
        %4209 = vmatpush2.bf16.xpose.msra.mxu0 0
        %4210 = vmatprep.subr.bf16.mxu0 0
        %4211 = vmatpush2.bf16.xpose.msra.mxu0 0
        %4212 = vmatprep.subr.bf16.mxu0 0
        %4213 = vmatpush2.bf16.xpose.msra.mxu0 0
        %4214 = vmatprep.subr.bf16.mxu0 0
        %4215 = vmatpush2.bf16.xpose.msra.mxu0 0
        %4216 = vmatprep.mubr.bf16.mxu0 0
        %4217 = vmatmul.mubr.bf16.gmra.mxu0 %v4179
        %v4218 = vpop.f32.mrf.mxu0
        %v4219 = vadd.f32 0.0, %v4218
        %v4220 = vpop.f32.mrf.mxu0
        %v4221 = vpop.f32.mrf.mxu0
        %v4222 = vpop.f32.mrf.mxu0
        %4223 = vdwg.mxu0
        %4224 = vrot.lane.b32.xlu0 %v1321, 104
        %v4225 = vpop.permute.xlu0 %4224
        %4226 = vrot.lane.b32.xlu0 %v1329, 72
        %v4227 = vpop.permute.xlu0 %4226
        %v4229 = vsel %vm1335, %v4225, 0
        %v4232 = vsel %vm1335, %v4227, 0
        %4234 = vmatprep.subr.bf16.mxu0 0
        %4235 = vmatpush1.bf16.xpose.msra.mxu0 0
        %4236 = vmatprep.subr.bf16.mxu0 0
        %4237 = vmatpush1.bf16.xpose.msra.mxu0 0
        %4238 = vmatprep.subr.bf16.mxu0 0
        %4239 = vmatpush1.bf16.xpose.msra.mxu0 0
        %4240 = vmatprep.subr.bf16.mxu0 0
        %4241 = vmatpush1.bf16.xpose.msra.mxu0 0
        %4242 = vmatprep.subr.bf16.mxu0 0
        %4243 = vmatpush1.bf16.xpose.msra.mxu0 0
        %4244 = vmatprep.subr.bf16.mxu0 0
        %4245 = vmatpush1.bf16.xpose.msra.mxu0 0
        %4246 = vmatprep.subr.bf16.mxu0 0
        %4247 = vmatpush1.bf16.xpose.msra.mxu0 0
        %4248 = vmatprep.subr.bf16.mxu0 0
        %4249 = vmatpush1.bf16.xpose.msra.mxu0 %v4232
        %4250 = vmatprep.subr.bf16.mxu0 0
        %4251 = vmatpush2.bf16.xpose.msra.mxu0 0
        %4252 = vmatprep.subr.bf16.mxu0 0
        %4253 = vmatpush2.bf16.xpose.msra.mxu0 0
        %4254 = vmatprep.subr.bf16.mxu0 0
        %4255 = vmatpush2.bf16.xpose.msra.mxu0 0
        %4256 = vmatprep.subr.bf16.mxu0 0
        %4257 = vmatpush2.bf16.xpose.msra.mxu0 0
        %4258 = vmatprep.subr.bf16.mxu0 0
        %4259 = vmatpush2.bf16.xpose.msra.mxu0 0
        %4260 = vmatprep.subr.bf16.mxu0 0
        %4261 = vmatpush2.bf16.xpose.msra.mxu0 0
        %4262 = vmatprep.subr.bf16.mxu0 0
        %4263 = vmatpush2.bf16.xpose.msra.mxu0 0
        %4264 = vmatprep.subr.bf16.mxu0 0
        %4265 = vmatpush2.bf16.xpose.msra.mxu0 0
        %4266 = vmatprep.mubr.bf16.mxu0 0
        %4267 = vmatmul.mubr.bf16.gmra.mxu0 %v4229
        %v4268 = vpop.f32.mrf.mxu0
        %v4269 = vadd.f32 0.0, %v4268
        %v4270 = vpop.f32.mrf.mxu0
        %v4271 = vpop.f32.mrf.mxu0
        %v4272 = vpop.f32.mrf.mxu0
        %4273 = vdwg.mxu0
        %4274 = vrot.lane.b32.xlu0 %v1322, 104
        %v4275 = vpop.permute.xlu0 %4274
        %4276 = vrot.lane.b32.xlu0 %v1330, 72
        %v4277 = vpop.permute.xlu0 %4276
        %v4279 = vsel %vm1335, %v4275, 0
        %v4282 = vsel %vm1335, %v4277, 0
        %4284 = vmatprep.subr.bf16.mxu0 0
        %4285 = vmatpush1.bf16.xpose.msra.mxu0 0
        %4286 = vmatprep.subr.bf16.mxu0 0
        %4287 = vmatpush1.bf16.xpose.msra.mxu0 0
        %4288 = vmatprep.subr.bf16.mxu0 0
        %4289 = vmatpush1.bf16.xpose.msra.mxu0 0
        %4290 = vmatprep.subr.bf16.mxu0 0
        %4291 = vmatpush1.bf16.xpose.msra.mxu0 0
        %4292 = vmatprep.subr.bf16.mxu0 0
        %4293 = vmatpush1.bf16.xpose.msra.mxu0 0
        %4294 = vmatprep.subr.bf16.mxu0 0
        %4295 = vmatpush1.bf16.xpose.msra.mxu0 0
        %4296 = vmatprep.subr.bf16.mxu0 0
        %4297 = vmatpush1.bf16.xpose.msra.mxu0 0
        %4298 = vmatprep.subr.bf16.mxu0 0
        %4299 = vmatpush1.bf16.xpose.msra.mxu0 %v4282
        %4300 = vmatprep.subr.bf16.mxu0 0
        %4301 = vmatpush2.bf16.xpose.msra.mxu0 0
        %4302 = vmatprep.subr.bf16.mxu0 0
        %4303 = vmatpush2.bf16.xpose.msra.mxu0 0
        %4304 = vmatprep.subr.bf16.mxu0 0
        %4305 = vmatpush2.bf16.xpose.msra.mxu0 0
        %4306 = vmatprep.subr.bf16.mxu0 0
        %4307 = vmatpush2.bf16.xpose.msra.mxu0 0
        %4308 = vmatprep.subr.bf16.mxu0 0
        %4309 = vmatpush2.bf16.xpose.msra.mxu0 0
        %4310 = vmatprep.subr.bf16.mxu0 0
        %4311 = vmatpush2.bf16.xpose.msra.mxu0 0
        %4312 = vmatprep.subr.bf16.mxu0 0
        %4313 = vmatpush2.bf16.xpose.msra.mxu0 0
        %4314 = vmatprep.subr.bf16.mxu0 0
        %4315 = vmatpush2.bf16.xpose.msra.mxu0 0
        %4316 = vmatprep.mubr.bf16.mxu0 0
        %4317 = vmatmul.mubr.bf16.gmra.mxu0 %v4279
        %v4318 = vpop.f32.mrf.mxu0
        %v4319 = vadd.f32 0.0, %v4318
        %v4320 = vpop.f32.mrf.mxu0
        %v4321 = vpop.f32.mrf.mxu0
        %v4322 = vpop.f32.mrf.mxu0
        %4323 = vdwg.mxu0
        %4324 = vrot.lane.b32.xlu0 %v1323, 104
        %v4325 = vpop.permute.xlu0 %4324
        %4326 = vrot.lane.b32.xlu0 %v1331, 72
        %v4327 = vpop.permute.xlu0 %4326
        %v4329 = vsel %vm1335, %v4325, 0
        %v4332 = vsel %vm1335, %v4327, 0
        %4334 = vmatprep.subr.bf16.mxu0 0
        %4335 = vmatpush1.bf16.xpose.msra.mxu0 0
        %4336 = vmatprep.subr.bf16.mxu0 0
        %4337 = vmatpush1.bf16.xpose.msra.mxu0 0
        %4338 = vmatprep.subr.bf16.mxu0 0
        %4339 = vmatpush1.bf16.xpose.msra.mxu0 0
        %4340 = vmatprep.subr.bf16.mxu0 0
        %4341 = vmatpush1.bf16.xpose.msra.mxu0 0
        %4342 = vmatprep.subr.bf16.mxu0 0
        %4343 = vmatpush1.bf16.xpose.msra.mxu0 0
        %4344 = vmatprep.subr.bf16.mxu0 0
        %4345 = vmatpush1.bf16.xpose.msra.mxu0 0
        %4346 = vmatprep.subr.bf16.mxu0 0
        %4347 = vmatpush1.bf16.xpose.msra.mxu0 0
        %4348 = vmatprep.subr.bf16.mxu0 0
        %4349 = vmatpush1.bf16.xpose.msra.mxu0 %v4332
        %4350 = vmatprep.subr.bf16.mxu0 0
        %4351 = vmatpush2.bf16.xpose.msra.mxu0 0
        %4352 = vmatprep.subr.bf16.mxu0 0
        %4353 = vmatpush2.bf16.xpose.msra.mxu0 0
        %4354 = vmatprep.subr.bf16.mxu0 0
        %4355 = vmatpush2.bf16.xpose.msra.mxu0 0
        %4356 = vmatprep.subr.bf16.mxu0 0
        %4357 = vmatpush2.bf16.xpose.msra.mxu0 0
        %4358 = vmatprep.subr.bf16.mxu0 0
        %4359 = vmatpush2.bf16.xpose.msra.mxu0 0
        %4360 = vmatprep.subr.bf16.mxu0 0
        %4361 = vmatpush2.bf16.xpose.msra.mxu0 0
        %4362 = vmatprep.subr.bf16.mxu0 0
        %4363 = vmatpush2.bf16.xpose.msra.mxu0 0
        %4364 = vmatprep.subr.bf16.mxu0 0
        %4365 = vmatpush2.bf16.xpose.msra.mxu0 0
        %4366 = vmatprep.mubr.bf16.mxu0 0
        %4367 = vmatmul.mubr.bf16.gmra.mxu0 %v4329
        %v4368 = vpop.f32.mrf.mxu0
        %v4369 = vadd.f32 0.0, %v4368
        %v4370 = vpop.f32.mrf.mxu0
        %v4371 = vpop.f32.mrf.mxu0
        %v4372 = vpop.f32.mrf.mxu0
        %4373 = vdwg.mxu0
        %v4374 = vsel %vm1335, %v4019, -inf
        %4375 = vmax.xlane.f32.xlu0 %v4374
        %v4376 = vpop.xlane.xlu0 %4375
        %v4377 = vsel %vm1335, %v4069, -inf
        %4378 = vmax.xlane.f32.xlu0 %v4377
        %v4379 = vpop.xlane.xlu0 %4378
        %v4380 = vsel %vm1335, %v4119, -inf
        %4381 = vmax.xlane.f32.xlu0 %v4380
        %v4382 = vpop.xlane.xlu0 %4381
        %v4383 = vsel %vm1335, %v4169, -inf
        %4384 = vmax.xlane.f32.xlu0 %v4383
        %v4385 = vpop.xlane.xlu0 %4384
        %v4386 = vsel %vm1335, %v4219, -inf
        %4387 = vmax.xlane.f32.xlu0 %v4386
        %v4388 = vpop.xlane.xlu0 %4387
        %v4389 = vsel %vm1335, %v4269, -inf
        %4390 = vmax.xlane.f32.xlu0 %v4389
        %v4391 = vpop.xlane.xlu0 %4390
        %v4392 = vsel %vm1335, %v4319, -inf
        %4393 = vmax.xlane.f32.xlu0 %v4392
        %v4394 = vpop.xlane.xlu0 %4393
        %v4395 = vsel %vm1335, %v4369, -inf
        %4396 = vmax.xlane.f32.xlu0 %v4395
        %v4397 = vpop.xlane.xlu0 %4396
        %v4398 = vsub.f32 %v4019, %v4376
        %v4399 = vsub.f32 %v4069, %v4379
        %v4400 = vsub.f32 %v4119, %v4382
        %v4401 = vsub.f32 %v4169, %v4385
        %v4402 = vsub.f32 %v4219, %v4388
        %v4403 = vsub.f32 %v4269, %v4391
        %v4404 = vsub.f32 %v4319, %v4394
        %v4405 = vsub.f32 %v4369, %v4397
        %v4406 = vmul.f32 %v4398, 1.442695
        %v4407 = vpow.pop %v4406
        %v4408 = vmul.f32 %v4399, 1.442695
        %v4409 = vpow.pop %v4408
        %v4410 = vmul.f32 %v4400, 1.442695
        %v4411 = vpow.pop %v4410
        %v4412 = vmul.f32 %v4401, 1.442695
        %v4413 = vpow.pop %v4412
        %v4414 = vmul.f32 %v4402, 1.442695
        %v4415 = vpow.pop %v4414
        %v4416 = vmul.f32 %v4403, 1.442695
        %v4417 = vpow.pop %v4416
        %v4418 = vmul.f32 %v4404, 1.442695
        %v4419 = vpow.pop %v4418
        %v4420 = vmul.f32 %v4405, 1.442695
        %v4421 = vpow.pop %v4420
        %v4422 = vsel %vm1335, %v4407, 0.0
        %4423 = vadd.xlane.f32.xlu0 %v4422
        %v4424 = vpop.xlane.xlu0 %4423
        %v4425 = vsel %vm1335, %v4409, 0.0
        %4426 = vadd.xlane.f32.xlu0 %v4425
        %v4427 = vpop.xlane.xlu0 %4426
        %v4428 = vsel %vm1335, %v4411, 0.0
        %4429 = vadd.xlane.f32.xlu0 %v4428
        %v4430 = vpop.xlane.xlu0 %4429
        %v4431 = vsel %vm1335, %v4413, 0.0
        %4432 = vadd.xlane.f32.xlu0 %v4431
        %v4433 = vpop.xlane.xlu0 %4432
        %v4434 = vsel %vm1335, %v4415, 0.0
        %4435 = vadd.xlane.f32.xlu0 %v4434
        %v4436 = vpop.xlane.xlu0 %4435
        %v4437 = vsel %vm1335, %v4417, 0.0
        %4438 = vadd.xlane.f32.xlu0 %v4437
        %v4439 = vpop.xlane.xlu0 %4438
        %v4440 = vsel %vm1335, %v4419, 0.0
        %4441 = vadd.xlane.f32.xlu0 %v4440
        %v4442 = vpop.xlane.xlu0 %4441
        %v4443 = vsel %vm1335, %v4421, 0.0
        %4444 = vadd.xlane.f32.xlu0 %v4443
        %v4445 = vpop.xlane.xlu0 %4444
        %v4446 = vrcp.pop %v4424
        %v4447 = vrcp.pop %v4427
        %v4448 = vrcp.pop %v4430
        %v4449 = vrcp.pop %v4433
        %v4450 = vrcp.pop %v4436
        %v4451 = vrcp.pop %v4439
        %v4452 = vrcp.pop %v4442
        %v4453 = vrcp.pop %v4445
        %v4454 = vmul.f32 %v4407, %v4446
        %v4455 = vmul.f32 %v4409, %v4447
        %v4456 = vmul.f32 %v4411, %v4448
        %v4457 = vmul.f32 %v4413, %v4449
        %v4458 = vmul.f32 %v4415, %v4450
        %v4459 = vmul.f32 %v4417, %v4451
        %v4460 = vmul.f32 %v4419, %v4452
        %v4461 = vmul.f32 %v4421, %v4453
        %v4462 = vpack.c.bf16 %v4454, %v4454
        %v4463 = vpack.c.bf16 %v4455, %v4455
        %v4464 = vpack.c.bf16 %v4456, %v4456
        %v4465 = vpack.c.bf16 %v4457, %v4457
        %v4466 = vpack.c.bf16 %v4458, %v4458
        %v4467 = vpack.c.bf16 %v4459, %v4459
        %v4468 = vpack.c.bf16 %v4460, %v4460
        %v4469 = vpack.c.bf16 %v4461, %v4461
        %4470 = vrot.lane.b32.xlu0 %v1324, 40
        %v4471 = vpop.permute.xlu0 %4470
        %v4473 = vsel %vm1335, %v4462, 0
        %v4476 = vsel %vm1826, %v4471, 0
        %4478 = vmatprep.subr.bf16.mxu0 0
        %4479 = vmatpush1.bf16.msra.mxu0 0
        %4480 = vmatprep.subr.bf16.mxu0 0
        %4481 = vmatpush1.bf16.msra.mxu0 0
        %4482 = vmatprep.subr.bf16.mxu0 0
        %4483 = vmatpush1.bf16.msra.mxu0 0
        %4484 = vmatprep.subr.bf16.mxu0 0
        %4485 = vmatpush1.bf16.msra.mxu0 0
        %4486 = vmatprep.subr.bf16.mxu0 0
        %4487 = vmatpush1.bf16.msra.mxu0 0
        %4488 = vmatprep.subr.bf16.mxu0 0
        %4489 = vmatpush1.bf16.msra.mxu0 0
        %4490 = vmatprep.subr.bf16.mxu0 0
        %4491 = vmatpush1.bf16.msra.mxu0 0
        %4492 = vmatprep.subr.bf16.mxu0 0
        %4493 = vmatpush1.bf16.msra.mxu0 %v4476
        %4494 = vmatprep.subr.bf16.mxu0 0
        %4495 = vmatpush2.bf16.msra.mxu0 0
        %4496 = vmatprep.subr.bf16.mxu0 0
        %4497 = vmatpush2.bf16.msra.mxu0 0
        %4498 = vmatprep.subr.bf16.mxu0 0
        %4499 = vmatpush2.bf16.msra.mxu0 0
        %4500 = vmatprep.subr.bf16.mxu0 0
        %4501 = vmatpush2.bf16.msra.mxu0 0
        %4502 = vmatprep.subr.bf16.mxu0 0
        %4503 = vmatpush2.bf16.msra.mxu0 0
        %4504 = vmatprep.subr.bf16.mxu0 0
        %4505 = vmatpush2.bf16.msra.mxu0 0
        %4506 = vmatprep.subr.bf16.mxu0 0
        %4507 = vmatpush2.bf16.msra.mxu0 0
        %4508 = vmatprep.subr.bf16.mxu0 0
        %4509 = vmatpush2.bf16.msra.mxu0 0
        %4510 = vmatprep.mubr.bf16.mxu0 0
        %4511 = vmatmul.mubr.bf16.gmra.mxu0 %v4473
        %v4512 = vpop.f32.mrf.mxu0
        %v4513 = vadd.f32 0.0, %v4512
        %v4514 = vpop.f32.mrf.mxu0
        %v4515 = vpop.f32.mrf.mxu0
        %v4516 = vpop.f32.mrf.mxu0
        %4517 = vdwg.mxu0
        %4518 = vrot.lane.b32.xlu0 %v1325, 40
        %v4519 = vpop.permute.xlu0 %4518
        %v4521 = vsel %vm1335, %v4463, 0
        %v4524 = vsel %vm1826, %v4519, 0
        %4526 = vmatprep.subr.bf16.mxu0 0
        %4527 = vmatpush1.bf16.msra.mxu0 0
        %4528 = vmatprep.subr.bf16.mxu0 0
        %4529 = vmatpush1.bf16.msra.mxu0 0
        %4530 = vmatprep.subr.bf16.mxu0 0
        %4531 = vmatpush1.bf16.msra.mxu0 0
        %4532 = vmatprep.subr.bf16.mxu0 0
        %4533 = vmatpush1.bf16.msra.mxu0 0
        %4534 = vmatprep.subr.bf16.mxu0 0
        %4535 = vmatpush1.bf16.msra.mxu0 0
        %4536 = vmatprep.subr.bf16.mxu0 0
        %4537 = vmatpush1.bf16.msra.mxu0 0
        %4538 = vmatprep.subr.bf16.mxu0 0
        %4539 = vmatpush1.bf16.msra.mxu0 0
        %4540 = vmatprep.subr.bf16.mxu0 0
        %4541 = vmatpush1.bf16.msra.mxu0 %v4524
        %4542 = vmatprep.subr.bf16.mxu0 0
        %4543 = vmatpush2.bf16.msra.mxu0 0
        %4544 = vmatprep.subr.bf16.mxu0 0
        %4545 = vmatpush2.bf16.msra.mxu0 0
        %4546 = vmatprep.subr.bf16.mxu0 0
        %4547 = vmatpush2.bf16.msra.mxu0 0
        %4548 = vmatprep.subr.bf16.mxu0 0
        %4549 = vmatpush2.bf16.msra.mxu0 0
        %4550 = vmatprep.subr.bf16.mxu0 0
        %4551 = vmatpush2.bf16.msra.mxu0 0
        %4552 = vmatprep.subr.bf16.mxu0 0
        %4553 = vmatpush2.bf16.msra.mxu0 0
        %4554 = vmatprep.subr.bf16.mxu0 0
        %4555 = vmatpush2.bf16.msra.mxu0 0
        %4556 = vmatprep.subr.bf16.mxu0 0
        %4557 = vmatpush2.bf16.msra.mxu0 0
        %4558 = vmatprep.mubr.bf16.mxu0 0
        %4559 = vmatmul.mubr.bf16.gmra.mxu0 %v4521
        %v4560 = vpop.f32.mrf.mxu0
        %v4561 = vadd.f32 0.0, %v4560
        %v4562 = vpop.f32.mrf.mxu0
        %v4563 = vpop.f32.mrf.mxu0
        %v4564 = vpop.f32.mrf.mxu0
        %4565 = vdwg.mxu0
        %4566 = vrot.lane.b32.xlu0 %v1326, 40
        %v4567 = vpop.permute.xlu0 %4566
        %v4569 = vsel %vm1335, %v4464, 0
        %v4572 = vsel %vm1826, %v4567, 0
        %4574 = vmatprep.subr.bf16.mxu0 0
        %4575 = vmatpush1.bf16.msra.mxu0 0
        %4576 = vmatprep.subr.bf16.mxu0 0
        %4577 = vmatpush1.bf16.msra.mxu0 0
        %4578 = vmatprep.subr.bf16.mxu0 0
        %4579 = vmatpush1.bf16.msra.mxu0 0
        %4580 = vmatprep.subr.bf16.mxu0 0
        %4581 = vmatpush1.bf16.msra.mxu0 0
        %4582 = vmatprep.subr.bf16.mxu0 0
        %4583 = vmatpush1.bf16.msra.mxu0 0
        %4584 = vmatprep.subr.bf16.mxu0 0
        %4585 = vmatpush1.bf16.msra.mxu0 0
        %4586 = vmatprep.subr.bf16.mxu0 0
        %4587 = vmatpush1.bf16.msra.mxu0 0
        %4588 = vmatprep.subr.bf16.mxu0 0
        %4589 = vmatpush1.bf16.msra.mxu0 %v4572
        %4590 = vmatprep.subr.bf16.mxu0 0
        %4591 = vmatpush2.bf16.msra.mxu0 0
        %4592 = vmatprep.subr.bf16.mxu0 0
        %4593 = vmatpush2.bf16.msra.mxu0 0
        %4594 = vmatprep.subr.bf16.mxu0 0
        %4595 = vmatpush2.bf16.msra.mxu0 0
        %4596 = vmatprep.subr.bf16.mxu0 0
        %4597 = vmatpush2.bf16.msra.mxu0 0
        %4598 = vmatprep.subr.bf16.mxu0 0
        %4599 = vmatpush2.bf16.msra.mxu0 0
        %4600 = vmatprep.subr.bf16.mxu0 0
        %4601 = vmatpush2.bf16.msra.mxu0 0
        %4602 = vmatprep.subr.bf16.mxu0 0
        %4603 = vmatpush2.bf16.msra.mxu0 0
        %4604 = vmatprep.subr.bf16.mxu0 0
        %4605 = vmatpush2.bf16.msra.mxu0 0
        %4606 = vmatprep.mubr.bf16.mxu0 0
        %4607 = vmatmul.mubr.bf16.gmra.mxu0 %v4569
        %v4608 = vpop.f32.mrf.mxu0
        %v4609 = vadd.f32 0.0, %v4608
        %v4610 = vpop.f32.mrf.mxu0
        %v4611 = vpop.f32.mrf.mxu0
        %v4612 = vpop.f32.mrf.mxu0
        %4613 = vdwg.mxu0
        %4614 = vrot.lane.b32.xlu0 %v1327, 40
        %v4615 = vpop.permute.xlu0 %4614
        %v4617 = vsel %vm1335, %v4465, 0
        %v4620 = vsel %vm1826, %v4615, 0
        %4622 = vmatprep.subr.bf16.mxu0 0
        %4623 = vmatpush1.bf16.msra.mxu0 0
        %4624 = vmatprep.subr.bf16.mxu0 0
        %4625 = vmatpush1.bf16.msra.mxu0 0
        %4626 = vmatprep.subr.bf16.mxu0 0
        %4627 = vmatpush1.bf16.msra.mxu0 0
        %4628 = vmatprep.subr.bf16.mxu0 0
        %4629 = vmatpush1.bf16.msra.mxu0 0
        %4630 = vmatprep.subr.bf16.mxu0 0
        %4631 = vmatpush1.bf16.msra.mxu0 0
        %4632 = vmatprep.subr.bf16.mxu0 0
        %4633 = vmatpush1.bf16.msra.mxu0 0
        %4634 = vmatprep.subr.bf16.mxu0 0
        %4635 = vmatpush1.bf16.msra.mxu0 0
        %4636 = vmatprep.subr.bf16.mxu0 0
        %4637 = vmatpush1.bf16.msra.mxu0 %v4620
        %4638 = vmatprep.subr.bf16.mxu0 0
        %4639 = vmatpush2.bf16.msra.mxu0 0
        %4640 = vmatprep.subr.bf16.mxu0 0
        %4641 = vmatpush2.bf16.msra.mxu0 0
        %4642 = vmatprep.subr.bf16.mxu0 0
        %4643 = vmatpush2.bf16.msra.mxu0 0
        %4644 = vmatprep.subr.bf16.mxu0 0
        %4645 = vmatpush2.bf16.msra.mxu0 0
        %4646 = vmatprep.subr.bf16.mxu0 0
        %4647 = vmatpush2.bf16.msra.mxu0 0
        %4648 = vmatprep.subr.bf16.mxu0 0
        %4649 = vmatpush2.bf16.msra.mxu0 0
        %4650 = vmatprep.subr.bf16.mxu0 0
        %4651 = vmatpush2.bf16.msra.mxu0 0
        %4652 = vmatprep.subr.bf16.mxu0 0
        %4653 = vmatpush2.bf16.msra.mxu0 0
        %4654 = vmatprep.mubr.bf16.mxu0 0
        %4655 = vmatmul.mubr.bf16.gmra.mxu0 %v4617
        %v4656 = vpop.f32.mrf.mxu0
        %v4657 = vadd.f32 0.0, %v4656
        %v4658 = vpop.f32.mrf.mxu0
        %v4659 = vpop.f32.mrf.mxu0
        %v4660 = vpop.f32.mrf.mxu0
        %4661 = vdwg.mxu0
        %4662 = vrot.lane.b32.xlu0 %v1328, 40
        %v4663 = vpop.permute.xlu0 %4662
        %v4665 = vsel %vm1335, %v4466, 0
        %v4668 = vsel %vm1826, %v4663, 0
        %4670 = vmatprep.subr.bf16.mxu0 0
        %4671 = vmatpush1.bf16.msra.mxu0 0
        %4672 = vmatprep.subr.bf16.mxu0 0
        %4673 = vmatpush1.bf16.msra.mxu0 0
        %4674 = vmatprep.subr.bf16.mxu0 0
        %4675 = vmatpush1.bf16.msra.mxu0 0
        %4676 = vmatprep.subr.bf16.mxu0 0
        %4677 = vmatpush1.bf16.msra.mxu0 0
        %4678 = vmatprep.subr.bf16.mxu0 0
        %4679 = vmatpush1.bf16.msra.mxu0 0
        %4680 = vmatprep.subr.bf16.mxu0 0
        %4681 = vmatpush1.bf16.msra.mxu0 0
        %4682 = vmatprep.subr.bf16.mxu0 0
        %4683 = vmatpush1.bf16.msra.mxu0 0
        %4684 = vmatprep.subr.bf16.mxu0 0
        %4685 = vmatpush1.bf16.msra.mxu0 %v4668
        %4686 = vmatprep.subr.bf16.mxu0 0
        %4687 = vmatpush2.bf16.msra.mxu0 0
        %4688 = vmatprep.subr.bf16.mxu0 0
        %4689 = vmatpush2.bf16.msra.mxu0 0
        %4690 = vmatprep.subr.bf16.mxu0 0
        %4691 = vmatpush2.bf16.msra.mxu0 0
        %4692 = vmatprep.subr.bf16.mxu0 0
        %4693 = vmatpush2.bf16.msra.mxu0 0
        %4694 = vmatprep.subr.bf16.mxu0 0
        %4695 = vmatpush2.bf16.msra.mxu0 0
        %4696 = vmatprep.subr.bf16.mxu0 0
        %4697 = vmatpush2.bf16.msra.mxu0 0
        %4698 = vmatprep.subr.bf16.mxu0 0
        %4699 = vmatpush2.bf16.msra.mxu0 0
        %4700 = vmatprep.subr.bf16.mxu0 0
        %4701 = vmatpush2.bf16.msra.mxu0 0
        %4702 = vmatprep.mubr.bf16.mxu0 0
        %4703 = vmatmul.mubr.bf16.gmra.mxu0 %v4665
        %v4704 = vpop.f32.mrf.mxu0
        %v4705 = vadd.f32 0.0, %v4704
        %v4706 = vpop.f32.mrf.mxu0
        %v4707 = vpop.f32.mrf.mxu0
        %v4708 = vpop.f32.mrf.mxu0
        %4709 = vdwg.mxu0
        %4710 = vrot.lane.b32.xlu0 %v1329, 40
        %v4711 = vpop.permute.xlu0 %4710
        %v4713 = vsel %vm1335, %v4467, 0
        %v4716 = vsel %vm1826, %v4711, 0
        %4718 = vmatprep.subr.bf16.mxu0 0
        %4719 = vmatpush1.bf16.msra.mxu0 0
        %4720 = vmatprep.subr.bf16.mxu0 0
        %4721 = vmatpush1.bf16.msra.mxu0 0
        %4722 = vmatprep.subr.bf16.mxu0 0
        %4723 = vmatpush1.bf16.msra.mxu0 0
        %4724 = vmatprep.subr.bf16.mxu0 0
        %4725 = vmatpush1.bf16.msra.mxu0 0
        %4726 = vmatprep.subr.bf16.mxu0 0
        %4727 = vmatpush1.bf16.msra.mxu0 0
        %4728 = vmatprep.subr.bf16.mxu0 0
        %4729 = vmatpush1.bf16.msra.mxu0 0
        %4730 = vmatprep.subr.bf16.mxu0 0
        %4731 = vmatpush1.bf16.msra.mxu0 0
        %4732 = vmatprep.subr.bf16.mxu0 0
        %4733 = vmatpush1.bf16.msra.mxu0 %v4716
        %4734 = vmatprep.subr.bf16.mxu0 0
        %4735 = vmatpush2.bf16.msra.mxu0 0
        %4736 = vmatprep.subr.bf16.mxu0 0
        %4737 = vmatpush2.bf16.msra.mxu0 0
        %4738 = vmatprep.subr.bf16.mxu0 0
        %4739 = vmatpush2.bf16.msra.mxu0 0
        %4740 = vmatprep.subr.bf16.mxu0 0
        %4741 = vmatpush2.bf16.msra.mxu0 0
        %4742 = vmatprep.subr.bf16.mxu0 0
        %4743 = vmatpush2.bf16.msra.mxu0 0
        %4744 = vmatprep.subr.bf16.mxu0 0
        %4745 = vmatpush2.bf16.msra.mxu0 0
        %4746 = vmatprep.subr.bf16.mxu0 0
        %4747 = vmatpush2.bf16.msra.mxu0 0
        %4748 = vmatprep.subr.bf16.mxu0 0
        %4749 = vmatpush2.bf16.msra.mxu0 0
        %4750 = vmatprep.mubr.bf16.mxu0 0
        %4751 = vmatmul.mubr.bf16.gmra.mxu0 %v4713
        %v4752 = vpop.f32.mrf.mxu0
        %v4753 = vadd.f32 0.0, %v4752
        %v4754 = vpop.f32.mrf.mxu0
        %v4755 = vpop.f32.mrf.mxu0
        %v4756 = vpop.f32.mrf.mxu0
        %4757 = vdwg.mxu0
        %4758 = vrot.lane.b32.xlu0 %v1330, 40
        %v4759 = vpop.permute.xlu0 %4758
        %v4761 = vsel %vm1335, %v4468, 0
        %v4764 = vsel %vm1826, %v4759, 0
        %4766 = vmatprep.subr.bf16.mxu0 0
        %4767 = vmatpush1.bf16.msra.mxu0 0
        %4768 = vmatprep.subr.bf16.mxu0 0
        %4769 = vmatpush1.bf16.msra.mxu0 0
        %4770 = vmatprep.subr.bf16.mxu0 0
        %4771 = vmatpush1.bf16.msra.mxu0 0
        %4772 = vmatprep.subr.bf16.mxu0 0
        %4773 = vmatpush1.bf16.msra.mxu0 0
        %4774 = vmatprep.subr.bf16.mxu0 0
        %4775 = vmatpush1.bf16.msra.mxu0 0
        %4776 = vmatprep.subr.bf16.mxu0 0
        %4777 = vmatpush1.bf16.msra.mxu0 0
        %4778 = vmatprep.subr.bf16.mxu0 0
        %4779 = vmatpush1.bf16.msra.mxu0 0
        %4780 = vmatprep.subr.bf16.mxu0 0
        %4781 = vmatpush1.bf16.msra.mxu0 %v4764
        %4782 = vmatprep.subr.bf16.mxu0 0
        %4783 = vmatpush2.bf16.msra.mxu0 0
        %4784 = vmatprep.subr.bf16.mxu0 0
        %4785 = vmatpush2.bf16.msra.mxu0 0
        %4786 = vmatprep.subr.bf16.mxu0 0
        %4787 = vmatpush2.bf16.msra.mxu0 0
        %4788 = vmatprep.subr.bf16.mxu0 0
        %4789 = vmatpush2.bf16.msra.mxu0 0
        %4790 = vmatprep.subr.bf16.mxu0 0
        %4791 = vmatpush2.bf16.msra.mxu0 0
        %4792 = vmatprep.subr.bf16.mxu0 0
        %4793 = vmatpush2.bf16.msra.mxu0 0
        %4794 = vmatprep.subr.bf16.mxu0 0
        %4795 = vmatpush2.bf16.msra.mxu0 0
        %4796 = vmatprep.subr.bf16.mxu0 0
        %4797 = vmatpush2.bf16.msra.mxu0 0
        %4798 = vmatprep.mubr.bf16.mxu0 0
        %4799 = vmatmul.mubr.bf16.gmra.mxu0 %v4761
        %v4800 = vpop.f32.mrf.mxu0
        %v4801 = vadd.f32 0.0, %v4800
        %v4802 = vpop.f32.mrf.mxu0
        %v4803 = vpop.f32.mrf.mxu0
        %v4804 = vpop.f32.mrf.mxu0
        %4805 = vdwg.mxu0
        %4806 = vrot.lane.b32.xlu0 %v1331, 40
        %v4807 = vpop.permute.xlu0 %4806
        %v4809 = vsel %vm1335, %v4469, 0
        %v4812 = vsel %vm1826, %v4807, 0
        %4814 = vmatprep.subr.bf16.mxu0 0
        %4815 = vmatpush1.bf16.msra.mxu0 0
        %4816 = vmatprep.subr.bf16.mxu0 0
        %4817 = vmatpush1.bf16.msra.mxu0 0
        %4818 = vmatprep.subr.bf16.mxu0 0
        %4819 = vmatpush1.bf16.msra.mxu0 0
        %4820 = vmatprep.subr.bf16.mxu0 0
        %4821 = vmatpush1.bf16.msra.mxu0 0
        %4822 = vmatprep.subr.bf16.mxu0 0
        %4823 = vmatpush1.bf16.msra.mxu0 0
        %4824 = vmatprep.subr.bf16.mxu0 0
        %4825 = vmatpush1.bf16.msra.mxu0 0
        %4826 = vmatprep.subr.bf16.mxu0 0
        %4827 = vmatpush1.bf16.msra.mxu0 0
        %4828 = vmatprep.subr.bf16.mxu0 0
        %4829 = vmatpush1.bf16.msra.mxu0 %v4812
        %4830 = vmatprep.subr.bf16.mxu0 0
        %4831 = vmatpush2.bf16.msra.mxu0 0
        %4832 = vmatprep.subr.bf16.mxu0 0
        %4833 = vmatpush2.bf16.msra.mxu0 0
        %4834 = vmatprep.subr.bf16.mxu0 0
        %4835 = vmatpush2.bf16.msra.mxu0 0
        %4836 = vmatprep.subr.bf16.mxu0 0
        %4837 = vmatpush2.bf16.msra.mxu0 0
        %4838 = vmatprep.subr.bf16.mxu0 0
        %4839 = vmatpush2.bf16.msra.mxu0 0
        %4840 = vmatprep.subr.bf16.mxu0 0
        %4841 = vmatpush2.bf16.msra.mxu0 0
        %4842 = vmatprep.subr.bf16.mxu0 0
        %4843 = vmatpush2.bf16.msra.mxu0 0
        %4844 = vmatprep.subr.bf16.mxu0 0
        %4845 = vmatpush2.bf16.msra.mxu0 0
        %4846 = vmatprep.mubr.bf16.mxu0 0
        %4847 = vmatmul.mubr.bf16.gmra.mxu0 %v4809
        %v4848 = vpop.f32.mrf.mxu0
        %v4849 = vadd.f32 0.0, %v4848
        %v4850 = vpop.f32.mrf.mxu0
        %v4851 = vpop.f32.mrf.mxu0
        %v4852 = vpop.f32.mrf.mxu0
        %4853 = vdwg.mxu0
        %4862 = vrot.lane.b32.xlu0 %v2753, 8
        %v4863 = vpop.permute.xlu0 %4862
        %4864 = vrot.lane.b32.xlu0 %v2801, 8
        %v4865 = vpop.permute.xlu0 %4864
        %4866 = vrot.lane.b32.xlu0 %v2849, 8
        %v4867 = vpop.permute.xlu0 %4866
        %4868 = vrot.lane.b32.xlu0 %v2897, 8
        %v4869 = vpop.permute.xlu0 %4868
        %4870 = vrot.lane.b32.xlu0 %v2945, 8
        %v4871 = vpop.permute.xlu0 %4870
        %4872 = vrot.lane.b32.xlu0 %v2993, 8
        %v4873 = vpop.permute.xlu0 %4872
        %4874 = vrot.lane.b32.xlu0 %v3041, 8
        %v4875 = vpop.permute.xlu0 %4874
        %4876 = vrot.lane.b32.xlu0 %v3089, 8
        %v4877 = vpop.permute.xlu0 %4876
        %4894 = vrot.lane.b32.xlu0 %v3633, 16
        %v4895 = vpop.permute.xlu0 %4894
        %4896 = vrot.lane.b32.xlu0 %v3681, 16
        %v4897 = vpop.permute.xlu0 %4896
        %4898 = vrot.lane.b32.xlu0 %v3729, 16
        %v4899 = vpop.permute.xlu0 %4898
        %4900 = vrot.lane.b32.xlu0 %v3777, 16
        %v4901 = vpop.permute.xlu0 %4900
        %4902 = vrot.lane.b32.xlu0 %v3825, 16
        %v4903 = vpop.permute.xlu0 %4902
        %4904 = vrot.lane.b32.xlu0 %v3873, 16
        %v4905 = vpop.permute.xlu0 %4904
        %4906 = vrot.lane.b32.xlu0 %v3921, 16
        %v4907 = vpop.permute.xlu0 %4906
        %4908 = vrot.lane.b32.xlu0 %v3969, 16
        %v4909 = vpop.permute.xlu0 %4908
        %4926 = vrot.lane.b32.xlu0 %v4513, 24
        %v4927 = vpop.permute.xlu0 %4926
        %4928 = vrot.lane.b32.xlu0 %v4561, 24
        %v4929 = vpop.permute.xlu0 %4928
        %4930 = vrot.lane.b32.xlu0 %v4609, 24
        %v4931 = vpop.permute.xlu0 %4930
        %4932 = vrot.lane.b32.xlu0 %v4657, 24
        %v4933 = vpop.permute.xlu0 %4932
        %4934 = vrot.lane.b32.xlu0 %v4705, 24
        %v4935 = vpop.permute.xlu0 %4934
        %4936 = vrot.lane.b32.xlu0 %v4753, 24
        %v4937 = vpop.permute.xlu0 %4936
        %4938 = vrot.lane.b32.xlu0 %v4801, 24
        %v4939 = vpop.permute.xlu0 %4938
        %4940 = vrot.lane.b32.xlu0 %v4849, 24
        %v4941 = vpop.permute.xlu0 %4940
        %v4950 = vsel %vm1335, %v1865, %v4863
        %v4951 = vsel %vm1335, %v1913, %v4865
        %v4952 = vsel %vm1335, %v1961, %v4867
        %v4953 = vsel %vm1335, %v2009, %v4869
        %v4954 = vsel %vm1335, %v2057, %v4871
        %v4955 = vsel %vm1335, %v2105, %v4873
        %v4956 = vsel %vm1335, %v2153, %v4875
        %v4957 = vsel %vm1335, %v2201, %v4877
        %vm4958 = vcmask 130048
        %v4959 = vsel %vm4958, %v4950, %v4895
        %v4960 = vsel %vm4958, %v4951, %v4897
        %v4961 = vsel %vm4958, %v4952, %v4899
        %v4962 = vsel %vm4958, %v4953, %v4901
        %v4963 = vsel %vm4958, %v4954, %v4903
        %v4964 = vsel %vm4958, %v4955, %v4905
        %v4965 = vsel %vm4958, %v4956, %v4907
        %v4966 = vsel %vm4958, %v4957, %v4909
        %vm4967 = vcmask 195584
        %v4968 = vsel %vm4967, %v4959, %v4927
        %v4969 = vsel %vm4967, %v4960, %v4929
        %v4970 = vsel %vm4967, %v4961, %v4931
        %v4971 = vsel %vm4967, %v4962, %v4933
        %v4972 = vsel %vm4967, %v4963, %v4935
        %v4973 = vsel %vm4967, %v4964, %v4937
        %v4974 = vsel %vm4967, %v4965, %v4939
        %v4975 = vsel %vm4967, %v4966, %v4941
        %v4976 = vpack.c.bf16 %v4969, %v4968
        %v4977 = vpack.c.bf16 %v4971, %v4970
        %v4978 = vpack.c.bf16 %v4973, %v4972
        %v4979 = vpack.c.bf16 %v4975, %v4974
        %v4980 = vld [vmem:[%s1098] sm:$0xf]
        %v4981 = vld [vmem:[%s1098 + $0x4] sm:$0xf]
        %v4982 = vld [vmem:[%s1098 + $0x8] sm:$0xf]
        %v4983 = vld [vmem:[%s1098 + $0xc] sm:$0xf]
        %v4984 = vld [vmem:[%s1101] sm:$0x1]
        %v4986 = vlaneseq
        %v4987 = vshrl.u32 %v4986, 7
        %v4988 = vsub.s32 0, %v4987
        %v4989 = vrot.slane %v4984, %v4988
        %v4995 = vunpack.c.l.b16 %v4980
        %v4996 = vunpack.c.l.b16 %v4981
        %v4997 = vunpack.c.l.b16 %v4982
        %v4998 = vunpack.c.l.b16 %v4983
        %v4999 = vpack.c.b16 %v4996, %v4995
        %v5000 = vpack.c.b16 %v4998, %v4997
        %v5004 = vsel %vm1230, %v4976, 0
        %v5007 = vsel %vm1230, %v4977, 0
        %v5010 = vsel %vm1230, %v4978, 0
        %v5013 = vsel %vm1230, %v4979, 0
        %5015 = vmatprep.subr.bf16.mxu0 0
        %5016 = vmatpush1.bf16.msra.mxu0 0
        %5017 = vmatprep.subr.bf16.mxu0 0
        %5018 = vmatpush1.bf16.msra.mxu0 0
        %5019 = vmatprep.subr.bf16.mxu0 0
        %5020 = vmatpush1.bf16.msra.mxu0 0
        %5021 = vmatprep.subr.bf16.mxu0 0
        %5022 = vmatpush1.bf16.msra.mxu0 0
        %5023 = vmatprep.subr.bf16.mxu0 0
        %5024 = vmatpush1.bf16.msra.mxu0 0
        %5025 = vmatprep.subr.bf16.mxu0 0
        %5026 = vmatpush1.bf16.msra.mxu0 0
        %5027 = vmatprep.subr.bf16.mxu0 0
        %5028 = vmatpush1.bf16.msra.mxu0 %v5000
        %5029 = vmatprep.subr.bf16.mxu0 0
        %5030 = vmatpush1.bf16.msra.mxu0 %v4999
        %5031 = vmatprep.subr.bf16.mxu0 0
        %5032 = vmatpush2.bf16.msra.mxu0 0
        %5033 = vmatprep.subr.bf16.mxu0 0
        %5034 = vmatpush2.bf16.msra.mxu0 0
        %5035 = vmatprep.subr.bf16.mxu0 0
        %5036 = vmatpush2.bf16.msra.mxu0 0
        %5037 = vmatprep.subr.bf16.mxu0 0
        %5038 = vmatpush2.bf16.msra.mxu0 0
        %5039 = vmatprep.subr.bf16.mxu0 0
        %5040 = vmatpush2.bf16.msra.mxu0 0
        %5041 = vmatprep.subr.bf16.mxu0 0
        %5042 = vmatpush2.bf16.msra.mxu0 0
        %5043 = vmatprep.subr.bf16.mxu0 0
        %5044 = vmatpush2.bf16.msra.mxu0 0
        %5045 = vmatprep.subr.bf16.mxu0 0
        %5046 = vmatpush2.bf16.msra.mxu0 0
        %5047 = vmatprep.mubr.bf16.mxu0 0
        %5048 = vmatmul.mubr.bf16.gmra.mxu0 %v5004
        %v5049 = vpop.f32.mrf.mxu0
        %v5050 = vadd.f32 %v4989, %v5049
        %v5051 = vpop.f32.mrf.mxu0
        %v5052 = vpop.f32.mrf.mxu0
        %v5053 = vadd.f32 %v4989, %v5052
        %v5054 = vpop.f32.mrf.mxu0
        %5055 = vmatprep.mubr.bf16.mxu0 0
        %5056 = vmatmul.mubr.bf16.gmra.mxu0 %v5007
        %v5057 = vpop.f32.mrf.mxu0
        %v5058 = vadd.f32 %v4989, %v5057
        %v5059 = vpop.f32.mrf.mxu0
        %v5060 = vpop.f32.mrf.mxu0
        %v5061 = vadd.f32 %v4989, %v5060
        %v5062 = vpop.f32.mrf.mxu0
        %5063 = vmatprep.mubr.bf16.mxu0 0
        %5064 = vmatmul.mubr.bf16.gmra.mxu0 %v5010
        %v5065 = vpop.f32.mrf.mxu0
        %v5066 = vadd.f32 %v4989, %v5065
        %v5067 = vpop.f32.mrf.mxu0
        %v5068 = vpop.f32.mrf.mxu0
        %v5069 = vadd.f32 %v4989, %v5068
        %v5070 = vpop.f32.mrf.mxu0
        %5071 = vmatprep.mubr.bf16.mxu0 0
        %5072 = vmatmul.mubr.bf16.gmra.mxu0 %v5013
        %v5073 = vpop.f32.mrf.mxu0
        %v5074 = vadd.f32 %v4989, %v5073
        %v5075 = vpop.f32.mrf.mxu0
        %v5076 = vpop.f32.mrf.mxu0
        %v5077 = vadd.f32 %v4989, %v5076
        %v5078 = vpop.f32.mrf.mxu0
        %5079 = vdwg.mxu0
        %v5080 = vadd.f32 %v1179, %v5050
        %v5081 = vadd.f32 %v1180, %v5053
        %v5082 = vadd.f32 %v1181, %v5058
        %v5083 = vadd.f32 %v1182, %v5061
        %v5084 = vadd.f32 %v1183, %v5066
        %v5085 = vadd.f32 %v1184, %v5069
        %v5086 = vadd.f32 %v1185, %v5074
        %v5087 = vadd.f32 %v1186, %v5077
        %v5088 = vsel %vm1230, %v5080, 0.0
        %5089 = vadd.xlane.f32.xlu0 %v5088
        %v5090 = vpop.xlane.xlu0 %5089
        %v5091 = vsel %vm1230, %v5081, 0.0
        %5092 = vadd.xlane.f32.xlu0 %v5091
        %v5093 = vpop.xlane.xlu0 %5092
        %v5094 = vsel %vm1230, %v5082, 0.0
        %5095 = vadd.xlane.f32.xlu0 %v5094
        %v5096 = vpop.xlane.xlu0 %5095
        %v5097 = vsel %vm1230, %v5083, 0.0
        %5098 = vadd.xlane.f32.xlu0 %v5097
        %v5099 = vpop.xlane.xlu0 %5098
        %v5100 = vsel %vm1230, %v5084, 0.0
        %5101 = vadd.xlane.f32.xlu0 %v5100
        %v5102 = vpop.xlane.xlu0 %5101
        %v5103 = vsel %vm1230, %v5085, 0.0
        %5104 = vadd.xlane.f32.xlu0 %v5103
        %v5105 = vpop.xlane.xlu0 %5104
        %v5106 = vsel %vm1230, %v5086, 0.0
        %5107 = vadd.xlane.f32.xlu0 %v5106
        %v5108 = vpop.xlane.xlu0 %5107
        %v5109 = vsel %vm1230, %v5087, 0.0
        %5110 = vadd.xlane.f32.xlu0 %v5109
        %v5111 = vpop.xlane.xlu0 %5110
        %v5112 = vrcp.pop 32.0
        %v5113 = vmul.f32 %v5090, %v5112
        %v5114 = vmul.f32 %v5093, %v5112
        %v5115 = vmul.f32 %v5096, %v5112
        %v5116 = vmul.f32 %v5099, %v5112
        %v5117 = vmul.f32 %v5102, %v5112
        %v5118 = vmul.f32 %v5105, %v5112
        %v5119 = vmul.f32 %v5108, %v5112
        %v5120 = vmul.f32 %v5111, %v5112
        %v5121 = vsub.f32 %v5080, %v5113
        %v5122 = vsub.f32 %v5081, %v5114
        %v5123 = vsub.f32 %v5082, %v5115
        %v5124 = vsub.f32 %v5083, %v5116
        %v5125 = vsub.f32 %v5084, %v5117
        %v5126 = vsub.f32 %v5085, %v5118
        %v5127 = vsub.f32 %v5086, %v5119
        %v5128 = vsub.f32 %v5087, %v5120
        %v5129 = vmul.f32 %v5121, %v5121
        %v5130 = vmul.f32 %v5122, %v5122
        %v5131 = vmul.f32 %v5123, %v5123
        %v5132 = vmul.f32 %v5124, %v5124
        %v5133 = vmul.f32 %v5125, %v5125
        %v5134 = vmul.f32 %v5126, %v5126
        %v5135 = vmul.f32 %v5127, %v5127
        %v5136 = vmul.f32 %v5128, %v5128
        %v5137 = vsel %vm1230, %v5129, 0.0
        %5138 = vadd.xlane.f32.xlu0 %v5137
        %v5139 = vpop.xlane.xlu0 %5138
        %v5140 = vsel %vm1230, %v5130, 0.0
        %5141 = vadd.xlane.f32.xlu0 %v5140
        %v5142 = vpop.xlane.xlu0 %5141
        %v5143 = vsel %vm1230, %v5131, 0.0
        %5144 = vadd.xlane.f32.xlu0 %v5143
        %v5145 = vpop.xlane.xlu0 %5144
        %v5146 = vsel %vm1230, %v5132, 0.0
        %5147 = vadd.xlane.f32.xlu0 %v5146
        %v5148 = vpop.xlane.xlu0 %5147
        %v5149 = vsel %vm1230, %v5133, 0.0
        %5150 = vadd.xlane.f32.xlu0 %v5149
        %v5151 = vpop.xlane.xlu0 %5150
        %v5152 = vsel %vm1230, %v5134, 0.0
        %5153 = vadd.xlane.f32.xlu0 %v5152
        %v5154 = vpop.xlane.xlu0 %5153
        %v5155 = vsel %vm1230, %v5135, 0.0
        %5156 = vadd.xlane.f32.xlu0 %v5155
        %v5157 = vpop.xlane.xlu0 %5156
        %v5158 = vsel %vm1230, %v5136, 0.0
        %5159 = vadd.xlane.f32.xlu0 %v5158
        %v5160 = vpop.xlane.xlu0 %5159
        %v5161 = vmul.f32 %v5139, %v5112
        %v5162 = vmul.f32 %v5142, %v5112
        %v5163 = vmul.f32 %v5145, %v5112
        %v5164 = vmul.f32 %v5148, %v5112
        %v5165 = vmul.f32 %v5151, %v5112
        %v5166 = vmul.f32 %v5154, %v5112
        %v5167 = vmul.f32 %v5157, %v5112
        %v5168 = vmul.f32 %v5160, %v5112
        %v5169 = vadd.f32 %v5161, 1e-05
        %v5170 = vadd.f32 %v5162, 1e-05
        %v5171 = vadd.f32 %v5163, 1e-05
        %v5172 = vadd.f32 %v5164, 1e-05
        %v5173 = vadd.f32 %v5165, 1e-05
        %v5174 = vadd.f32 %v5166, 1e-05
        %v5175 = vadd.f32 %v5167, 1e-05
        %v5176 = vadd.f32 %v5168, 1e-05
        %v5177 = vrsqrt.pop %v5169
        %v5178 = vrsqrt.pop %v5170
        %v5179 = vrsqrt.pop %v5171
        %v5180 = vrsqrt.pop %v5172
        %v5181 = vrsqrt.pop %v5173
        %v5182 = vrsqrt.pop %v5174
        %v5183 = vrsqrt.pop %v5175
        %v5184 = vrsqrt.pop %v5176
        %v5185 = vmul.f32 %v5121, %v5177
        %v5186 = vmul.f32 %v5122, %v5178
        %v5187 = vmul.f32 %v5123, %v5179
        %v5188 = vmul.f32 %v5124, %v5180
        %v5189 = vmul.f32 %v5125, %v5181
        %v5190 = vmul.f32 %v5126, %v5182
        %v5191 = vmul.f32 %v5127, %v5183
        %v5192 = vmul.f32 %v5128, %v5184
        %v5193 = vld [vmem:[%s1104] sm:$0x1]
        %v5195 = vlaneseq
        %v5196 = vshrl.u32 %v5195, 7
        %v5197 = vsub.s32 0, %v5196
        %v5198 = vrot.slane %v5193, %v5197
        %v5200 = vmul.f32 %v5185, %v5198
        %v5201 = vmul.f32 %v5186, %v5198
        %v5202 = vmul.f32 %v5187, %v5198
        %v5203 = vmul.f32 %v5188, %v5198
        %v5204 = vmul.f32 %v5189, %v5198
        %v5205 = vmul.f32 %v5190, %v5198
        %v5206 = vmul.f32 %v5191, %v5198
        %v5207 = vmul.f32 %v5192, %v5198
        %v5208 = vld [vmem:[%s1107] sm:$0x1]
        %v5210 = vlaneseq
        %v5211 = vshrl.u32 %v5210, 7
        %v5212 = vsub.s32 0, %v5211
        %v5213 = vrot.slane %v5208, %v5212
        %v5215 = vadd.f32 %v5200, %v5213
        %v5216 = vadd.f32 %v5201, %v5213
        %v5217 = vadd.f32 %v5202, %v5213
        %v5218 = vadd.f32 %v5203, %v5213
        %v5219 = vadd.f32 %v5204, %v5213
        %v5220 = vadd.f32 %v5205, %v5213
        %v5221 = vadd.f32 %v5206, %v5213
        %v5222 = vadd.f32 %v5207, %v5213
        %v5223 = vpack.c.bf16 %v5216, %v5215
        %v5224 = vpack.c.bf16 %v5218, %v5217
        %v5225 = vpack.c.bf16 %v5220, %v5219
        %v5226 = vpack.c.bf16 %v5222, %v5221
        %v5227 = vld [vmem:[%s1112] sm:$0xf]
        %v5228 = vld [vmem:[%s1112 + $0x4] sm:$0xf]
        %v5229 = vld [vmem:[%s1112 + $0x8] sm:$0xf]
        %v5230 = vld [vmem:[%s1112 + $0xc] sm:$0xf]
        %v5231 = vld [vmem:[%s1115] sm:$0x1]
        %v5233 = vlaneseq
        %v5234 = vshrl.u32 %v5233, 7
        %v5235 = vsub.s32 0, %v5234
        %v5236 = vrot.slane %v5231, %v5235
        %v5242 = vunpack.c.l.b16 %v5227
        %v5243 = vunpack.c.l.b16 %v5228
        %v5244 = vunpack.c.l.b16 %v5229
        %v5245 = vunpack.c.l.b16 %v5230
        %v5246 = vpack.c.b16 %v5243, %v5242
        %v5247 = vpack.c.b16 %v5245, %v5244
        %v5251 = vsel %vm1230, %v5223, 0
        %v5254 = vsel %vm1230, %v5224, 0
        %v5257 = vsel %vm1230, %v5225, 0
        %v5260 = vsel %vm1230, %v5226, 0
        %5262 = vmatprep.subr.bf16.mxu0 0
        %5263 = vmatpush1.bf16.msra.mxu0 0
        %5264 = vmatprep.subr.bf16.mxu0 0
        %5265 = vmatpush1.bf16.msra.mxu0 0
        %5266 = vmatprep.subr.bf16.mxu0 0
        %5267 = vmatpush1.bf16.msra.mxu0 0
        %5268 = vmatprep.subr.bf16.mxu0 0
        %5269 = vmatpush1.bf16.msra.mxu0 0
        %5270 = vmatprep.subr.bf16.mxu0 0
        %5271 = vmatpush1.bf16.msra.mxu0 0
        %5272 = vmatprep.subr.bf16.mxu0 0
        %5273 = vmatpush1.bf16.msra.mxu0 0
        %5274 = vmatprep.subr.bf16.mxu0 0
        %5275 = vmatpush1.bf16.msra.mxu0 %v5247
        %5276 = vmatprep.subr.bf16.mxu0 0
        %5277 = vmatpush1.bf16.msra.mxu0 %v5246
        %5278 = vmatprep.subr.bf16.mxu0 0
        %5279 = vmatpush2.bf16.msra.mxu0 0
        %5280 = vmatprep.subr.bf16.mxu0 0
        %5281 = vmatpush2.bf16.msra.mxu0 0
        %5282 = vmatprep.subr.bf16.mxu0 0
        %5283 = vmatpush2.bf16.msra.mxu0 0
        %5284 = vmatprep.subr.bf16.mxu0 0
        %5285 = vmatpush2.bf16.msra.mxu0 0
        %5286 = vmatprep.subr.bf16.mxu0 0
        %5287 = vmatpush2.bf16.msra.mxu0 0
        %5288 = vmatprep.subr.bf16.mxu0 0
        %5289 = vmatpush2.bf16.msra.mxu0 0
        %5290 = vmatprep.subr.bf16.mxu0 0
        %5291 = vmatpush2.bf16.msra.mxu0 0
        %5292 = vmatprep.subr.bf16.mxu0 0
        %5293 = vmatpush2.bf16.msra.mxu0 0
        %5294 = vmatprep.mubr.bf16.mxu0 0
        %5295 = vmatmul.mubr.bf16.gmra.mxu0 %v5251
        %v5296 = vpop.f32.mrf.mxu0
        %v5297 = vadd.f32 %v5236, %v5296
        %v5298 = vpop.f32.mrf.mxu0
        %v5299 = vpop.f32.mrf.mxu0
        %v5300 = vadd.f32 %v5236, %v5299
        %v5301 = vpop.f32.mrf.mxu0
        %5302 = vmatprep.mubr.bf16.mxu0 0
        %5303 = vmatmul.mubr.bf16.gmra.mxu0 %v5254
        %v5304 = vpop.f32.mrf.mxu0
        %v5305 = vadd.f32 %v5236, %v5304
        %v5306 = vpop.f32.mrf.mxu0
        %v5307 = vpop.f32.mrf.mxu0
        %v5308 = vadd.f32 %v5236, %v5307
        %v5309 = vpop.f32.mrf.mxu0
        %5310 = vmatprep.mubr.bf16.mxu0 0
        %5311 = vmatmul.mubr.bf16.gmra.mxu0 %v5257
        %v5312 = vpop.f32.mrf.mxu0
        %v5313 = vadd.f32 %v5236, %v5312
        %v5314 = vpop.f32.mrf.mxu0
        %v5315 = vpop.f32.mrf.mxu0
        %v5316 = vadd.f32 %v5236, %v5315
        %v5317 = vpop.f32.mrf.mxu0
        %5318 = vmatprep.mubr.bf16.mxu0 0
        %5319 = vmatmul.mubr.bf16.gmra.mxu0 %v5260
        %v5320 = vpop.f32.mrf.mxu0
        %v5321 = vadd.f32 %v5236, %v5320
        %v5322 = vpop.f32.mrf.mxu0
        %v5323 = vpop.f32.mrf.mxu0
        %v5324 = vadd.f32 %v5236, %v5323
        %v5325 = vpop.f32.mrf.mxu0
        %5326 = vdwg.mxu0
        %v5327 = vld [vmem:[%s1120] sm:$0xf]
        %v5328 = vld [vmem:[%s1120 + $0x4] sm:$0xf]
        %v5329 = vld [vmem:[%s1120 + $0x8] sm:$0xf]
        %v5330 = vld [vmem:[%s1120 + $0xc] sm:$0xf]
        %v5331 = vld [vmem:[%s909] sm:$0x1]
        %v5333 = vlaneseq
        %v5334 = vshrl.u32 %v5333, 7
        %v5335 = vsub.s32 0, %v5334
        %v5336 = vrot.slane %v5331, %v5335
        %v5354 = vunpack.c.l.b16 %v1187
        %v5355 = vunpack.c.l.b16 %v1188
        %v5356 = vunpack.c.l.b16 %v1189
        %v5357 = vunpack.c.l.b16 %v1190
        %v5358 = vunpack.c.l.b16 %v1191
        %v5359 = vunpack.c.l.b16 %v1192
        %v5360 = vunpack.c.l.b16 %v1193
        %v5361 = vunpack.c.l.b16 %v1194
        %v5362 = vunpack.c.l.b16 %v1195
        %v5363 = vunpack.c.l.b16 %v1196
        %v5364 = vunpack.c.l.b16 %v1197
        %v5365 = vunpack.c.l.b16 %v1198
        %v5366 = vunpack.c.l.b16 %v1199
        %v5367 = vunpack.c.l.b16 %v1200
        %v5368 = vunpack.c.l.b16 %v1201
        %v5369 = vunpack.c.l.b16 %v1202
        %v5370 = vpack.c.b16 %v5355, %v5354
        %v5371 = vpack.c.b16 %v5357, %v5356
        %v5372 = vpack.c.b16 %v5359, %v5358
        %v5373 = vpack.c.b16 %v5361, %v5360
        %v5374 = vpack.c.b16 %v5363, %v5362
        %v5375 = vpack.c.b16 %v5365, %v5364
        %v5376 = vpack.c.b16 %v5367, %v5366
        %v5377 = vpack.c.b16 %v5369, %v5368
        %v5382 = vunpack.c.l.b16 %v5327
        %v5383 = vunpack.c.l.b16 %v5328
        %v5384 = vunpack.c.l.b16 %v5329
        %v5385 = vunpack.c.l.b16 %v5330
        %v5386 = vpack.c.b16 %v5383, %v5382
        %v5387 = vpack.c.b16 %v5385, %v5384
        %v5391 = vsel %vm1230, %v5370, 0
        %v5394 = vsel %vm1230, %v5371, 0
        %v5397 = vsel %vm1230, %v5372, 0
        %v5400 = vsel %vm1230, %v5373, 0
        %v5403 = vsel %vm1230, %v5374, 0
        %v5406 = vsel %vm1230, %v5375, 0
        %v5409 = vsel %vm1230, %v5376, 0
        %v5412 = vsel %vm1230, %v5377, 0
        %5414 = vmatprep.subr.bf16.mxu0 0
        %5415 = vmatpush1.bf16.msra.mxu0 0
        %5416 = vmatprep.subr.bf16.mxu0 0
        %5417 = vmatpush1.bf16.msra.mxu0 0
        %5418 = vmatprep.subr.bf16.mxu0 0
        %5419 = vmatpush1.bf16.msra.mxu0 0
        %5420 = vmatprep.subr.bf16.mxu0 0
        %5421 = vmatpush1.bf16.msra.mxu0 0
        %5422 = vmatprep.subr.bf16.mxu0 0
        %5423 = vmatpush1.bf16.msra.mxu0 0
        %5424 = vmatprep.subr.bf16.mxu0 0
        %5425 = vmatpush1.bf16.msra.mxu0 0
        %5426 = vmatprep.subr.bf16.mxu0 0
        %5427 = vmatpush1.bf16.msra.mxu0 %v5387
        %5428 = vmatprep.subr.bf16.mxu0 0
        %5429 = vmatpush1.bf16.msra.mxu0 %v5386
        %5430 = vmatprep.subr.bf16.mxu0 0
        %5431 = vmatpush2.bf16.msra.mxu0 0
        %5432 = vmatprep.subr.bf16.mxu0 0
        %5433 = vmatpush2.bf16.msra.mxu0 0
        %5434 = vmatprep.subr.bf16.mxu0 0
        %5435 = vmatpush2.bf16.msra.mxu0 0
        %5436 = vmatprep.subr.bf16.mxu0 0
        %5437 = vmatpush2.bf16.msra.mxu0 0
        %5438 = vmatprep.subr.bf16.mxu0 0
        %5439 = vmatpush2.bf16.msra.mxu0 0
        %5440 = vmatprep.subr.bf16.mxu0 0
        %5441 = vmatpush2.bf16.msra.mxu0 0
        %5442 = vmatprep.subr.bf16.mxu0 0
        %5443 = vmatpush2.bf16.msra.mxu0 0
        %5444 = vmatprep.subr.bf16.mxu0 0
        %5445 = vmatpush2.bf16.msra.mxu0 0
        %5446 = vmatprep.mubr.bf16.mxu0 0
        %5447 = vmatmul.mubr.bf16.gmra.mxu0 %v5391
        %v5448 = vpop.f32.mrf.mxu0
        %v5449 = vadd.f32 %v5336, %v5448
        %v5450 = vpop.f32.mrf.mxu0
        %v5451 = vpop.f32.mrf.mxu0
        %v5452 = vadd.f32 %v5336, %v5451
        %v5453 = vpop.f32.mrf.mxu0
        %5454 = vmatprep.mubr.bf16.mxu0 0
        %5455 = vmatmul.mubr.bf16.gmra.mxu0 %v5394
        %v5456 = vpop.f32.mrf.mxu0
        %v5457 = vadd.f32 %v5336, %v5456
        %v5458 = vpop.f32.mrf.mxu0
        %v5459 = vpop.f32.mrf.mxu0
        %v5460 = vadd.f32 %v5336, %v5459
        %v5461 = vpop.f32.mrf.mxu0
        %5462 = vmatprep.mubr.bf16.mxu0 0
        %5463 = vmatmul.mubr.bf16.gmra.mxu0 %v5397
        %v5464 = vpop.f32.mrf.mxu0
        %v5465 = vadd.f32 %v5336, %v5464
        %v5466 = vpop.f32.mrf.mxu0
        %v5467 = vpop.f32.mrf.mxu0
        %v5468 = vadd.f32 %v5336, %v5467
        %v5469 = vpop.f32.mrf.mxu0
        %5470 = vmatprep.mubr.bf16.mxu0 0
        %5471 = vmatmul.mubr.bf16.gmra.mxu0 %v5400
        %v5472 = vpop.f32.mrf.mxu0
        %v5473 = vadd.f32 %v5336, %v5472
        %v5474 = vpop.f32.mrf.mxu0
        %v5475 = vpop.f32.mrf.mxu0
        %v5476 = vadd.f32 %v5336, %v5475
        %v5477 = vpop.f32.mrf.mxu0
        %5478 = vmatprep.mubr.bf16.mxu0 0
        %5479 = vmatmul.mubr.bf16.gmra.mxu0 %v5403
        %v5480 = vpop.f32.mrf.mxu0
        %v5481 = vadd.f32 %v5336, %v5480
        %v5482 = vpop.f32.mrf.mxu0
        %v5483 = vpop.f32.mrf.mxu0
        %v5484 = vadd.f32 %v5336, %v5483
        %v5485 = vpop.f32.mrf.mxu0
        %5486 = vmatprep.mubr.bf16.mxu0 0
        %5487 = vmatmul.mubr.bf16.gmra.mxu0 %v5406
        %v5488 = vpop.f32.mrf.mxu0
        %v5489 = vadd.f32 %v5336, %v5488
        %v5490 = vpop.f32.mrf.mxu0
        %v5491 = vpop.f32.mrf.mxu0
        %v5492 = vadd.f32 %v5336, %v5491
        %v5493 = vpop.f32.mrf.mxu0
        %5494 = vmatprep.mubr.bf16.mxu0 0
        %5495 = vmatmul.mubr.bf16.gmra.mxu0 %v5409
        %v5496 = vpop.f32.mrf.mxu0
        %v5497 = vadd.f32 %v5336, %v5496
        %v5498 = vpop.f32.mrf.mxu0
        %v5499 = vpop.f32.mrf.mxu0
        %v5500 = vadd.f32 %v5336, %v5499
        %v5501 = vpop.f32.mrf.mxu0
        %5502 = vmatprep.mubr.bf16.mxu0 0
        %5503 = vmatmul.mubr.bf16.gmra.mxu0 %v5412
        %v5504 = vpop.f32.mrf.mxu0
        %v5505 = vadd.f32 %v5336, %v5504
        %v5506 = vpop.f32.mrf.mxu0
        %v5507 = vpop.f32.mrf.mxu0
        %v5508 = vadd.f32 %v5336, %v5507
        %v5509 = vpop.f32.mrf.mxu0
        %5510 = vdwg.mxu0
        %v5511 = vmul.f32 %v5297, 0.35355338
        %v5512 = vmul.f32 %v5300, 0.35355338
        %v5513 = vmul.f32 %v5305, 0.35355338
        %v5514 = vmul.f32 %v5308, 0.35355338
        %v5515 = vmul.f32 %v5313, 0.35355338
        %v5516 = vmul.f32 %v5316, 0.35355338
        %v5517 = vmul.f32 %v5321, 0.35355338
        %v5518 = vmul.f32 %v5324, 0.35355338
        %v5519 = vpack.c.bf16 %v5511, %v5511
        %v5520 = vpack.c.bf16 %v5512, %v5512
        %v5521 = vpack.c.bf16 %v5513, %v5513
        %v5522 = vpack.c.bf16 %v5514, %v5514
        %v5523 = vpack.c.bf16 %v5515, %v5515
        %v5524 = vpack.c.bf16 %v5516, %v5516
        %v5525 = vpack.c.bf16 %v5517, %v5517
        %v5526 = vpack.c.bf16 %v5518, %v5518
        %v5527 = vpack.c.bf16 %v5452, %v5449
        %v5528 = vpack.c.bf16 %v5460, %v5457
        %v5529 = vpack.c.bf16 %v5468, %v5465
        %v5530 = vpack.c.bf16 %v5476, %v5473
        %v5531 = vpack.c.bf16 %v5484, %v5481
        %v5532 = vpack.c.bf16 %v5492, %v5489
        %v5533 = vpack.c.bf16 %v5500, %v5497
        %v5534 = vpack.c.bf16 %v5508, %v5505
        %v5536 = vsel %vm1335, %v5519, 0
        %v5539 = vsel %vm1335, %v5527, 0
        %5541 = vmatprep.subr.bf16.mxu0 0
        %5542 = vmatpush1.bf16.xpose.msra.mxu0 0
        %5543 = vmatprep.subr.bf16.mxu0 0
        %5544 = vmatpush1.bf16.xpose.msra.mxu0 0
        %5545 = vmatprep.subr.bf16.mxu0 0
        %5546 = vmatpush1.bf16.xpose.msra.mxu0 0
        %5547 = vmatprep.subr.bf16.mxu0 0
        %5548 = vmatpush1.bf16.xpose.msra.mxu0 0
        %5549 = vmatprep.subr.bf16.mxu0 0
        %5550 = vmatpush1.bf16.xpose.msra.mxu0 0
        %5551 = vmatprep.subr.bf16.mxu0 0
        %5552 = vmatpush1.bf16.xpose.msra.mxu0 0
        %5553 = vmatprep.subr.bf16.mxu0 0
        %5554 = vmatpush1.bf16.xpose.msra.mxu0 0
        %5555 = vmatprep.subr.bf16.mxu0 0
        %5556 = vmatpush1.bf16.xpose.msra.mxu0 %v5539
        %5557 = vmatprep.subr.bf16.mxu0 0
        %5558 = vmatpush2.bf16.xpose.msra.mxu0 0
        %5559 = vmatprep.subr.bf16.mxu0 0
        %5560 = vmatpush2.bf16.xpose.msra.mxu0 0
        %5561 = vmatprep.subr.bf16.mxu0 0
        %5562 = vmatpush2.bf16.xpose.msra.mxu0 0
        %5563 = vmatprep.subr.bf16.mxu0 0
        %5564 = vmatpush2.bf16.xpose.msra.mxu0 0
        %5565 = vmatprep.subr.bf16.mxu0 0
        %5566 = vmatpush2.bf16.xpose.msra.mxu0 0
        %5567 = vmatprep.subr.bf16.mxu0 0
        %5568 = vmatpush2.bf16.xpose.msra.mxu0 0
        %5569 = vmatprep.subr.bf16.mxu0 0
        %5570 = vmatpush2.bf16.xpose.msra.mxu0 0
        %5571 = vmatprep.subr.bf16.mxu0 0
        %5572 = vmatpush2.bf16.xpose.msra.mxu0 0
        %5573 = vmatprep.mubr.bf16.mxu0 0
        %5574 = vmatmul.mubr.bf16.gmra.mxu0 %v5536
        %v5575 = vpop.f32.mrf.mxu0
        %v5576 = vadd.f32 0.0, %v5575
        %v5577 = vpop.f32.mrf.mxu0
        %v5578 = vpop.f32.mrf.mxu0
        %v5579 = vpop.f32.mrf.mxu0
        %5580 = vdwg.mxu0
        %v5582 = vsel %vm1335, %v5520, 0
        %v5585 = vsel %vm1335, %v5528, 0
        %5587 = vmatprep.subr.bf16.mxu0 0
        %5588 = vmatpush1.bf16.xpose.msra.mxu0 0
        %5589 = vmatprep.subr.bf16.mxu0 0
        %5590 = vmatpush1.bf16.xpose.msra.mxu0 0
        %5591 = vmatprep.subr.bf16.mxu0 0
        %5592 = vmatpush1.bf16.xpose.msra.mxu0 0
        %5593 = vmatprep.subr.bf16.mxu0 0
        %5594 = vmatpush1.bf16.xpose.msra.mxu0 0
        %5595 = vmatprep.subr.bf16.mxu0 0
        %5596 = vmatpush1.bf16.xpose.msra.mxu0 0
        %5597 = vmatprep.subr.bf16.mxu0 0
        %5598 = vmatpush1.bf16.xpose.msra.mxu0 0
        %5599 = vmatprep.subr.bf16.mxu0 0
        %5600 = vmatpush1.bf16.xpose.msra.mxu0 0
        %5601 = vmatprep.subr.bf16.mxu0 0
        %5602 = vmatpush1.bf16.xpose.msra.mxu0 %v5585
        %5603 = vmatprep.subr.bf16.mxu0 0
        %5604 = vmatpush2.bf16.xpose.msra.mxu0 0
        %5605 = vmatprep.subr.bf16.mxu0 0
        %5606 = vmatpush2.bf16.xpose.msra.mxu0 0
        %5607 = vmatprep.subr.bf16.mxu0 0
        %5608 = vmatpush2.bf16.xpose.msra.mxu0 0
        %5609 = vmatprep.subr.bf16.mxu0 0
        %5610 = vmatpush2.bf16.xpose.msra.mxu0 0
        %5611 = vmatprep.subr.bf16.mxu0 0
        %5612 = vmatpush2.bf16.xpose.msra.mxu0 0
        %5613 = vmatprep.subr.bf16.mxu0 0
        %5614 = vmatpush2.bf16.xpose.msra.mxu0 0
        %5615 = vmatprep.subr.bf16.mxu0 0
        %5616 = vmatpush2.bf16.xpose.msra.mxu0 0
        %5617 = vmatprep.subr.bf16.mxu0 0
        %5618 = vmatpush2.bf16.xpose.msra.mxu0 0
        %5619 = vmatprep.mubr.bf16.mxu0 0
        %5620 = vmatmul.mubr.bf16.gmra.mxu0 %v5582
        %v5621 = vpop.f32.mrf.mxu0
        %v5622 = vadd.f32 0.0, %v5621
        %v5623 = vpop.f32.mrf.mxu0
        %v5624 = vpop.f32.mrf.mxu0
        %v5625 = vpop.f32.mrf.mxu0
        %5626 = vdwg.mxu0
        %v5628 = vsel %vm1335, %v5521, 0
        %v5631 = vsel %vm1335, %v5529, 0
        %5633 = vmatprep.subr.bf16.mxu0 0
        %5634 = vmatpush1.bf16.xpose.msra.mxu0 0
        %5635 = vmatprep.subr.bf16.mxu0 0
        %5636 = vmatpush1.bf16.xpose.msra.mxu0 0
        %5637 = vmatprep.subr.bf16.mxu0 0
        %5638 = vmatpush1.bf16.xpose.msra.mxu0 0
        %5639 = vmatprep.subr.bf16.mxu0 0
        %5640 = vmatpush1.bf16.xpose.msra.mxu0 0
        %5641 = vmatprep.subr.bf16.mxu0 0
        %5642 = vmatpush1.bf16.xpose.msra.mxu0 0
        %5643 = vmatprep.subr.bf16.mxu0 0
        %5644 = vmatpush1.bf16.xpose.msra.mxu0 0
        %5645 = vmatprep.subr.bf16.mxu0 0
        %5646 = vmatpush1.bf16.xpose.msra.mxu0 0
        %5647 = vmatprep.subr.bf16.mxu0 0
        %5648 = vmatpush1.bf16.xpose.msra.mxu0 %v5631
        %5649 = vmatprep.subr.bf16.mxu0 0
        %5650 = vmatpush2.bf16.xpose.msra.mxu0 0
        %5651 = vmatprep.subr.bf16.mxu0 0
        %5652 = vmatpush2.bf16.xpose.msra.mxu0 0
        %5653 = vmatprep.subr.bf16.mxu0 0
        %5654 = vmatpush2.bf16.xpose.msra.mxu0 0
        %5655 = vmatprep.subr.bf16.mxu0 0
        %5656 = vmatpush2.bf16.xpose.msra.mxu0 0
        %5657 = vmatprep.subr.bf16.mxu0 0
        %5658 = vmatpush2.bf16.xpose.msra.mxu0 0
        %5659 = vmatprep.subr.bf16.mxu0 0
        %5660 = vmatpush2.bf16.xpose.msra.mxu0 0
        %5661 = vmatprep.subr.bf16.mxu0 0
        %5662 = vmatpush2.bf16.xpose.msra.mxu0 0
        %5663 = vmatprep.subr.bf16.mxu0 0
        %5664 = vmatpush2.bf16.xpose.msra.mxu0 0
        %5665 = vmatprep.mubr.bf16.mxu0 0
        %5666 = vmatmul.mubr.bf16.gmra.mxu0 %v5628
        %v5667 = vpop.f32.mrf.mxu0
        %v5668 = vadd.f32 0.0, %v5667
        %v5669 = vpop.f32.mrf.mxu0
        %v5670 = vpop.f32.mrf.mxu0
        %v5671 = vpop.f32.mrf.mxu0
        %5672 = vdwg.mxu0
        %v5674 = vsel %vm1335, %v5522, 0
        %v5677 = vsel %vm1335, %v5530, 0
        %5679 = vmatprep.subr.bf16.mxu0 0
        %5680 = vmatpush1.bf16.xpose.msra.mxu0 0
        %5681 = vmatprep.subr.bf16.mxu0 0
        %5682 = vmatpush1.bf16.xpose.msra.mxu0 0
        %5683 = vmatprep.subr.bf16.mxu0 0
        %5684 = vmatpush1.bf16.xpose.msra.mxu0 0
        %5685 = vmatprep.subr.bf16.mxu0 0
        %5686 = vmatpush1.bf16.xpose.msra.mxu0 0
        %5687 = vmatprep.subr.bf16.mxu0 0
        %5688 = vmatpush1.bf16.xpose.msra.mxu0 0
        %5689 = vmatprep.subr.bf16.mxu0 0
        %5690 = vmatpush1.bf16.xpose.msra.mxu0 0
        %5691 = vmatprep.subr.bf16.mxu0 0
        %5692 = vmatpush1.bf16.xpose.msra.mxu0 0
        %5693 = vmatprep.subr.bf16.mxu0 0
        %5694 = vmatpush1.bf16.xpose.msra.mxu0 %v5677
        %5695 = vmatprep.subr.bf16.mxu0 0
        %5696 = vmatpush2.bf16.xpose.msra.mxu0 0
        %5697 = vmatprep.subr.bf16.mxu0 0
        %5698 = vmatpush2.bf16.xpose.msra.mxu0 0
        %5699 = vmatprep.subr.bf16.mxu0 0
        %5700 = vmatpush2.bf16.xpose.msra.mxu0 0
        %5701 = vmatprep.subr.bf16.mxu0 0
        %5702 = vmatpush2.bf16.xpose.msra.mxu0 0
        %5703 = vmatprep.subr.bf16.mxu0 0
        %5704 = vmatpush2.bf16.xpose.msra.mxu0 0
        %5705 = vmatprep.subr.bf16.mxu0 0
        %5706 = vmatpush2.bf16.xpose.msra.mxu0 0
        %5707 = vmatprep.subr.bf16.mxu0 0
        %5708 = vmatpush2.bf16.xpose.msra.mxu0 0
        %5709 = vmatprep.subr.bf16.mxu0 0
        %5710 = vmatpush2.bf16.xpose.msra.mxu0 0
        %5711 = vmatprep.mubr.bf16.mxu0 0
        %5712 = vmatmul.mubr.bf16.gmra.mxu0 %v5674
        %v5713 = vpop.f32.mrf.mxu0
        %v5714 = vadd.f32 0.0, %v5713
        %v5715 = vpop.f32.mrf.mxu0
        %v5716 = vpop.f32.mrf.mxu0
        %v5717 = vpop.f32.mrf.mxu0
        %5718 = vdwg.mxu0
        %v5720 = vsel %vm1335, %v5523, 0
        %v5723 = vsel %vm1335, %v5531, 0
        %5725 = vmatprep.subr.bf16.mxu0 0
        %5726 = vmatpush1.bf16.xpose.msra.mxu0 0
        %5727 = vmatprep.subr.bf16.mxu0 0
        %5728 = vmatpush1.bf16.xpose.msra.mxu0 0
        %5729 = vmatprep.subr.bf16.mxu0 0
        %5730 = vmatpush1.bf16.xpose.msra.mxu0 0
        %5731 = vmatprep.subr.bf16.mxu0 0
        %5732 = vmatpush1.bf16.xpose.msra.mxu0 0
        %5733 = vmatprep.subr.bf16.mxu0 0
        %5734 = vmatpush1.bf16.xpose.msra.mxu0 0
        %5735 = vmatprep.subr.bf16.mxu0 0
        %5736 = vmatpush1.bf16.xpose.msra.mxu0 0
        %5737 = vmatprep.subr.bf16.mxu0 0
        %5738 = vmatpush1.bf16.xpose.msra.mxu0 0
        %5739 = vmatprep.subr.bf16.mxu0 0
        %5740 = vmatpush1.bf16.xpose.msra.mxu0 %v5723
        %5741 = vmatprep.subr.bf16.mxu0 0
        %5742 = vmatpush2.bf16.xpose.msra.mxu0 0
        %5743 = vmatprep.subr.bf16.mxu0 0
        %5744 = vmatpush2.bf16.xpose.msra.mxu0 0
        %5745 = vmatprep.subr.bf16.mxu0 0
        %5746 = vmatpush2.bf16.xpose.msra.mxu0 0
        %5747 = vmatprep.subr.bf16.mxu0 0
        %5748 = vmatpush2.bf16.xpose.msra.mxu0 0
        %5749 = vmatprep.subr.bf16.mxu0 0
        %5750 = vmatpush2.bf16.xpose.msra.mxu0 0
        %5751 = vmatprep.subr.bf16.mxu0 0
        %5752 = vmatpush2.bf16.xpose.msra.mxu0 0
        %5753 = vmatprep.subr.bf16.mxu0 0
        %5754 = vmatpush2.bf16.xpose.msra.mxu0 0
        %5755 = vmatprep.subr.bf16.mxu0 0
        %5756 = vmatpush2.bf16.xpose.msra.mxu0 0
        %5757 = vmatprep.mubr.bf16.mxu0 0
        %5758 = vmatmul.mubr.bf16.gmra.mxu0 %v5720
        %v5759 = vpop.f32.mrf.mxu0
        %v5760 = vadd.f32 0.0, %v5759
        %v5761 = vpop.f32.mrf.mxu0
        %v5762 = vpop.f32.mrf.mxu0
        %v5763 = vpop.f32.mrf.mxu0
        %5764 = vdwg.mxu0
        %v5766 = vsel %vm1335, %v5524, 0
        %v5769 = vsel %vm1335, %v5532, 0
        %5771 = vmatprep.subr.bf16.mxu0 0
        %5772 = vmatpush1.bf16.xpose.msra.mxu0 0
        %5773 = vmatprep.subr.bf16.mxu0 0
        %5774 = vmatpush1.bf16.xpose.msra.mxu0 0
        %5775 = vmatprep.subr.bf16.mxu0 0
        %5776 = vmatpush1.bf16.xpose.msra.mxu0 0
        %5777 = vmatprep.subr.bf16.mxu0 0
        %5778 = vmatpush1.bf16.xpose.msra.mxu0 0
        %5779 = vmatprep.subr.bf16.mxu0 0
        %5780 = vmatpush1.bf16.xpose.msra.mxu0 0
        %5781 = vmatprep.subr.bf16.mxu0 0
        %5782 = vmatpush1.bf16.xpose.msra.mxu0 0
        %5783 = vmatprep.subr.bf16.mxu0 0
        %5784 = vmatpush1.bf16.xpose.msra.mxu0 0
        %5785 = vmatprep.subr.bf16.mxu0 0
        %5786 = vmatpush1.bf16.xpose.msra.mxu0 %v5769
        %5787 = vmatprep.subr.bf16.mxu0 0
        %5788 = vmatpush2.bf16.xpose.msra.mxu0 0
        %5789 = vmatprep.subr.bf16.mxu0 0
        %5790 = vmatpush2.bf16.xpose.msra.mxu0 0
        %5791 = vmatprep.subr.bf16.mxu0 0
        %5792 = vmatpush2.bf16.xpose.msra.mxu0 0
        %5793 = vmatprep.subr.bf16.mxu0 0
        %5794 = vmatpush2.bf16.xpose.msra.mxu0 0
        %5795 = vmatprep.subr.bf16.mxu0 0
        %5796 = vmatpush2.bf16.xpose.msra.mxu0 0
        %5797 = vmatprep.subr.bf16.mxu0 0
        %5798 = vmatpush2.bf16.xpose.msra.mxu0 0
        %5799 = vmatprep.subr.bf16.mxu0 0
        %5800 = vmatpush2.bf16.xpose.msra.mxu0 0
        %5801 = vmatprep.subr.bf16.mxu0 0
        %5802 = vmatpush2.bf16.xpose.msra.mxu0 0
        %5803 = vmatprep.mubr.bf16.mxu0 0
        %5804 = vmatmul.mubr.bf16.gmra.mxu0 %v5766
        %v5805 = vpop.f32.mrf.mxu0
        %v5806 = vadd.f32 0.0, %v5805
        %v5807 = vpop.f32.mrf.mxu0
        %v5808 = vpop.f32.mrf.mxu0
        %v5809 = vpop.f32.mrf.mxu0
        %5810 = vdwg.mxu0
        %v5812 = vsel %vm1335, %v5525, 0
        %v5815 = vsel %vm1335, %v5533, 0
        %5817 = vmatprep.subr.bf16.mxu0 0
        %5818 = vmatpush1.bf16.xpose.msra.mxu0 0
        %5819 = vmatprep.subr.bf16.mxu0 0
        %5820 = vmatpush1.bf16.xpose.msra.mxu0 0
        %5821 = vmatprep.subr.bf16.mxu0 0
        %5822 = vmatpush1.bf16.xpose.msra.mxu0 0
        %5823 = vmatprep.subr.bf16.mxu0 0
        %5824 = vmatpush1.bf16.xpose.msra.mxu0 0
        %5825 = vmatprep.subr.bf16.mxu0 0
        %5826 = vmatpush1.bf16.xpose.msra.mxu0 0
        %5827 = vmatprep.subr.bf16.mxu0 0
        %5828 = vmatpush1.bf16.xpose.msra.mxu0 0
        %5829 = vmatprep.subr.bf16.mxu0 0
        %5830 = vmatpush1.bf16.xpose.msra.mxu0 0
        %5831 = vmatprep.subr.bf16.mxu0 0
        %5832 = vmatpush1.bf16.xpose.msra.mxu0 %v5815
        %5833 = vmatprep.subr.bf16.mxu0 0
        %5834 = vmatpush2.bf16.xpose.msra.mxu0 0
        %5835 = vmatprep.subr.bf16.mxu0 0
        %5836 = vmatpush2.bf16.xpose.msra.mxu0 0
        %5837 = vmatprep.subr.bf16.mxu0 0
        %5838 = vmatpush2.bf16.xpose.msra.mxu0 0
        %5839 = vmatprep.subr.bf16.mxu0 0
        %5840 = vmatpush2.bf16.xpose.msra.mxu0 0
        %5841 = vmatprep.subr.bf16.mxu0 0
        %5842 = vmatpush2.bf16.xpose.msra.mxu0 0
        %5843 = vmatprep.subr.bf16.mxu0 0
        %5844 = vmatpush2.bf16.xpose.msra.mxu0 0
        %5845 = vmatprep.subr.bf16.mxu0 0
        %5846 = vmatpush2.bf16.xpose.msra.mxu0 0
        %5847 = vmatprep.subr.bf16.mxu0 0
        %5848 = vmatpush2.bf16.xpose.msra.mxu0 0
        %5849 = vmatprep.mubr.bf16.mxu0 0
        %5850 = vmatmul.mubr.bf16.gmra.mxu0 %v5812
        %v5851 = vpop.f32.mrf.mxu0
        %v5852 = vadd.f32 0.0, %v5851
        %v5853 = vpop.f32.mrf.mxu0
        %v5854 = vpop.f32.mrf.mxu0
        %v5855 = vpop.f32.mrf.mxu0
        %5856 = vdwg.mxu0
        %v5858 = vsel %vm1335, %v5526, 0
        %v5861 = vsel %vm1335, %v5534, 0
        %5863 = vmatprep.subr.bf16.mxu0 0
        %5864 = vmatpush1.bf16.xpose.msra.mxu0 0
        %5865 = vmatprep.subr.bf16.mxu0 0
        %5866 = vmatpush1.bf16.xpose.msra.mxu0 0
        %5867 = vmatprep.subr.bf16.mxu0 0
        %5868 = vmatpush1.bf16.xpose.msra.mxu0 0
        %5869 = vmatprep.subr.bf16.mxu0 0
        %5870 = vmatpush1.bf16.xpose.msra.mxu0 0
        %5871 = vmatprep.subr.bf16.mxu0 0
        %5872 = vmatpush1.bf16.xpose.msra.mxu0 0
        %5873 = vmatprep.subr.bf16.mxu0 0
        %5874 = vmatpush1.bf16.xpose.msra.mxu0 0
        %5875 = vmatprep.subr.bf16.mxu0 0
        %5876 = vmatpush1.bf16.xpose.msra.mxu0 0
        %5877 = vmatprep.subr.bf16.mxu0 0
        %5878 = vmatpush1.bf16.xpose.msra.mxu0 %v5861
        %5879 = vmatprep.subr.bf16.mxu0 0
        %5880 = vmatpush2.bf16.xpose.msra.mxu0 0
        %5881 = vmatprep.subr.bf16.mxu0 0
        %5882 = vmatpush2.bf16.xpose.msra.mxu0 0
        %5883 = vmatprep.subr.bf16.mxu0 0
        %5884 = vmatpush2.bf16.xpose.msra.mxu0 0
        %5885 = vmatprep.subr.bf16.mxu0 0
        %5886 = vmatpush2.bf16.xpose.msra.mxu0 0
        %5887 = vmatprep.subr.bf16.mxu0 0
        %5888 = vmatpush2.bf16.xpose.msra.mxu0 0
        %5889 = vmatprep.subr.bf16.mxu0 0
        %5890 = vmatpush2.bf16.xpose.msra.mxu0 0
        %5891 = vmatprep.subr.bf16.mxu0 0
        %5892 = vmatpush2.bf16.xpose.msra.mxu0 0
        %5893 = vmatprep.subr.bf16.mxu0 0
        %5894 = vmatpush2.bf16.xpose.msra.mxu0 0
        %5895 = vmatprep.mubr.bf16.mxu0 0
        %5896 = vmatmul.mubr.bf16.gmra.mxu0 %v5858
        %v5897 = vpop.f32.mrf.mxu0
        %v5898 = vadd.f32 0.0, %v5897
        %v5899 = vpop.f32.mrf.mxu0
        %v5900 = vpop.f32.mrf.mxu0
        %v5901 = vpop.f32.mrf.mxu0
        %5902 = vdwg.mxu0
        %v5903 = vsel %vm4958, %v5576, -inf
        %5904 = vmax.xlane.f32.xlu0 %v5903
        %v5905 = vpop.xlane.xlu0 %5904
        %v5906 = vsel %vm4958, %v5622, -inf
        %5907 = vmax.xlane.f32.xlu0 %v5906
        %v5908 = vpop.xlane.xlu0 %5907
        %v5909 = vsel %vm4958, %v5668, -inf
        %5910 = vmax.xlane.f32.xlu0 %v5909
        %v5911 = vpop.xlane.xlu0 %5910
        %v5912 = vsel %vm4958, %v5714, -inf
        %5913 = vmax.xlane.f32.xlu0 %v5912
        %v5914 = vpop.xlane.xlu0 %5913
        %v5915 = vsel %vm4958, %v5760, -inf
        %5916 = vmax.xlane.f32.xlu0 %v5915
        %v5917 = vpop.xlane.xlu0 %5916
        %v5918 = vsel %vm4958, %v5806, -inf
        %5919 = vmax.xlane.f32.xlu0 %v5918
        %v5920 = vpop.xlane.xlu0 %5919
        %v5921 = vsel %vm4958, %v5852, -inf
        %5922 = vmax.xlane.f32.xlu0 %v5921
        %v5923 = vpop.xlane.xlu0 %5922
        %v5924 = vsel %vm4958, %v5898, -inf
        %5925 = vmax.xlane.f32.xlu0 %v5924
        %v5926 = vpop.xlane.xlu0 %5925
        %v5927 = vsub.f32 %v5576, %v5905
        %v5928 = vsub.f32 %v5622, %v5908
        %v5929 = vsub.f32 %v5668, %v5911
        %v5930 = vsub.f32 %v5714, %v5914
        %v5931 = vsub.f32 %v5760, %v5917
        %v5932 = vsub.f32 %v5806, %v5920
        %v5933 = vsub.f32 %v5852, %v5923
        %v5934 = vsub.f32 %v5898, %v5926
        %v5935 = vmul.f32 %v5927, 1.442695
        %v5936 = vpow.pop %v5935
        %v5937 = vmul.f32 %v5928, 1.442695
        %v5938 = vpow.pop %v5937
        %v5939 = vmul.f32 %v5929, 1.442695
        %v5940 = vpow.pop %v5939
        %v5941 = vmul.f32 %v5930, 1.442695
        %v5942 = vpow.pop %v5941
        %v5943 = vmul.f32 %v5931, 1.442695
        %v5944 = vpow.pop %v5943
        %v5945 = vmul.f32 %v5932, 1.442695
        %v5946 = vpow.pop %v5945
        %v5947 = vmul.f32 %v5933, 1.442695
        %v5948 = vpow.pop %v5947
        %v5949 = vmul.f32 %v5934, 1.442695
        %v5950 = vpow.pop %v5949
        %v5951 = vsel %vm4958, %v5936, 0.0
        %5952 = vadd.xlane.f32.xlu0 %v5951
        %v5953 = vpop.xlane.xlu0 %5952
        %v5954 = vsel %vm4958, %v5938, 0.0
        %5955 = vadd.xlane.f32.xlu0 %v5954
        %v5956 = vpop.xlane.xlu0 %5955
        %v5957 = vsel %vm4958, %v5940, 0.0
        %5958 = vadd.xlane.f32.xlu0 %v5957
        %v5959 = vpop.xlane.xlu0 %5958
        %v5960 = vsel %vm4958, %v5942, 0.0
        %5961 = vadd.xlane.f32.xlu0 %v5960
        %v5962 = vpop.xlane.xlu0 %5961
        %v5963 = vsel %vm4958, %v5944, 0.0
        %5964 = vadd.xlane.f32.xlu0 %v5963
        %v5965 = vpop.xlane.xlu0 %5964
        %v5966 = vsel %vm4958, %v5946, 0.0
        %5967 = vadd.xlane.f32.xlu0 %v5966
        %v5968 = vpop.xlane.xlu0 %5967
        %v5969 = vsel %vm4958, %v5948, 0.0
        %5970 = vadd.xlane.f32.xlu0 %v5969
        %v5971 = vpop.xlane.xlu0 %5970
        %v5972 = vsel %vm4958, %v5950, 0.0
        %5973 = vadd.xlane.f32.xlu0 %v5972
        %v5974 = vpop.xlane.xlu0 %5973
        %v5975 = vrcp.pop %v5953
        %v5976 = vrcp.pop %v5956
        %v5977 = vrcp.pop %v5959
        %v5978 = vrcp.pop %v5962
        %v5979 = vrcp.pop %v5965
        %v5980 = vrcp.pop %v5968
        %v5981 = vrcp.pop %v5971
        %v5982 = vrcp.pop %v5974
        %v5983 = vmul.f32 %v5936, %v5975
        %v5984 = vmul.f32 %v5938, %v5976
        %v5985 = vmul.f32 %v5940, %v5977
        %v5986 = vmul.f32 %v5942, %v5978
        %v5987 = vmul.f32 %v5944, %v5979
        %v5988 = vmul.f32 %v5946, %v5980
        %v5989 = vmul.f32 %v5948, %v5981
        %v5990 = vmul.f32 %v5950, %v5982
        %v5991 = vpack.c.bf16 %v5983, %v5983
        %v5992 = vpack.c.bf16 %v5984, %v5984
        %v5993 = vpack.c.bf16 %v5985, %v5985
        %v5994 = vpack.c.bf16 %v5986, %v5986
        %v5995 = vpack.c.bf16 %v5987, %v5987
        %v5996 = vpack.c.bf16 %v5988, %v5988
        %v5997 = vpack.c.bf16 %v5989, %v5989
        %v5998 = vpack.c.bf16 %v5990, %v5990
        %6000 = vrot.lane.b32.xlu0 %v5527, 96
        %v6001 = vpop.permute.xlu0 %6000
        %v6004 = vsel %vm4958, %v5991, 0
        %6006 = vmatprep.subr.bf16.mxu0 0
        %6007 = vmatpush1.bf16.msra.mxu0 0
        %6008 = vmatprep.subr.bf16.mxu0 0
        %6009 = vmatpush1.bf16.msra.mxu0 0
        %6010 = vmatprep.subr.bf16.mxu0 0
        %6011 = vmatpush1.bf16.msra.mxu0 0
        %6012 = vmatprep.subr.bf16.mxu0 0
        %6013 = vmatpush1.bf16.msra.mxu0 0
        %6014 = vmatprep.subr.bf16.mxu0 0
        %6015 = vmatpush1.bf16.msra.mxu0 0
        %6016 = vmatprep.subr.bf16.mxu0 0
        %6017 = vmatpush1.bf16.msra.mxu0 0
        %6018 = vmatprep.subr.bf16.mxu0 0
        %6019 = vmatpush1.bf16.msra.mxu0 0
        %6020 = vmatprep.subr.bf16.mxu0 0
        %6021 = vmatpush1.bf16.msra.mxu0 %v6001
        %6022 = vmatprep.subr.bf16.mxu0 0
        %6023 = vmatpush2.bf16.msra.mxu0 0
        %6024 = vmatprep.subr.bf16.mxu0 0
        %6025 = vmatpush2.bf16.msra.mxu0 0
        %6026 = vmatprep.subr.bf16.mxu0 0
        %6027 = vmatpush2.bf16.msra.mxu0 0
        %6028 = vmatprep.subr.bf16.mxu0 0
        %6029 = vmatpush2.bf16.msra.mxu0 0
        %6030 = vmatprep.subr.bf16.mxu0 0
        %6031 = vmatpush2.bf16.msra.mxu0 0
        %6032 = vmatprep.subr.bf16.mxu0 0
        %6033 = vmatpush2.bf16.msra.mxu0 0
        %6034 = vmatprep.subr.bf16.mxu0 0
        %6035 = vmatpush2.bf16.msra.mxu0 0
        %6036 = vmatprep.subr.bf16.mxu0 0
        %6037 = vmatpush2.bf16.msra.mxu0 0
        %6038 = vmatprep.mubr.bf16.mxu0 0
        %6039 = vmatmul.mubr.bf16.gmra.mxu0 %v6004
        %v6040 = vpop.f32.mrf.mxu0
        %v6041 = vadd.f32 0.0, %v6040
        %v6042 = vpop.f32.mrf.mxu0
        %v6043 = vpop.f32.mrf.mxu0
        %v6044 = vpop.f32.mrf.mxu0
        %6045 = vdwg.mxu0
        %6047 = vrot.lane.b32.xlu0 %v5528, 96
        %v6048 = vpop.permute.xlu0 %6047
        %v6051 = vsel %vm4958, %v5992, 0
        %6053 = vmatprep.subr.bf16.mxu0 0
        %6054 = vmatpush1.bf16.msra.mxu0 0
        %6055 = vmatprep.subr.bf16.mxu0 0
        %6056 = vmatpush1.bf16.msra.mxu0 0
        %6057 = vmatprep.subr.bf16.mxu0 0
        %6058 = vmatpush1.bf16.msra.mxu0 0
        %6059 = vmatprep.subr.bf16.mxu0 0
        %6060 = vmatpush1.bf16.msra.mxu0 0
        %6061 = vmatprep.subr.bf16.mxu0 0
        %6062 = vmatpush1.bf16.msra.mxu0 0
        %6063 = vmatprep.subr.bf16.mxu0 0
        %6064 = vmatpush1.bf16.msra.mxu0 0
        %6065 = vmatprep.subr.bf16.mxu0 0
        %6066 = vmatpush1.bf16.msra.mxu0 0
        %6067 = vmatprep.subr.bf16.mxu0 0
        %6068 = vmatpush1.bf16.msra.mxu0 %v6048
        %6069 = vmatprep.subr.bf16.mxu0 0
        %6070 = vmatpush2.bf16.msra.mxu0 0
        %6071 = vmatprep.subr.bf16.mxu0 0
        %6072 = vmatpush2.bf16.msra.mxu0 0
        %6073 = vmatprep.subr.bf16.mxu0 0
        %6074 = vmatpush2.bf16.msra.mxu0 0
        %6075 = vmatprep.subr.bf16.mxu0 0
        %6076 = vmatpush2.bf16.msra.mxu0 0
        %6077 = vmatprep.subr.bf16.mxu0 0
        %6078 = vmatpush2.bf16.msra.mxu0 0
        %6079 = vmatprep.subr.bf16.mxu0 0
        %6080 = vmatpush2.bf16.msra.mxu0 0
        %6081 = vmatprep.subr.bf16.mxu0 0
        %6082 = vmatpush2.bf16.msra.mxu0 0
        %6083 = vmatprep.subr.bf16.mxu0 0
        %6084 = vmatpush2.bf16.msra.mxu0 0
        %6085 = vmatprep.mubr.bf16.mxu0 0
        %6086 = vmatmul.mubr.bf16.gmra.mxu0 %v6051
        %v6087 = vpop.f32.mrf.mxu0
        %v6088 = vadd.f32 0.0, %v6087
        %v6089 = vpop.f32.mrf.mxu0
        %v6090 = vpop.f32.mrf.mxu0
        %v6091 = vpop.f32.mrf.mxu0
        %6092 = vdwg.mxu0
        %6094 = vrot.lane.b32.xlu0 %v5529, 96
        %v6095 = vpop.permute.xlu0 %6094
        %v6098 = vsel %vm4958, %v5993, 0
        %6100 = vmatprep.subr.bf16.mxu0 0
        %6101 = vmatpush1.bf16.msra.mxu0 0
        %6102 = vmatprep.subr.bf16.mxu0 0
        %6103 = vmatpush1.bf16.msra.mxu0 0
        %6104 = vmatprep.subr.bf16.mxu0 0
        %6105 = vmatpush1.bf16.msra.mxu0 0
        %6106 = vmatprep.subr.bf16.mxu0 0
        %6107 = vmatpush1.bf16.msra.mxu0 0
        %6108 = vmatprep.subr.bf16.mxu0 0
        %6109 = vmatpush1.bf16.msra.mxu0 0
        %6110 = vmatprep.subr.bf16.mxu0 0
        %6111 = vmatpush1.bf16.msra.mxu0 0
        %6112 = vmatprep.subr.bf16.mxu0 0
        %6113 = vmatpush1.bf16.msra.mxu0 0
        %6114 = vmatprep.subr.bf16.mxu0 0
        %6115 = vmatpush1.bf16.msra.mxu0 %v6095
        %6116 = vmatprep.subr.bf16.mxu0 0
        %6117 = vmatpush2.bf16.msra.mxu0 0
        %6118 = vmatprep.subr.bf16.mxu0 0
        %6119 = vmatpush2.bf16.msra.mxu0 0
        %6120 = vmatprep.subr.bf16.mxu0 0
        %6121 = vmatpush2.bf16.msra.mxu0 0
        %6122 = vmatprep.subr.bf16.mxu0 0
        %6123 = vmatpush2.bf16.msra.mxu0 0
        %6124 = vmatprep.subr.bf16.mxu0 0
        %6125 = vmatpush2.bf16.msra.mxu0 0
        %6126 = vmatprep.subr.bf16.mxu0 0
        %6127 = vmatpush2.bf16.msra.mxu0 0
        %6128 = vmatprep.subr.bf16.mxu0 0
        %6129 = vmatpush2.bf16.msra.mxu0 0
        %6130 = vmatprep.subr.bf16.mxu0 0
        %6131 = vmatpush2.bf16.msra.mxu0 0
        %6132 = vmatprep.mubr.bf16.mxu0 0
        %6133 = vmatmul.mubr.bf16.gmra.mxu0 %v6098
        %v6134 = vpop.f32.mrf.mxu0
        %v6135 = vadd.f32 0.0, %v6134
        %v6136 = vpop.f32.mrf.mxu0
        %v6137 = vpop.f32.mrf.mxu0
        %v6138 = vpop.f32.mrf.mxu0
        %6139 = vdwg.mxu0
        %6141 = vrot.lane.b32.xlu0 %v5530, 96
        %v6142 = vpop.permute.xlu0 %6141
        %v6145 = vsel %vm4958, %v5994, 0
        %6147 = vmatprep.subr.bf16.mxu0 0
        %6148 = vmatpush1.bf16.msra.mxu0 0
        %6149 = vmatprep.subr.bf16.mxu0 0
        %6150 = vmatpush1.bf16.msra.mxu0 0
        %6151 = vmatprep.subr.bf16.mxu0 0
        %6152 = vmatpush1.bf16.msra.mxu0 0
        %6153 = vmatprep.subr.bf16.mxu0 0
        %6154 = vmatpush1.bf16.msra.mxu0 0
        %6155 = vmatprep.subr.bf16.mxu0 0
        %6156 = vmatpush1.bf16.msra.mxu0 0
        %6157 = vmatprep.subr.bf16.mxu0 0
        %6158 = vmatpush1.bf16.msra.mxu0 0
        %6159 = vmatprep.subr.bf16.mxu0 0
        %6160 = vmatpush1.bf16.msra.mxu0 0
        %6161 = vmatprep.subr.bf16.mxu0 0
        %6162 = vmatpush1.bf16.msra.mxu0 %v6142
        %6163 = vmatprep.subr.bf16.mxu0 0
        %6164 = vmatpush2.bf16.msra.mxu0 0
        %6165 = vmatprep.subr.bf16.mxu0 0
        %6166 = vmatpush2.bf16.msra.mxu0 0
        %6167 = vmatprep.subr.bf16.mxu0 0
        %6168 = vmatpush2.bf16.msra.mxu0 0
        %6169 = vmatprep.subr.bf16.mxu0 0
        %6170 = vmatpush2.bf16.msra.mxu0 0
        %6171 = vmatprep.subr.bf16.mxu0 0
        %6172 = vmatpush2.bf16.msra.mxu0 0
        %6173 = vmatprep.subr.bf16.mxu0 0
        %6174 = vmatpush2.bf16.msra.mxu0 0
        %6175 = vmatprep.subr.bf16.mxu0 0
        %6176 = vmatpush2.bf16.msra.mxu0 0
        %6177 = vmatprep.subr.bf16.mxu0 0
        %6178 = vmatpush2.bf16.msra.mxu0 0
        %6179 = vmatprep.mubr.bf16.mxu0 0
        %6180 = vmatmul.mubr.bf16.gmra.mxu0 %v6145
        %v6181 = vpop.f32.mrf.mxu0
        %v6182 = vadd.f32 0.0, %v6181
        %v6183 = vpop.f32.mrf.mxu0
        %v6184 = vpop.f32.mrf.mxu0
        %v6185 = vpop.f32.mrf.mxu0
        %6186 = vdwg.mxu0
        %6188 = vrot.lane.b32.xlu0 %v5531, 96
        %v6189 = vpop.permute.xlu0 %6188
        %v6192 = vsel %vm4958, %v5995, 0
        %6194 = vmatprep.subr.bf16.mxu0 0
        %6195 = vmatpush1.bf16.msra.mxu0 0
        %6196 = vmatprep.subr.bf16.mxu0 0
        %6197 = vmatpush1.bf16.msra.mxu0 0
        %6198 = vmatprep.subr.bf16.mxu0 0
        %6199 = vmatpush1.bf16.msra.mxu0 0
        %6200 = vmatprep.subr.bf16.mxu0 0
        %6201 = vmatpush1.bf16.msra.mxu0 0
        %6202 = vmatprep.subr.bf16.mxu0 0
        %6203 = vmatpush1.bf16.msra.mxu0 0
        %6204 = vmatprep.subr.bf16.mxu0 0
        %6205 = vmatpush1.bf16.msra.mxu0 0
        %6206 = vmatprep.subr.bf16.mxu0 0
        %6207 = vmatpush1.bf16.msra.mxu0 0
        %6208 = vmatprep.subr.bf16.mxu0 0
        %6209 = vmatpush1.bf16.msra.mxu0 %v6189
        %6210 = vmatprep.subr.bf16.mxu0 0
        %6211 = vmatpush2.bf16.msra.mxu0 0
        %6212 = vmatprep.subr.bf16.mxu0 0
        %6213 = vmatpush2.bf16.msra.mxu0 0
        %6214 = vmatprep.subr.bf16.mxu0 0
        %6215 = vmatpush2.bf16.msra.mxu0 0
        %6216 = vmatprep.subr.bf16.mxu0 0
        %6217 = vmatpush2.bf16.msra.mxu0 0
        %6218 = vmatprep.subr.bf16.mxu0 0
        %6219 = vmatpush2.bf16.msra.mxu0 0
        %6220 = vmatprep.subr.bf16.mxu0 0
        %6221 = vmatpush2.bf16.msra.mxu0 0
        %6222 = vmatprep.subr.bf16.mxu0 0
        %6223 = vmatpush2.bf16.msra.mxu0 0
        %6224 = vmatprep.subr.bf16.mxu0 0
        %6225 = vmatpush2.bf16.msra.mxu0 0
        %6226 = vmatprep.mubr.bf16.mxu0 0
        %6227 = vmatmul.mubr.bf16.gmra.mxu0 %v6192
        %v6228 = vpop.f32.mrf.mxu0
        %v6229 = vadd.f32 0.0, %v6228
        %v6230 = vpop.f32.mrf.mxu0
        %v6231 = vpop.f32.mrf.mxu0
        %v6232 = vpop.f32.mrf.mxu0
        %6233 = vdwg.mxu0
        %6235 = vrot.lane.b32.xlu0 %v5532, 96
        %v6236 = vpop.permute.xlu0 %6235
        %v6239 = vsel %vm4958, %v5996, 0
        %6241 = vmatprep.subr.bf16.mxu0 0
        %6242 = vmatpush1.bf16.msra.mxu0 0
        %6243 = vmatprep.subr.bf16.mxu0 0
        %6244 = vmatpush1.bf16.msra.mxu0 0
        %6245 = vmatprep.subr.bf16.mxu0 0
        %6246 = vmatpush1.bf16.msra.mxu0 0
        %6247 = vmatprep.subr.bf16.mxu0 0
        %6248 = vmatpush1.bf16.msra.mxu0 0
        %6249 = vmatprep.subr.bf16.mxu0 0
        %6250 = vmatpush1.bf16.msra.mxu0 0
        %6251 = vmatprep.subr.bf16.mxu0 0
        %6252 = vmatpush1.bf16.msra.mxu0 0
        %6253 = vmatprep.subr.bf16.mxu0 0
        %6254 = vmatpush1.bf16.msra.mxu0 0
        %6255 = vmatprep.subr.bf16.mxu0 0
        %6256 = vmatpush1.bf16.msra.mxu0 %v6236
        %6257 = vmatprep.subr.bf16.mxu0 0
        %6258 = vmatpush2.bf16.msra.mxu0 0
        %6259 = vmatprep.subr.bf16.mxu0 0
        %6260 = vmatpush2.bf16.msra.mxu0 0
        %6261 = vmatprep.subr.bf16.mxu0 0
        %6262 = vmatpush2.bf16.msra.mxu0 0
        %6263 = vmatprep.subr.bf16.mxu0 0
        %6264 = vmatpush2.bf16.msra.mxu0 0
        %6265 = vmatprep.subr.bf16.mxu0 0
        %6266 = vmatpush2.bf16.msra.mxu0 0
        %6267 = vmatprep.subr.bf16.mxu0 0
        %6268 = vmatpush2.bf16.msra.mxu0 0
        %6269 = vmatprep.subr.bf16.mxu0 0
        %6270 = vmatpush2.bf16.msra.mxu0 0
        %6271 = vmatprep.subr.bf16.mxu0 0
        %6272 = vmatpush2.bf16.msra.mxu0 0
        %6273 = vmatprep.mubr.bf16.mxu0 0
        %6274 = vmatmul.mubr.bf16.gmra.mxu0 %v6239
        %v6275 = vpop.f32.mrf.mxu0
        %v6276 = vadd.f32 0.0, %v6275
        %v6277 = vpop.f32.mrf.mxu0
        %v6278 = vpop.f32.mrf.mxu0
        %v6279 = vpop.f32.mrf.mxu0
        %6280 = vdwg.mxu0
        %6282 = vrot.lane.b32.xlu0 %v5533, 96
        %v6283 = vpop.permute.xlu0 %6282
        %v6286 = vsel %vm4958, %v5997, 0
        %6288 = vmatprep.subr.bf16.mxu0 0
        %6289 = vmatpush1.bf16.msra.mxu0 0
        %6290 = vmatprep.subr.bf16.mxu0 0
        %6291 = vmatpush1.bf16.msra.mxu0 0
        %6292 = vmatprep.subr.bf16.mxu0 0
        %6293 = vmatpush1.bf16.msra.mxu0 0
        %6294 = vmatprep.subr.bf16.mxu0 0
        %6295 = vmatpush1.bf16.msra.mxu0 0
        %6296 = vmatprep.subr.bf16.mxu0 0
        %6297 = vmatpush1.bf16.msra.mxu0 0
        %6298 = vmatprep.subr.bf16.mxu0 0
        %6299 = vmatpush1.bf16.msra.mxu0 0
        %6300 = vmatprep.subr.bf16.mxu0 0
        %6301 = vmatpush1.bf16.msra.mxu0 0
        %6302 = vmatprep.subr.bf16.mxu0 0
        %6303 = vmatpush1.bf16.msra.mxu0 %v6283
        %6304 = vmatprep.subr.bf16.mxu0 0
        %6305 = vmatpush2.bf16.msra.mxu0 0
        %6306 = vmatprep.subr.bf16.mxu0 0
        %6307 = vmatpush2.bf16.msra.mxu0 0
        %6308 = vmatprep.subr.bf16.mxu0 0
        %6309 = vmatpush2.bf16.msra.mxu0 0
        %6310 = vmatprep.subr.bf16.mxu0 0
        %6311 = vmatpush2.bf16.msra.mxu0 0
        %6312 = vmatprep.subr.bf16.mxu0 0
        %6313 = vmatpush2.bf16.msra.mxu0 0
        %6314 = vmatprep.subr.bf16.mxu0 0
        %6315 = vmatpush2.bf16.msra.mxu0 0
        %6316 = vmatprep.subr.bf16.mxu0 0
        %6317 = vmatpush2.bf16.msra.mxu0 0
        %6318 = vmatprep.subr.bf16.mxu0 0
        %6319 = vmatpush2.bf16.msra.mxu0 0
        %6320 = vmatprep.mubr.bf16.mxu0 0
        %6321 = vmatmul.mubr.bf16.gmra.mxu0 %v6286
        %v6322 = vpop.f32.mrf.mxu0
        %v6323 = vadd.f32 0.0, %v6322
        %v6324 = vpop.f32.mrf.mxu0
        %v6325 = vpop.f32.mrf.mxu0
        %v6326 = vpop.f32.mrf.mxu0
        %6327 = vdwg.mxu0
        %6329 = vrot.lane.b32.xlu0 %v5534, 96
        %v6330 = vpop.permute.xlu0 %6329
        %v6333 = vsel %vm4958, %v5998, 0
        %6335 = vmatprep.subr.bf16.mxu0 0
        %6336 = vmatpush1.bf16.msra.mxu0 0
        %6337 = vmatprep.subr.bf16.mxu0 0
        %6338 = vmatpush1.bf16.msra.mxu0 0
        %6339 = vmatprep.subr.bf16.mxu0 0
        %6340 = vmatpush1.bf16.msra.mxu0 0
        %6341 = vmatprep.subr.bf16.mxu0 0
        %6342 = vmatpush1.bf16.msra.mxu0 0
        %6343 = vmatprep.subr.bf16.mxu0 0
        %6344 = vmatpush1.bf16.msra.mxu0 0
        %6345 = vmatprep.subr.bf16.mxu0 0
        %6346 = vmatpush1.bf16.msra.mxu0 0
        %6347 = vmatprep.subr.bf16.mxu0 0
        %6348 = vmatpush1.bf16.msra.mxu0 0
        %6349 = vmatprep.subr.bf16.mxu0 0
        %6350 = vmatpush1.bf16.msra.mxu0 %v6330
        %6351 = vmatprep.subr.bf16.mxu0 0
        %6352 = vmatpush2.bf16.msra.mxu0 0
        %6353 = vmatprep.subr.bf16.mxu0 0
        %6354 = vmatpush2.bf16.msra.mxu0 0
        %6355 = vmatprep.subr.bf16.mxu0 0
        %6356 = vmatpush2.bf16.msra.mxu0 0
        %6357 = vmatprep.subr.bf16.mxu0 0
        %6358 = vmatpush2.bf16.msra.mxu0 0
        %6359 = vmatprep.subr.bf16.mxu0 0
        %6360 = vmatpush2.bf16.msra.mxu0 0
        %6361 = vmatprep.subr.bf16.mxu0 0
        %6362 = vmatpush2.bf16.msra.mxu0 0
        %6363 = vmatprep.subr.bf16.mxu0 0
        %6364 = vmatpush2.bf16.msra.mxu0 0
        %6365 = vmatprep.subr.bf16.mxu0 0
        %6366 = vmatpush2.bf16.msra.mxu0 0
        %6367 = vmatprep.mubr.bf16.mxu0 0
        %6368 = vmatmul.mubr.bf16.gmra.mxu0 %v6333
        %v6369 = vpop.f32.mrf.mxu0
        %v6370 = vadd.f32 0.0, %v6369
        %v6371 = vpop.f32.mrf.mxu0
        %v6372 = vpop.f32.mrf.mxu0
        %v6373 = vpop.f32.mrf.mxu0
        %6374 = vdwg.mxu0
        %6376 = vrot.lane.b32.xlu0 %v5519, 120
        %v6377 = vpop.permute.xlu0 %6376
        %6378 = vrot.lane.b32.xlu0 %v5527, 120
        %v6379 = vpop.permute.xlu0 %6378
        %v6381 = vsel %vm1335, %v6377, 0
        %v6384 = vsel %vm1335, %v6379, 0
        %6386 = vmatprep.subr.bf16.mxu0 0
        %6387 = vmatpush1.bf16.xpose.msra.mxu0 0
        %6388 = vmatprep.subr.bf16.mxu0 0
        %6389 = vmatpush1.bf16.xpose.msra.mxu0 0
        %6390 = vmatprep.subr.bf16.mxu0 0
        %6391 = vmatpush1.bf16.xpose.msra.mxu0 0
        %6392 = vmatprep.subr.bf16.mxu0 0
        %6393 = vmatpush1.bf16.xpose.msra.mxu0 0
        %6394 = vmatprep.subr.bf16.mxu0 0
        %6395 = vmatpush1.bf16.xpose.msra.mxu0 0
        %6396 = vmatprep.subr.bf16.mxu0 0
        %6397 = vmatpush1.bf16.xpose.msra.mxu0 0
        %6398 = vmatprep.subr.bf16.mxu0 0
        %6399 = vmatpush1.bf16.xpose.msra.mxu0 0
        %6400 = vmatprep.subr.bf16.mxu0 0
        %6401 = vmatpush1.bf16.xpose.msra.mxu0 %v6384
        %6402 = vmatprep.subr.bf16.mxu0 0
        %6403 = vmatpush2.bf16.xpose.msra.mxu0 0
        %6404 = vmatprep.subr.bf16.mxu0 0
        %6405 = vmatpush2.bf16.xpose.msra.mxu0 0
        %6406 = vmatprep.subr.bf16.mxu0 0
        %6407 = vmatpush2.bf16.xpose.msra.mxu0 0
        %6408 = vmatprep.subr.bf16.mxu0 0
        %6409 = vmatpush2.bf16.xpose.msra.mxu0 0
        %6410 = vmatprep.subr.bf16.mxu0 0
        %6411 = vmatpush2.bf16.xpose.msra.mxu0 0
        %6412 = vmatprep.subr.bf16.mxu0 0
        %6413 = vmatpush2.bf16.xpose.msra.mxu0 0
        %6414 = vmatprep.subr.bf16.mxu0 0
        %6415 = vmatpush2.bf16.xpose.msra.mxu0 0
        %6416 = vmatprep.subr.bf16.mxu0 0
        %6417 = vmatpush2.bf16.xpose.msra.mxu0 0
        %6418 = vmatprep.mubr.bf16.mxu0 0
        %6419 = vmatmul.mubr.bf16.gmra.mxu0 %v6381
        %v6420 = vpop.f32.mrf.mxu0
        %v6421 = vadd.f32 0.0, %v6420
        %v6422 = vpop.f32.mrf.mxu0
        %v6423 = vpop.f32.mrf.mxu0
        %v6424 = vpop.f32.mrf.mxu0
        %6425 = vdwg.mxu0
        %6427 = vrot.lane.b32.xlu0 %v5520, 120
        %v6428 = vpop.permute.xlu0 %6427
        %6429 = vrot.lane.b32.xlu0 %v5528, 120
        %v6430 = vpop.permute.xlu0 %6429
        %v6432 = vsel %vm1335, %v6428, 0
        %v6435 = vsel %vm1335, %v6430, 0
        %6437 = vmatprep.subr.bf16.mxu0 0
        %6438 = vmatpush1.bf16.xpose.msra.mxu0 0
        %6439 = vmatprep.subr.bf16.mxu0 0
        %6440 = vmatpush1.bf16.xpose.msra.mxu0 0
        %6441 = vmatprep.subr.bf16.mxu0 0
        %6442 = vmatpush1.bf16.xpose.msra.mxu0 0
        %6443 = vmatprep.subr.bf16.mxu0 0
        %6444 = vmatpush1.bf16.xpose.msra.mxu0 0
        %6445 = vmatprep.subr.bf16.mxu0 0
        %6446 = vmatpush1.bf16.xpose.msra.mxu0 0
        %6447 = vmatprep.subr.bf16.mxu0 0
        %6448 = vmatpush1.bf16.xpose.msra.mxu0 0
        %6449 = vmatprep.subr.bf16.mxu0 0
        %6450 = vmatpush1.bf16.xpose.msra.mxu0 0
        %6451 = vmatprep.subr.bf16.mxu0 0
        %6452 = vmatpush1.bf16.xpose.msra.mxu0 %v6435
        %6453 = vmatprep.subr.bf16.mxu0 0
        %6454 = vmatpush2.bf16.xpose.msra.mxu0 0
        %6455 = vmatprep.subr.bf16.mxu0 0
        %6456 = vmatpush2.bf16.xpose.msra.mxu0 0
        %6457 = vmatprep.subr.bf16.mxu0 0
        %6458 = vmatpush2.bf16.xpose.msra.mxu0 0
        %6459 = vmatprep.subr.bf16.mxu0 0
        %6460 = vmatpush2.bf16.xpose.msra.mxu0 0
        %6461 = vmatprep.subr.bf16.mxu0 0
        %6462 = vmatpush2.bf16.xpose.msra.mxu0 0
        %6463 = vmatprep.subr.bf16.mxu0 0
        %6464 = vmatpush2.bf16.xpose.msra.mxu0 0
        %6465 = vmatprep.subr.bf16.mxu0 0
        %6466 = vmatpush2.bf16.xpose.msra.mxu0 0
        %6467 = vmatprep.subr.bf16.mxu0 0
        %6468 = vmatpush2.bf16.xpose.msra.mxu0 0
        %6469 = vmatprep.mubr.bf16.mxu0 0
        %6470 = vmatmul.mubr.bf16.gmra.mxu0 %v6432
        %v6471 = vpop.f32.mrf.mxu0
        %v6472 = vadd.f32 0.0, %v6471
        %v6473 = vpop.f32.mrf.mxu0
        %v6474 = vpop.f32.mrf.mxu0
        %v6475 = vpop.f32.mrf.mxu0
        %6476 = vdwg.mxu0
        %6478 = vrot.lane.b32.xlu0 %v5521, 120
        %v6479 = vpop.permute.xlu0 %6478
        %6480 = vrot.lane.b32.xlu0 %v5529, 120
        %v6481 = vpop.permute.xlu0 %6480
        %v6483 = vsel %vm1335, %v6479, 0
        %v6486 = vsel %vm1335, %v6481, 0
        %6488 = vmatprep.subr.bf16.mxu0 0
        %6489 = vmatpush1.bf16.xpose.msra.mxu0 0
        %6490 = vmatprep.subr.bf16.mxu0 0
        %6491 = vmatpush1.bf16.xpose.msra.mxu0 0
        %6492 = vmatprep.subr.bf16.mxu0 0
        %6493 = vmatpush1.bf16.xpose.msra.mxu0 0
        %6494 = vmatprep.subr.bf16.mxu0 0
        %6495 = vmatpush1.bf16.xpose.msra.mxu0 0
        %6496 = vmatprep.subr.bf16.mxu0 0
        %6497 = vmatpush1.bf16.xpose.msra.mxu0 0
        %6498 = vmatprep.subr.bf16.mxu0 0
        %6499 = vmatpush1.bf16.xpose.msra.mxu0 0
        %6500 = vmatprep.subr.bf16.mxu0 0
        %6501 = vmatpush1.bf16.xpose.msra.mxu0 0
        %6502 = vmatprep.subr.bf16.mxu0 0
        %6503 = vmatpush1.bf16.xpose.msra.mxu0 %v6486
        %6504 = vmatprep.subr.bf16.mxu0 0
        %6505 = vmatpush2.bf16.xpose.msra.mxu0 0
        %6506 = vmatprep.subr.bf16.mxu0 0
        %6507 = vmatpush2.bf16.xpose.msra.mxu0 0
        %6508 = vmatprep.subr.bf16.mxu0 0
        %6509 = vmatpush2.bf16.xpose.msra.mxu0 0
        %6510 = vmatprep.subr.bf16.mxu0 0
        %6511 = vmatpush2.bf16.xpose.msra.mxu0 0
        %6512 = vmatprep.subr.bf16.mxu0 0
        %6513 = vmatpush2.bf16.xpose.msra.mxu0 0
        %6514 = vmatprep.subr.bf16.mxu0 0
        %6515 = vmatpush2.bf16.xpose.msra.mxu0 0
        %6516 = vmatprep.subr.bf16.mxu0 0
        %6517 = vmatpush2.bf16.xpose.msra.mxu0 0
        %6518 = vmatprep.subr.bf16.mxu0 0
        %6519 = vmatpush2.bf16.xpose.msra.mxu0 0
        %6520 = vmatprep.mubr.bf16.mxu0 0
        %6521 = vmatmul.mubr.bf16.gmra.mxu0 %v6483
        %v6522 = vpop.f32.mrf.mxu0
        %v6523 = vadd.f32 0.0, %v6522
        %v6524 = vpop.f32.mrf.mxu0
        %v6525 = vpop.f32.mrf.mxu0
        %v6526 = vpop.f32.mrf.mxu0
        %6527 = vdwg.mxu0
        %6529 = vrot.lane.b32.xlu0 %v5522, 120
        %v6530 = vpop.permute.xlu0 %6529
        %6531 = vrot.lane.b32.xlu0 %v5530, 120
        %v6532 = vpop.permute.xlu0 %6531
        %v6534 = vsel %vm1335, %v6530, 0
        %v6537 = vsel %vm1335, %v6532, 0
        %6539 = vmatprep.subr.bf16.mxu0 0
        %6540 = vmatpush1.bf16.xpose.msra.mxu0 0
        %6541 = vmatprep.subr.bf16.mxu0 0
        %6542 = vmatpush1.bf16.xpose.msra.mxu0 0
        %6543 = vmatprep.subr.bf16.mxu0 0
        %6544 = vmatpush1.bf16.xpose.msra.mxu0 0
        %6545 = vmatprep.subr.bf16.mxu0 0
        %6546 = vmatpush1.bf16.xpose.msra.mxu0 0
        %6547 = vmatprep.subr.bf16.mxu0 0
        %6548 = vmatpush1.bf16.xpose.msra.mxu0 0
        %6549 = vmatprep.subr.bf16.mxu0 0
        %6550 = vmatpush1.bf16.xpose.msra.mxu0 0
        %6551 = vmatprep.subr.bf16.mxu0 0
        %6552 = vmatpush1.bf16.xpose.msra.mxu0 0
        %6553 = vmatprep.subr.bf16.mxu0 0
        %6554 = vmatpush1.bf16.xpose.msra.mxu0 %v6537
        %6555 = vmatprep.subr.bf16.mxu0 0
        %6556 = vmatpush2.bf16.xpose.msra.mxu0 0
        %6557 = vmatprep.subr.bf16.mxu0 0
        %6558 = vmatpush2.bf16.xpose.msra.mxu0 0
        %6559 = vmatprep.subr.bf16.mxu0 0
        %6560 = vmatpush2.bf16.xpose.msra.mxu0 0
        %6561 = vmatprep.subr.bf16.mxu0 0
        %6562 = vmatpush2.bf16.xpose.msra.mxu0 0
        %6563 = vmatprep.subr.bf16.mxu0 0
        %6564 = vmatpush2.bf16.xpose.msra.mxu0 0
        %6565 = vmatprep.subr.bf16.mxu0 0
        %6566 = vmatpush2.bf16.xpose.msra.mxu0 0
        %6567 = vmatprep.subr.bf16.mxu0 0
        %6568 = vmatpush2.bf16.xpose.msra.mxu0 0
        %6569 = vmatprep.subr.bf16.mxu0 0
        %6570 = vmatpush2.bf16.xpose.msra.mxu0 0
        %6571 = vmatprep.mubr.bf16.mxu0 0
        %6572 = vmatmul.mubr.bf16.gmra.mxu0 %v6534
        %v6573 = vpop.f32.mrf.mxu0
        %v6574 = vadd.f32 0.0, %v6573
        %v6575 = vpop.f32.mrf.mxu0
        %v6576 = vpop.f32.mrf.mxu0
        %v6577 = vpop.f32.mrf.mxu0
        %6578 = vdwg.mxu0
        %6580 = vrot.lane.b32.xlu0 %v5523, 120
        %v6581 = vpop.permute.xlu0 %6580
        %6582 = vrot.lane.b32.xlu0 %v5531, 120
        %v6583 = vpop.permute.xlu0 %6582
        %v6585 = vsel %vm1335, %v6581, 0
        %v6588 = vsel %vm1335, %v6583, 0
        %6590 = vmatprep.subr.bf16.mxu0 0
        %6591 = vmatpush1.bf16.xpose.msra.mxu0 0
        %6592 = vmatprep.subr.bf16.mxu0 0
        %6593 = vmatpush1.bf16.xpose.msra.mxu0 0
        %6594 = vmatprep.subr.bf16.mxu0 0
        %6595 = vmatpush1.bf16.xpose.msra.mxu0 0
        %6596 = vmatprep.subr.bf16.mxu0 0
        %6597 = vmatpush1.bf16.xpose.msra.mxu0 0
        %6598 = vmatprep.subr.bf16.mxu0 0
        %6599 = vmatpush1.bf16.xpose.msra.mxu0 0
        %6600 = vmatprep.subr.bf16.mxu0 0
        %6601 = vmatpush1.bf16.xpose.msra.mxu0 0
        %6602 = vmatprep.subr.bf16.mxu0 0
        %6603 = vmatpush1.bf16.xpose.msra.mxu0 0
        %6604 = vmatprep.subr.bf16.mxu0 0
        %6605 = vmatpush1.bf16.xpose.msra.mxu0 %v6588
        %6606 = vmatprep.subr.bf16.mxu0 0
        %6607 = vmatpush2.bf16.xpose.msra.mxu0 0
        %6608 = vmatprep.subr.bf16.mxu0 0
        %6609 = vmatpush2.bf16.xpose.msra.mxu0 0
        %6610 = vmatprep.subr.bf16.mxu0 0
        %6611 = vmatpush2.bf16.xpose.msra.mxu0 0
        %6612 = vmatprep.subr.bf16.mxu0 0
        %6613 = vmatpush2.bf16.xpose.msra.mxu0 0
        %6614 = vmatprep.subr.bf16.mxu0 0
        %6615 = vmatpush2.bf16.xpose.msra.mxu0 0
        %6616 = vmatprep.subr.bf16.mxu0 0
        %6617 = vmatpush2.bf16.xpose.msra.mxu0 0
        %6618 = vmatprep.subr.bf16.mxu0 0
        %6619 = vmatpush2.bf16.xpose.msra.mxu0 0
        %6620 = vmatprep.subr.bf16.mxu0 0
        %6621 = vmatpush2.bf16.xpose.msra.mxu0 0
        %6622 = vmatprep.mubr.bf16.mxu0 0
        %6623 = vmatmul.mubr.bf16.gmra.mxu0 %v6585
        %v6624 = vpop.f32.mrf.mxu0
        %v6625 = vadd.f32 0.0, %v6624
        %v6626 = vpop.f32.mrf.mxu0
        %v6627 = vpop.f32.mrf.mxu0
        %v6628 = vpop.f32.mrf.mxu0
        %6629 = vdwg.mxu0
        %6631 = vrot.lane.b32.xlu0 %v5524, 120
        %v6632 = vpop.permute.xlu0 %6631
        %6633 = vrot.lane.b32.xlu0 %v5532, 120
        %v6634 = vpop.permute.xlu0 %6633
        %v6636 = vsel %vm1335, %v6632, 0
        %v6639 = vsel %vm1335, %v6634, 0
        %6641 = vmatprep.subr.bf16.mxu0 0
        %6642 = vmatpush1.bf16.xpose.msra.mxu0 0
        %6643 = vmatprep.subr.bf16.mxu0 0
        %6644 = vmatpush1.bf16.xpose.msra.mxu0 0
        %6645 = vmatprep.subr.bf16.mxu0 0
        %6646 = vmatpush1.bf16.xpose.msra.mxu0 0
        %6647 = vmatprep.subr.bf16.mxu0 0
        %6648 = vmatpush1.bf16.xpose.msra.mxu0 0
        %6649 = vmatprep.subr.bf16.mxu0 0
        %6650 = vmatpush1.bf16.xpose.msra.mxu0 0
        %6651 = vmatprep.subr.bf16.mxu0 0
        %6652 = vmatpush1.bf16.xpose.msra.mxu0 0
        %6653 = vmatprep.subr.bf16.mxu0 0
        %6654 = vmatpush1.bf16.xpose.msra.mxu0 0
        %6655 = vmatprep.subr.bf16.mxu0 0
        %6656 = vmatpush1.bf16.xpose.msra.mxu0 %v6639
        %6657 = vmatprep.subr.bf16.mxu0 0
        %6658 = vmatpush2.bf16.xpose.msra.mxu0 0
        %6659 = vmatprep.subr.bf16.mxu0 0
        %6660 = vmatpush2.bf16.xpose.msra.mxu0 0
        %6661 = vmatprep.subr.bf16.mxu0 0
        %6662 = vmatpush2.bf16.xpose.msra.mxu0 0
        %6663 = vmatprep.subr.bf16.mxu0 0
        %6664 = vmatpush2.bf16.xpose.msra.mxu0 0
        %6665 = vmatprep.subr.bf16.mxu0 0
        %6666 = vmatpush2.bf16.xpose.msra.mxu0 0
        %6667 = vmatprep.subr.bf16.mxu0 0
        %6668 = vmatpush2.bf16.xpose.msra.mxu0 0
        %6669 = vmatprep.subr.bf16.mxu0 0
        %6670 = vmatpush2.bf16.xpose.msra.mxu0 0
        %6671 = vmatprep.subr.bf16.mxu0 0
        %6672 = vmatpush2.bf16.xpose.msra.mxu0 0
        %6673 = vmatprep.mubr.bf16.mxu0 0
        %6674 = vmatmul.mubr.bf16.gmra.mxu0 %v6636
        %v6675 = vpop.f32.mrf.mxu0
        %v6676 = vadd.f32 0.0, %v6675
        %v6677 = vpop.f32.mrf.mxu0
        %v6678 = vpop.f32.mrf.mxu0
        %v6679 = vpop.f32.mrf.mxu0
        %6680 = vdwg.mxu0
        %6682 = vrot.lane.b32.xlu0 %v5525, 120
        %v6683 = vpop.permute.xlu0 %6682
        %6684 = vrot.lane.b32.xlu0 %v5533, 120
        %v6685 = vpop.permute.xlu0 %6684
        %v6687 = vsel %vm1335, %v6683, 0
        %v6690 = vsel %vm1335, %v6685, 0
        %6692 = vmatprep.subr.bf16.mxu0 0
        %6693 = vmatpush1.bf16.xpose.msra.mxu0 0
        %6694 = vmatprep.subr.bf16.mxu0 0
        %6695 = vmatpush1.bf16.xpose.msra.mxu0 0
        %6696 = vmatprep.subr.bf16.mxu0 0
        %6697 = vmatpush1.bf16.xpose.msra.mxu0 0
        %6698 = vmatprep.subr.bf16.mxu0 0
        %6699 = vmatpush1.bf16.xpose.msra.mxu0 0
        %6700 = vmatprep.subr.bf16.mxu0 0
        %6701 = vmatpush1.bf16.xpose.msra.mxu0 0
        %6702 = vmatprep.subr.bf16.mxu0 0
        %6703 = vmatpush1.bf16.xpose.msra.mxu0 0
        %6704 = vmatprep.subr.bf16.mxu0 0
        %6705 = vmatpush1.bf16.xpose.msra.mxu0 0
        %6706 = vmatprep.subr.bf16.mxu0 0
        %6707 = vmatpush1.bf16.xpose.msra.mxu0 %v6690
        %6708 = vmatprep.subr.bf16.mxu0 0
        %6709 = vmatpush2.bf16.xpose.msra.mxu0 0
        %6710 = vmatprep.subr.bf16.mxu0 0
        %6711 = vmatpush2.bf16.xpose.msra.mxu0 0
        %6712 = vmatprep.subr.bf16.mxu0 0
        %6713 = vmatpush2.bf16.xpose.msra.mxu0 0
        %6714 = vmatprep.subr.bf16.mxu0 0
        %6715 = vmatpush2.bf16.xpose.msra.mxu0 0
        %6716 = vmatprep.subr.bf16.mxu0 0
        %6717 = vmatpush2.bf16.xpose.msra.mxu0 0
        %6718 = vmatprep.subr.bf16.mxu0 0
        %6719 = vmatpush2.bf16.xpose.msra.mxu0 0
        %6720 = vmatprep.subr.bf16.mxu0 0
        %6721 = vmatpush2.bf16.xpose.msra.mxu0 0
        %6722 = vmatprep.subr.bf16.mxu0 0
        %6723 = vmatpush2.bf16.xpose.msra.mxu0 0
        %6724 = vmatprep.mubr.bf16.mxu0 0
        %6725 = vmatmul.mubr.bf16.gmra.mxu0 %v6687
        %v6726 = vpop.f32.mrf.mxu0
        %v6727 = vadd.f32 0.0, %v6726
        %v6728 = vpop.f32.mrf.mxu0
        %v6729 = vpop.f32.mrf.mxu0
        %v6730 = vpop.f32.mrf.mxu0
        %6731 = vdwg.mxu0
        %6733 = vrot.lane.b32.xlu0 %v5526, 120
        %v6734 = vpop.permute.xlu0 %6733
        %6735 = vrot.lane.b32.xlu0 %v5534, 120
        %v6736 = vpop.permute.xlu0 %6735
        %v6738 = vsel %vm1335, %v6734, 0
        %v6741 = vsel %vm1335, %v6736, 0
        %6743 = vmatprep.subr.bf16.mxu0 0
        %6744 = vmatpush1.bf16.xpose.msra.mxu0 0
        %6745 = vmatprep.subr.bf16.mxu0 0
        %6746 = vmatpush1.bf16.xpose.msra.mxu0 0
        %6747 = vmatprep.subr.bf16.mxu0 0
        %6748 = vmatpush1.bf16.xpose.msra.mxu0 0
        %6749 = vmatprep.subr.bf16.mxu0 0
        %6750 = vmatpush1.bf16.xpose.msra.mxu0 0
        %6751 = vmatprep.subr.bf16.mxu0 0
        %6752 = vmatpush1.bf16.xpose.msra.mxu0 0
        %6753 = vmatprep.subr.bf16.mxu0 0
        %6754 = vmatpush1.bf16.xpose.msra.mxu0 0
        %6755 = vmatprep.subr.bf16.mxu0 0
        %6756 = vmatpush1.bf16.xpose.msra.mxu0 0
        %6757 = vmatprep.subr.bf16.mxu0 0
        %6758 = vmatpush1.bf16.xpose.msra.mxu0 %v6741
        %6759 = vmatprep.subr.bf16.mxu0 0
        %6760 = vmatpush2.bf16.xpose.msra.mxu0 0
        %6761 = vmatprep.subr.bf16.mxu0 0
        %6762 = vmatpush2.bf16.xpose.msra.mxu0 0
        %6763 = vmatprep.subr.bf16.mxu0 0
        %6764 = vmatpush2.bf16.xpose.msra.mxu0 0
        %6765 = vmatprep.subr.bf16.mxu0 0
        %6766 = vmatpush2.bf16.xpose.msra.mxu0 0
        %6767 = vmatprep.subr.bf16.mxu0 0
        %6768 = vmatpush2.bf16.xpose.msra.mxu0 0
        %6769 = vmatprep.subr.bf16.mxu0 0
        %6770 = vmatpush2.bf16.xpose.msra.mxu0 0
        %6771 = vmatprep.subr.bf16.mxu0 0
        %6772 = vmatpush2.bf16.xpose.msra.mxu0 0
        %6773 = vmatprep.subr.bf16.mxu0 0
        %6774 = vmatpush2.bf16.xpose.msra.mxu0 0
        %6775 = vmatprep.mubr.bf16.mxu0 0
        %6776 = vmatmul.mubr.bf16.gmra.mxu0 %v6738
        %v6777 = vpop.f32.mrf.mxu0
        %v6778 = vadd.f32 0.0, %v6777
        %v6779 = vpop.f32.mrf.mxu0
        %v6780 = vpop.f32.mrf.mxu0
        %v6781 = vpop.f32.mrf.mxu0
        %6782 = vdwg.mxu0
        %v6783 = vsel %vm4958, %v6421, -inf
        %6784 = vmax.xlane.f32.xlu0 %v6783
        %v6785 = vpop.xlane.xlu0 %6784
        %v6786 = vsel %vm4958, %v6472, -inf
        %6787 = vmax.xlane.f32.xlu0 %v6786
        %v6788 = vpop.xlane.xlu0 %6787
        %v6789 = vsel %vm4958, %v6523, -inf
        %6790 = vmax.xlane.f32.xlu0 %v6789
        %v6791 = vpop.xlane.xlu0 %6790
        %v6792 = vsel %vm4958, %v6574, -inf
        %6793 = vmax.xlane.f32.xlu0 %v6792
        %v6794 = vpop.xlane.xlu0 %6793
        %v6795 = vsel %vm4958, %v6625, -inf
        %6796 = vmax.xlane.f32.xlu0 %v6795
        %v6797 = vpop.xlane.xlu0 %6796
        %v6798 = vsel %vm4958, %v6676, -inf
        %6799 = vmax.xlane.f32.xlu0 %v6798
        %v6800 = vpop.xlane.xlu0 %6799
        %v6801 = vsel %vm4958, %v6727, -inf
        %6802 = vmax.xlane.f32.xlu0 %v6801
        %v6803 = vpop.xlane.xlu0 %6802
        %v6804 = vsel %vm4958, %v6778, -inf
        %6805 = vmax.xlane.f32.xlu0 %v6804
        %v6806 = vpop.xlane.xlu0 %6805
        %v6807 = vsub.f32 %v6421, %v6785
        %v6808 = vsub.f32 %v6472, %v6788
        %v6809 = vsub.f32 %v6523, %v6791
        %v6810 = vsub.f32 %v6574, %v6794
        %v6811 = vsub.f32 %v6625, %v6797
        %v6812 = vsub.f32 %v6676, %v6800
        %v6813 = vsub.f32 %v6727, %v6803
        %v6814 = vsub.f32 %v6778, %v6806
        %v6815 = vmul.f32 %v6807, 1.442695
        %v6816 = vpow.pop %v6815
        %v6817 = vmul.f32 %v6808, 1.442695
        %v6818 = vpow.pop %v6817
        %v6819 = vmul.f32 %v6809, 1.442695
        %v6820 = vpow.pop %v6819
        %v6821 = vmul.f32 %v6810, 1.442695
        %v6822 = vpow.pop %v6821
        %v6823 = vmul.f32 %v6811, 1.442695
        %v6824 = vpow.pop %v6823
        %v6825 = vmul.f32 %v6812, 1.442695
        %v6826 = vpow.pop %v6825
        %v6827 = vmul.f32 %v6813, 1.442695
        %v6828 = vpow.pop %v6827
        %v6829 = vmul.f32 %v6814, 1.442695
        %v6830 = vpow.pop %v6829
        %v6831 = vsel %vm4958, %v6816, 0.0
        %6832 = vadd.xlane.f32.xlu0 %v6831
        %v6833 = vpop.xlane.xlu0 %6832
        %v6834 = vsel %vm4958, %v6818, 0.0
        %6835 = vadd.xlane.f32.xlu0 %v6834
        %v6836 = vpop.xlane.xlu0 %6835
        %v6837 = vsel %vm4958, %v6820, 0.0
        %6838 = vadd.xlane.f32.xlu0 %v6837
        %v6839 = vpop.xlane.xlu0 %6838
        %v6840 = vsel %vm4958, %v6822, 0.0
        %6841 = vadd.xlane.f32.xlu0 %v6840
        %v6842 = vpop.xlane.xlu0 %6841
        %v6843 = vsel %vm4958, %v6824, 0.0
        %6844 = vadd.xlane.f32.xlu0 %v6843
        %v6845 = vpop.xlane.xlu0 %6844
        %v6846 = vsel %vm4958, %v6826, 0.0
        %6847 = vadd.xlane.f32.xlu0 %v6846
        %v6848 = vpop.xlane.xlu0 %6847
        %v6849 = vsel %vm4958, %v6828, 0.0
        %6850 = vadd.xlane.f32.xlu0 %v6849
        %v6851 = vpop.xlane.xlu0 %6850
        %v6852 = vsel %vm4958, %v6830, 0.0
        %6853 = vadd.xlane.f32.xlu0 %v6852
        %v6854 = vpop.xlane.xlu0 %6853
        %v6855 = vrcp.pop %v6833
        %v6856 = vrcp.pop %v6836
        %v6857 = vrcp.pop %v6839
        %v6858 = vrcp.pop %v6842
        %v6859 = vrcp.pop %v6845
        %v6860 = vrcp.pop %v6848
        %v6861 = vrcp.pop %v6851
        %v6862 = vrcp.pop %v6854
        %v6863 = vmul.f32 %v6816, %v6855
        %v6864 = vmul.f32 %v6818, %v6856
        %v6865 = vmul.f32 %v6820, %v6857
        %v6866 = vmul.f32 %v6822, %v6858
        %v6867 = vmul.f32 %v6824, %v6859
        %v6868 = vmul.f32 %v6826, %v6860
        %v6869 = vmul.f32 %v6828, %v6861
        %v6870 = vmul.f32 %v6830, %v6862
        %v6871 = vpack.c.bf16 %v6863, %v6863
        %v6872 = vpack.c.bf16 %v6864, %v6864
        %v6873 = vpack.c.bf16 %v6865, %v6865
        %v6874 = vpack.c.bf16 %v6866, %v6866
        %v6875 = vpack.c.bf16 %v6867, %v6867
        %v6876 = vpack.c.bf16 %v6868, %v6868
        %v6877 = vpack.c.bf16 %v6869, %v6869
        %v6878 = vpack.c.bf16 %v6870, %v6870
        %6879 = vrot.lane.b32.xlu0 %v5527, 88
        %v6880 = vpop.permute.xlu0 %6879
        %v6883 = vsel %vm4958, %v6871, 0
        %6885 = vmatprep.subr.bf16.mxu0 0
        %6886 = vmatpush1.bf16.msra.mxu0 0
        %6887 = vmatprep.subr.bf16.mxu0 0
        %6888 = vmatpush1.bf16.msra.mxu0 0
        %6889 = vmatprep.subr.bf16.mxu0 0
        %6890 = vmatpush1.bf16.msra.mxu0 0
        %6891 = vmatprep.subr.bf16.mxu0 0
        %6892 = vmatpush1.bf16.msra.mxu0 0
        %6893 = vmatprep.subr.bf16.mxu0 0
        %6894 = vmatpush1.bf16.msra.mxu0 0
        %6895 = vmatprep.subr.bf16.mxu0 0
        %6896 = vmatpush1.bf16.msra.mxu0 0
        %6897 = vmatprep.subr.bf16.mxu0 0
        %6898 = vmatpush1.bf16.msra.mxu0 0
        %6899 = vmatprep.subr.bf16.mxu0 0
        %6900 = vmatpush1.bf16.msra.mxu0 %v6880
        %6901 = vmatprep.subr.bf16.mxu0 0
        %6902 = vmatpush2.bf16.msra.mxu0 0
        %6903 = vmatprep.subr.bf16.mxu0 0
        %6904 = vmatpush2.bf16.msra.mxu0 0
        %6905 = vmatprep.subr.bf16.mxu0 0
        %6906 = vmatpush2.bf16.msra.mxu0 0
        %6907 = vmatprep.subr.bf16.mxu0 0
        %6908 = vmatpush2.bf16.msra.mxu0 0
        %6909 = vmatprep.subr.bf16.mxu0 0
        %6910 = vmatpush2.bf16.msra.mxu0 0
        %6911 = vmatprep.subr.bf16.mxu0 0
        %6912 = vmatpush2.bf16.msra.mxu0 0
        %6913 = vmatprep.subr.bf16.mxu0 0
        %6914 = vmatpush2.bf16.msra.mxu0 0
        %6915 = vmatprep.subr.bf16.mxu0 0
        %6916 = vmatpush2.bf16.msra.mxu0 0
        %6917 = vmatprep.mubr.bf16.mxu0 0
        %6918 = vmatmul.mubr.bf16.gmra.mxu0 %v6883
        %v6919 = vpop.f32.mrf.mxu0
        %v6920 = vadd.f32 0.0, %v6919
        %v6921 = vpop.f32.mrf.mxu0
        %v6922 = vpop.f32.mrf.mxu0
        %v6923 = vpop.f32.mrf.mxu0
        %6924 = vdwg.mxu0
        %6925 = vrot.lane.b32.xlu0 %v5528, 88
        %v6926 = vpop.permute.xlu0 %6925
        %v6929 = vsel %vm4958, %v6872, 0
        %6931 = vmatprep.subr.bf16.mxu0 0
        %6932 = vmatpush1.bf16.msra.mxu0 0
        %6933 = vmatprep.subr.bf16.mxu0 0
        %6934 = vmatpush1.bf16.msra.mxu0 0
        %6935 = vmatprep.subr.bf16.mxu0 0
        %6936 = vmatpush1.bf16.msra.mxu0 0
        %6937 = vmatprep.subr.bf16.mxu0 0
        %6938 = vmatpush1.bf16.msra.mxu0 0
        %6939 = vmatprep.subr.bf16.mxu0 0
        %6940 = vmatpush1.bf16.msra.mxu0 0
        %6941 = vmatprep.subr.bf16.mxu0 0
        %6942 = vmatpush1.bf16.msra.mxu0 0
        %6943 = vmatprep.subr.bf16.mxu0 0
        %6944 = vmatpush1.bf16.msra.mxu0 0
        %6945 = vmatprep.subr.bf16.mxu0 0
        %6946 = vmatpush1.bf16.msra.mxu0 %v6926
        %6947 = vmatprep.subr.bf16.mxu0 0
        %6948 = vmatpush2.bf16.msra.mxu0 0
        %6949 = vmatprep.subr.bf16.mxu0 0
        %6950 = vmatpush2.bf16.msra.mxu0 0
        %6951 = vmatprep.subr.bf16.mxu0 0
        %6952 = vmatpush2.bf16.msra.mxu0 0
        %6953 = vmatprep.subr.bf16.mxu0 0
        %6954 = vmatpush2.bf16.msra.mxu0 0
        %6955 = vmatprep.subr.bf16.mxu0 0
        %6956 = vmatpush2.bf16.msra.mxu0 0
        %6957 = vmatprep.subr.bf16.mxu0 0
        %6958 = vmatpush2.bf16.msra.mxu0 0
        %6959 = vmatprep.subr.bf16.mxu0 0
        %6960 = vmatpush2.bf16.msra.mxu0 0
        %6961 = vmatprep.subr.bf16.mxu0 0
        %6962 = vmatpush2.bf16.msra.mxu0 0
        %6963 = vmatprep.mubr.bf16.mxu0 0
        %6964 = vmatmul.mubr.bf16.gmra.mxu0 %v6929
        %v6965 = vpop.f32.mrf.mxu0
        %v6966 = vadd.f32 0.0, %v6965
        %v6967 = vpop.f32.mrf.mxu0
        %v6968 = vpop.f32.mrf.mxu0
        %v6969 = vpop.f32.mrf.mxu0
        %6970 = vdwg.mxu0
        %6971 = vrot.lane.b32.xlu0 %v5529, 88
        %v6972 = vpop.permute.xlu0 %6971
        %v6975 = vsel %vm4958, %v6873, 0
        %6977 = vmatprep.subr.bf16.mxu0 0
        %6978 = vmatpush1.bf16.msra.mxu0 0
        %6979 = vmatprep.subr.bf16.mxu0 0
        %6980 = vmatpush1.bf16.msra.mxu0 0
        %6981 = vmatprep.subr.bf16.mxu0 0
        %6982 = vmatpush1.bf16.msra.mxu0 0
        %6983 = vmatprep.subr.bf16.mxu0 0
        %6984 = vmatpush1.bf16.msra.mxu0 0
        %6985 = vmatprep.subr.bf16.mxu0 0
        %6986 = vmatpush1.bf16.msra.mxu0 0
        %6987 = vmatprep.subr.bf16.mxu0 0
        %6988 = vmatpush1.bf16.msra.mxu0 0
        %6989 = vmatprep.subr.bf16.mxu0 0
        %6990 = vmatpush1.bf16.msra.mxu0 0
        %6991 = vmatprep.subr.bf16.mxu0 0
        %6992 = vmatpush1.bf16.msra.mxu0 %v6972
        %6993 = vmatprep.subr.bf16.mxu0 0
        %6994 = vmatpush2.bf16.msra.mxu0 0
        %6995 = vmatprep.subr.bf16.mxu0 0
        %6996 = vmatpush2.bf16.msra.mxu0 0
        %6997 = vmatprep.subr.bf16.mxu0 0
        %6998 = vmatpush2.bf16.msra.mxu0 0
        %6999 = vmatprep.subr.bf16.mxu0 0
        %7000 = vmatpush2.bf16.msra.mxu0 0
        %7001 = vmatprep.subr.bf16.mxu0 0
        %7002 = vmatpush2.bf16.msra.mxu0 0
        %7003 = vmatprep.subr.bf16.mxu0 0
        %7004 = vmatpush2.bf16.msra.mxu0 0
        %7005 = vmatprep.subr.bf16.mxu0 0
        %7006 = vmatpush2.bf16.msra.mxu0 0
        %7007 = vmatprep.subr.bf16.mxu0 0
        %7008 = vmatpush2.bf16.msra.mxu0 0
        %7009 = vmatprep.mubr.bf16.mxu0 0
        %7010 = vmatmul.mubr.bf16.gmra.mxu0 %v6975
        %v7011 = vpop.f32.mrf.mxu0
        %v7012 = vadd.f32 0.0, %v7011
        %v7013 = vpop.f32.mrf.mxu0
        %v7014 = vpop.f32.mrf.mxu0
        %v7015 = vpop.f32.mrf.mxu0
        %7016 = vdwg.mxu0
        %7017 = vrot.lane.b32.xlu0 %v5530, 88
        %v7018 = vpop.permute.xlu0 %7017
        %v7021 = vsel %vm4958, %v6874, 0
        %7023 = vmatprep.subr.bf16.mxu0 0
        %7024 = vmatpush1.bf16.msra.mxu0 0
        %7025 = vmatprep.subr.bf16.mxu0 0
        %7026 = vmatpush1.bf16.msra.mxu0 0
        %7027 = vmatprep.subr.bf16.mxu0 0
        %7028 = vmatpush1.bf16.msra.mxu0 0
        %7029 = vmatprep.subr.bf16.mxu0 0
        %7030 = vmatpush1.bf16.msra.mxu0 0
        %7031 = vmatprep.subr.bf16.mxu0 0
        %7032 = vmatpush1.bf16.msra.mxu0 0
        %7033 = vmatprep.subr.bf16.mxu0 0
        %7034 = vmatpush1.bf16.msra.mxu0 0
        %7035 = vmatprep.subr.bf16.mxu0 0
        %7036 = vmatpush1.bf16.msra.mxu0 0
        %7037 = vmatprep.subr.bf16.mxu0 0
        %7038 = vmatpush1.bf16.msra.mxu0 %v7018
        %7039 = vmatprep.subr.bf16.mxu0 0
        %7040 = vmatpush2.bf16.msra.mxu0 0
        %7041 = vmatprep.subr.bf16.mxu0 0
        %7042 = vmatpush2.bf16.msra.mxu0 0
        %7043 = vmatprep.subr.bf16.mxu0 0
        %7044 = vmatpush2.bf16.msra.mxu0 0
        %7045 = vmatprep.subr.bf16.mxu0 0
        %7046 = vmatpush2.bf16.msra.mxu0 0
        %7047 = vmatprep.subr.bf16.mxu0 0
        %7048 = vmatpush2.bf16.msra.mxu0 0
        %7049 = vmatprep.subr.bf16.mxu0 0
        %7050 = vmatpush2.bf16.msra.mxu0 0
        %7051 = vmatprep.subr.bf16.mxu0 0
        %7052 = vmatpush2.bf16.msra.mxu0 0
        %7053 = vmatprep.subr.bf16.mxu0 0
        %7054 = vmatpush2.bf16.msra.mxu0 0
        %7055 = vmatprep.mubr.bf16.mxu0 0
        %7056 = vmatmul.mubr.bf16.gmra.mxu0 %v7021
        %v7057 = vpop.f32.mrf.mxu0
        %v7058 = vadd.f32 0.0, %v7057
        %v7059 = vpop.f32.mrf.mxu0
        %v7060 = vpop.f32.mrf.mxu0
        %v7061 = vpop.f32.mrf.mxu0
        %7062 = vdwg.mxu0
        %7063 = vrot.lane.b32.xlu0 %v5531, 88
        %v7064 = vpop.permute.xlu0 %7063
        %v7067 = vsel %vm4958, %v6875, 0
        %7069 = vmatprep.subr.bf16.mxu0 0
        %7070 = vmatpush1.bf16.msra.mxu0 0
        %7071 = vmatprep.subr.bf16.mxu0 0
        %7072 = vmatpush1.bf16.msra.mxu0 0
        %7073 = vmatprep.subr.bf16.mxu0 0
        %7074 = vmatpush1.bf16.msra.mxu0 0
        %7075 = vmatprep.subr.bf16.mxu0 0
        %7076 = vmatpush1.bf16.msra.mxu0 0
        %7077 = vmatprep.subr.bf16.mxu0 0
        %7078 = vmatpush1.bf16.msra.mxu0 0
        %7079 = vmatprep.subr.bf16.mxu0 0
        %7080 = vmatpush1.bf16.msra.mxu0 0
        %7081 = vmatprep.subr.bf16.mxu0 0
        %7082 = vmatpush1.bf16.msra.mxu0 0
        %7083 = vmatprep.subr.bf16.mxu0 0
        %7084 = vmatpush1.bf16.msra.mxu0 %v7064
        %7085 = vmatprep.subr.bf16.mxu0 0
        %7086 = vmatpush2.bf16.msra.mxu0 0
        %7087 = vmatprep.subr.bf16.mxu0 0
        %7088 = vmatpush2.bf16.msra.mxu0 0
        %7089 = vmatprep.subr.bf16.mxu0 0
        %7090 = vmatpush2.bf16.msra.mxu0 0
        %7091 = vmatprep.subr.bf16.mxu0 0
        %7092 = vmatpush2.bf16.msra.mxu0 0
        %7093 = vmatprep.subr.bf16.mxu0 0
        %7094 = vmatpush2.bf16.msra.mxu0 0
        %7095 = vmatprep.subr.bf16.mxu0 0
        %7096 = vmatpush2.bf16.msra.mxu0 0
        %7097 = vmatprep.subr.bf16.mxu0 0
        %7098 = vmatpush2.bf16.msra.mxu0 0
        %7099 = vmatprep.subr.bf16.mxu0 0
        %7100 = vmatpush2.bf16.msra.mxu0 0
        %7101 = vmatprep.mubr.bf16.mxu0 0
        %7102 = vmatmul.mubr.bf16.gmra.mxu0 %v7067
        %v7103 = vpop.f32.mrf.mxu0
        %v7104 = vadd.f32 0.0, %v7103
        %v7105 = vpop.f32.mrf.mxu0
        %v7106 = vpop.f32.mrf.mxu0
        %v7107 = vpop.f32.mrf.mxu0
        %7108 = vdwg.mxu0
        %7109 = vrot.lane.b32.xlu0 %v5532, 88
        %v7110 = vpop.permute.xlu0 %7109
        %v7113 = vsel %vm4958, %v6876, 0
        %7115 = vmatprep.subr.bf16.mxu0 0
        %7116 = vmatpush1.bf16.msra.mxu0 0
        %7117 = vmatprep.subr.bf16.mxu0 0
        %7118 = vmatpush1.bf16.msra.mxu0 0
        %7119 = vmatprep.subr.bf16.mxu0 0
        %7120 = vmatpush1.bf16.msra.mxu0 0
        %7121 = vmatprep.subr.bf16.mxu0 0
        %7122 = vmatpush1.bf16.msra.mxu0 0
        %7123 = vmatprep.subr.bf16.mxu0 0
        %7124 = vmatpush1.bf16.msra.mxu0 0
        %7125 = vmatprep.subr.bf16.mxu0 0
        %7126 = vmatpush1.bf16.msra.mxu0 0
        %7127 = vmatprep.subr.bf16.mxu0 0
        %7128 = vmatpush1.bf16.msra.mxu0 0
        %7129 = vmatprep.subr.bf16.mxu0 0
        %7130 = vmatpush1.bf16.msra.mxu0 %v7110
        %7131 = vmatprep.subr.bf16.mxu0 0
        %7132 = vmatpush2.bf16.msra.mxu0 0
        %7133 = vmatprep.subr.bf16.mxu0 0
        %7134 = vmatpush2.bf16.msra.mxu0 0
        %7135 = vmatprep.subr.bf16.mxu0 0
        %7136 = vmatpush2.bf16.msra.mxu0 0
        %7137 = vmatprep.subr.bf16.mxu0 0
        %7138 = vmatpush2.bf16.msra.mxu0 0
        %7139 = vmatprep.subr.bf16.mxu0 0
        %7140 = vmatpush2.bf16.msra.mxu0 0
        %7141 = vmatprep.subr.bf16.mxu0 0
        %7142 = vmatpush2.bf16.msra.mxu0 0
        %7143 = vmatprep.subr.bf16.mxu0 0
        %7144 = vmatpush2.bf16.msra.mxu0 0
        %7145 = vmatprep.subr.bf16.mxu0 0
        %7146 = vmatpush2.bf16.msra.mxu0 0
        %7147 = vmatprep.mubr.bf16.mxu0 0
        %7148 = vmatmul.mubr.bf16.gmra.mxu0 %v7113
        %v7149 = vpop.f32.mrf.mxu0
        %v7150 = vadd.f32 0.0, %v7149
        %v7151 = vpop.f32.mrf.mxu0
        %v7152 = vpop.f32.mrf.mxu0
        %v7153 = vpop.f32.mrf.mxu0
        %7154 = vdwg.mxu0
        %7155 = vrot.lane.b32.xlu0 %v5533, 88
        %v7156 = vpop.permute.xlu0 %7155
        %v7159 = vsel %vm4958, %v6877, 0
        %7161 = vmatprep.subr.bf16.mxu0 0
        %7162 = vmatpush1.bf16.msra.mxu0 0
        %7163 = vmatprep.subr.bf16.mxu0 0
        %7164 = vmatpush1.bf16.msra.mxu0 0
        %7165 = vmatprep.subr.bf16.mxu0 0
        %7166 = vmatpush1.bf16.msra.mxu0 0
        %7167 = vmatprep.subr.bf16.mxu0 0
        %7168 = vmatpush1.bf16.msra.mxu0 0
        %7169 = vmatprep.subr.bf16.mxu0 0
        %7170 = vmatpush1.bf16.msra.mxu0 0
        %7171 = vmatprep.subr.bf16.mxu0 0
        %7172 = vmatpush1.bf16.msra.mxu0 0
        %7173 = vmatprep.subr.bf16.mxu0 0
        %7174 = vmatpush1.bf16.msra.mxu0 0
        %7175 = vmatprep.subr.bf16.mxu0 0
        %7176 = vmatpush1.bf16.msra.mxu0 %v7156
        %7177 = vmatprep.subr.bf16.mxu0 0
        %7178 = vmatpush2.bf16.msra.mxu0 0
        %7179 = vmatprep.subr.bf16.mxu0 0
        %7180 = vmatpush2.bf16.msra.mxu0 0
        %7181 = vmatprep.subr.bf16.mxu0 0
        %7182 = vmatpush2.bf16.msra.mxu0 0
        %7183 = vmatprep.subr.bf16.mxu0 0
        %7184 = vmatpush2.bf16.msra.mxu0 0
        %7185 = vmatprep.subr.bf16.mxu0 0
        %7186 = vmatpush2.bf16.msra.mxu0 0
        %7187 = vmatprep.subr.bf16.mxu0 0
        %7188 = vmatpush2.bf16.msra.mxu0 0
        %7189 = vmatprep.subr.bf16.mxu0 0
        %7190 = vmatpush2.bf16.msra.mxu0 0
        %7191 = vmatprep.subr.bf16.mxu0 0
        %7192 = vmatpush2.bf16.msra.mxu0 0
        %7193 = vmatprep.mubr.bf16.mxu0 0
        %7194 = vmatmul.mubr.bf16.gmra.mxu0 %v7159
        %v7195 = vpop.f32.mrf.mxu0
        %v7196 = vadd.f32 0.0, %v7195
        %v7197 = vpop.f32.mrf.mxu0
        %v7198 = vpop.f32.mrf.mxu0
        %v7199 = vpop.f32.mrf.mxu0
        %7200 = vdwg.mxu0
        %7201 = vrot.lane.b32.xlu0 %v5534, 88
        %v7202 = vpop.permute.xlu0 %7201
        %v7205 = vsel %vm4958, %v6878, 0
        %7207 = vmatprep.subr.bf16.mxu0 0
        %7208 = vmatpush1.bf16.msra.mxu0 0
        %7209 = vmatprep.subr.bf16.mxu0 0
        %7210 = vmatpush1.bf16.msra.mxu0 0
        %7211 = vmatprep.subr.bf16.mxu0 0
        %7212 = vmatpush1.bf16.msra.mxu0 0
        %7213 = vmatprep.subr.bf16.mxu0 0
        %7214 = vmatpush1.bf16.msra.mxu0 0
        %7215 = vmatprep.subr.bf16.mxu0 0
        %7216 = vmatpush1.bf16.msra.mxu0 0
        %7217 = vmatprep.subr.bf16.mxu0 0
        %7218 = vmatpush1.bf16.msra.mxu0 0
        %7219 = vmatprep.subr.bf16.mxu0 0
        %7220 = vmatpush1.bf16.msra.mxu0 0
        %7221 = vmatprep.subr.bf16.mxu0 0
        %7222 = vmatpush1.bf16.msra.mxu0 %v7202
        %7223 = vmatprep.subr.bf16.mxu0 0
        %7224 = vmatpush2.bf16.msra.mxu0 0
        %7225 = vmatprep.subr.bf16.mxu0 0
        %7226 = vmatpush2.bf16.msra.mxu0 0
        %7227 = vmatprep.subr.bf16.mxu0 0
        %7228 = vmatpush2.bf16.msra.mxu0 0
        %7229 = vmatprep.subr.bf16.mxu0 0
        %7230 = vmatpush2.bf16.msra.mxu0 0
        %7231 = vmatprep.subr.bf16.mxu0 0
        %7232 = vmatpush2.bf16.msra.mxu0 0
        %7233 = vmatprep.subr.bf16.mxu0 0
        %7234 = vmatpush2.bf16.msra.mxu0 0
        %7235 = vmatprep.subr.bf16.mxu0 0
        %7236 = vmatpush2.bf16.msra.mxu0 0
        %7237 = vmatprep.subr.bf16.mxu0 0
        %7238 = vmatpush2.bf16.msra.mxu0 0
        %7239 = vmatprep.mubr.bf16.mxu0 0
        %7240 = vmatmul.mubr.bf16.gmra.mxu0 %v7205
        %v7241 = vpop.f32.mrf.mxu0
        %v7242 = vadd.f32 0.0, %v7241
        %v7243 = vpop.f32.mrf.mxu0
        %v7244 = vpop.f32.mrf.mxu0
        %v7245 = vpop.f32.mrf.mxu0
        %7246 = vdwg.mxu0
        %7247 = vrot.lane.b32.xlu0 %v5519, 112
        %v7248 = vpop.permute.xlu0 %7247
        %7249 = vrot.lane.b32.xlu0 %v5527, 112
        %v7250 = vpop.permute.xlu0 %7249
        %v7252 = vsel %vm1335, %v7248, 0
        %v7255 = vsel %vm1335, %v7250, 0
        %7257 = vmatprep.subr.bf16.mxu0 0
        %7258 = vmatpush1.bf16.xpose.msra.mxu0 0
        %7259 = vmatprep.subr.bf16.mxu0 0
        %7260 = vmatpush1.bf16.xpose.msra.mxu0 0
        %7261 = vmatprep.subr.bf16.mxu0 0
        %7262 = vmatpush1.bf16.xpose.msra.mxu0 0
        %7263 = vmatprep.subr.bf16.mxu0 0
        %7264 = vmatpush1.bf16.xpose.msra.mxu0 0
        %7265 = vmatprep.subr.bf16.mxu0 0
        %7266 = vmatpush1.bf16.xpose.msra.mxu0 0
        %7267 = vmatprep.subr.bf16.mxu0 0
        %7268 = vmatpush1.bf16.xpose.msra.mxu0 0
        %7269 = vmatprep.subr.bf16.mxu0 0
        %7270 = vmatpush1.bf16.xpose.msra.mxu0 0
        %7271 = vmatprep.subr.bf16.mxu0 0
        %7272 = vmatpush1.bf16.xpose.msra.mxu0 %v7255
        %7273 = vmatprep.subr.bf16.mxu0 0
        %7274 = vmatpush2.bf16.xpose.msra.mxu0 0
        %7275 = vmatprep.subr.bf16.mxu0 0
        %7276 = vmatpush2.bf16.xpose.msra.mxu0 0
        %7277 = vmatprep.subr.bf16.mxu0 0
        %7278 = vmatpush2.bf16.xpose.msra.mxu0 0
        %7279 = vmatprep.subr.bf16.mxu0 0
        %7280 = vmatpush2.bf16.xpose.msra.mxu0 0
        %7281 = vmatprep.subr.bf16.mxu0 0
        %7282 = vmatpush2.bf16.xpose.msra.mxu0 0
        %7283 = vmatprep.subr.bf16.mxu0 0
        %7284 = vmatpush2.bf16.xpose.msra.mxu0 0
        %7285 = vmatprep.subr.bf16.mxu0 0
        %7286 = vmatpush2.bf16.xpose.msra.mxu0 0
        %7287 = vmatprep.subr.bf16.mxu0 0
        %7288 = vmatpush2.bf16.xpose.msra.mxu0 0
        %7289 = vmatprep.mubr.bf16.mxu0 0
        %7290 = vmatmul.mubr.bf16.gmra.mxu0 %v7252
        %v7291 = vpop.f32.mrf.mxu0
        %v7292 = vadd.f32 0.0, %v7291
        %v7293 = vpop.f32.mrf.mxu0
        %v7294 = vpop.f32.mrf.mxu0
        %v7295 = vpop.f32.mrf.mxu0
        %7296 = vdwg.mxu0
        %7297 = vrot.lane.b32.xlu0 %v5520, 112
        %v7298 = vpop.permute.xlu0 %7297
        %7299 = vrot.lane.b32.xlu0 %v5528, 112
        %v7300 = vpop.permute.xlu0 %7299
        %v7302 = vsel %vm1335, %v7298, 0
        %v7305 = vsel %vm1335, %v7300, 0
        %7307 = vmatprep.subr.bf16.mxu0 0
        %7308 = vmatpush1.bf16.xpose.msra.mxu0 0
        %7309 = vmatprep.subr.bf16.mxu0 0
        %7310 = vmatpush1.bf16.xpose.msra.mxu0 0
        %7311 = vmatprep.subr.bf16.mxu0 0
        %7312 = vmatpush1.bf16.xpose.msra.mxu0 0
        %7313 = vmatprep.subr.bf16.mxu0 0
        %7314 = vmatpush1.bf16.xpose.msra.mxu0 0
        %7315 = vmatprep.subr.bf16.mxu0 0
        %7316 = vmatpush1.bf16.xpose.msra.mxu0 0
        %7317 = vmatprep.subr.bf16.mxu0 0
        %7318 = vmatpush1.bf16.xpose.msra.mxu0 0
        %7319 = vmatprep.subr.bf16.mxu0 0
        %7320 = vmatpush1.bf16.xpose.msra.mxu0 0
        %7321 = vmatprep.subr.bf16.mxu0 0
        %7322 = vmatpush1.bf16.xpose.msra.mxu0 %v7305
        %7323 = vmatprep.subr.bf16.mxu0 0
        %7324 = vmatpush2.bf16.xpose.msra.mxu0 0
        %7325 = vmatprep.subr.bf16.mxu0 0
        %7326 = vmatpush2.bf16.xpose.msra.mxu0 0
        %7327 = vmatprep.subr.bf16.mxu0 0
        %7328 = vmatpush2.bf16.xpose.msra.mxu0 0
        %7329 = vmatprep.subr.bf16.mxu0 0
        %7330 = vmatpush2.bf16.xpose.msra.mxu0 0
        %7331 = vmatprep.subr.bf16.mxu0 0
        %7332 = vmatpush2.bf16.xpose.msra.mxu0 0
        %7333 = vmatprep.subr.bf16.mxu0 0
        %7334 = vmatpush2.bf16.xpose.msra.mxu0 0
        %7335 = vmatprep.subr.bf16.mxu0 0
        %7336 = vmatpush2.bf16.xpose.msra.mxu0 0
        %7337 = vmatprep.subr.bf16.mxu0 0
        %7338 = vmatpush2.bf16.xpose.msra.mxu0 0
        %7339 = vmatprep.mubr.bf16.mxu0 0
        %7340 = vmatmul.mubr.bf16.gmra.mxu0 %v7302
        %v7341 = vpop.f32.mrf.mxu0
        %v7342 = vadd.f32 0.0, %v7341
        %v7343 = vpop.f32.mrf.mxu0
        %v7344 = vpop.f32.mrf.mxu0
        %v7345 = vpop.f32.mrf.mxu0
        %7346 = vdwg.mxu0
        %7347 = vrot.lane.b32.xlu0 %v5521, 112
        %v7348 = vpop.permute.xlu0 %7347
        %7349 = vrot.lane.b32.xlu0 %v5529, 112
        %v7350 = vpop.permute.xlu0 %7349
        %v7352 = vsel %vm1335, %v7348, 0
        %v7355 = vsel %vm1335, %v7350, 0
        %7357 = vmatprep.subr.bf16.mxu0 0
        %7358 = vmatpush1.bf16.xpose.msra.mxu0 0
        %7359 = vmatprep.subr.bf16.mxu0 0
        %7360 = vmatpush1.bf16.xpose.msra.mxu0 0
        %7361 = vmatprep.subr.bf16.mxu0 0
        %7362 = vmatpush1.bf16.xpose.msra.mxu0 0
        %7363 = vmatprep.subr.bf16.mxu0 0
        %7364 = vmatpush1.bf16.xpose.msra.mxu0 0
        %7365 = vmatprep.subr.bf16.mxu0 0
        %7366 = vmatpush1.bf16.xpose.msra.mxu0 0
        %7367 = vmatprep.subr.bf16.mxu0 0
        %7368 = vmatpush1.bf16.xpose.msra.mxu0 0
        %7369 = vmatprep.subr.bf16.mxu0 0
        %7370 = vmatpush1.bf16.xpose.msra.mxu0 0
        %7371 = vmatprep.subr.bf16.mxu0 0
        %7372 = vmatpush1.bf16.xpose.msra.mxu0 %v7355
        %7373 = vmatprep.subr.bf16.mxu0 0
        %7374 = vmatpush2.bf16.xpose.msra.mxu0 0
        %7375 = vmatprep.subr.bf16.mxu0 0
        %7376 = vmatpush2.bf16.xpose.msra.mxu0 0
        %7377 = vmatprep.subr.bf16.mxu0 0
        %7378 = vmatpush2.bf16.xpose.msra.mxu0 0
        %7379 = vmatprep.subr.bf16.mxu0 0
        %7380 = vmatpush2.bf16.xpose.msra.mxu0 0
        %7381 = vmatprep.subr.bf16.mxu0 0
        %7382 = vmatpush2.bf16.xpose.msra.mxu0 0
        %7383 = vmatprep.subr.bf16.mxu0 0
        %7384 = vmatpush2.bf16.xpose.msra.mxu0 0
        %7385 = vmatprep.subr.bf16.mxu0 0
        %7386 = vmatpush2.bf16.xpose.msra.mxu0 0
        %7387 = vmatprep.subr.bf16.mxu0 0
        %7388 = vmatpush2.bf16.xpose.msra.mxu0 0
        %7389 = vmatprep.mubr.bf16.mxu0 0
        %7390 = vmatmul.mubr.bf16.gmra.mxu0 %v7352
        %v7391 = vpop.f32.mrf.mxu0
        %v7392 = vadd.f32 0.0, %v7391
        %v7393 = vpop.f32.mrf.mxu0
        %v7394 = vpop.f32.mrf.mxu0
        %v7395 = vpop.f32.mrf.mxu0
        %7396 = vdwg.mxu0
        %7397 = vrot.lane.b32.xlu0 %v5522, 112
        %v7398 = vpop.permute.xlu0 %7397
        %7399 = vrot.lane.b32.xlu0 %v5530, 112
        %v7400 = vpop.permute.xlu0 %7399
        %v7402 = vsel %vm1335, %v7398, 0
        %v7405 = vsel %vm1335, %v7400, 0
        %7407 = vmatprep.subr.bf16.mxu0 0
        %7408 = vmatpush1.bf16.xpose.msra.mxu0 0
        %7409 = vmatprep.subr.bf16.mxu0 0
        %7410 = vmatpush1.bf16.xpose.msra.mxu0 0
        %7411 = vmatprep.subr.bf16.mxu0 0
        %7412 = vmatpush1.bf16.xpose.msra.mxu0 0
        %7413 = vmatprep.subr.bf16.mxu0 0
        %7414 = vmatpush1.bf16.xpose.msra.mxu0 0
        %7415 = vmatprep.subr.bf16.mxu0 0
        %7416 = vmatpush1.bf16.xpose.msra.mxu0 0
        %7417 = vmatprep.subr.bf16.mxu0 0
        %7418 = vmatpush1.bf16.xpose.msra.mxu0 0
        %7419 = vmatprep.subr.bf16.mxu0 0
        %7420 = vmatpush1.bf16.xpose.msra.mxu0 0
        %7421 = vmatprep.subr.bf16.mxu0 0
        %7422 = vmatpush1.bf16.xpose.msra.mxu0 %v7405
        %7423 = vmatprep.subr.bf16.mxu0 0
        %7424 = vmatpush2.bf16.xpose.msra.mxu0 0
        %7425 = vmatprep.subr.bf16.mxu0 0
        %7426 = vmatpush2.bf16.xpose.msra.mxu0 0
        %7427 = vmatprep.subr.bf16.mxu0 0
        %7428 = vmatpush2.bf16.xpose.msra.mxu0 0
        %7429 = vmatprep.subr.bf16.mxu0 0
        %7430 = vmatpush2.bf16.xpose.msra.mxu0 0
        %7431 = vmatprep.subr.bf16.mxu0 0
        %7432 = vmatpush2.bf16.xpose.msra.mxu0 0
        %7433 = vmatprep.subr.bf16.mxu0 0
        %7434 = vmatpush2.bf16.xpose.msra.mxu0 0
        %7435 = vmatprep.subr.bf16.mxu0 0
        %7436 = vmatpush2.bf16.xpose.msra.mxu0 0
        %7437 = vmatprep.subr.bf16.mxu0 0
        %7438 = vmatpush2.bf16.xpose.msra.mxu0 0
        %7439 = vmatprep.mubr.bf16.mxu0 0
        %7440 = vmatmul.mubr.bf16.gmra.mxu0 %v7402
        %v7441 = vpop.f32.mrf.mxu0
        %v7442 = vadd.f32 0.0, %v7441
        %v7443 = vpop.f32.mrf.mxu0
        %v7444 = vpop.f32.mrf.mxu0
        %v7445 = vpop.f32.mrf.mxu0
        %7446 = vdwg.mxu0
        %7447 = vrot.lane.b32.xlu0 %v5523, 112
        %v7448 = vpop.permute.xlu0 %7447
        %7449 = vrot.lane.b32.xlu0 %v5531, 112
        %v7450 = vpop.permute.xlu0 %7449
        %v7452 = vsel %vm1335, %v7448, 0
        %v7455 = vsel %vm1335, %v7450, 0
        %7457 = vmatprep.subr.bf16.mxu0 0
        %7458 = vmatpush1.bf16.xpose.msra.mxu0 0
        %7459 = vmatprep.subr.bf16.mxu0 0
        %7460 = vmatpush1.bf16.xpose.msra.mxu0 0
        %7461 = vmatprep.subr.bf16.mxu0 0
        %7462 = vmatpush1.bf16.xpose.msra.mxu0 0
        %7463 = vmatprep.subr.bf16.mxu0 0
        %7464 = vmatpush1.bf16.xpose.msra.mxu0 0
        %7465 = vmatprep.subr.bf16.mxu0 0
        %7466 = vmatpush1.bf16.xpose.msra.mxu0 0
        %7467 = vmatprep.subr.bf16.mxu0 0
        %7468 = vmatpush1.bf16.xpose.msra.mxu0 0
        %7469 = vmatprep.subr.bf16.mxu0 0
        %7470 = vmatpush1.bf16.xpose.msra.mxu0 0
        %7471 = vmatprep.subr.bf16.mxu0 0
        %7472 = vmatpush1.bf16.xpose.msra.mxu0 %v7455
        %7473 = vmatprep.subr.bf16.mxu0 0
        %7474 = vmatpush2.bf16.xpose.msra.mxu0 0
        %7475 = vmatprep.subr.bf16.mxu0 0
        %7476 = vmatpush2.bf16.xpose.msra.mxu0 0
        %7477 = vmatprep.subr.bf16.mxu0 0
        %7478 = vmatpush2.bf16.xpose.msra.mxu0 0
        %7479 = vmatprep.subr.bf16.mxu0 0
        %7480 = vmatpush2.bf16.xpose.msra.mxu0 0
        %7481 = vmatprep.subr.bf16.mxu0 0
        %7482 = vmatpush2.bf16.xpose.msra.mxu0 0
        %7483 = vmatprep.subr.bf16.mxu0 0
        %7484 = vmatpush2.bf16.xpose.msra.mxu0 0
        %7485 = vmatprep.subr.bf16.mxu0 0
        %7486 = vmatpush2.bf16.xpose.msra.mxu0 0
        %7487 = vmatprep.subr.bf16.mxu0 0
        %7488 = vmatpush2.bf16.xpose.msra.mxu0 0
        %7489 = vmatprep.mubr.bf16.mxu0 0
        %7490 = vmatmul.mubr.bf16.gmra.mxu0 %v7452
        %v7491 = vpop.f32.mrf.mxu0
        %v7492 = vadd.f32 0.0, %v7491
        %v7493 = vpop.f32.mrf.mxu0
        %v7494 = vpop.f32.mrf.mxu0
        %v7495 = vpop.f32.mrf.mxu0
        %7496 = vdwg.mxu0
        %7497 = vrot.lane.b32.xlu0 %v5524, 112
        %v7498 = vpop.permute.xlu0 %7497
        %7499 = vrot.lane.b32.xlu0 %v5532, 112
        %v7500 = vpop.permute.xlu0 %7499
        %v7502 = vsel %vm1335, %v7498, 0
        %v7505 = vsel %vm1335, %v7500, 0
        %7507 = vmatprep.subr.bf16.mxu0 0
        %7508 = vmatpush1.bf16.xpose.msra.mxu0 0
        %7509 = vmatprep.subr.bf16.mxu0 0
        %7510 = vmatpush1.bf16.xpose.msra.mxu0 0
        %7511 = vmatprep.subr.bf16.mxu0 0
        %7512 = vmatpush1.bf16.xpose.msra.mxu0 0
        %7513 = vmatprep.subr.bf16.mxu0 0
        %7514 = vmatpush1.bf16.xpose.msra.mxu0 0
        %7515 = vmatprep.subr.bf16.mxu0 0
        %7516 = vmatpush1.bf16.xpose.msra.mxu0 0
        %7517 = vmatprep.subr.bf16.mxu0 0
        %7518 = vmatpush1.bf16.xpose.msra.mxu0 0
        %7519 = vmatprep.subr.bf16.mxu0 0
        %7520 = vmatpush1.bf16.xpose.msra.mxu0 0
        %7521 = vmatprep.subr.bf16.mxu0 0
        %7522 = vmatpush1.bf16.xpose.msra.mxu0 %v7505
        %7523 = vmatprep.subr.bf16.mxu0 0
        %7524 = vmatpush2.bf16.xpose.msra.mxu0 0
        %7525 = vmatprep.subr.bf16.mxu0 0
        %7526 = vmatpush2.bf16.xpose.msra.mxu0 0
        %7527 = vmatprep.subr.bf16.mxu0 0
        %7528 = vmatpush2.bf16.xpose.msra.mxu0 0
        %7529 = vmatprep.subr.bf16.mxu0 0
        %7530 = vmatpush2.bf16.xpose.msra.mxu0 0
        %7531 = vmatprep.subr.bf16.mxu0 0
        %7532 = vmatpush2.bf16.xpose.msra.mxu0 0
        %7533 = vmatprep.subr.bf16.mxu0 0
        %7534 = vmatpush2.bf16.xpose.msra.mxu0 0
        %7535 = vmatprep.subr.bf16.mxu0 0
        %7536 = vmatpush2.bf16.xpose.msra.mxu0 0
        %7537 = vmatprep.subr.bf16.mxu0 0
        %7538 = vmatpush2.bf16.xpose.msra.mxu0 0
        %7539 = vmatprep.mubr.bf16.mxu0 0
        %7540 = vmatmul.mubr.bf16.gmra.mxu0 %v7502
        %v7541 = vpop.f32.mrf.mxu0
        %v7542 = vadd.f32 0.0, %v7541
        %v7543 = vpop.f32.mrf.mxu0
        %v7544 = vpop.f32.mrf.mxu0
        %v7545 = vpop.f32.mrf.mxu0
        %7546 = vdwg.mxu0
        %7547 = vrot.lane.b32.xlu0 %v5525, 112
        %v7548 = vpop.permute.xlu0 %7547
        %7549 = vrot.lane.b32.xlu0 %v5533, 112
        %v7550 = vpop.permute.xlu0 %7549
        %v7552 = vsel %vm1335, %v7548, 0
        %v7555 = vsel %vm1335, %v7550, 0
        %7557 = vmatprep.subr.bf16.mxu0 0
        %7558 = vmatpush1.bf16.xpose.msra.mxu0 0
        %7559 = vmatprep.subr.bf16.mxu0 0
        %7560 = vmatpush1.bf16.xpose.msra.mxu0 0
        %7561 = vmatprep.subr.bf16.mxu0 0
        %7562 = vmatpush1.bf16.xpose.msra.mxu0 0
        %7563 = vmatprep.subr.bf16.mxu0 0
        %7564 = vmatpush1.bf16.xpose.msra.mxu0 0
        %7565 = vmatprep.subr.bf16.mxu0 0
        %7566 = vmatpush1.bf16.xpose.msra.mxu0 0
        %7567 = vmatprep.subr.bf16.mxu0 0
        %7568 = vmatpush1.bf16.xpose.msra.mxu0 0
        %7569 = vmatprep.subr.bf16.mxu0 0
        %7570 = vmatpush1.bf16.xpose.msra.mxu0 0
        %7571 = vmatprep.subr.bf16.mxu0 0
        %7572 = vmatpush1.bf16.xpose.msra.mxu0 %v7555
        %7573 = vmatprep.subr.bf16.mxu0 0
        %7574 = vmatpush2.bf16.xpose.msra.mxu0 0
        %7575 = vmatprep.subr.bf16.mxu0 0
        %7576 = vmatpush2.bf16.xpose.msra.mxu0 0
        %7577 = vmatprep.subr.bf16.mxu0 0
        %7578 = vmatpush2.bf16.xpose.msra.mxu0 0
        %7579 = vmatprep.subr.bf16.mxu0 0
        %7580 = vmatpush2.bf16.xpose.msra.mxu0 0
        %7581 = vmatprep.subr.bf16.mxu0 0
        %7582 = vmatpush2.bf16.xpose.msra.mxu0 0
        %7583 = vmatprep.subr.bf16.mxu0 0
        %7584 = vmatpush2.bf16.xpose.msra.mxu0 0
        %7585 = vmatprep.subr.bf16.mxu0 0
        %7586 = vmatpush2.bf16.xpose.msra.mxu0 0
        %7587 = vmatprep.subr.bf16.mxu0 0
        %7588 = vmatpush2.bf16.xpose.msra.mxu0 0
        %7589 = vmatprep.mubr.bf16.mxu0 0
        %7590 = vmatmul.mubr.bf16.gmra.mxu0 %v7552
        %v7591 = vpop.f32.mrf.mxu0
        %v7592 = vadd.f32 0.0, %v7591
        %v7593 = vpop.f32.mrf.mxu0
        %v7594 = vpop.f32.mrf.mxu0
        %v7595 = vpop.f32.mrf.mxu0
        %7596 = vdwg.mxu0
        %7597 = vrot.lane.b32.xlu0 %v5526, 112
        %v7598 = vpop.permute.xlu0 %7597
        %7599 = vrot.lane.b32.xlu0 %v5534, 112
        %v7600 = vpop.permute.xlu0 %7599
        %v7602 = vsel %vm1335, %v7598, 0
        %v7605 = vsel %vm1335, %v7600, 0
        %7607 = vmatprep.subr.bf16.mxu0 0
        %7608 = vmatpush1.bf16.xpose.msra.mxu0 0
        %7609 = vmatprep.subr.bf16.mxu0 0
        %7610 = vmatpush1.bf16.xpose.msra.mxu0 0
        %7611 = vmatprep.subr.bf16.mxu0 0
        %7612 = vmatpush1.bf16.xpose.msra.mxu0 0
        %7613 = vmatprep.subr.bf16.mxu0 0
        %7614 = vmatpush1.bf16.xpose.msra.mxu0 0
        %7615 = vmatprep.subr.bf16.mxu0 0
        %7616 = vmatpush1.bf16.xpose.msra.mxu0 0
        %7617 = vmatprep.subr.bf16.mxu0 0
        %7618 = vmatpush1.bf16.xpose.msra.mxu0 0
        %7619 = vmatprep.subr.bf16.mxu0 0
        %7620 = vmatpush1.bf16.xpose.msra.mxu0 0
        %7621 = vmatprep.subr.bf16.mxu0 0
        %7622 = vmatpush1.bf16.xpose.msra.mxu0 %v7605
        %7623 = vmatprep.subr.bf16.mxu0 0
        %7624 = vmatpush2.bf16.xpose.msra.mxu0 0
        %7625 = vmatprep.subr.bf16.mxu0 0
        %7626 = vmatpush2.bf16.xpose.msra.mxu0 0
        %7627 = vmatprep.subr.bf16.mxu0 0
        %7628 = vmatpush2.bf16.xpose.msra.mxu0 0
        %7629 = vmatprep.subr.bf16.mxu0 0
        %7630 = vmatpush2.bf16.xpose.msra.mxu0 0
        %7631 = vmatprep.subr.bf16.mxu0 0
        %7632 = vmatpush2.bf16.xpose.msra.mxu0 0
        %7633 = vmatprep.subr.bf16.mxu0 0
        %7634 = vmatpush2.bf16.xpose.msra.mxu0 0
        %7635 = vmatprep.subr.bf16.mxu0 0
        %7636 = vmatpush2.bf16.xpose.msra.mxu0 0
        %7637 = vmatprep.subr.bf16.mxu0 0
        %7638 = vmatpush2.bf16.xpose.msra.mxu0 0
        %7639 = vmatprep.mubr.bf16.mxu0 0
        %7640 = vmatmul.mubr.bf16.gmra.mxu0 %v7602
        %v7641 = vpop.f32.mrf.mxu0
        %v7642 = vadd.f32 0.0, %v7641
        %v7643 = vpop.f32.mrf.mxu0
        %v7644 = vpop.f32.mrf.mxu0
        %v7645 = vpop.f32.mrf.mxu0
        %7646 = vdwg.mxu0
        %v7647 = vsel %vm4958, %v7292, -inf
        %7648 = vmax.xlane.f32.xlu0 %v7647
        %v7649 = vpop.xlane.xlu0 %7648
        %v7650 = vsel %vm4958, %v7342, -inf
        %7651 = vmax.xlane.f32.xlu0 %v7650
        %v7652 = vpop.xlane.xlu0 %7651
        %v7653 = vsel %vm4958, %v7392, -inf
        %7654 = vmax.xlane.f32.xlu0 %v7653
        %v7655 = vpop.xlane.xlu0 %7654
        %v7656 = vsel %vm4958, %v7442, -inf
        %7657 = vmax.xlane.f32.xlu0 %v7656
        %v7658 = vpop.xlane.xlu0 %7657
        %v7659 = vsel %vm4958, %v7492, -inf
        %7660 = vmax.xlane.f32.xlu0 %v7659
        %v7661 = vpop.xlane.xlu0 %7660
        %v7662 = vsel %vm4958, %v7542, -inf
        %7663 = vmax.xlane.f32.xlu0 %v7662
        %v7664 = vpop.xlane.xlu0 %7663
        %v7665 = vsel %vm4958, %v7592, -inf
        %7666 = vmax.xlane.f32.xlu0 %v7665
        %v7667 = vpop.xlane.xlu0 %7666
        %v7668 = vsel %vm4958, %v7642, -inf
        %7669 = vmax.xlane.f32.xlu0 %v7668
        %v7670 = vpop.xlane.xlu0 %7669
        %v7671 = vsub.f32 %v7292, %v7649
        %v7672 = vsub.f32 %v7342, %v7652
        %v7673 = vsub.f32 %v7392, %v7655
        %v7674 = vsub.f32 %v7442, %v7658
        %v7675 = vsub.f32 %v7492, %v7661
        %v7676 = vsub.f32 %v7542, %v7664
        %v7677 = vsub.f32 %v7592, %v7667
        %v7678 = vsub.f32 %v7642, %v7670
        %v7679 = vmul.f32 %v7671, 1.442695
        %v7680 = vpow.pop %v7679
        %v7681 = vmul.f32 %v7672, 1.442695
        %v7682 = vpow.pop %v7681
        %v7683 = vmul.f32 %v7673, 1.442695
        %v7684 = vpow.pop %v7683
        %v7685 = vmul.f32 %v7674, 1.442695
        %v7686 = vpow.pop %v7685
        %v7687 = vmul.f32 %v7675, 1.442695
        %v7688 = vpow.pop %v7687
        %v7689 = vmul.f32 %v7676, 1.442695
        %v7690 = vpow.pop %v7689
        %v7691 = vmul.f32 %v7677, 1.442695
        %v7692 = vpow.pop %v7691
        %v7693 = vmul.f32 %v7678, 1.442695
        %v7694 = vpow.pop %v7693
        %v7695 = vsel %vm4958, %v7680, 0.0
        %7696 = vadd.xlane.f32.xlu0 %v7695
        %v7697 = vpop.xlane.xlu0 %7696
        %v7698 = vsel %vm4958, %v7682, 0.0
        %7699 = vadd.xlane.f32.xlu0 %v7698
        %v7700 = vpop.xlane.xlu0 %7699
        %v7701 = vsel %vm4958, %v7684, 0.0
        %7702 = vadd.xlane.f32.xlu0 %v7701
        %v7703 = vpop.xlane.xlu0 %7702
        %v7704 = vsel %vm4958, %v7686, 0.0
        %7705 = vadd.xlane.f32.xlu0 %v7704
        %v7706 = vpop.xlane.xlu0 %7705
        %v7707 = vsel %vm4958, %v7688, 0.0
        %7708 = vadd.xlane.f32.xlu0 %v7707
        %v7709 = vpop.xlane.xlu0 %7708
        %v7710 = vsel %vm4958, %v7690, 0.0
        %7711 = vadd.xlane.f32.xlu0 %v7710
        %v7712 = vpop.xlane.xlu0 %7711
        %v7713 = vsel %vm4958, %v7692, 0.0
        %7714 = vadd.xlane.f32.xlu0 %v7713
        %v7715 = vpop.xlane.xlu0 %7714
        %v7716 = vsel %vm4958, %v7694, 0.0
        %7717 = vadd.xlane.f32.xlu0 %v7716
        %v7718 = vpop.xlane.xlu0 %7717
        %v7719 = vrcp.pop %v7697
        %v7720 = vrcp.pop %v7700
        %v7721 = vrcp.pop %v7703
        %v7722 = vrcp.pop %v7706
        %v7723 = vrcp.pop %v7709
        %v7724 = vrcp.pop %v7712
        %v7725 = vrcp.pop %v7715
        %v7726 = vrcp.pop %v7718
        %v7727 = vmul.f32 %v7680, %v7719
        %v7728 = vmul.f32 %v7682, %v7720
        %v7729 = vmul.f32 %v7684, %v7721
        %v7730 = vmul.f32 %v7686, %v7722
        %v7731 = vmul.f32 %v7688, %v7723
        %v7732 = vmul.f32 %v7690, %v7724
        %v7733 = vmul.f32 %v7692, %v7725
        %v7734 = vmul.f32 %v7694, %v7726
        %v7735 = vpack.c.bf16 %v7727, %v7727
        %v7736 = vpack.c.bf16 %v7728, %v7728
        %v7737 = vpack.c.bf16 %v7729, %v7729
        %v7738 = vpack.c.bf16 %v7730, %v7730
        %v7739 = vpack.c.bf16 %v7731, %v7731
        %v7740 = vpack.c.bf16 %v7732, %v7732
        %v7741 = vpack.c.bf16 %v7733, %v7733
        %v7742 = vpack.c.bf16 %v7734, %v7734
        %7743 = vrot.lane.b32.xlu0 %v5527, 80
        %v7744 = vpop.permute.xlu0 %7743
        %v7747 = vsel %vm4958, %v7735, 0
        %7749 = vmatprep.subr.bf16.mxu0 0
        %7750 = vmatpush1.bf16.msra.mxu0 0
        %7751 = vmatprep.subr.bf16.mxu0 0
        %7752 = vmatpush1.bf16.msra.mxu0 0
        %7753 = vmatprep.subr.bf16.mxu0 0
        %7754 = vmatpush1.bf16.msra.mxu0 0
        %7755 = vmatprep.subr.bf16.mxu0 0
        %7756 = vmatpush1.bf16.msra.mxu0 0
        %7757 = vmatprep.subr.bf16.mxu0 0
        %7758 = vmatpush1.bf16.msra.mxu0 0
        %7759 = vmatprep.subr.bf16.mxu0 0
        %7760 = vmatpush1.bf16.msra.mxu0 0
        %7761 = vmatprep.subr.bf16.mxu0 0
        %7762 = vmatpush1.bf16.msra.mxu0 0
        %7763 = vmatprep.subr.bf16.mxu0 0
        %7764 = vmatpush1.bf16.msra.mxu0 %v7744
        %7765 = vmatprep.subr.bf16.mxu0 0
        %7766 = vmatpush2.bf16.msra.mxu0 0
        %7767 = vmatprep.subr.bf16.mxu0 0
        %7768 = vmatpush2.bf16.msra.mxu0 0
        %7769 = vmatprep.subr.bf16.mxu0 0
        %7770 = vmatpush2.bf16.msra.mxu0 0
        %7771 = vmatprep.subr.bf16.mxu0 0
        %7772 = vmatpush2.bf16.msra.mxu0 0
        %7773 = vmatprep.subr.bf16.mxu0 0
        %7774 = vmatpush2.bf16.msra.mxu0 0
        %7775 = vmatprep.subr.bf16.mxu0 0
        %7776 = vmatpush2.bf16.msra.mxu0 0
        %7777 = vmatprep.subr.bf16.mxu0 0
        %7778 = vmatpush2.bf16.msra.mxu0 0
        %7779 = vmatprep.subr.bf16.mxu0 0
        %7780 = vmatpush2.bf16.msra.mxu0 0
        %7781 = vmatprep.mubr.bf16.mxu0 0
        %7782 = vmatmul.mubr.bf16.gmra.mxu0 %v7747
        %v7783 = vpop.f32.mrf.mxu0
        %v7784 = vadd.f32 0.0, %v7783
        %v7785 = vpop.f32.mrf.mxu0
        %v7786 = vpop.f32.mrf.mxu0
        %v7787 = vpop.f32.mrf.mxu0
        %7788 = vdwg.mxu0
        %7789 = vrot.lane.b32.xlu0 %v5528, 80
        %v7790 = vpop.permute.xlu0 %7789
        %v7793 = vsel %vm4958, %v7736, 0
        %7795 = vmatprep.subr.bf16.mxu0 0
        %7796 = vmatpush1.bf16.msra.mxu0 0
        %7797 = vmatprep.subr.bf16.mxu0 0
        %7798 = vmatpush1.bf16.msra.mxu0 0
        %7799 = vmatprep.subr.bf16.mxu0 0
        %7800 = vmatpush1.bf16.msra.mxu0 0
        %7801 = vmatprep.subr.bf16.mxu0 0
        %7802 = vmatpush1.bf16.msra.mxu0 0
        %7803 = vmatprep.subr.bf16.mxu0 0
        %7804 = vmatpush1.bf16.msra.mxu0 0
        %7805 = vmatprep.subr.bf16.mxu0 0
        %7806 = vmatpush1.bf16.msra.mxu0 0
        %7807 = vmatprep.subr.bf16.mxu0 0
        %7808 = vmatpush1.bf16.msra.mxu0 0
        %7809 = vmatprep.subr.bf16.mxu0 0
        %7810 = vmatpush1.bf16.msra.mxu0 %v7790
        %7811 = vmatprep.subr.bf16.mxu0 0
        %7812 = vmatpush2.bf16.msra.mxu0 0
        %7813 = vmatprep.subr.bf16.mxu0 0
        %7814 = vmatpush2.bf16.msra.mxu0 0
        %7815 = vmatprep.subr.bf16.mxu0 0
        %7816 = vmatpush2.bf16.msra.mxu0 0
        %7817 = vmatprep.subr.bf16.mxu0 0
        %7818 = vmatpush2.bf16.msra.mxu0 0
        %7819 = vmatprep.subr.bf16.mxu0 0
        %7820 = vmatpush2.bf16.msra.mxu0 0
        %7821 = vmatprep.subr.bf16.mxu0 0
        %7822 = vmatpush2.bf16.msra.mxu0 0
        %7823 = vmatprep.subr.bf16.mxu0 0
        %7824 = vmatpush2.bf16.msra.mxu0 0
        %7825 = vmatprep.subr.bf16.mxu0 0
        %7826 = vmatpush2.bf16.msra.mxu0 0
        %7827 = vmatprep.mubr.bf16.mxu0 0
        %7828 = vmatmul.mubr.bf16.gmra.mxu0 %v7793
        %v7829 = vpop.f32.mrf.mxu0
        %v7830 = vadd.f32 0.0, %v7829
        %v7831 = vpop.f32.mrf.mxu0
        %v7832 = vpop.f32.mrf.mxu0
        %v7833 = vpop.f32.mrf.mxu0
        %7834 = vdwg.mxu0
        %7835 = vrot.lane.b32.xlu0 %v5529, 80
        %v7836 = vpop.permute.xlu0 %7835
        %v7839 = vsel %vm4958, %v7737, 0
        %7841 = vmatprep.subr.bf16.mxu0 0
        %7842 = vmatpush1.bf16.msra.mxu0 0
        %7843 = vmatprep.subr.bf16.mxu0 0
        %7844 = vmatpush1.bf16.msra.mxu0 0
        %7845 = vmatprep.subr.bf16.mxu0 0
        %7846 = vmatpush1.bf16.msra.mxu0 0
        %7847 = vmatprep.subr.bf16.mxu0 0
        %7848 = vmatpush1.bf16.msra.mxu0 0
        %7849 = vmatprep.subr.bf16.mxu0 0
        %7850 = vmatpush1.bf16.msra.mxu0 0
        %7851 = vmatprep.subr.bf16.mxu0 0
        %7852 = vmatpush1.bf16.msra.mxu0 0
        %7853 = vmatprep.subr.bf16.mxu0 0
        %7854 = vmatpush1.bf16.msra.mxu0 0
        %7855 = vmatprep.subr.bf16.mxu0 0
        %7856 = vmatpush1.bf16.msra.mxu0 %v7836
        %7857 = vmatprep.subr.bf16.mxu0 0
        %7858 = vmatpush2.bf16.msra.mxu0 0
        %7859 = vmatprep.subr.bf16.mxu0 0
        %7860 = vmatpush2.bf16.msra.mxu0 0
        %7861 = vmatprep.subr.bf16.mxu0 0
        %7862 = vmatpush2.bf16.msra.mxu0 0
        %7863 = vmatprep.subr.bf16.mxu0 0
        %7864 = vmatpush2.bf16.msra.mxu0 0
        %7865 = vmatprep.subr.bf16.mxu0 0
        %7866 = vmatpush2.bf16.msra.mxu0 0
        %7867 = vmatprep.subr.bf16.mxu0 0
        %7868 = vmatpush2.bf16.msra.mxu0 0
        %7869 = vmatprep.subr.bf16.mxu0 0
        %7870 = vmatpush2.bf16.msra.mxu0 0
        %7871 = vmatprep.subr.bf16.mxu0 0
        %7872 = vmatpush2.bf16.msra.mxu0 0
        %7873 = vmatprep.mubr.bf16.mxu0 0
        %7874 = vmatmul.mubr.bf16.gmra.mxu0 %v7839
        %v7875 = vpop.f32.mrf.mxu0
        %v7876 = vadd.f32 0.0, %v7875
        %v7877 = vpop.f32.mrf.mxu0
        %v7878 = vpop.f32.mrf.mxu0
        %v7879 = vpop.f32.mrf.mxu0
        %7880 = vdwg.mxu0
        %7881 = vrot.lane.b32.xlu0 %v5530, 80
        %v7882 = vpop.permute.xlu0 %7881
        %v7885 = vsel %vm4958, %v7738, 0
        %7887 = vmatprep.subr.bf16.mxu0 0
        %7888 = vmatpush1.bf16.msra.mxu0 0
        %7889 = vmatprep.subr.bf16.mxu0 0
        %7890 = vmatpush1.bf16.msra.mxu0 0
        %7891 = vmatprep.subr.bf16.mxu0 0
        %7892 = vmatpush1.bf16.msra.mxu0 0
        %7893 = vmatprep.subr.bf16.mxu0 0
        %7894 = vmatpush1.bf16.msra.mxu0 0
        %7895 = vmatprep.subr.bf16.mxu0 0
        %7896 = vmatpush1.bf16.msra.mxu0 0
        %7897 = vmatprep.subr.bf16.mxu0 0
        %7898 = vmatpush1.bf16.msra.mxu0 0
        %7899 = vmatprep.subr.bf16.mxu0 0
        %7900 = vmatpush1.bf16.msra.mxu0 0
        %7901 = vmatprep.subr.bf16.mxu0 0
        %7902 = vmatpush1.bf16.msra.mxu0 %v7882
        %7903 = vmatprep.subr.bf16.mxu0 0
        %7904 = vmatpush2.bf16.msra.mxu0 0
        %7905 = vmatprep.subr.bf16.mxu0 0
        %7906 = vmatpush2.bf16.msra.mxu0 0
        %7907 = vmatprep.subr.bf16.mxu0 0
        %7908 = vmatpush2.bf16.msra.mxu0 0
        %7909 = vmatprep.subr.bf16.mxu0 0
        %7910 = vmatpush2.bf16.msra.mxu0 0
        %7911 = vmatprep.subr.bf16.mxu0 0
        %7912 = vmatpush2.bf16.msra.mxu0 0
        %7913 = vmatprep.subr.bf16.mxu0 0
        %7914 = vmatpush2.bf16.msra.mxu0 0
        %7915 = vmatprep.subr.bf16.mxu0 0
        %7916 = vmatpush2.bf16.msra.mxu0 0
        %7917 = vmatprep.subr.bf16.mxu0 0
        %7918 = vmatpush2.bf16.msra.mxu0 0
        %7919 = vmatprep.mubr.bf16.mxu0 0
        %7920 = vmatmul.mubr.bf16.gmra.mxu0 %v7885
        %v7921 = vpop.f32.mrf.mxu0
        %v7922 = vadd.f32 0.0, %v7921
        %v7923 = vpop.f32.mrf.mxu0
        %v7924 = vpop.f32.mrf.mxu0
        %v7925 = vpop.f32.mrf.mxu0
        %7926 = vdwg.mxu0
        %7927 = vrot.lane.b32.xlu0 %v5531, 80
        %v7928 = vpop.permute.xlu0 %7927
        %v7931 = vsel %vm4958, %v7739, 0
        %7933 = vmatprep.subr.bf16.mxu0 0
        %7934 = vmatpush1.bf16.msra.mxu0 0
        %7935 = vmatprep.subr.bf16.mxu0 0
        %7936 = vmatpush1.bf16.msra.mxu0 0
        %7937 = vmatprep.subr.bf16.mxu0 0
        %7938 = vmatpush1.bf16.msra.mxu0 0
        %7939 = vmatprep.subr.bf16.mxu0 0
        %7940 = vmatpush1.bf16.msra.mxu0 0
        %7941 = vmatprep.subr.bf16.mxu0 0
        %7942 = vmatpush1.bf16.msra.mxu0 0
        %7943 = vmatprep.subr.bf16.mxu0 0
        %7944 = vmatpush1.bf16.msra.mxu0 0
        %7945 = vmatprep.subr.bf16.mxu0 0
        %7946 = vmatpush1.bf16.msra.mxu0 0
        %7947 = vmatprep.subr.bf16.mxu0 0
        %7948 = vmatpush1.bf16.msra.mxu0 %v7928
        %7949 = vmatprep.subr.bf16.mxu0 0
        %7950 = vmatpush2.bf16.msra.mxu0 0
        %7951 = vmatprep.subr.bf16.mxu0 0
        %7952 = vmatpush2.bf16.msra.mxu0 0
        %7953 = vmatprep.subr.bf16.mxu0 0
        %7954 = vmatpush2.bf16.msra.mxu0 0
        %7955 = vmatprep.subr.bf16.mxu0 0
        %7956 = vmatpush2.bf16.msra.mxu0 0
        %7957 = vmatprep.subr.bf16.mxu0 0
        %7958 = vmatpush2.bf16.msra.mxu0 0
        %7959 = vmatprep.subr.bf16.mxu0 0
        %7960 = vmatpush2.bf16.msra.mxu0 0
        %7961 = vmatprep.subr.bf16.mxu0 0
        %7962 = vmatpush2.bf16.msra.mxu0 0
        %7963 = vmatprep.subr.bf16.mxu0 0
        %7964 = vmatpush2.bf16.msra.mxu0 0
        %7965 = vmatprep.mubr.bf16.mxu0 0
        %7966 = vmatmul.mubr.bf16.gmra.mxu0 %v7931
        %v7967 = vpop.f32.mrf.mxu0
        %v7968 = vadd.f32 0.0, %v7967
        %v7969 = vpop.f32.mrf.mxu0
        %v7970 = vpop.f32.mrf.mxu0
        %v7971 = vpop.f32.mrf.mxu0
        %7972 = vdwg.mxu0
        %7973 = vrot.lane.b32.xlu0 %v5532, 80
        %v7974 = vpop.permute.xlu0 %7973
        %v7977 = vsel %vm4958, %v7740, 0
        %7979 = vmatprep.subr.bf16.mxu0 0
        %7980 = vmatpush1.bf16.msra.mxu0 0
        %7981 = vmatprep.subr.bf16.mxu0 0
        %7982 = vmatpush1.bf16.msra.mxu0 0
        %7983 = vmatprep.subr.bf16.mxu0 0
        %7984 = vmatpush1.bf16.msra.mxu0 0
        %7985 = vmatprep.subr.bf16.mxu0 0
        %7986 = vmatpush1.bf16.msra.mxu0 0
        %7987 = vmatprep.subr.bf16.mxu0 0
        %7988 = vmatpush1.bf16.msra.mxu0 0
        %7989 = vmatprep.subr.bf16.mxu0 0
        %7990 = vmatpush1.bf16.msra.mxu0 0
        %7991 = vmatprep.subr.bf16.mxu0 0
        %7992 = vmatpush1.bf16.msra.mxu0 0
        %7993 = vmatprep.subr.bf16.mxu0 0
        %7994 = vmatpush1.bf16.msra.mxu0 %v7974
        %7995 = vmatprep.subr.bf16.mxu0 0
        %7996 = vmatpush2.bf16.msra.mxu0 0
        %7997 = vmatprep.subr.bf16.mxu0 0
        %7998 = vmatpush2.bf16.msra.mxu0 0
        %7999 = vmatprep.subr.bf16.mxu0 0
        %8000 = vmatpush2.bf16.msra.mxu0 0
        %8001 = vmatprep.subr.bf16.mxu0 0
        %8002 = vmatpush2.bf16.msra.mxu0 0
        %8003 = vmatprep.subr.bf16.mxu0 0
        %8004 = vmatpush2.bf16.msra.mxu0 0
        %8005 = vmatprep.subr.bf16.mxu0 0
        %8006 = vmatpush2.bf16.msra.mxu0 0
        %8007 = vmatprep.subr.bf16.mxu0 0
        %8008 = vmatpush2.bf16.msra.mxu0 0
        %8009 = vmatprep.subr.bf16.mxu0 0
        %8010 = vmatpush2.bf16.msra.mxu0 0
        %8011 = vmatprep.mubr.bf16.mxu0 0
        %8012 = vmatmul.mubr.bf16.gmra.mxu0 %v7977
        %v8013 = vpop.f32.mrf.mxu0
        %v8014 = vadd.f32 0.0, %v8013
        %v8015 = vpop.f32.mrf.mxu0
        %v8016 = vpop.f32.mrf.mxu0
        %v8017 = vpop.f32.mrf.mxu0
        %8018 = vdwg.mxu0
        %8019 = vrot.lane.b32.xlu0 %v5533, 80
        %v8020 = vpop.permute.xlu0 %8019
        %v8023 = vsel %vm4958, %v7741, 0
        %8025 = vmatprep.subr.bf16.mxu0 0
        %8026 = vmatpush1.bf16.msra.mxu0 0
        %8027 = vmatprep.subr.bf16.mxu0 0
        %8028 = vmatpush1.bf16.msra.mxu0 0
        %8029 = vmatprep.subr.bf16.mxu0 0
        %8030 = vmatpush1.bf16.msra.mxu0 0
        %8031 = vmatprep.subr.bf16.mxu0 0
        %8032 = vmatpush1.bf16.msra.mxu0 0
        %8033 = vmatprep.subr.bf16.mxu0 0
        %8034 = vmatpush1.bf16.msra.mxu0 0
        %8035 = vmatprep.subr.bf16.mxu0 0
        %8036 = vmatpush1.bf16.msra.mxu0 0
        %8037 = vmatprep.subr.bf16.mxu0 0
        %8038 = vmatpush1.bf16.msra.mxu0 0
        %8039 = vmatprep.subr.bf16.mxu0 0
        %8040 = vmatpush1.bf16.msra.mxu0 %v8020
        %8041 = vmatprep.subr.bf16.mxu0 0
        %8042 = vmatpush2.bf16.msra.mxu0 0
        %8043 = vmatprep.subr.bf16.mxu0 0
        %8044 = vmatpush2.bf16.msra.mxu0 0
        %8045 = vmatprep.subr.bf16.mxu0 0
        %8046 = vmatpush2.bf16.msra.mxu0 0
        %8047 = vmatprep.subr.bf16.mxu0 0
        %8048 = vmatpush2.bf16.msra.mxu0 0
        %8049 = vmatprep.subr.bf16.mxu0 0
        %8050 = vmatpush2.bf16.msra.mxu0 0
        %8051 = vmatprep.subr.bf16.mxu0 0
        %8052 = vmatpush2.bf16.msra.mxu0 0
        %8053 = vmatprep.subr.bf16.mxu0 0
        %8054 = vmatpush2.bf16.msra.mxu0 0
        %8055 = vmatprep.subr.bf16.mxu0 0
        %8056 = vmatpush2.bf16.msra.mxu0 0
        %8057 = vmatprep.mubr.bf16.mxu0 0
        %8058 = vmatmul.mubr.bf16.gmra.mxu0 %v8023
        %v8059 = vpop.f32.mrf.mxu0
        %v8060 = vadd.f32 0.0, %v8059
        %v8061 = vpop.f32.mrf.mxu0
        %v8062 = vpop.f32.mrf.mxu0
        %v8063 = vpop.f32.mrf.mxu0
        %8064 = vdwg.mxu0
        %8065 = vrot.lane.b32.xlu0 %v5534, 80
        %v8066 = vpop.permute.xlu0 %8065
        %v8069 = vsel %vm4958, %v7742, 0
        %8071 = vmatprep.subr.bf16.mxu0 0
        %8072 = vmatpush1.bf16.msra.mxu0 0
        %8073 = vmatprep.subr.bf16.mxu0 0
        %8074 = vmatpush1.bf16.msra.mxu0 0
        %8075 = vmatprep.subr.bf16.mxu0 0
        %8076 = vmatpush1.bf16.msra.mxu0 0
        %8077 = vmatprep.subr.bf16.mxu0 0
        %8078 = vmatpush1.bf16.msra.mxu0 0
        %8079 = vmatprep.subr.bf16.mxu0 0
        %8080 = vmatpush1.bf16.msra.mxu0 0
        %8081 = vmatprep.subr.bf16.mxu0 0
        %8082 = vmatpush1.bf16.msra.mxu0 0
        %8083 = vmatprep.subr.bf16.mxu0 0
        %8084 = vmatpush1.bf16.msra.mxu0 0
        %8085 = vmatprep.subr.bf16.mxu0 0
        %8086 = vmatpush1.bf16.msra.mxu0 %v8066
        %8087 = vmatprep.subr.bf16.mxu0 0
        %8088 = vmatpush2.bf16.msra.mxu0 0
        %8089 = vmatprep.subr.bf16.mxu0 0
        %8090 = vmatpush2.bf16.msra.mxu0 0
        %8091 = vmatprep.subr.bf16.mxu0 0
        %8092 = vmatpush2.bf16.msra.mxu0 0
        %8093 = vmatprep.subr.bf16.mxu0 0
        %8094 = vmatpush2.bf16.msra.mxu0 0
        %8095 = vmatprep.subr.bf16.mxu0 0
        %8096 = vmatpush2.bf16.msra.mxu0 0
        %8097 = vmatprep.subr.bf16.mxu0 0
        %8098 = vmatpush2.bf16.msra.mxu0 0
        %8099 = vmatprep.subr.bf16.mxu0 0
        %8100 = vmatpush2.bf16.msra.mxu0 0
        %8101 = vmatprep.subr.bf16.mxu0 0
        %8102 = vmatpush2.bf16.msra.mxu0 0
        %8103 = vmatprep.mubr.bf16.mxu0 0
        %8104 = vmatmul.mubr.bf16.gmra.mxu0 %v8069
        %v8105 = vpop.f32.mrf.mxu0
        %v8106 = vadd.f32 0.0, %v8105
        %v8107 = vpop.f32.mrf.mxu0
        %v8108 = vpop.f32.mrf.mxu0
        %v8109 = vpop.f32.mrf.mxu0
        %8110 = vdwg.mxu0
        %8111 = vrot.lane.b32.xlu0 %v5519, 104
        %v8112 = vpop.permute.xlu0 %8111
        %8113 = vrot.lane.b32.xlu0 %v5527, 104
        %v8114 = vpop.permute.xlu0 %8113
        %v8116 = vsel %vm1335, %v8112, 0
        %v8119 = vsel %vm1335, %v8114, 0
        %8121 = vmatprep.subr.bf16.mxu0 0
        %8122 = vmatpush1.bf16.xpose.msra.mxu0 0
        %8123 = vmatprep.subr.bf16.mxu0 0
        %8124 = vmatpush1.bf16.xpose.msra.mxu0 0
        %8125 = vmatprep.subr.bf16.mxu0 0
        %8126 = vmatpush1.bf16.xpose.msra.mxu0 0
        %8127 = vmatprep.subr.bf16.mxu0 0
        %8128 = vmatpush1.bf16.xpose.msra.mxu0 0
        %8129 = vmatprep.subr.bf16.mxu0 0
        %8130 = vmatpush1.bf16.xpose.msra.mxu0 0
        %8131 = vmatprep.subr.bf16.mxu0 0
        %8132 = vmatpush1.bf16.xpose.msra.mxu0 0
        %8133 = vmatprep.subr.bf16.mxu0 0
        %8134 = vmatpush1.bf16.xpose.msra.mxu0 0
        %8135 = vmatprep.subr.bf16.mxu0 0
        %8136 = vmatpush1.bf16.xpose.msra.mxu0 %v8119
        %8137 = vmatprep.subr.bf16.mxu0 0
        %8138 = vmatpush2.bf16.xpose.msra.mxu0 0
        %8139 = vmatprep.subr.bf16.mxu0 0
        %8140 = vmatpush2.bf16.xpose.msra.mxu0 0
        %8141 = vmatprep.subr.bf16.mxu0 0
        %8142 = vmatpush2.bf16.xpose.msra.mxu0 0
        %8143 = vmatprep.subr.bf16.mxu0 0
        %8144 = vmatpush2.bf16.xpose.msra.mxu0 0
        %8145 = vmatprep.subr.bf16.mxu0 0
        %8146 = vmatpush2.bf16.xpose.msra.mxu0 0
        %8147 = vmatprep.subr.bf16.mxu0 0
        %8148 = vmatpush2.bf16.xpose.msra.mxu0 0
        %8149 = vmatprep.subr.bf16.mxu0 0
        %8150 = vmatpush2.bf16.xpose.msra.mxu0 0
        %8151 = vmatprep.subr.bf16.mxu0 0
        %8152 = vmatpush2.bf16.xpose.msra.mxu0 0
        %8153 = vmatprep.mubr.bf16.mxu0 0
        %8154 = vmatmul.mubr.bf16.gmra.mxu0 %v8116
        %v8155 = vpop.f32.mrf.mxu0
        %v8156 = vadd.f32 0.0, %v8155
        %v8157 = vpop.f32.mrf.mxu0
        %v8158 = vpop.f32.mrf.mxu0
        %v8159 = vpop.f32.mrf.mxu0
        %8160 = vdwg.mxu0
        %8161 = vrot.lane.b32.xlu0 %v5520, 104
        %v8162 = vpop.permute.xlu0 %8161
        %8163 = vrot.lane.b32.xlu0 %v5528, 104
        %v8164 = vpop.permute.xlu0 %8163
        %v8166 = vsel %vm1335, %v8162, 0
        %v8169 = vsel %vm1335, %v8164, 0
        %8171 = vmatprep.subr.bf16.mxu0 0
        %8172 = vmatpush1.bf16.xpose.msra.mxu0 0
        %8173 = vmatprep.subr.bf16.mxu0 0
        %8174 = vmatpush1.bf16.xpose.msra.mxu0 0
        %8175 = vmatprep.subr.bf16.mxu0 0
        %8176 = vmatpush1.bf16.xpose.msra.mxu0 0
        %8177 = vmatprep.subr.bf16.mxu0 0
        %8178 = vmatpush1.bf16.xpose.msra.mxu0 0
        %8179 = vmatprep.subr.bf16.mxu0 0
        %8180 = vmatpush1.bf16.xpose.msra.mxu0 0
        %8181 = vmatprep.subr.bf16.mxu0 0
        %8182 = vmatpush1.bf16.xpose.msra.mxu0 0
        %8183 = vmatprep.subr.bf16.mxu0 0
        %8184 = vmatpush1.bf16.xpose.msra.mxu0 0
        %8185 = vmatprep.subr.bf16.mxu0 0
        %8186 = vmatpush1.bf16.xpose.msra.mxu0 %v8169
        %8187 = vmatprep.subr.bf16.mxu0 0
        %8188 = vmatpush2.bf16.xpose.msra.mxu0 0
        %8189 = vmatprep.subr.bf16.mxu0 0
        %8190 = vmatpush2.bf16.xpose.msra.mxu0 0
        %8191 = vmatprep.subr.bf16.mxu0 0
        %8192 = vmatpush2.bf16.xpose.msra.mxu0 0
        %8193 = vmatprep.subr.bf16.mxu0 0
        %8194 = vmatpush2.bf16.xpose.msra.mxu0 0
        %8195 = vmatprep.subr.bf16.mxu0 0
        %8196 = vmatpush2.bf16.xpose.msra.mxu0 0
        %8197 = vmatprep.subr.bf16.mxu0 0
        %8198 = vmatpush2.bf16.xpose.msra.mxu0 0
        %8199 = vmatprep.subr.bf16.mxu0 0
        %8200 = vmatpush2.bf16.xpose.msra.mxu0 0
        %8201 = vmatprep.subr.bf16.mxu0 0
        %8202 = vmatpush2.bf16.xpose.msra.mxu0 0
        %8203 = vmatprep.mubr.bf16.mxu0 0
        %8204 = vmatmul.mubr.bf16.gmra.mxu0 %v8166
        %v8205 = vpop.f32.mrf.mxu0
        %v8206 = vadd.f32 0.0, %v8205
        %v8207 = vpop.f32.mrf.mxu0
        %v8208 = vpop.f32.mrf.mxu0
        %v8209 = vpop.f32.mrf.mxu0
        %8210 = vdwg.mxu0
        %8211 = vrot.lane.b32.xlu0 %v5521, 104
        %v8212 = vpop.permute.xlu0 %8211
        %8213 = vrot.lane.b32.xlu0 %v5529, 104
        %v8214 = vpop.permute.xlu0 %8213
        %v8216 = vsel %vm1335, %v8212, 0
        %v8219 = vsel %vm1335, %v8214, 0
        %8221 = vmatprep.subr.bf16.mxu0 0
        %8222 = vmatpush1.bf16.xpose.msra.mxu0 0
        %8223 = vmatprep.subr.bf16.mxu0 0
        %8224 = vmatpush1.bf16.xpose.msra.mxu0 0
        %8225 = vmatprep.subr.bf16.mxu0 0
        %8226 = vmatpush1.bf16.xpose.msra.mxu0 0
        %8227 = vmatprep.subr.bf16.mxu0 0
        %8228 = vmatpush1.bf16.xpose.msra.mxu0 0
        %8229 = vmatprep.subr.bf16.mxu0 0
        %8230 = vmatpush1.bf16.xpose.msra.mxu0 0
        %8231 = vmatprep.subr.bf16.mxu0 0
        %8232 = vmatpush1.bf16.xpose.msra.mxu0 0
        %8233 = vmatprep.subr.bf16.mxu0 0
        %8234 = vmatpush1.bf16.xpose.msra.mxu0 0
        %8235 = vmatprep.subr.bf16.mxu0 0
        %8236 = vmatpush1.bf16.xpose.msra.mxu0 %v8219
        %8237 = vmatprep.subr.bf16.mxu0 0
        %8238 = vmatpush2.bf16.xpose.msra.mxu0 0
        %8239 = vmatprep.subr.bf16.mxu0 0
        %8240 = vmatpush2.bf16.xpose.msra.mxu0 0
        %8241 = vmatprep.subr.bf16.mxu0 0
        %8242 = vmatpush2.bf16.xpose.msra.mxu0 0
        %8243 = vmatprep.subr.bf16.mxu0 0
        %8244 = vmatpush2.bf16.xpose.msra.mxu0 0
        %8245 = vmatprep.subr.bf16.mxu0 0
        %8246 = vmatpush2.bf16.xpose.msra.mxu0 0
        %8247 = vmatprep.subr.bf16.mxu0 0
        %8248 = vmatpush2.bf16.xpose.msra.mxu0 0
        %8249 = vmatprep.subr.bf16.mxu0 0
        %8250 = vmatpush2.bf16.xpose.msra.mxu0 0
        %8251 = vmatprep.subr.bf16.mxu0 0
        %8252 = vmatpush2.bf16.xpose.msra.mxu0 0
        %8253 = vmatprep.mubr.bf16.mxu0 0
        %8254 = vmatmul.mubr.bf16.gmra.mxu0 %v8216
        %v8255 = vpop.f32.mrf.mxu0
        %v8256 = vadd.f32 0.0, %v8255
        %v8257 = vpop.f32.mrf.mxu0
        %v8258 = vpop.f32.mrf.mxu0
        %v8259 = vpop.f32.mrf.mxu0
        %8260 = vdwg.mxu0
        %8261 = vrot.lane.b32.xlu0 %v5522, 104
        %v8262 = vpop.permute.xlu0 %8261
        %8263 = vrot.lane.b32.xlu0 %v5530, 104
        %v8264 = vpop.permute.xlu0 %8263
        %v8266 = vsel %vm1335, %v8262, 0
        %v8269 = vsel %vm1335, %v8264, 0
        %8271 = vmatprep.subr.bf16.mxu0 0
        %8272 = vmatpush1.bf16.xpose.msra.mxu0 0
        %8273 = vmatprep.subr.bf16.mxu0 0
        %8274 = vmatpush1.bf16.xpose.msra.mxu0 0
        %8275 = vmatprep.subr.bf16.mxu0 0
        %8276 = vmatpush1.bf16.xpose.msra.mxu0 0
        %8277 = vmatprep.subr.bf16.mxu0 0
        %8278 = vmatpush1.bf16.xpose.msra.mxu0 0
        %8279 = vmatprep.subr.bf16.mxu0 0
        %8280 = vmatpush1.bf16.xpose.msra.mxu0 0
        %8281 = vmatprep.subr.bf16.mxu0 0
        %8282 = vmatpush1.bf16.xpose.msra.mxu0 0
        %8283 = vmatprep.subr.bf16.mxu0 0
        %8284 = vmatpush1.bf16.xpose.msra.mxu0 0
        %8285 = vmatprep.subr.bf16.mxu0 0
        %8286 = vmatpush1.bf16.xpose.msra.mxu0 %v8269
        %8287 = vmatprep.subr.bf16.mxu0 0
        %8288 = vmatpush2.bf16.xpose.msra.mxu0 0
        %8289 = vmatprep.subr.bf16.mxu0 0
        %8290 = vmatpush2.bf16.xpose.msra.mxu0 0
        %8291 = vmatprep.subr.bf16.mxu0 0
        %8292 = vmatpush2.bf16.xpose.msra.mxu0 0
        %8293 = vmatprep.subr.bf16.mxu0 0
        %8294 = vmatpush2.bf16.xpose.msra.mxu0 0
        %8295 = vmatprep.subr.bf16.mxu0 0
        %8296 = vmatpush2.bf16.xpose.msra.mxu0 0
        %8297 = vmatprep.subr.bf16.mxu0 0
        %8298 = vmatpush2.bf16.xpose.msra.mxu0 0
        %8299 = vmatprep.subr.bf16.mxu0 0
        %8300 = vmatpush2.bf16.xpose.msra.mxu0 0
        %8301 = vmatprep.subr.bf16.mxu0 0
        %8302 = vmatpush2.bf16.xpose.msra.mxu0 0
        %8303 = vmatprep.mubr.bf16.mxu0 0
        %8304 = vmatmul.mubr.bf16.gmra.mxu0 %v8266
        %v8305 = vpop.f32.mrf.mxu0
        %v8306 = vadd.f32 0.0, %v8305
        %v8307 = vpop.f32.mrf.mxu0
        %v8308 = vpop.f32.mrf.mxu0
        %v8309 = vpop.f32.mrf.mxu0
        %8310 = vdwg.mxu0
        %8311 = vrot.lane.b32.xlu0 %v5523, 104
        %v8312 = vpop.permute.xlu0 %8311
        %8313 = vrot.lane.b32.xlu0 %v5531, 104
        %v8314 = vpop.permute.xlu0 %8313
        %v8316 = vsel %vm1335, %v8312, 0
        %v8319 = vsel %vm1335, %v8314, 0
        %8321 = vmatprep.subr.bf16.mxu0 0
        %8322 = vmatpush1.bf16.xpose.msra.mxu0 0
        %8323 = vmatprep.subr.bf16.mxu0 0
        %8324 = vmatpush1.bf16.xpose.msra.mxu0 0
        %8325 = vmatprep.subr.bf16.mxu0 0
        %8326 = vmatpush1.bf16.xpose.msra.mxu0 0
        %8327 = vmatprep.subr.bf16.mxu0 0
        %8328 = vmatpush1.bf16.xpose.msra.mxu0 0
        %8329 = vmatprep.subr.bf16.mxu0 0
        %8330 = vmatpush1.bf16.xpose.msra.mxu0 0
        %8331 = vmatprep.subr.bf16.mxu0 0
        %8332 = vmatpush1.bf16.xpose.msra.mxu0 0
        %8333 = vmatprep.subr.bf16.mxu0 0
        %8334 = vmatpush1.bf16.xpose.msra.mxu0 0
        %8335 = vmatprep.subr.bf16.mxu0 0
        %8336 = vmatpush1.bf16.xpose.msra.mxu0 %v8319
        %8337 = vmatprep.subr.bf16.mxu0 0
        %8338 = vmatpush2.bf16.xpose.msra.mxu0 0
        %8339 = vmatprep.subr.bf16.mxu0 0
        %8340 = vmatpush2.bf16.xpose.msra.mxu0 0
        %8341 = vmatprep.subr.bf16.mxu0 0
        %8342 = vmatpush2.bf16.xpose.msra.mxu0 0
        %8343 = vmatprep.subr.bf16.mxu0 0
        %8344 = vmatpush2.bf16.xpose.msra.mxu0 0
        %8345 = vmatprep.subr.bf16.mxu0 0
        %8346 = vmatpush2.bf16.xpose.msra.mxu0 0
        %8347 = vmatprep.subr.bf16.mxu0 0
        %8348 = vmatpush2.bf16.xpose.msra.mxu0 0
        %8349 = vmatprep.subr.bf16.mxu0 0
        %8350 = vmatpush2.bf16.xpose.msra.mxu0 0
        %8351 = vmatprep.subr.bf16.mxu0 0
        %8352 = vmatpush2.bf16.xpose.msra.mxu0 0
        %8353 = vmatprep.mubr.bf16.mxu0 0
        %8354 = vmatmul.mubr.bf16.gmra.mxu0 %v8316
        %v8355 = vpop.f32.mrf.mxu0
        %v8356 = vadd.f32 0.0, %v8355
        %v8357 = vpop.f32.mrf.mxu0
        %v8358 = vpop.f32.mrf.mxu0
        %v8359 = vpop.f32.mrf.mxu0
        %8360 = vdwg.mxu0
        %8361 = vrot.lane.b32.xlu0 %v5524, 104
        %v8362 = vpop.permute.xlu0 %8361
        %8363 = vrot.lane.b32.xlu0 %v5532, 104
        %v8364 = vpop.permute.xlu0 %8363
        %v8366 = vsel %vm1335, %v8362, 0
        %v8369 = vsel %vm1335, %v8364, 0
        %8371 = vmatprep.subr.bf16.mxu0 0
        %8372 = vmatpush1.bf16.xpose.msra.mxu0 0
        %8373 = vmatprep.subr.bf16.mxu0 0
        %8374 = vmatpush1.bf16.xpose.msra.mxu0 0
        %8375 = vmatprep.subr.bf16.mxu0 0
        %8376 = vmatpush1.bf16.xpose.msra.mxu0 0
        %8377 = vmatprep.subr.bf16.mxu0 0
        %8378 = vmatpush1.bf16.xpose.msra.mxu0 0
        %8379 = vmatprep.subr.bf16.mxu0 0
        %8380 = vmatpush1.bf16.xpose.msra.mxu0 0
        %8381 = vmatprep.subr.bf16.mxu0 0
        %8382 = vmatpush1.bf16.xpose.msra.mxu0 0
        %8383 = vmatprep.subr.bf16.mxu0 0
        %8384 = vmatpush1.bf16.xpose.msra.mxu0 0
        %8385 = vmatprep.subr.bf16.mxu0 0
        %8386 = vmatpush1.bf16.xpose.msra.mxu0 %v8369
        %8387 = vmatprep.subr.bf16.mxu0 0
        %8388 = vmatpush2.bf16.xpose.msra.mxu0 0
        %8389 = vmatprep.subr.bf16.mxu0 0
        %8390 = vmatpush2.bf16.xpose.msra.mxu0 0
        %8391 = vmatprep.subr.bf16.mxu0 0
        %8392 = vmatpush2.bf16.xpose.msra.mxu0 0
        %8393 = vmatprep.subr.bf16.mxu0 0
        %8394 = vmatpush2.bf16.xpose.msra.mxu0 0
        %8395 = vmatprep.subr.bf16.mxu0 0
        %8396 = vmatpush2.bf16.xpose.msra.mxu0 0
        %8397 = vmatprep.subr.bf16.mxu0 0
        %8398 = vmatpush2.bf16.xpose.msra.mxu0 0
        %8399 = vmatprep.subr.bf16.mxu0 0
        %8400 = vmatpush2.bf16.xpose.msra.mxu0 0
        %8401 = vmatprep.subr.bf16.mxu0 0
        %8402 = vmatpush2.bf16.xpose.msra.mxu0 0
        %8403 = vmatprep.mubr.bf16.mxu0 0
        %8404 = vmatmul.mubr.bf16.gmra.mxu0 %v8366
        %v8405 = vpop.f32.mrf.mxu0
        %v8406 = vadd.f32 0.0, %v8405
        %v8407 = vpop.f32.mrf.mxu0
        %v8408 = vpop.f32.mrf.mxu0
        %v8409 = vpop.f32.mrf.mxu0
        %8410 = vdwg.mxu0
        %8411 = vrot.lane.b32.xlu0 %v5525, 104
        %v8412 = vpop.permute.xlu0 %8411
        %8413 = vrot.lane.b32.xlu0 %v5533, 104
        %v8414 = vpop.permute.xlu0 %8413
        %v8416 = vsel %vm1335, %v8412, 0
        %v8419 = vsel %vm1335, %v8414, 0
        %8421 = vmatprep.subr.bf16.mxu0 0
        %8422 = vmatpush1.bf16.xpose.msra.mxu0 0
        %8423 = vmatprep.subr.bf16.mxu0 0
        %8424 = vmatpush1.bf16.xpose.msra.mxu0 0
        %8425 = vmatprep.subr.bf16.mxu0 0
        %8426 = vmatpush1.bf16.xpose.msra.mxu0 0
        %8427 = vmatprep.subr.bf16.mxu0 0
        %8428 = vmatpush1.bf16.xpose.msra.mxu0 0
        %8429 = vmatprep.subr.bf16.mxu0 0
        %8430 = vmatpush1.bf16.xpose.msra.mxu0 0
        %8431 = vmatprep.subr.bf16.mxu0 0
        %8432 = vmatpush1.bf16.xpose.msra.mxu0 0
        %8433 = vmatprep.subr.bf16.mxu0 0
        %8434 = vmatpush1.bf16.xpose.msra.mxu0 0
        %8435 = vmatprep.subr.bf16.mxu0 0
        %8436 = vmatpush1.bf16.xpose.msra.mxu0 %v8419
        %8437 = vmatprep.subr.bf16.mxu0 0
        %8438 = vmatpush2.bf16.xpose.msra.mxu0 0
        %8439 = vmatprep.subr.bf16.mxu0 0
        %8440 = vmatpush2.bf16.xpose.msra.mxu0 0
        %8441 = vmatprep.subr.bf16.mxu0 0
        %8442 = vmatpush2.bf16.xpose.msra.mxu0 0
        %8443 = vmatprep.subr.bf16.mxu0 0
        %8444 = vmatpush2.bf16.xpose.msra.mxu0 0
        %8445 = vmatprep.subr.bf16.mxu0 0
        %8446 = vmatpush2.bf16.xpose.msra.mxu0 0
        %8447 = vmatprep.subr.bf16.mxu0 0
        %8448 = vmatpush2.bf16.xpose.msra.mxu0 0
        %8449 = vmatprep.subr.bf16.mxu0 0
        %8450 = vmatpush2.bf16.xpose.msra.mxu0 0
        %8451 = vmatprep.subr.bf16.mxu0 0
        %8452 = vmatpush2.bf16.xpose.msra.mxu0 0
        %8453 = vmatprep.mubr.bf16.mxu0 0
        %8454 = vmatmul.mubr.bf16.gmra.mxu0 %v8416
        %v8455 = vpop.f32.mrf.mxu0
        %v8456 = vadd.f32 0.0, %v8455
        %v8457 = vpop.f32.mrf.mxu0
        %v8458 = vpop.f32.mrf.mxu0
        %v8459 = vpop.f32.mrf.mxu0
        %8460 = vdwg.mxu0
        %8461 = vrot.lane.b32.xlu0 %v5526, 104
        %v8462 = vpop.permute.xlu0 %8461
        %8463 = vrot.lane.b32.xlu0 %v5534, 104
        %v8464 = vpop.permute.xlu0 %8463
        %v8466 = vsel %vm1335, %v8462, 0
        %v8469 = vsel %vm1335, %v8464, 0
        %8471 = vmatprep.subr.bf16.mxu0 0
        %8472 = vmatpush1.bf16.xpose.msra.mxu0 0
        %8473 = vmatprep.subr.bf16.mxu0 0
        %8474 = vmatpush1.bf16.xpose.msra.mxu0 0
        %8475 = vmatprep.subr.bf16.mxu0 0
        %8476 = vmatpush1.bf16.xpose.msra.mxu0 0
        %8477 = vmatprep.subr.bf16.mxu0 0
        %8478 = vmatpush1.bf16.xpose.msra.mxu0 0
        %8479 = vmatprep.subr.bf16.mxu0 0
        %8480 = vmatpush1.bf16.xpose.msra.mxu0 0
        %8481 = vmatprep.subr.bf16.mxu0 0
        %8482 = vmatpush1.bf16.xpose.msra.mxu0 0
        %8483 = vmatprep.subr.bf16.mxu0 0
        %8484 = vmatpush1.bf16.xpose.msra.mxu0 0
        %8485 = vmatprep.subr.bf16.mxu0 0
        %8486 = vmatpush1.bf16.xpose.msra.mxu0 %v8469
        %8487 = vmatprep.subr.bf16.mxu0 0
        %8488 = vmatpush2.bf16.xpose.msra.mxu0 0
        %8489 = vmatprep.subr.bf16.mxu0 0
        %8490 = vmatpush2.bf16.xpose.msra.mxu0 0
        %8491 = vmatprep.subr.bf16.mxu0 0
        %8492 = vmatpush2.bf16.xpose.msra.mxu0 0
        %8493 = vmatprep.subr.bf16.mxu0 0
        %8494 = vmatpush2.bf16.xpose.msra.mxu0 0
        %8495 = vmatprep.subr.bf16.mxu0 0
        %8496 = vmatpush2.bf16.xpose.msra.mxu0 0
        %8497 = vmatprep.subr.bf16.mxu0 0
        %8498 = vmatpush2.bf16.xpose.msra.mxu0 0
        %8499 = vmatprep.subr.bf16.mxu0 0
        %8500 = vmatpush2.bf16.xpose.msra.mxu0 0
        %8501 = vmatprep.subr.bf16.mxu0 0
        %8502 = vmatpush2.bf16.xpose.msra.mxu0 0
        %8503 = vmatprep.mubr.bf16.mxu0 0
        %8504 = vmatmul.mubr.bf16.gmra.mxu0 %v8466
        %v8505 = vpop.f32.mrf.mxu0
        %v8506 = vadd.f32 0.0, %v8505
        %v8507 = vpop.f32.mrf.mxu0
        %v8508 = vpop.f32.mrf.mxu0
        %v8509 = vpop.f32.mrf.mxu0
        %8510 = vdwg.mxu0
        %v8511 = vsel %vm4958, %v8156, -inf
        %8512 = vmax.xlane.f32.xlu0 %v8511
        %v8513 = vpop.xlane.xlu0 %8512
        %v8514 = vsel %vm4958, %v8206, -inf
        %8515 = vmax.xlane.f32.xlu0 %v8514
        %v8516 = vpop.xlane.xlu0 %8515
        %v8517 = vsel %vm4958, %v8256, -inf
        %8518 = vmax.xlane.f32.xlu0 %v8517
        %v8519 = vpop.xlane.xlu0 %8518
        %v8520 = vsel %vm4958, %v8306, -inf
        %8521 = vmax.xlane.f32.xlu0 %v8520
        %v8522 = vpop.xlane.xlu0 %8521
        %v8523 = vsel %vm4958, %v8356, -inf
        %8524 = vmax.xlane.f32.xlu0 %v8523
        %v8525 = vpop.xlane.xlu0 %8524
        %v8526 = vsel %vm4958, %v8406, -inf
        %8527 = vmax.xlane.f32.xlu0 %v8526
        %v8528 = vpop.xlane.xlu0 %8527
        %v8529 = vsel %vm4958, %v8456, -inf
        %8530 = vmax.xlane.f32.xlu0 %v8529
        %v8531 = vpop.xlane.xlu0 %8530
        %v8532 = vsel %vm4958, %v8506, -inf
        %8533 = vmax.xlane.f32.xlu0 %v8532
        %v8534 = vpop.xlane.xlu0 %8533
        %v8535 = vsub.f32 %v8156, %v8513
        %v8536 = vsub.f32 %v8206, %v8516
        %v8537 = vsub.f32 %v8256, %v8519
        %v8538 = vsub.f32 %v8306, %v8522
        %v8539 = vsub.f32 %v8356, %v8525
        %v8540 = vsub.f32 %v8406, %v8528
        %v8541 = vsub.f32 %v8456, %v8531
        %v8542 = vsub.f32 %v8506, %v8534
        %v8543 = vmul.f32 %v8535, 1.442695
        %v8544 = vpow.pop %v8543
        %v8545 = vmul.f32 %v8536, 1.442695
        %v8546 = vpow.pop %v8545
        %v8547 = vmul.f32 %v8537, 1.442695
        %v8548 = vpow.pop %v8547
        %v8549 = vmul.f32 %v8538, 1.442695
        %v8550 = vpow.pop %v8549
        %v8551 = vmul.f32 %v8539, 1.442695
        %v8552 = vpow.pop %v8551
        %v8553 = vmul.f32 %v8540, 1.442695
        %v8554 = vpow.pop %v8553
        %v8555 = vmul.f32 %v8541, 1.442695
        %v8556 = vpow.pop %v8555
        %v8557 = vmul.f32 %v8542, 1.442695
        %v8558 = vpow.pop %v8557
        %v8559 = vsel %vm4958, %v8544, 0.0
        %8560 = vadd.xlane.f32.xlu0 %v8559
        %v8561 = vpop.xlane.xlu0 %8560
        %v8562 = vsel %vm4958, %v8546, 0.0
        %8563 = vadd.xlane.f32.xlu0 %v8562
        %v8564 = vpop.xlane.xlu0 %8563
        %v8565 = vsel %vm4958, %v8548, 0.0
        %8566 = vadd.xlane.f32.xlu0 %v8565
        %v8567 = vpop.xlane.xlu0 %8566
        %v8568 = vsel %vm4958, %v8550, 0.0
        %8569 = vadd.xlane.f32.xlu0 %v8568
        %v8570 = vpop.xlane.xlu0 %8569
        %v8571 = vsel %vm4958, %v8552, 0.0
        %8572 = vadd.xlane.f32.xlu0 %v8571
        %v8573 = vpop.xlane.xlu0 %8572
        %v8574 = vsel %vm4958, %v8554, 0.0
        %8575 = vadd.xlane.f32.xlu0 %v8574
        %v8576 = vpop.xlane.xlu0 %8575
        %v8577 = vsel %vm4958, %v8556, 0.0
        %8578 = vadd.xlane.f32.xlu0 %v8577
        %v8579 = vpop.xlane.xlu0 %8578
        %v8580 = vsel %vm4958, %v8558, 0.0
        %8581 = vadd.xlane.f32.xlu0 %v8580
        %v8582 = vpop.xlane.xlu0 %8581
        %v8583 = vrcp.pop %v8561
        %v8584 = vrcp.pop %v8564
        %v8585 = vrcp.pop %v8567
        %v8586 = vrcp.pop %v8570
        %v8587 = vrcp.pop %v8573
        %v8588 = vrcp.pop %v8576
        %v8589 = vrcp.pop %v8579
        %v8590 = vrcp.pop %v8582
        %v8591 = vmul.f32 %v8544, %v8583
        %v8592 = vmul.f32 %v8546, %v8584
        %v8593 = vmul.f32 %v8548, %v8585
        %v8594 = vmul.f32 %v8550, %v8586
        %v8595 = vmul.f32 %v8552, %v8587
        %v8596 = vmul.f32 %v8554, %v8588
        %v8597 = vmul.f32 %v8556, %v8589
        %v8598 = vmul.f32 %v8558, %v8590
        %v8599 = vpack.c.bf16 %v8591, %v8591
        %v8600 = vpack.c.bf16 %v8592, %v8592
        %v8601 = vpack.c.bf16 %v8593, %v8593
        %v8602 = vpack.c.bf16 %v8594, %v8594
        %v8603 = vpack.c.bf16 %v8595, %v8595
        %v8604 = vpack.c.bf16 %v8596, %v8596
        %v8605 = vpack.c.bf16 %v8597, %v8597
        %v8606 = vpack.c.bf16 %v8598, %v8598
        %8607 = vrot.lane.b32.xlu0 %v5527, 72
        %v8608 = vpop.permute.xlu0 %8607
        %v8611 = vsel %vm4958, %v8599, 0
        %8613 = vmatprep.subr.bf16.mxu0 0
        %8614 = vmatpush1.bf16.msra.mxu0 0
        %8615 = vmatprep.subr.bf16.mxu0 0
        %8616 = vmatpush1.bf16.msra.mxu0 0
        %8617 = vmatprep.subr.bf16.mxu0 0
        %8618 = vmatpush1.bf16.msra.mxu0 0
        %8619 = vmatprep.subr.bf16.mxu0 0
        %8620 = vmatpush1.bf16.msra.mxu0 0
        %8621 = vmatprep.subr.bf16.mxu0 0
        %8622 = vmatpush1.bf16.msra.mxu0 0
        %8623 = vmatprep.subr.bf16.mxu0 0
        %8624 = vmatpush1.bf16.msra.mxu0 0
        %8625 = vmatprep.subr.bf16.mxu0 0
        %8626 = vmatpush1.bf16.msra.mxu0 0
        %8627 = vmatprep.subr.bf16.mxu0 0
        %8628 = vmatpush1.bf16.msra.mxu0 %v8608
        %8629 = vmatprep.subr.bf16.mxu0 0
        %8630 = vmatpush2.bf16.msra.mxu0 0
        %8631 = vmatprep.subr.bf16.mxu0 0
        %8632 = vmatpush2.bf16.msra.mxu0 0
        %8633 = vmatprep.subr.bf16.mxu0 0
        %8634 = vmatpush2.bf16.msra.mxu0 0
        %8635 = vmatprep.subr.bf16.mxu0 0
        %8636 = vmatpush2.bf16.msra.mxu0 0
        %8637 = vmatprep.subr.bf16.mxu0 0
        %8638 = vmatpush2.bf16.msra.mxu0 0
        %8639 = vmatprep.subr.bf16.mxu0 0
        %8640 = vmatpush2.bf16.msra.mxu0 0
        %8641 = vmatprep.subr.bf16.mxu0 0
        %8642 = vmatpush2.bf16.msra.mxu0 0
        %8643 = vmatprep.subr.bf16.mxu0 0
        %8644 = vmatpush2.bf16.msra.mxu0 0
        %8645 = vmatprep.mubr.bf16.mxu0 0
        %8646 = vmatmul.mubr.bf16.gmra.mxu0 %v8611
        %v8647 = vpop.f32.mrf.mxu0
        %v8648 = vadd.f32 0.0, %v8647
        %v8649 = vpop.f32.mrf.mxu0
        %v8650 = vpop.f32.mrf.mxu0
        %v8651 = vpop.f32.mrf.mxu0
        %8652 = vdwg.mxu0
        %8653 = vrot.lane.b32.xlu0 %v5528, 72
        %v8654 = vpop.permute.xlu0 %8653
        %v8657 = vsel %vm4958, %v8600, 0
        %8659 = vmatprep.subr.bf16.mxu0 0
        %8660 = vmatpush1.bf16.msra.mxu0 0
        %8661 = vmatprep.subr.bf16.mxu0 0
        %8662 = vmatpush1.bf16.msra.mxu0 0
        %8663 = vmatprep.subr.bf16.mxu0 0
        %8664 = vmatpush1.bf16.msra.mxu0 0
        %8665 = vmatprep.subr.bf16.mxu0 0
        %8666 = vmatpush1.bf16.msra.mxu0 0
        %8667 = vmatprep.subr.bf16.mxu0 0
        %8668 = vmatpush1.bf16.msra.mxu0 0
        %8669 = vmatprep.subr.bf16.mxu0 0
        %8670 = vmatpush1.bf16.msra.mxu0 0
        %8671 = vmatprep.subr.bf16.mxu0 0
        %8672 = vmatpush1.bf16.msra.mxu0 0
        %8673 = vmatprep.subr.bf16.mxu0 0
        %8674 = vmatpush1.bf16.msra.mxu0 %v8654
        %8675 = vmatprep.subr.bf16.mxu0 0
        %8676 = vmatpush2.bf16.msra.mxu0 0
        %8677 = vmatprep.subr.bf16.mxu0 0
        %8678 = vmatpush2.bf16.msra.mxu0 0
        %8679 = vmatprep.subr.bf16.mxu0 0
        %8680 = vmatpush2.bf16.msra.mxu0 0
        %8681 = vmatprep.subr.bf16.mxu0 0
        %8682 = vmatpush2.bf16.msra.mxu0 0
        %8683 = vmatprep.subr.bf16.mxu0 0
        %8684 = vmatpush2.bf16.msra.mxu0 0
        %8685 = vmatprep.subr.bf16.mxu0 0
        %8686 = vmatpush2.bf16.msra.mxu0 0
        %8687 = vmatprep.subr.bf16.mxu0 0
        %8688 = vmatpush2.bf16.msra.mxu0 0
        %8689 = vmatprep.subr.bf16.mxu0 0
        %8690 = vmatpush2.bf16.msra.mxu0 0
        %8691 = vmatprep.mubr.bf16.mxu0 0
        %8692 = vmatmul.mubr.bf16.gmra.mxu0 %v8657
        %v8693 = vpop.f32.mrf.mxu0
        %v8694 = vadd.f32 0.0, %v8693
        %v8695 = vpop.f32.mrf.mxu0
        %v8696 = vpop.f32.mrf.mxu0
        %v8697 = vpop.f32.mrf.mxu0
        %8698 = vdwg.mxu0
        %8699 = vrot.lane.b32.xlu0 %v5529, 72
        %v8700 = vpop.permute.xlu0 %8699
        %v8703 = vsel %vm4958, %v8601, 0
        %8705 = vmatprep.subr.bf16.mxu0 0
        %8706 = vmatpush1.bf16.msra.mxu0 0
        %8707 = vmatprep.subr.bf16.mxu0 0
        %8708 = vmatpush1.bf16.msra.mxu0 0
        %8709 = vmatprep.subr.bf16.mxu0 0
        %8710 = vmatpush1.bf16.msra.mxu0 0
        %8711 = vmatprep.subr.bf16.mxu0 0
        %8712 = vmatpush1.bf16.msra.mxu0 0
        %8713 = vmatprep.subr.bf16.mxu0 0
        %8714 = vmatpush1.bf16.msra.mxu0 0
        %8715 = vmatprep.subr.bf16.mxu0 0
        %8716 = vmatpush1.bf16.msra.mxu0 0
        %8717 = vmatprep.subr.bf16.mxu0 0
        %8718 = vmatpush1.bf16.msra.mxu0 0
        %8719 = vmatprep.subr.bf16.mxu0 0
        %8720 = vmatpush1.bf16.msra.mxu0 %v8700
        %8721 = vmatprep.subr.bf16.mxu0 0
        %8722 = vmatpush2.bf16.msra.mxu0 0
        %8723 = vmatprep.subr.bf16.mxu0 0
        %8724 = vmatpush2.bf16.msra.mxu0 0
        %8725 = vmatprep.subr.bf16.mxu0 0
        %8726 = vmatpush2.bf16.msra.mxu0 0
        %8727 = vmatprep.subr.bf16.mxu0 0
        %8728 = vmatpush2.bf16.msra.mxu0 0
        %8729 = vmatprep.subr.bf16.mxu0 0
        %8730 = vmatpush2.bf16.msra.mxu0 0
        %8731 = vmatprep.subr.bf16.mxu0 0
        %8732 = vmatpush2.bf16.msra.mxu0 0
        %8733 = vmatprep.subr.bf16.mxu0 0
        %8734 = vmatpush2.bf16.msra.mxu0 0
        %8735 = vmatprep.subr.bf16.mxu0 0
        %8736 = vmatpush2.bf16.msra.mxu0 0
        %8737 = vmatprep.mubr.bf16.mxu0 0
        %8738 = vmatmul.mubr.bf16.gmra.mxu0 %v8703
        %v8739 = vpop.f32.mrf.mxu0
        %v8740 = vadd.f32 0.0, %v8739
        %v8741 = vpop.f32.mrf.mxu0
        %v8742 = vpop.f32.mrf.mxu0
        %v8743 = vpop.f32.mrf.mxu0
        %8744 = vdwg.mxu0
        %8745 = vrot.lane.b32.xlu0 %v5530, 72
        %v8746 = vpop.permute.xlu0 %8745
        %v8749 = vsel %vm4958, %v8602, 0
        %8751 = vmatprep.subr.bf16.mxu0 0
        %8752 = vmatpush1.bf16.msra.mxu0 0
        %8753 = vmatprep.subr.bf16.mxu0 0
        %8754 = vmatpush1.bf16.msra.mxu0 0
        %8755 = vmatprep.subr.bf16.mxu0 0
        %8756 = vmatpush1.bf16.msra.mxu0 0
        %8757 = vmatprep.subr.bf16.mxu0 0
        %8758 = vmatpush1.bf16.msra.mxu0 0
        %8759 = vmatprep.subr.bf16.mxu0 0
        %8760 = vmatpush1.bf16.msra.mxu0 0
        %8761 = vmatprep.subr.bf16.mxu0 0
        %8762 = vmatpush1.bf16.msra.mxu0 0
        %8763 = vmatprep.subr.bf16.mxu0 0
        %8764 = vmatpush1.bf16.msra.mxu0 0
        %8765 = vmatprep.subr.bf16.mxu0 0
        %8766 = vmatpush1.bf16.msra.mxu0 %v8746
        %8767 = vmatprep.subr.bf16.mxu0 0
        %8768 = vmatpush2.bf16.msra.mxu0 0
        %8769 = vmatprep.subr.bf16.mxu0 0
        %8770 = vmatpush2.bf16.msra.mxu0 0
        %8771 = vmatprep.subr.bf16.mxu0 0
        %8772 = vmatpush2.bf16.msra.mxu0 0
        %8773 = vmatprep.subr.bf16.mxu0 0
        %8774 = vmatpush2.bf16.msra.mxu0 0
        %8775 = vmatprep.subr.bf16.mxu0 0
        %8776 = vmatpush2.bf16.msra.mxu0 0
        %8777 = vmatprep.subr.bf16.mxu0 0
        %8778 = vmatpush2.bf16.msra.mxu0 0
        %8779 = vmatprep.subr.bf16.mxu0 0
        %8780 = vmatpush2.bf16.msra.mxu0 0
        %8781 = vmatprep.subr.bf16.mxu0 0
        %8782 = vmatpush2.bf16.msra.mxu0 0
        %8783 = vmatprep.mubr.bf16.mxu0 0
        %8784 = vmatmul.mubr.bf16.gmra.mxu0 %v8749
        %v8785 = vpop.f32.mrf.mxu0
        %v8786 = vadd.f32 0.0, %v8785
        %v8787 = vpop.f32.mrf.mxu0
        %v8788 = vpop.f32.mrf.mxu0
        %v8789 = vpop.f32.mrf.mxu0
        %8790 = vdwg.mxu0
        %8791 = vrot.lane.b32.xlu0 %v5531, 72
        %v8792 = vpop.permute.xlu0 %8791
        %v8795 = vsel %vm4958, %v8603, 0
        %8797 = vmatprep.subr.bf16.mxu0 0
        %8798 = vmatpush1.bf16.msra.mxu0 0
        %8799 = vmatprep.subr.bf16.mxu0 0
        %8800 = vmatpush1.bf16.msra.mxu0 0
        %8801 = vmatprep.subr.bf16.mxu0 0
        %8802 = vmatpush1.bf16.msra.mxu0 0
        %8803 = vmatprep.subr.bf16.mxu0 0
        %8804 = vmatpush1.bf16.msra.mxu0 0
        %8805 = vmatprep.subr.bf16.mxu0 0
        %8806 = vmatpush1.bf16.msra.mxu0 0
        %8807 = vmatprep.subr.bf16.mxu0 0
        %8808 = vmatpush1.bf16.msra.mxu0 0
        %8809 = vmatprep.subr.bf16.mxu0 0
        %8810 = vmatpush1.bf16.msra.mxu0 0
        %8811 = vmatprep.subr.bf16.mxu0 0
        %8812 = vmatpush1.bf16.msra.mxu0 %v8792
        %8813 = vmatprep.subr.bf16.mxu0 0
        %8814 = vmatpush2.bf16.msra.mxu0 0
        %8815 = vmatprep.subr.bf16.mxu0 0
        %8816 = vmatpush2.bf16.msra.mxu0 0
        %8817 = vmatprep.subr.bf16.mxu0 0
        %8818 = vmatpush2.bf16.msra.mxu0 0
        %8819 = vmatprep.subr.bf16.mxu0 0
        %8820 = vmatpush2.bf16.msra.mxu0 0
        %8821 = vmatprep.subr.bf16.mxu0 0
        %8822 = vmatpush2.bf16.msra.mxu0 0
        %8823 = vmatprep.subr.bf16.mxu0 0
        %8824 = vmatpush2.bf16.msra.mxu0 0
        %8825 = vmatprep.subr.bf16.mxu0 0
        %8826 = vmatpush2.bf16.msra.mxu0 0
        %8827 = vmatprep.subr.bf16.mxu0 0
        %8828 = vmatpush2.bf16.msra.mxu0 0
        %8829 = vmatprep.mubr.bf16.mxu0 0
        %8830 = vmatmul.mubr.bf16.gmra.mxu0 %v8795
        %v8831 = vpop.f32.mrf.mxu0
        %v8832 = vadd.f32 0.0, %v8831
        %v8833 = vpop.f32.mrf.mxu0
        %v8834 = vpop.f32.mrf.mxu0
        %v8835 = vpop.f32.mrf.mxu0
        %8836 = vdwg.mxu0
        %8837 = vrot.lane.b32.xlu0 %v5532, 72
        %v8838 = vpop.permute.xlu0 %8837
        %v8841 = vsel %vm4958, %v8604, 0
        %8843 = vmatprep.subr.bf16.mxu0 0
        %8844 = vmatpush1.bf16.msra.mxu0 0
        %8845 = vmatprep.subr.bf16.mxu0 0
        %8846 = vmatpush1.bf16.msra.mxu0 0
        %8847 = vmatprep.subr.bf16.mxu0 0
        %8848 = vmatpush1.bf16.msra.mxu0 0
        %8849 = vmatprep.subr.bf16.mxu0 0
        %8850 = vmatpush1.bf16.msra.mxu0 0
        %8851 = vmatprep.subr.bf16.mxu0 0
        %8852 = vmatpush1.bf16.msra.mxu0 0
        %8853 = vmatprep.subr.bf16.mxu0 0
        %8854 = vmatpush1.bf16.msra.mxu0 0
        %8855 = vmatprep.subr.bf16.mxu0 0
        %8856 = vmatpush1.bf16.msra.mxu0 0
        %8857 = vmatprep.subr.bf16.mxu0 0
        %8858 = vmatpush1.bf16.msra.mxu0 %v8838
        %8859 = vmatprep.subr.bf16.mxu0 0
        %8860 = vmatpush2.bf16.msra.mxu0 0
        %8861 = vmatprep.subr.bf16.mxu0 0
        %8862 = vmatpush2.bf16.msra.mxu0 0
        %8863 = vmatprep.subr.bf16.mxu0 0
        %8864 = vmatpush2.bf16.msra.mxu0 0
        %8865 = vmatprep.subr.bf16.mxu0 0
        %8866 = vmatpush2.bf16.msra.mxu0 0
        %8867 = vmatprep.subr.bf16.mxu0 0
        %8868 = vmatpush2.bf16.msra.mxu0 0
        %8869 = vmatprep.subr.bf16.mxu0 0
        %8870 = vmatpush2.bf16.msra.mxu0 0
        %8871 = vmatprep.subr.bf16.mxu0 0
        %8872 = vmatpush2.bf16.msra.mxu0 0
        %8873 = vmatprep.subr.bf16.mxu0 0
        %8874 = vmatpush2.bf16.msra.mxu0 0
        %8875 = vmatprep.mubr.bf16.mxu0 0
        %8876 = vmatmul.mubr.bf16.gmra.mxu0 %v8841
        %v8877 = vpop.f32.mrf.mxu0
        %v8878 = vadd.f32 0.0, %v8877
        %v8879 = vpop.f32.mrf.mxu0
        %v8880 = vpop.f32.mrf.mxu0
        %v8881 = vpop.f32.mrf.mxu0
        %8882 = vdwg.mxu0
        %8883 = vrot.lane.b32.xlu0 %v5533, 72
        %v8884 = vpop.permute.xlu0 %8883
        %v8887 = vsel %vm4958, %v8605, 0
        %8889 = vmatprep.subr.bf16.mxu0 0
        %8890 = vmatpush1.bf16.msra.mxu0 0
        %8891 = vmatprep.subr.bf16.mxu0 0
        %8892 = vmatpush1.bf16.msra.mxu0 0
        %8893 = vmatprep.subr.bf16.mxu0 0
        %8894 = vmatpush1.bf16.msra.mxu0 0
        %8895 = vmatprep.subr.bf16.mxu0 0
        %8896 = vmatpush1.bf16.msra.mxu0 0
        %8897 = vmatprep.subr.bf16.mxu0 0
        %8898 = vmatpush1.bf16.msra.mxu0 0
        %8899 = vmatprep.subr.bf16.mxu0 0
        %8900 = vmatpush1.bf16.msra.mxu0 0
        %8901 = vmatprep.subr.bf16.mxu0 0
        %8902 = vmatpush1.bf16.msra.mxu0 0
        %8903 = vmatprep.subr.bf16.mxu0 0
        %8904 = vmatpush1.bf16.msra.mxu0 %v8884
        %8905 = vmatprep.subr.bf16.mxu0 0
        %8906 = vmatpush2.bf16.msra.mxu0 0
        %8907 = vmatprep.subr.bf16.mxu0 0
        %8908 = vmatpush2.bf16.msra.mxu0 0
        %8909 = vmatprep.subr.bf16.mxu0 0
        %8910 = vmatpush2.bf16.msra.mxu0 0
        %8911 = vmatprep.subr.bf16.mxu0 0
        %8912 = vmatpush2.bf16.msra.mxu0 0
        %8913 = vmatprep.subr.bf16.mxu0 0
        %8914 = vmatpush2.bf16.msra.mxu0 0
        %8915 = vmatprep.subr.bf16.mxu0 0
        %8916 = vmatpush2.bf16.msra.mxu0 0
        %8917 = vmatprep.subr.bf16.mxu0 0
        %8918 = vmatpush2.bf16.msra.mxu0 0
        %8919 = vmatprep.subr.bf16.mxu0 0
        %8920 = vmatpush2.bf16.msra.mxu0 0
        %8921 = vmatprep.mubr.bf16.mxu0 0
        %8922 = vmatmul.mubr.bf16.gmra.mxu0 %v8887
        %v8923 = vpop.f32.mrf.mxu0
        %v8924 = vadd.f32 0.0, %v8923
        %v8925 = vpop.f32.mrf.mxu0
        %v8926 = vpop.f32.mrf.mxu0
        %v8927 = vpop.f32.mrf.mxu0
        %8928 = vdwg.mxu0
        %8929 = vrot.lane.b32.xlu0 %v5534, 72
        %v8930 = vpop.permute.xlu0 %8929
        %v8933 = vsel %vm4958, %v8606, 0
        %8935 = vmatprep.subr.bf16.mxu0 0
        %8936 = vmatpush1.bf16.msra.mxu0 0
        %8937 = vmatprep.subr.bf16.mxu0 0
        %8938 = vmatpush1.bf16.msra.mxu0 0
        %8939 = vmatprep.subr.bf16.mxu0 0
        %8940 = vmatpush1.bf16.msra.mxu0 0
        %8941 = vmatprep.subr.bf16.mxu0 0
        %8942 = vmatpush1.bf16.msra.mxu0 0
        %8943 = vmatprep.subr.bf16.mxu0 0
        %8944 = vmatpush1.bf16.msra.mxu0 0
        %8945 = vmatprep.subr.bf16.mxu0 0
        %8946 = vmatpush1.bf16.msra.mxu0 0
        %8947 = vmatprep.subr.bf16.mxu0 0
        %8948 = vmatpush1.bf16.msra.mxu0 0
        %8949 = vmatprep.subr.bf16.mxu0 0
        %8950 = vmatpush1.bf16.msra.mxu0 %v8930
        %8951 = vmatprep.subr.bf16.mxu0 0
        %8952 = vmatpush2.bf16.msra.mxu0 0
        %8953 = vmatprep.subr.bf16.mxu0 0
        %8954 = vmatpush2.bf16.msra.mxu0 0
        %8955 = vmatprep.subr.bf16.mxu0 0
        %8956 = vmatpush2.bf16.msra.mxu0 0
        %8957 = vmatprep.subr.bf16.mxu0 0
        %8958 = vmatpush2.bf16.msra.mxu0 0
        %8959 = vmatprep.subr.bf16.mxu0 0
        %8960 = vmatpush2.bf16.msra.mxu0 0
        %8961 = vmatprep.subr.bf16.mxu0 0
        %8962 = vmatpush2.bf16.msra.mxu0 0
        %8963 = vmatprep.subr.bf16.mxu0 0
        %8964 = vmatpush2.bf16.msra.mxu0 0
        %8965 = vmatprep.subr.bf16.mxu0 0
        %8966 = vmatpush2.bf16.msra.mxu0 0
        %8967 = vmatprep.mubr.bf16.mxu0 0
        %8968 = vmatmul.mubr.bf16.gmra.mxu0 %v8933
        %v8969 = vpop.f32.mrf.mxu0
        %v8970 = vadd.f32 0.0, %v8969
        %v8971 = vpop.f32.mrf.mxu0
        %v8972 = vpop.f32.mrf.mxu0
        %v8973 = vpop.f32.mrf.mxu0
        %8974 = vdwg.mxu0
        %8983 = vrot.lane.b32.xlu0 %v6920, 8
        %v8984 = vpop.permute.xlu0 %8983
        %8985 = vrot.lane.b32.xlu0 %v6966, 8
        %v8986 = vpop.permute.xlu0 %8985
        %8987 = vrot.lane.b32.xlu0 %v7012, 8
        %v8988 = vpop.permute.xlu0 %8987
        %8989 = vrot.lane.b32.xlu0 %v7058, 8
        %v8990 = vpop.permute.xlu0 %8989
        %8991 = vrot.lane.b32.xlu0 %v7104, 8
        %v8992 = vpop.permute.xlu0 %8991
        %8993 = vrot.lane.b32.xlu0 %v7150, 8
        %v8994 = vpop.permute.xlu0 %8993
        %8995 = vrot.lane.b32.xlu0 %v7196, 8
        %v8996 = vpop.permute.xlu0 %8995
        %8997 = vrot.lane.b32.xlu0 %v7242, 8
        %v8998 = vpop.permute.xlu0 %8997
        %9015 = vrot.lane.b32.xlu0 %v7784, 16
        %v9016 = vpop.permute.xlu0 %9015
        %9017 = vrot.lane.b32.xlu0 %v7830, 16
        %v9018 = vpop.permute.xlu0 %9017
        %9019 = vrot.lane.b32.xlu0 %v7876, 16
        %v9020 = vpop.permute.xlu0 %9019
        %9021 = vrot.lane.b32.xlu0 %v7922, 16
        %v9022 = vpop.permute.xlu0 %9021
        %9023 = vrot.lane.b32.xlu0 %v7968, 16
        %v9024 = vpop.permute.xlu0 %9023
        %9025 = vrot.lane.b32.xlu0 %v8014, 16
        %v9026 = vpop.permute.xlu0 %9025
        %9027 = vrot.lane.b32.xlu0 %v8060, 16
        %v9028 = vpop.permute.xlu0 %9027
        %9029 = vrot.lane.b32.xlu0 %v8106, 16
        %v9030 = vpop.permute.xlu0 %9029
        %9047 = vrot.lane.b32.xlu0 %v8648, 24
        %v9048 = vpop.permute.xlu0 %9047
        %9049 = vrot.lane.b32.xlu0 %v8694, 24
        %v9050 = vpop.permute.xlu0 %9049
        %9051 = vrot.lane.b32.xlu0 %v8740, 24
        %v9052 = vpop.permute.xlu0 %9051
        %9053 = vrot.lane.b32.xlu0 %v8786, 24
        %v9054 = vpop.permute.xlu0 %9053
        %9055 = vrot.lane.b32.xlu0 %v8832, 24
        %v9056 = vpop.permute.xlu0 %9055
        %9057 = vrot.lane.b32.xlu0 %v8878, 24
        %v9058 = vpop.permute.xlu0 %9057
        %9059 = vrot.lane.b32.xlu0 %v8924, 24
        %v9060 = vpop.permute.xlu0 %9059
        %9061 = vrot.lane.b32.xlu0 %v8970, 24
        %v9062 = vpop.permute.xlu0 %9061
        %v9071 = vsel %vm1335, %v6041, %v8984
        %v9072 = vsel %vm1335, %v6088, %v8986
        %v9073 = vsel %vm1335, %v6135, %v8988
        %v9074 = vsel %vm1335, %v6182, %v8990
        %v9075 = vsel %vm1335, %v6229, %v8992
        %v9076 = vsel %vm1335, %v6276, %v8994
        %v9077 = vsel %vm1335, %v6323, %v8996
        %v9078 = vsel %vm1335, %v6370, %v8998
        %v9079 = vsel %vm4958, %v9071, %v9016
        %v9080 = vsel %vm4958, %v9072, %v9018
        %v9081 = vsel %vm4958, %v9073, %v9020
        %v9082 = vsel %vm4958, %v9074, %v9022
        %v9083 = vsel %vm4958, %v9075, %v9024
        %v9084 = vsel %vm4958, %v9076, %v9026
        %v9085 = vsel %vm4958, %v9077, %v9028
        %v9086 = vsel %vm4958, %v9078, %v9030
        %v9087 = vsel %vm4967, %v9079, %v9048
        %v9088 = vsel %vm4967, %v9080, %v9050
        %v9089 = vsel %vm4967, %v9081, %v9052
        %v9090 = vsel %vm4967, %v9082, %v9054
        %v9091 = vsel %vm4967, %v9083, %v9056
        %v9092 = vsel %vm4967, %v9084, %v9058
        %v9093 = vsel %vm4967, %v9085, %v9060
        %v9094 = vsel %vm4967, %v9086, %v9062
        %v9095 = vpack.c.bf16 %v9088, %v9087
        %v9096 = vpack.c.bf16 %v9090, %v9089
        %v9097 = vpack.c.bf16 %v9092, %v9091
        %v9098 = vpack.c.bf16 %v9094, %v9093
        %v9099 = vld [vmem:[%s1125] sm:$0xf]
        %v9100 = vld [vmem:[%s1125 + $0x4] sm:$0xf]
        %v9101 = vld [vmem:[%s1125 + $0x8] sm:$0xf]
        %v9102 = vld [vmem:[%s1125 + $0xc] sm:$0xf]
        %v9103 = vld [vmem:[%s1128] sm:$0x1]
        %v9105 = vlaneseq
        %v9106 = vshrl.u32 %v9105, 7
        %v9107 = vsub.s32 0, %v9106
        %v9108 = vrot.slane %v9103, %v9107
        %v9114 = vunpack.c.l.b16 %v9099
        %v9115 = vunpack.c.l.b16 %v9100
        %v9116 = vunpack.c.l.b16 %v9101
        %v9117 = vunpack.c.l.b16 %v9102
        %v9118 = vpack.c.b16 %v9115, %v9114
        %v9119 = vpack.c.b16 %v9117, %v9116
        %v9123 = vsel %vm1230, %v9095, 0
        %v9126 = vsel %vm1230, %v9096, 0
        %v9129 = vsel %vm1230, %v9097, 0
        %v9132 = vsel %vm1230, %v9098, 0
        %9134 = vmatprep.subr.bf16.mxu0 0
        %9135 = vmatpush1.bf16.msra.mxu0 0
        %9136 = vmatprep.subr.bf16.mxu0 0
        %9137 = vmatpush1.bf16.msra.mxu0 0
        %9138 = vmatprep.subr.bf16.mxu0 0
        %9139 = vmatpush1.bf16.msra.mxu0 0
        %9140 = vmatprep.subr.bf16.mxu0 0
        %9141 = vmatpush1.bf16.msra.mxu0 0
        %9142 = vmatprep.subr.bf16.mxu0 0
        %9143 = vmatpush1.bf16.msra.mxu0 0
        %9144 = vmatprep.subr.bf16.mxu0 0
        %9145 = vmatpush1.bf16.msra.mxu0 0
        %9146 = vmatprep.subr.bf16.mxu0 0
        %9147 = vmatpush1.bf16.msra.mxu0 %v9119
        %9148 = vmatprep.subr.bf16.mxu0 0
        %9149 = vmatpush1.bf16.msra.mxu0 %v9118
        %9150 = vmatprep.subr.bf16.mxu0 0
        %9151 = vmatpush2.bf16.msra.mxu0 0
        %9152 = vmatprep.subr.bf16.mxu0 0
        %9153 = vmatpush2.bf16.msra.mxu0 0
        %9154 = vmatprep.subr.bf16.mxu0 0
        %9155 = vmatpush2.bf16.msra.mxu0 0
        %9156 = vmatprep.subr.bf16.mxu0 0
        %9157 = vmatpush2.bf16.msra.mxu0 0
        %9158 = vmatprep.subr.bf16.mxu0 0
        %9159 = vmatpush2.bf16.msra.mxu0 0
        %9160 = vmatprep.subr.bf16.mxu0 0
        %9161 = vmatpush2.bf16.msra.mxu0 0
        %9162 = vmatprep.subr.bf16.mxu0 0
        %9163 = vmatpush2.bf16.msra.mxu0 0
        %9164 = vmatprep.subr.bf16.mxu0 0
        %9165 = vmatpush2.bf16.msra.mxu0 0
        %9166 = vmatprep.mubr.bf16.mxu0 0
        %9167 = vmatmul.mubr.bf16.gmra.mxu0 %v9123
        %v9168 = vpop.f32.mrf.mxu0
        %v9169 = vadd.f32 %v9108, %v9168
        %v9170 = vpop.f32.mrf.mxu0
        %v9171 = vpop.f32.mrf.mxu0
        %v9172 = vadd.f32 %v9108, %v9171
        %v9173 = vpop.f32.mrf.mxu0
        %9174 = vmatprep.mubr.bf16.mxu0 0
        %9175 = vmatmul.mubr.bf16.gmra.mxu0 %v9126
        %v9176 = vpop.f32.mrf.mxu0
        %v9177 = vadd.f32 %v9108, %v9176
        %v9178 = vpop.f32.mrf.mxu0
        %v9179 = vpop.f32.mrf.mxu0
        %v9180 = vadd.f32 %v9108, %v9179
        %v9181 = vpop.f32.mrf.mxu0
        %9182 = vmatprep.mubr.bf16.mxu0 0
        %9183 = vmatmul.mubr.bf16.gmra.mxu0 %v9129
        %v9184 = vpop.f32.mrf.mxu0
        %v9185 = vadd.f32 %v9108, %v9184
        %v9186 = vpop.f32.mrf.mxu0
        %v9187 = vpop.f32.mrf.mxu0
        %v9188 = vadd.f32 %v9108, %v9187
        %v9189 = vpop.f32.mrf.mxu0
        %9190 = vmatprep.mubr.bf16.mxu0 0
        %9191 = vmatmul.mubr.bf16.gmra.mxu0 %v9132
        %v9192 = vpop.f32.mrf.mxu0
        %v9193 = vadd.f32 %v9108, %v9192
        %v9194 = vpop.f32.mrf.mxu0
        %v9195 = vpop.f32.mrf.mxu0
        %v9196 = vadd.f32 %v9108, %v9195
        %v9197 = vpop.f32.mrf.mxu0
        %9198 = vdwg.mxu0
        %v9199 = vadd.f32 %v5215, %v9169
        %v9200 = vadd.f32 %v5216, %v9172
        %v9201 = vadd.f32 %v5217, %v9177
        %v9202 = vadd.f32 %v5218, %v9180
        %v9203 = vadd.f32 %v5219, %v9185
        %v9204 = vadd.f32 %v5220, %v9188
        %v9205 = vadd.f32 %v5221, %v9193
        %v9206 = vadd.f32 %v5222, %v9196
        %v9207 = vsel %vm1230, %v9199, 0.0
        %9208 = vadd.xlane.f32.xlu0 %v9207
        %v9209 = vpop.xlane.xlu0 %9208
        %v9210 = vsel %vm1230, %v9200, 0.0
        %9211 = vadd.xlane.f32.xlu0 %v9210
        %v9212 = vpop.xlane.xlu0 %9211
        %v9213 = vsel %vm1230, %v9201, 0.0
        %9214 = vadd.xlane.f32.xlu0 %v9213
        %v9215 = vpop.xlane.xlu0 %9214
        %v9216 = vsel %vm1230, %v9202, 0.0
        %9217 = vadd.xlane.f32.xlu0 %v9216
        %v9218 = vpop.xlane.xlu0 %9217
        %v9219 = vsel %vm1230, %v9203, 0.0
        %9220 = vadd.xlane.f32.xlu0 %v9219
        %v9221 = vpop.xlane.xlu0 %9220
        %v9222 = vsel %vm1230, %v9204, 0.0
        %9223 = vadd.xlane.f32.xlu0 %v9222
        %v9224 = vpop.xlane.xlu0 %9223
        %v9225 = vsel %vm1230, %v9205, 0.0
        %9226 = vadd.xlane.f32.xlu0 %v9225
        %v9227 = vpop.xlane.xlu0 %9226
        %v9228 = vsel %vm1230, %v9206, 0.0
        %9229 = vadd.xlane.f32.xlu0 %v9228
        %v9230 = vpop.xlane.xlu0 %9229
        %v9231 = vmul.f32 %v9209, %v5112
        %v9232 = vmul.f32 %v9212, %v5112
        %v9233 = vmul.f32 %v9215, %v5112
        %v9234 = vmul.f32 %v9218, %v5112
        %v9235 = vmul.f32 %v9221, %v5112
        %v9236 = vmul.f32 %v9224, %v5112
        %v9237 = vmul.f32 %v9227, %v5112
        %v9238 = vmul.f32 %v9230, %v5112
        %v9239 = vsub.f32 %v9199, %v9231
        %v9240 = vsub.f32 %v9200, %v9232
        %v9241 = vsub.f32 %v9201, %v9233
        %v9242 = vsub.f32 %v9202, %v9234
        %v9243 = vsub.f32 %v9203, %v9235
        %v9244 = vsub.f32 %v9204, %v9236
        %v9245 = vsub.f32 %v9205, %v9237
        %v9246 = vsub.f32 %v9206, %v9238
        %v9247 = vmul.f32 %v9239, %v9239
        %v9248 = vmul.f32 %v9240, %v9240
        %v9249 = vmul.f32 %v9241, %v9241
        %v9250 = vmul.f32 %v9242, %v9242
        %v9251 = vmul.f32 %v9243, %v9243
        %v9252 = vmul.f32 %v9244, %v9244
        %v9253 = vmul.f32 %v9245, %v9245
        %v9254 = vmul.f32 %v9246, %v9246
        %v9255 = vsel %vm1230, %v9247, 0.0
        %9256 = vadd.xlane.f32.xlu0 %v9255
        %v9257 = vpop.xlane.xlu0 %9256
        %v9258 = vsel %vm1230, %v9248, 0.0
        %9259 = vadd.xlane.f32.xlu0 %v9258
        %v9260 = vpop.xlane.xlu0 %9259
        %v9261 = vsel %vm1230, %v9249, 0.0
        %9262 = vadd.xlane.f32.xlu0 %v9261
        %v9263 = vpop.xlane.xlu0 %9262
        %v9264 = vsel %vm1230, %v9250, 0.0
        %9265 = vadd.xlane.f32.xlu0 %v9264
        %v9266 = vpop.xlane.xlu0 %9265
        %v9267 = vsel %vm1230, %v9251, 0.0
        %9268 = vadd.xlane.f32.xlu0 %v9267
        %v9269 = vpop.xlane.xlu0 %9268
        %v9270 = vsel %vm1230, %v9252, 0.0
        %9271 = vadd.xlane.f32.xlu0 %v9270
        %v9272 = vpop.xlane.xlu0 %9271
        %v9273 = vsel %vm1230, %v9253, 0.0
        %9274 = vadd.xlane.f32.xlu0 %v9273
        %v9275 = vpop.xlane.xlu0 %9274
        %v9276 = vsel %vm1230, %v9254, 0.0
        %9277 = vadd.xlane.f32.xlu0 %v9276
        %v9278 = vpop.xlane.xlu0 %9277
        %v9279 = vmul.f32 %v9257, %v5112
        %v9280 = vmul.f32 %v9260, %v5112
        %v9281 = vmul.f32 %v9263, %v5112
        %v9282 = vmul.f32 %v9266, %v5112
        %v9283 = vmul.f32 %v9269, %v5112
        %v9284 = vmul.f32 %v9272, %v5112
        %v9285 = vmul.f32 %v9275, %v5112
        %v9286 = vmul.f32 %v9278, %v5112
        %v9287 = vadd.f32 %v9279, 1e-05
        %v9288 = vadd.f32 %v9280, 1e-05
        %v9289 = vadd.f32 %v9281, 1e-05
        %v9290 = vadd.f32 %v9282, 1e-05
        %v9291 = vadd.f32 %v9283, 1e-05
        %v9292 = vadd.f32 %v9284, 1e-05
        %v9293 = vadd.f32 %v9285, 1e-05
        %v9294 = vadd.f32 %v9286, 1e-05
        %v9295 = vrsqrt.pop %v9287
        %v9296 = vrsqrt.pop %v9288
        %v9297 = vrsqrt.pop %v9289
        %v9298 = vrsqrt.pop %v9290
        %v9299 = vrsqrt.pop %v9291
        %v9300 = vrsqrt.pop %v9292
        %v9301 = vrsqrt.pop %v9293
        %v9302 = vrsqrt.pop %v9294
        %v9303 = vmul.f32 %v9239, %v9295
        %v9304 = vmul.f32 %v9240, %v9296
        %v9305 = vmul.f32 %v9241, %v9297
        %v9306 = vmul.f32 %v9242, %v9298
        %v9307 = vmul.f32 %v9243, %v9299
        %v9308 = vmul.f32 %v9244, %v9300
        %v9309 = vmul.f32 %v9245, %v9301
        %v9310 = vmul.f32 %v9246, %v9302
        %v9311 = vld [vmem:[%s1131] sm:$0x1]
        %v9313 = vlaneseq
        %v9314 = vshrl.u32 %v9313, 7
        %v9315 = vsub.s32 0, %v9314
        %v9316 = vrot.slane %v9311, %v9315
        %v9318 = vmul.f32 %v9303, %v9316
        %v9319 = vmul.f32 %v9304, %v9316
        %v9320 = vmul.f32 %v9305, %v9316
        %v9321 = vmul.f32 %v9306, %v9316
        %v9322 = vmul.f32 %v9307, %v9316
        %v9323 = vmul.f32 %v9308, %v9316
        %v9324 = vmul.f32 %v9309, %v9316
        %v9325 = vmul.f32 %v9310, %v9316
        %v9326 = vld [vmem:[%s1134] sm:$0x1]
        %v9328 = vlaneseq
        %v9329 = vshrl.u32 %v9328, 7
        %v9330 = vsub.s32 0, %v9329
        %v9331 = vrot.slane %v9326, %v9330
        %v9333 = vadd.f32 %v9318, %v9331
        %v9334 = vadd.f32 %v9319, %v9331
        %v9335 = vadd.f32 %v9320, %v9331
        %v9336 = vadd.f32 %v9321, %v9331
        %v9337 = vadd.f32 %v9322, %v9331
        %v9338 = vadd.f32 %v9323, %v9331
        %v9339 = vadd.f32 %v9324, %v9331
        %v9340 = vadd.f32 %v9325, %v9331
        %v9341 = vpack.c.bf16 %v9334, %v9333
        %v9342 = vpack.c.bf16 %v9336, %v9335
        %v9343 = vpack.c.bf16 %v9338, %v9337
        %v9344 = vpack.c.bf16 %v9340, %v9339
        %v9345 = vld [vmem:[%s1139] sm:$0xf]
        %v9346 = vld [vmem:[%s1139 + $0x4] sm:$0xf]
        %v9347 = vld [vmem:[%s1139 + $0x8] sm:$0xf]
        %v9348 = vld [vmem:[%s1139 + $0xc] sm:$0xf]
        %v9349 = vld [vmem:[%s917] sm:$0x1]
        %v9351 = vlaneseq
        %v9352 = vshrl.u32 %v9351, 7
        %v9353 = vsub.s32 0, %v9352
        %v9354 = vrot.slane %v9349, %v9353
        %v9360 = vunpack.c.l.b16 %v9345
        %v9361 = vunpack.c.l.b16 %v9346
        %v9362 = vunpack.c.l.b16 %v9347
        %v9363 = vunpack.c.l.b16 %v9348
        %v9364 = vpack.c.b16 %v9361, %v9360
        %v9365 = vpack.c.b16 %v9363, %v9362
        %v9369 = vsel %vm1230, %v9341, 0
        %v9372 = vsel %vm1230, %v9342, 0
        %v9375 = vsel %vm1230, %v9343, 0
        %v9378 = vsel %vm1230, %v9344, 0
        %9380 = vmatprep.subr.bf16.mxu0 0
        %9381 = vmatpush1.bf16.msra.mxu0 0
        %9382 = vmatprep.subr.bf16.mxu0 0
        %9383 = vmatpush1.bf16.msra.mxu0 0
        %9384 = vmatprep.subr.bf16.mxu0 0
        %9385 = vmatpush1.bf16.msra.mxu0 0
        %9386 = vmatprep.subr.bf16.mxu0 0
        %9387 = vmatpush1.bf16.msra.mxu0 0
        %9388 = vmatprep.subr.bf16.mxu0 0
        %9389 = vmatpush1.bf16.msra.mxu0 0
        %9390 = vmatprep.subr.bf16.mxu0 0
        %9391 = vmatpush1.bf16.msra.mxu0 0
        %9392 = vmatprep.subr.bf16.mxu0 0
        %9393 = vmatpush1.bf16.msra.mxu0 %v9365
        %9394 = vmatprep.subr.bf16.mxu0 0
        %9395 = vmatpush1.bf16.msra.mxu0 %v9364
        %9396 = vmatprep.subr.bf16.mxu0 0
        %9397 = vmatpush2.bf16.msra.mxu0 0
        %9398 = vmatprep.subr.bf16.mxu0 0
        %9399 = vmatpush2.bf16.msra.mxu0 0
        %9400 = vmatprep.subr.bf16.mxu0 0
        %9401 = vmatpush2.bf16.msra.mxu0 0
        %9402 = vmatprep.subr.bf16.mxu0 0
        %9403 = vmatpush2.bf16.msra.mxu0 0
        %9404 = vmatprep.subr.bf16.mxu0 0
        %9405 = vmatpush2.bf16.msra.mxu0 0
        %9406 = vmatprep.subr.bf16.mxu0 0
        %9407 = vmatpush2.bf16.msra.mxu0 0
        %9408 = vmatprep.subr.bf16.mxu0 0
        %9409 = vmatpush2.bf16.msra.mxu0 0
        %9410 = vmatprep.subr.bf16.mxu0 0
        %9411 = vmatpush2.bf16.msra.mxu0 0
        %9412 = vmatprep.mubr.bf16.mxu0 0
        %9413 = vmatmul.mubr.bf16.gmra.mxu0 %v9369
        %v9414 = vpop.f32.mrf.mxu0
        %v9415 = vadd.f32 %v9354, %v9414
        %v9416 = vpop.f32.mrf.mxu0
        %v9417 = vpop.f32.mrf.mxu0
        %v9418 = vadd.f32 %v9354, %v9417
        %v9419 = vpop.f32.mrf.mxu0
        %9420 = vmatprep.mubr.bf16.mxu0 0
        %9421 = vmatmul.mubr.bf16.gmra.mxu0 %v9372
        %v9422 = vpop.f32.mrf.mxu0
        %v9423 = vadd.f32 %v9354, %v9422
        %v9424 = vpop.f32.mrf.mxu0
        %v9425 = vpop.f32.mrf.mxu0
        %v9426 = vadd.f32 %v9354, %v9425
        %v9427 = vpop.f32.mrf.mxu0
        %9428 = vmatprep.mubr.bf16.mxu0 0
        %9429 = vmatmul.mubr.bf16.gmra.mxu0 %v9375
        %v9430 = vpop.f32.mrf.mxu0
        %v9431 = vadd.f32 %v9354, %v9430
        %v9432 = vpop.f32.mrf.mxu0
        %v9433 = vpop.f32.mrf.mxu0
        %v9434 = vadd.f32 %v9354, %v9433
        %v9435 = vpop.f32.mrf.mxu0
        %9436 = vmatprep.mubr.bf16.mxu0 0
        %9437 = vmatmul.mubr.bf16.gmra.mxu0 %v9378
        %v9438 = vpop.f32.mrf.mxu0
        %v9439 = vadd.f32 %v9354, %v9438
        %v9440 = vpop.f32.mrf.mxu0
        %v9441 = vpop.f32.mrf.mxu0
        %v9442 = vadd.f32 %v9354, %v9441
        %v9443 = vpop.f32.mrf.mxu0
        %9444 = vdwg.mxu0
        %v9445 = vmax.f32 %v9415, 0.0
        %v9446 = vmax.f32 %v9418, 0.0
        %v9447 = vmax.f32 %v9423, 0.0
        %v9448 = vmax.f32 %v9426, 0.0
        %v9449 = vmax.f32 %v9431, 0.0
        %v9450 = vmax.f32 %v9434, 0.0
        %v9451 = vmax.f32 %v9439, 0.0
        %v9452 = vmax.f32 %v9442, 0.0
        %v9453 = vpack.c.bf16 %v9446, %v9445
        %v9454 = vpack.c.bf16 %v9448, %v9447
        %v9455 = vpack.c.bf16 %v9450, %v9449
        %v9456 = vpack.c.bf16 %v9452, %v9451
        %v9457 = vld [vmem:[%s1144] sm:$0xf]
        %v9458 = vld [vmem:[%s1144 + $0x4] sm:$0xf]
        %v9459 = vld [vmem:[%s1144 + $0x8] sm:$0xf]
        %v9460 = vld [vmem:[%s1144 + $0xc] sm:$0xf]
        %v9461 = vld [vmem:[%s1144 + $0x10] sm:$0xf]
        %v9462 = vld [vmem:[%s1144 + $0x14] sm:$0xf]
        %v9463 = vld [vmem:[%s1144 + $0x18] sm:$0xf]
        %v9464 = vld [vmem:[%s1144 + $0x1c] sm:$0xf]
        %v9465 = vld [vmem:[%s925] sm:$0x1]
        %v9467 = vlaneseq
        %v9468 = vshrl.u32 %v9467, 7
        %v9469 = vsub.s32 0, %v9468
        %v9470 = vrot.slane %v9465, %v9469
        %v9480 = vunpack.c.l.b16 %v9457
        %v9481 = vunpack.c.l.b16 %v9458
        %v9482 = vunpack.c.l.b16 %v9459
        %v9483 = vunpack.c.l.b16 %v9460
        %v9484 = vunpack.c.l.b16 %v9461
        %v9485 = vunpack.c.l.b16 %v9462
        %v9486 = vunpack.c.l.b16 %v9463
        %v9487 = vunpack.c.l.b16 %v9464
        %v9488 = vpack.c.b16 %v9481, %v9480
        %v9489 = vpack.c.b16 %v9483, %v9482
        %v9490 = vpack.c.b16 %v9485, %v9484
        %v9491 = vpack.c.b16 %v9487, %v9486
        %vm9496 = vcmask 523264
        %v9498 = vsel %vm9496, %v9453, 0
        %v9501 = vsel %vm9496, %v9454, 0
        %v9504 = vsel %vm9496, %v9455, 0
        %v9507 = vsel %vm9496, %v9456, 0
        %9509 = vmatprep.subr.bf16.mxu0 0
        %9510 = vmatpush1.bf16.msra.mxu0 0
        %9511 = vmatprep.subr.bf16.mxu0 0
        %9512 = vmatpush1.bf16.msra.mxu0 0
        %9513 = vmatprep.subr.bf16.mxu0 0
        %9514 = vmatpush1.bf16.msra.mxu0 0
        %9515 = vmatprep.subr.bf16.mxu0 0
        %9516 = vmatpush1.bf16.msra.mxu0 0
        %9517 = vmatprep.subr.bf16.mxu0 0
        %9518 = vmatpush1.bf16.msra.mxu0 %v9491
        %9519 = vmatprep.subr.bf16.mxu0 0
        %9520 = vmatpush1.bf16.msra.mxu0 %v9490
        %9521 = vmatprep.subr.bf16.mxu0 0
        %9522 = vmatpush1.bf16.msra.mxu0 %v9489
        %9523 = vmatprep.subr.bf16.mxu0 0
        %9524 = vmatpush1.bf16.msra.mxu0 %v9488
        %9525 = vmatprep.subr.bf16.mxu0 0
        %9526 = vmatpush2.bf16.msra.mxu0 0
        %9527 = vmatprep.subr.bf16.mxu0 0
        %9528 = vmatpush2.bf16.msra.mxu0 0
        %9529 = vmatprep.subr.bf16.mxu0 0
        %9530 = vmatpush2.bf16.msra.mxu0 0
        %9531 = vmatprep.subr.bf16.mxu0 0
        %9532 = vmatpush2.bf16.msra.mxu0 0
        %9533 = vmatprep.subr.bf16.mxu0 0
        %9534 = vmatpush2.bf16.msra.mxu0 0
        %9535 = vmatprep.subr.bf16.mxu0 0
        %9536 = vmatpush2.bf16.msra.mxu0 0
        %9537 = vmatprep.subr.bf16.mxu0 0
        %9538 = vmatpush2.bf16.msra.mxu0 0
        %9539 = vmatprep.subr.bf16.mxu0 0
        %9540 = vmatpush2.bf16.msra.mxu0 0
        %9541 = vmatprep.mubr.bf16.mxu0 0
        %9542 = vmatmul.mubr.bf16.gmra.mxu0 %v9498
        %v9543 = vpop.f32.mrf.mxu0
        %v9544 = vadd.f32 %v9470, %v9543
        %v9545 = vpop.f32.mrf.mxu0
        %v9546 = vpop.f32.mrf.mxu0
        %v9547 = vadd.f32 %v9470, %v9546
        %v9548 = vpop.f32.mrf.mxu0
        %9549 = vmatprep.mubr.bf16.mxu0 0
        %9550 = vmatmul.mubr.bf16.gmra.mxu0 %v9501
        %v9551 = vpop.f32.mrf.mxu0
        %v9552 = vadd.f32 %v9470, %v9551
        %v9553 = vpop.f32.mrf.mxu0
        %v9554 = vpop.f32.mrf.mxu0
        %v9555 = vadd.f32 %v9470, %v9554
        %v9556 = vpop.f32.mrf.mxu0
        %9557 = vmatprep.mubr.bf16.mxu0 0
        %9558 = vmatmul.mubr.bf16.gmra.mxu0 %v9504
        %v9559 = vpop.f32.mrf.mxu0
        %v9560 = vadd.f32 %v9470, %v9559
        %v9561 = vpop.f32.mrf.mxu0
        %v9562 = vpop.f32.mrf.mxu0
        %v9563 = vadd.f32 %v9470, %v9562
        %v9564 = vpop.f32.mrf.mxu0
        %9565 = vmatprep.mubr.bf16.mxu0 0
        %9566 = vmatmul.mubr.bf16.gmra.mxu0 %v9507
        %v9567 = vpop.f32.mrf.mxu0
        %v9568 = vadd.f32 %v9470, %v9567
        %v9569 = vpop.f32.mrf.mxu0
        %v9570 = vpop.f32.mrf.mxu0
        %v9571 = vadd.f32 %v9470, %v9570
        %v9572 = vpop.f32.mrf.mxu0
        %9573 = vdwg.mxu0
        %v9574 = vadd.f32 %v9333, %v9544
        %v9575 = vadd.f32 %v9334, %v9547
        %v9576 = vadd.f32 %v9335, %v9552
        %v9577 = vadd.f32 %v9336, %v9555
        %v9578 = vadd.f32 %v9337, %v9560
        %v9579 = vadd.f32 %v9338, %v9563
        %v9580 = vadd.f32 %v9339, %v9568
        %v9581 = vadd.f32 %v9340, %v9571
        %v9582 = vsel %vm1230, %v9574, 0.0
        %9583 = vadd.xlane.f32.xlu0 %v9582
        %v9584 = vpop.xlane.xlu0 %9583
        %v9585 = vsel %vm1230, %v9575, 0.0
        %9586 = vadd.xlane.f32.xlu0 %v9585
        %v9587 = vpop.xlane.xlu0 %9586
        %v9588 = vsel %vm1230, %v9576, 0.0
        %9589 = vadd.xlane.f32.xlu0 %v9588
        %v9590 = vpop.xlane.xlu0 %9589
        %v9591 = vsel %vm1230, %v9577, 0.0
        %9592 = vadd.xlane.f32.xlu0 %v9591
        %v9593 = vpop.xlane.xlu0 %9592
        %v9594 = vsel %vm1230, %v9578, 0.0
        %9595 = vadd.xlane.f32.xlu0 %v9594
        %v9596 = vpop.xlane.xlu0 %9595
        %v9597 = vsel %vm1230, %v9579, 0.0
        %9598 = vadd.xlane.f32.xlu0 %v9597
        %v9599 = vpop.xlane.xlu0 %9598
        %v9600 = vsel %vm1230, %v9580, 0.0
        %9601 = vadd.xlane.f32.xlu0 %v9600
        %v9602 = vpop.xlane.xlu0 %9601
        %v9603 = vsel %vm1230, %v9581, 0.0
        %9604 = vadd.xlane.f32.xlu0 %v9603
        %v9605 = vpop.xlane.xlu0 %9604
        %v9606 = vmul.f32 %v9584, %v5112
        %v9607 = vmul.f32 %v9587, %v5112
        %v9608 = vmul.f32 %v9590, %v5112
        %v9609 = vmul.f32 %v9593, %v5112
        %v9610 = vmul.f32 %v9596, %v5112
        %v9611 = vmul.f32 %v9599, %v5112
        %v9612 = vmul.f32 %v9602, %v5112
        %v9613 = vmul.f32 %v9605, %v5112
        %v9614 = vsub.f32 %v9574, %v9606
        %v9615 = vsub.f32 %v9575, %v9607
        %v9616 = vsub.f32 %v9576, %v9608
        %v9617 = vsub.f32 %v9577, %v9609
        %v9618 = vsub.f32 %v9578, %v9610
        %v9619 = vsub.f32 %v9579, %v9611
        %v9620 = vsub.f32 %v9580, %v9612
        %v9621 = vsub.f32 %v9581, %v9613
        %v9622 = vmul.f32 %v9614, %v9614
        %v9623 = vmul.f32 %v9615, %v9615
        %v9624 = vmul.f32 %v9616, %v9616
        %v9625 = vmul.f32 %v9617, %v9617
        %v9626 = vmul.f32 %v9618, %v9618
        %v9627 = vmul.f32 %v9619, %v9619
        %v9628 = vmul.f32 %v9620, %v9620
        %v9629 = vmul.f32 %v9621, %v9621
        %v9630 = vsel %vm1230, %v9622, 0.0
        %9631 = vadd.xlane.f32.xlu0 %v9630
        %v9632 = vpop.xlane.xlu0 %9631
        %v9633 = vsel %vm1230, %v9623, 0.0
        %9634 = vadd.xlane.f32.xlu0 %v9633
        %v9635 = vpop.xlane.xlu0 %9634
        %v9636 = vsel %vm1230, %v9624, 0.0
        %9637 = vadd.xlane.f32.xlu0 %v9636
        %v9638 = vpop.xlane.xlu0 %9637
        %v9639 = vsel %vm1230, %v9625, 0.0
        %9640 = vadd.xlane.f32.xlu0 %v9639
        %v9641 = vpop.xlane.xlu0 %9640
        %v9642 = vsel %vm1230, %v9626, 0.0
        %9643 = vadd.xlane.f32.xlu0 %v9642
        %v9644 = vpop.xlane.xlu0 %9643
        %v9645 = vsel %vm1230, %v9627, 0.0
        %9646 = vadd.xlane.f32.xlu0 %v9645
        %v9647 = vpop.xlane.xlu0 %9646
        %v9648 = vsel %vm1230, %v9628, 0.0
        %9649 = vadd.xlane.f32.xlu0 %v9648
        %v9650 = vpop.xlane.xlu0 %9649
        %v9651 = vsel %vm1230, %v9629, 0.0
        %9652 = vadd.xlane.f32.xlu0 %v9651
        %v9653 = vpop.xlane.xlu0 %9652
        %v9654 = vmul.f32 %v9632, %v5112
        %v9655 = vmul.f32 %v9635, %v5112
        %v9656 = vmul.f32 %v9638, %v5112
        %v9657 = vmul.f32 %v9641, %v5112
        %v9658 = vmul.f32 %v9644, %v5112
        %v9659 = vmul.f32 %v9647, %v5112
        %v9660 = vmul.f32 %v9650, %v5112
        %v9661 = vmul.f32 %v9653, %v5112
        %v9662 = vadd.f32 %v9654, 1e-05
        %v9663 = vadd.f32 %v9655, 1e-05
        %v9664 = vadd.f32 %v9656, 1e-05
        %v9665 = vadd.f32 %v9657, 1e-05
        %v9666 = vadd.f32 %v9658, 1e-05
        %v9667 = vadd.f32 %v9659, 1e-05
        %v9668 = vadd.f32 %v9660, 1e-05
        %v9669 = vadd.f32 %v9661, 1e-05
        %v9670 = vrsqrt.pop %v9662
        %v9671 = vrsqrt.pop %v9663
        %v9672 = vrsqrt.pop %v9664
        %v9673 = vrsqrt.pop %v9665
        %v9674 = vrsqrt.pop %v9666
        %v9675 = vrsqrt.pop %v9667
        %v9676 = vrsqrt.pop %v9668
        %v9677 = vrsqrt.pop %v9669
        %v9678 = vmul.f32 %v9614, %v9670
        %v9679 = vmul.f32 %v9615, %v9671
        %v9680 = vmul.f32 %v9616, %v9672
        %v9681 = vmul.f32 %v9617, %v9673
        %v9682 = vmul.f32 %v9618, %v9674
        %v9683 = vmul.f32 %v9619, %v9675
        %v9684 = vmul.f32 %v9620, %v9676
        %v9685 = vmul.f32 %v9621, %v9677
        %v9686 = vld [vmem:[%s1147] sm:$0x1]
        %v9688 = vlaneseq
        %v9689 = vshrl.u32 %v9688, 7
        %v9690 = vsub.s32 0, %v9689
        %v9691 = vrot.slane %v9686, %v9690
        %v9693 = vmul.f32 %v9678, %v9691
        %v9694 = vmul.f32 %v9679, %v9691
        %v9695 = vmul.f32 %v9680, %v9691
        %v9696 = vmul.f32 %v9681, %v9691
        %v9697 = vmul.f32 %v9682, %v9691
        %v9698 = vmul.f32 %v9683, %v9691
        %v9699 = vmul.f32 %v9684, %v9691
        %v9700 = vmul.f32 %v9685, %v9691
        %v9701 = vld [vmem:[%s1150] sm:$0x1]
        %v9703 = vlaneseq
        %v9704 = vshrl.u32 %v9703, 7
        %v9705 = vsub.s32 0, %v9704
        %v9706 = vrot.slane %v9701, %v9705
        %v9708 = vadd.f32 %v9693, %v9706
        %v9709 = vadd.f32 %v9694, %v9706
        %v9710 = vadd.f32 %v9695, %v9706
        %v9711 = vadd.f32 %v9696, %v9706
        %v9712 = vadd.f32 %v9697, %v9706
        %v9713 = vadd.f32 %v9698, %v9706
        %v9714 = vadd.f32 %v9699, %v9706
        %v9715 = vadd.f32 %v9700, %v9706
        %9716 = vst.msk [vmem:[#allocation2] sm:$0xff] %vm1230, %v9708
        %9717 = vst.msk [vmem:[#allocation2 + $0x8] sm:$0xff] %vm1230, %v9709
        %9718 = vst.msk [vmem:[#allocation2 + $0x10] sm:$0xff] %vm1230, %v9710
        %9719 = vst.msk [vmem:[#allocation2 + $0x18] sm:$0xff] %vm1230, %v9711
        %9720 = vst.msk [vmem:[#allocation2 + $0x20] sm:$0xff] %vm1230, %v9712
        %9721 = vst.msk [vmem:[#allocation2 + $0x28] sm:$0xff] %vm1230, %v9713
        %9722 = vst.msk [vmem:[#allocation2 + $0x30] sm:$0xff] %vm1230, %v9714
        %9723 = vst.msk [vmem:[#allocation2 + $0x38] sm:$0xff] %vm1230, %v9715
        %p9724 = scmp.eq.s32.totalorder %s46, 1
        // Predicated region
        $region133: #{transformer_decoder_4d.1} parent=115 // pred_check
          %p9725 = pneg %p9724
        $region134: #{transformer_decoder_4d.1} parent=115 // pred_check_branch
          %9727 = sbr.rel (%p9725) target = $region136
        $region135: #{transformer_decoder_4d.1} parent=115 // pred_region
          %v9728 = vsel %vm1230, %v9708, 0.0
          %9729 = vadd.xlane.f32.xlu0 %v9728
          %v9730 = vpop.xlane.xlu0 %9729
          %v9731 = vsel %vm1230, %v9709, 0.0
          %9732 = vadd.xlane.f32.xlu0 %v9731
          %v9733 = vpop.xlane.xlu0 %9732
          %v9734 = vsel %vm1230, %v9710, 0.0
          %9735 = vadd.xlane.f32.xlu0 %v9734
          %v9736 = vpop.xlane.xlu0 %9735
          %v9737 = vsel %vm1230, %v9711, 0.0
          %9738 = vadd.xlane.f32.xlu0 %v9737
          %v9739 = vpop.xlane.xlu0 %9738
          %v9740 = vsel %vm1230, %v9712, 0.0
          %9741 = vadd.xlane.f32.xlu0 %v9740
          %v9742 = vpop.xlane.xlu0 %9741
          %v9743 = vsel %vm1230, %v9713, 0.0
          %9744 = vadd.xlane.f32.xlu0 %v9743
          %v9745 = vpop.xlane.xlu0 %9744
          %v9746 = vsel %vm1230, %v9714, 0.0
          %9747 = vadd.xlane.f32.xlu0 %v9746
          %v9748 = vpop.xlane.xlu0 %9747
          %v9749 = vsel %vm1230, %v9715, 0.0
          %9750 = vadd.xlane.f32.xlu0 %v9749
          %v9751 = vpop.xlane.xlu0 %9750
          %v9752 = vmul.f32 %v9730, %v5112
          %v9753 = vmul.f32 %v9733, %v5112
          %v9754 = vmul.f32 %v9736, %v5112
          %v9755 = vmul.f32 %v9739, %v5112
          %v9756 = vmul.f32 %v9742, %v5112
          %v9757 = vmul.f32 %v9745, %v5112
          %v9758 = vmul.f32 %v9748, %v5112
          %v9759 = vmul.f32 %v9751, %v5112
          %v9760 = vsub.f32 %v9708, %v9752
          %v9761 = vsub.f32 %v9709, %v9753
          %v9762 = vsub.f32 %v9710, %v9754
          %v9763 = vsub.f32 %v9711, %v9755
          %v9764 = vsub.f32 %v9712, %v9756
          %v9765 = vsub.f32 %v9713, %v9757
          %v9766 = vsub.f32 %v9714, %v9758
          %v9767 = vsub.f32 %v9715, %v9759
          %v9768 = vmul.f32 %v9760, %v9760
          %v9769 = vmul.f32 %v9761, %v9761
          %v9770 = vmul.f32 %v9762, %v9762
          %v9771 = vmul.f32 %v9763, %v9763
          %v9772 = vmul.f32 %v9764, %v9764
          %v9773 = vmul.f32 %v9765, %v9765
          %v9774 = vmul.f32 %v9766, %v9766
          %v9775 = vmul.f32 %v9767, %v9767
          %v9776 = vsel %vm1230, %v9768, 0.0
          %9777 = vadd.xlane.f32.xlu0 %v9776
          %v9778 = vpop.xlane.xlu0 %9777
          %v9779 = vsel %vm1230, %v9769, 0.0
          %9780 = vadd.xlane.f32.xlu0 %v9779
          %v9781 = vpop.xlane.xlu0 %9780
          %v9782 = vsel %vm1230, %v9770, 0.0
          %9783 = vadd.xlane.f32.xlu0 %v9782
          %v9784 = vpop.xlane.xlu0 %9783
          %v9785 = vsel %vm1230, %v9771, 0.0
          %9786 = vadd.xlane.f32.xlu0 %v9785
          %v9787 = vpop.xlane.xlu0 %9786
          %v9788 = vsel %vm1230, %v9772, 0.0
          %9789 = vadd.xlane.f32.xlu0 %v9788
          %v9790 = vpop.xlane.xlu0 %9789
          %v9791 = vsel %vm1230, %v9773, 0.0
          %9792 = vadd.xlane.f32.xlu0 %v9791
          %v9793 = vpop.xlane.xlu0 %9792
          %v9794 = vsel %vm1230, %v9774, 0.0
          %9795 = vadd.xlane.f32.xlu0 %v9794
          %v9796 = vpop.xlane.xlu0 %9795
          %v9797 = vsel %vm1230, %v9775, 0.0
          %9798 = vadd.xlane.f32.xlu0 %v9797
          %v9799 = vpop.xlane.xlu0 %9798
          %v9800 = vmul.f32 %v9778, %v5112
          %v9801 = vmul.f32 %v9781, %v5112
          %v9802 = vmul.f32 %v9784, %v5112
          %v9803 = vmul.f32 %v9787, %v5112
          %v9804 = vmul.f32 %v9790, %v5112
          %v9805 = vmul.f32 %v9793, %v5112
          %v9806 = vmul.f32 %v9796, %v5112
          %v9807 = vmul.f32 %v9799, %v5112
          %v9808 = vadd.f32 %v9800, 1e-05
          %v9809 = vadd.f32 %v9801, 1e-05
          %v9810 = vadd.f32 %v9802, 1e-05
          %v9811 = vadd.f32 %v9803, 1e-05
          %v9812 = vadd.f32 %v9804, 1e-05
          %v9813 = vadd.f32 %v9805, 1e-05
          %v9814 = vadd.f32 %v9806, 1e-05
          %v9815 = vadd.f32 %v9807, 1e-05
          %v9816 = vrsqrt.pop %v9808
          %v9817 = vrsqrt.pop %v9809
          %v9818 = vrsqrt.pop %v9810
          %v9819 = vrsqrt.pop %v9811
          %v9820 = vrsqrt.pop %v9812
          %v9821 = vrsqrt.pop %v9813
          %v9822 = vrsqrt.pop %v9814
          %v9823 = vrsqrt.pop %v9815
          %v9824 = vmul.f32 %v9760, %v9816
          %v9825 = vmul.f32 %v9761, %v9817
          %v9826 = vmul.f32 %v9762, %v9818
          %v9827 = vmul.f32 %v9763, %v9819
          %v9828 = vmul.f32 %v9764, %v9820
          %v9829 = vmul.f32 %v9765, %v9821
          %v9830 = vmul.f32 %v9766, %v9822
          %v9831 = vmul.f32 %v9767, %v9823
          %v9832 = vld [vmem:[%s22] sm:$0x1]
          %v9834 = vlaneseq
          %v9835 = vshrl.u32 %v9834, 7
          %v9836 = vsub.s32 0, %v9835
          %v9837 = vrot.slane %v9832, %v9836
          %v9839 = vmul.f32 %v9824, %v9837
          %v9840 = vmul.f32 %v9825, %v9837
          %v9841 = vmul.f32 %v9826, %v9837
          %v9842 = vmul.f32 %v9827, %v9837
          %v9843 = vmul.f32 %v9828, %v9837
          %v9844 = vmul.f32 %v9829, %v9837
          %v9845 = vmul.f32 %v9830, %v9837
          %v9846 = vmul.f32 %v9831, %v9837
          %v9847 = vld [vmem:[%s23] sm:$0x1]
          %v9849 = vlaneseq
          %v9850 = vshrl.u32 %v9849, 7
          %v9851 = vsub.s32 0, %v9850
          %v9852 = vrot.slane %v9847, %v9851
          %v9854 = vadd.f32 %v9839, %v9852
          %v9855 = vadd.f32 %v9840, %v9852
          %v9856 = vadd.f32 %v9841, %v9852
          %v9857 = vadd.f32 %v9842, %v9852
          %v9858 = vadd.f32 %v9843, %v9852
          %v9859 = vadd.f32 %v9844, %v9852
          %v9860 = vadd.f32 %v9845, %v9852
          %v9861 = vadd.f32 %v9846, %v9852
          %9862 = vst.msk [vmem:[%s1155] sm:$0xff] %vm1230, %v9854
          %9863 = vst.msk [vmem:[%s1155 + $0x8] sm:$0xff] %vm1230, %v9855
          %9864 = vst.msk [vmem:[%s1155 + $0x10] sm:$0xff] %vm1230, %v9856
          %9865 = vst.msk [vmem:[%s1155 + $0x18] sm:$0xff] %vm1230, %v9857
          %9866 = vst.msk [vmem:[%s1155 + $0x20] sm:$0xff] %vm1230, %v9858
          %9867 = vst.msk [vmem:[%s1155 + $0x28] sm:$0xff] %vm1230, %v9859
          %9868 = vst.msk [vmem:[%s1155 + $0x30] sm:$0xff] %vm1230, %v9860
          %9869 = vst.msk [vmem:[%s1155 + $0x38] sm:$0xff] %vm1230, %v9861
        $region136: #{transformer_decoder_4d.1} parent=115 // pred_fallthru
          _
        %s9870 = smul.u32 8, %s45
        %p9871 = scmp.lt.s32.totalorder %s9870, 7
        %s9872 = scalar_select %p9871, %s9870, 7
        %s9873 = smul.addr %s9872, 8
        %s9874 = scalar_lea.vmem %s24, %s9873
        // Predicated region
        $region137: #{transformer_decoder_4d.1} parent=115 // pred_check
          %p9875 = pneg %p685
        $region138: #{transformer_decoder_4d.1} parent=115 // pred_check_branch
          %9877 = sbr.rel (%p9875) target = $region140
        $region139: #{transformer_decoder_4d.1} parent=115 // pred_region
          %s9878 = smul.u32 8, %s45
        $region140: #{transformer_decoder_4d.1} parent=115 // pred_fallthru
          _
        // Predicated region
        $region141: #{transformer_decoder_4d.1} parent=115 // pred_check
          %p9879 = pneg %p685
        $region142: #{transformer_decoder_4d.1} parent=115 // pred_check_branch
          %9881 = sbr.rel (%p9879) target = $region144
        $region143: #{transformer_decoder_4d.1} parent=115 // pred_region
          %s9882 = smul.u32 8, %s45
          %p9883 = scmp.lt.s32.totalorder %s9882, 7
          %s9884 = scalar_select %p9883, %s9882, 7
          %s9885 = smul.addr %s9884, 8
          %s9886 = scalar_lea.vmem %s24, %s9885
        $region144: #{transformer_decoder_4d.1} parent=115 // pred_fallthru
          _
      $region116: #{transformer_decoder_4d.1} parent=5 // pred_fallthru
        _
      %p9887 = scmp.le.s32.totalorder 2, %s36
      // Predicated region
      $region145: #{transformer_decoder_4d.1} parent=5 // pred_check
        %p9888 = pneg %p9887
      $region146: #{transformer_decoder_4d.1} parent=5 // pred_check_branch
        %9890 = sbr.rel (%p9888) target = $region148
      $region147: #{transformer_decoder_4d.1} parent=5 // pred_region
        %s9891 = ssub.s32 %s36, 2
      $region148: #{transformer_decoder_4d.1} parent=5 // pred_fallthru
        _
    $region6: #{transformer_decoder_4d.1} parent=1 // loop_footer
      %s40 = sadd.s32 1, %s36
    $region7: #{transformer_decoder_4d.1} parent=1 // loop_footer_branch
      %35 = sbr.rel target = $region3
    $region8: #{transformer_decoder_4d.1} parent=1 // loop_exit
      _
    %9892 = vsyncpa [#allocation4], 1
    %s9893 = scalar_lea.sflag [#allocation4], 1
    %9894 = vsyncpa %s9893, 1
    %9895 = vsyncpa [#allocation6], 1
    %s9896 = scalar_lea.sflag [#allocation6], 1
    %9897 = vsyncpa %s9896, 1

</llo_original>
